<compile_context>
chip_gen: v6e
topology: v6e:2x2x1
jax: 0.10.0
libtpu: 0.0.40
codegen_flags: <defaults>
</compile_context>

<pallas_src>
import functools

import jax
import jax.numpy as jnp
from jax.experimental import pallas as pl
from jax.experimental.pallas import tpu as pltpu

EPS = 1e-5


def _pick_band_height(H, W, target_rows=1024):
    """Largest divisor of H whose band (bh * W pixels) keeps the bf16 im2col
    patch tile around ~1K rows (a few MiB at production channel counts)."""
    start = min(H, max(1, target_rows // max(W, 1)))
    for bh in range(start, 0, -1):
        if H % bh == 0:
            return bh
    return 1


def resnet_block_kernel(x_ref, w1_ref, w2_ref, aff_ref, out_ref,
                        xp_scr, patch_scr, conv_scr, *, band_h):
    """One grid step = one batch element.

    x_ref     : (1, H, W, C)        unpadded NHWC input
    w1_ref    : (9*CK, C)  bf16     conv1 weights, im2col layout
    w2_ref    : (9*CK, C)  bf16     conv2 weights, im2col layout
    aff_ref   : (1, 4, C)           rows = (gamma1, beta1, gamma2, beta2)
    out_ref   : (1, H, W, C)
    xp_scr    : (H+2, W+2, C) bf16  reflection-padded activation
    patch_scr : (BH*W, 9*CK)  bf16  im2col patch tile for one row band
    conv_scr  : (H*W, C)      f32   conv output (full-image stats for IN)
    """
    _, H, W, C = x_ref.shape
    CK = patch_scr.shape[1] // 9       # per-tap column stride (lane aligned)
    BH = band_h
    NB = H // BH
    inv_n = 1.0 / float(H * W)

    # Gap columns between per-tap blocks are never written by the tap copies;
    # the matching weight rows are zero, but stale VMEM could hold NaN/Inf.
    # Zero only the gaps, once per grid step (scratch is per-core under
    # megacore "parallel", so gating on program_id(0) == 0 would be unsafe).
    # Trace-time constant -> no code at production C (multiple of 128).
    if C != CK:
        gap = jnp.zeros((BH * W, CK - C), jnp.bfloat16)
        for k in range(9):
            patch_scr[:, k * CK + C:(k + 1) * CK] = gap

    def set_padded(interior_bf16):
        # Write the reflect-padded activation; borders are copied from the
        # already-written interior so the source value is consumed by a
        # single store and does not stay live.
        xp_scr[1:H + 1, 1:W + 1, :] = interior_bf16
        xp_scr[0:1, 1:W + 1, :] = xp_scr[2:3, 1:W + 1, :]              # top    <- row 1
        xp_scr[H + 1:H + 2, 1:W + 1, :] = xp_scr[H - 1:H, 1:W + 1, :]  # bottom <- row H-2
        xp_scr[:, 0:1, :] = xp_scr[:, 2:3, :]                          # left   <- col 1
        xp_scr[:, W + 1:W + 2, :] = xp_scr[:, W - 1:W, :]              # right  <- col W-2

    def conv3x3_banded(w_ref):
        # Row-banded im2col + one bf16 MXU matmul per band (f32 accumulate).
        # Writes the conv output into conv_scr and returns per-channel
        # (sum, sum_sq) so instance-norm stats need no extra pass.
        s1 = jnp.zeros((1, C), jnp.float32)
        s2 = jnp.zeros((1, C), jnp.float32)
        for band in range(NB):            # static unroll: band i+1 tap stores
            r0 = band * BH                # overlap band i's matmul
            for dy in range(3):
                for dx in range(3):
                    k = dy * 3 + dx
                    patch_scr[:, k * CK:k * CK + C] = (
                        xp_scr[r0 + dy:r0 + dy + BH, dx:dx + W, :]
                        .reshape(BH * W, C))
            r = jnp.dot(patch_scr[...], w_ref[...],
                        preferred_element_type=jnp.float32)
            conv_scr[r0 * W:r0 * W + BH * W, :] = r
            s1 = s1 + jnp.sum(r, axis=0, keepdims=True)
            s2 = s2 + jnp.sum(r * r, axis=0, keepdims=True)
        return s1, s2

    def norm_scale_shift(s1, s2, gamma, beta):
        # Fused one-pass instance-norm stats: var = E[x^2] - mean^2 (>= 0),
        # eps inside rsqrt; folded into a single per-element scale/shift.
        mean = s1 * inv_n
        var = jnp.maximum(s2 * inv_n - mean * mean, 0.0)
        scale = jax.lax.rsqrt(var + EPS) * gamma
        shift = beta - mean * scale
        return scale, shift

    aff = aff_ref[0].astype(jnp.float32)                       # (4, C)
    g1, b1, g2, b2 = aff[0:1], aff[1:2], aff[2:3], aff[3:4]

    # ---- reflect pad -> conv1 -> cond. instance norm -> relu ---------------
    set_padded(x_ref[0].astype(jnp.bfloat16))
    s1, s2 = conv3x3_banded(w1_ref)
    scale, shift = norm_scale_shift(s1, s2, g1, b1)
    h = jnp.maximum(conv_scr[...] * scale + shift, 0.0)

    # ---- reflect pad (same scratch) -> conv2 -> cond. instance norm --------
    set_padded(h.reshape(H, W, C).astype(jnp.bfloat16))
    s1, s2 = conv3x3_banded(w2_ref)
    scale, shift = norm_scale_shift(s1, s2, g2, b2)
    h = conv_scr[...] * scale + shift

    # ---- residual add (re-read x from the ref; it was never kept live) -----
    out_ref[0] = (x_ref[0].astype(jnp.float32)
                  + h.reshape(H, W, C)).astype(out_ref.dtype)


def _im2col_weights(w, ck):
    """(3,3,C,C) HWIO -> bf16 (9*ck, C); each tap's C input channels are
    zero-padded to a lane-aligned stride ck."""
    kh, kw, cin, cout = w.shape
    wp = jnp.zeros((kh * kw, ck, cout), jnp.float32)
    wp = wp.at[:, :cin, :].set(w.astype(jnp.float32).reshape(kh * kw, cin, cout))
    return wp.reshape(kh * kw * ck, cout).astype(jnp.bfloat16)


def resnet_block(x, y, params):
    """x: (B, H, W, C) float32 NHWC, y: (B,) int32 class labels."""
    B, H, W, C = x.shape
    assert H >= 2 and W >= 2, "reflection padding needs H, W >= 2"
    CK = ((C + 127) // 128) * 128          # lane-aligned per-tap stride
    BH = _pick_band_height(H, W)           # conv row-band height (divides H)

    w1 = _im2col_weights(params["w1"], CK)                       # (9*CK, C) bf16
    w2 = _im2col_weights(params["w2"], CK)
    # class-conditional affine lookup, packed as rows (g1, b1, g2, b2)
    aff = jnp.stack([params["gamma1"][y], params["beta1"][y],
                     params["gamma2"][y], params["beta2"][y]],
                    axis=1).astype(jnp.float32)                  # (B, 4, C)

    # VMEM budget: double-buffered x/out blocks + (double-buffered) weights
    # and affine + the three scratch buffers, with ~50% headroom.
    isz = x.dtype.itemsize
    need = (2 * 2 * H * W * C * isz            # x + out blocks, 2-deep pipeline
            + 2 * 2 * 9 * CK * C * 2           # w1 + w2 (bf16), double-buffered
            + 2 * 4 * C * 4                    # packed affine
            + (H + 2) * (W + 2) * C * 2        # xp_scr (bf16)
            + BH * W * 9 * CK * 2              # patch_scr (bf16)
            + H * W * C * 4)                   # conv_scr (f32)
    vmem_limit = int(min(100 * 2**20, max(32 * 2**20, need * 1.5)))

    kernel = functools.partial(resnet_block_kernel, band_h=BH)

    return pl.pallas_call(
        kernel,
        out_shape=jax.ShapeDtypeStruct((B, H, W, C), x.dtype),
        grid_spec=pltpu.PrefetchScalarGridSpec(
            num_scalar_prefetch=0,
            grid=(B,),
            in_specs=[
                pl.BlockSpec((1, H, W, C), lambda b: (b, 0, 0, 0)),
                # Grid-invariant weights: constant block index, so the
                # pipeline elides the repeated DMA after step 0.
                pl.BlockSpec((9 * CK, C),  lambda b: (0, 0)),
                pl.BlockSpec((9 * CK, C),  lambda b: (0, 0)),
                pl.BlockSpec((1, 4, C),    lambda b: (b, 0, 0)),
            ],
            out_specs=pl.BlockSpec((1, H, W, C), lambda b: (b, 0, 0, 0)),
            scratch_shapes=[
                pltpu.VMEM((H + 2, W + 2, C), jnp.bfloat16),   # padded activation
                pltpu.VMEM((BH * W, 9 * CK), jnp.bfloat16),    # im2col band tile
                pltpu.VMEM((H * W, C), jnp.float32),           # conv output
            ],
        ),
        compiler_params=pltpu.CompilerParams(
            dimension_semantics=("parallel",),
            vmem_limit_bytes=vmem_limit,
        ),
    )(x, w1, w2, aff)


def ref_forward(x, y, params):
    """Pure-JAX reference (same math; bf16 conv inputs, f32 accumulation)."""
    def conv(h, w):
        hp = jnp.pad(h, ((0, 0), (1, 1), (1, 1), (0, 0)), mode="reflect")
        return jax.lax.conv_general_dilated(
            hp.astype(jnp.bfloat16), w.astype(jnp.bfloat16), (1, 1), "VALID",
            dimension_numbers=("NHWC", "HWIO", "NHWC"),
            preferred_element_type=jnp.float32)

    def cin(h, g, b):
        mean = h.mean(axis=(1, 2), keepdims=True)
        var = ((h - mean) ** 2).mean(axis=(1, 2), keepdims=True)
        hn = (h - mean) * jax.lax.rsqrt(var + EPS)
        return hn * g[:, None, None, :] + b[:, None, None, :]

    h = conv(x, params["w1"])
    h = cin(h, params["gamma1"][y], params["beta1"][y])
    h = jnp.maximum(h, 0.0)
    h = conv(h, params["w2"])
    h = cin(h, params["gamma2"][y], params["beta2"][y])
    return x + h


if __name__ == "__main__":
    B, H, W, C = 2, 16, 16, 4          # conv_dim = 4
    NUM_CLASSES = 10

    key = jax.random.PRNGKey(0)
    k = jax.random.split(key, 8)
    fan_in = 9 * C
    params = {
        # conv weights, HWIO, no bias (use_bias=False)
        "w1": jax.random.normal(k[0], (3, 3, C, C), jnp.float32) / jnp.sqrt(fan_in),
        "w2": jax.random.normal(k[1], (3, 3, C, C), jnp.float32) / jnp.sqrt(fan_in),
        # class-conditional instance-norm embeddings (num_classes, C)
        "gamma1": 1.0 + 0.1 * jax.random.normal(k[2], (NUM_CLASSES, C), jnp.float32),
        "beta1":  0.1 * jax.random.normal(k[3], (NUM_CLASSES, C), jnp.float32),
        "gamma2": 1.0 + 0.1 * jax.random.normal(k[4], (NUM_CLASSES, C), jnp.float32),
        "beta2":  0.1 * jax.random.normal(k[5], (NUM_CLASSES, C), jnp.float32),
    }

    x = jax.random.normal(k[6], (B, H, W, C), jnp.float32)
    y = jax.random.randint(k[7], (B,), 0, NUM_CLASSES)

    out = jax.block_until_ready(resnet_block(x, y, params))
    ref = jax.block_until_ready(ref_forward(x, y, params))

    assert out.shape == (B, H, W, C)
    # bf16 conv inputs in both kernel and reference; residual/norm stay f32.
    assert jnp.allclose(out, ref, atol=1e-2, rtol=1e-2), (
        f"max abs err {jnp.max(jnp.abs(out - ref))}")
    print("KERNEL_OK")
</pallas_src>

<mosaic_0001>
module attributes {stable_mosaic.version = 11 : i64} {
  func.func @resnet_block_kernel(%arg0: i32, %arg1: memref<1x16x16x4xf32, #tpu.memory_space<vmem>>, %arg2: memref<1152x4xbf16, #tpu.memory_space<vmem>>, %arg3: memref<1152x4xbf16, #tpu.memory_space<vmem>>, %arg4: memref<1x4x4xf32, #tpu.memory_space<vmem>>, %arg5: memref<1x16x16x4xf32, #tpu.memory_space<vmem>>, %arg6: memref<18x18x4xbf16, #tpu.memory_space<vmem>>, %arg7: memref<256x1152xbf16, #tpu.memory_space<vmem>>, %arg8: memref<256x4xf32, #tpu.memory_space<vmem>>) attributes {dimension_semantics = [#tpu.dimension_semantics<parallel>], iteration_bounds = array<i64: 2>, scalar_prefetch = 0 : i64, scratch_operands = 3 : i64, tpu.core_type = #tpu.core_type<tc>, window_params = [{transform_indices = @transform_0, window_bounds = array<i64: 1, 16, 16, 4>}, {pipeline_mode = #tpu.pipeline_mode<synchronous>, transform_indices = @transform_1, window_bounds = array<i64: 1152, 4>}, {pipeline_mode = #tpu.pipeline_mode<synchronous>, transform_indices = @transform_2, window_bounds = array<i64: 1152, 4>}, {transform_indices = @transform_3, window_bounds = array<i64: 1, 4, 4>}, {transform_indices = @transform_4, window_bounds = array<i64: 1, 16, 16, 4>}]} {
    %cst = arith.constant 0.000000e+00 : bf16
    %0 = vector.broadcast %cst : bf16 to vector<256x124xbf16>
    %c0 = arith.constant 0 : index
    %c4 = arith.constant 4 : index
    %1 = vector.load %arg7[%c0, %c4] : memref<256x1152xbf16, #tpu.memory_space<vmem>>, vector<256x124xbf16>
    tpu.vector_store %arg7[%c0, %c4], %0 {strides = array<i32>} : memref<256x1152xbf16, #tpu.memory_space<vmem>>, vector<256x124xbf16>,
    %c0_0 = arith.constant 0 : index
    %c132 = arith.constant 132 : index
    %2 = vector.load %arg7[%c0_0, %c132] : memref<256x1152xbf16, #tpu.memory_space<vmem>>, vector<256x124xbf16>
    tpu.vector_store %arg7[%c0_0, %c132], %0 {strides = array<i32>} : memref<256x1152xbf16, #tpu.memory_space<vmem>>, vector<256x124xbf16>,
    %c0_1 = arith.constant 0 : index
    %c260 = arith.constant 260 : index
    %3 = vector.load %arg7[%c0_1, %c260] : memref<256x1152xbf16, #tpu.memory_space<vmem>>, vector<256x124xbf16>
    tpu.vector_store %arg7[%c0_1, %c260], %0 {strides = array<i32>} : memref<256x1152xbf16, #tpu.memory_space<vmem>>, vector<256x124xbf16>,
    %c0_2 = arith.constant 0 : index
    %c388 = arith.constant 388 : index
    %4 = vector.load %arg7[%c0_2, %c388] : memref<256x1152xbf16, #tpu.memory_space<vmem>>, vector<256x124xbf16>
    tpu.vector_store %arg7[%c0_2, %c388], %0 {strides = array<i32>} : memref<256x1152xbf16, #tpu.memory_space<vmem>>, vector<256x124xbf16>,
    %c0_3 = arith.constant 0 : index
    %c516 = arith.constant 516 : index
    %5 = vector.load %arg7[%c0_3, %c516] : memref<256x1152xbf16, #tpu.memory_space<vmem>>, vector<256x124xbf16>
    tpu.vector_store %arg7[%c0_3, %c516], %0 {strides = array<i32>} : memref<256x1152xbf16, #tpu.memory_space<vmem>>, vector<256x124xbf16>,
    %c0_4 = arith.constant 0 : index
    %c644 = arith.constant 644 : index
    %6 = vector.load %arg7[%c0_4, %c644] : memref<256x1152xbf16, #tpu.memory_space<vmem>>, vector<256x124xbf16>
    tpu.vector_store %arg7[%c0_4, %c644], %0 {strides = array<i32>} : memref<256x1152xbf16, #tpu.memory_space<vmem>>, vector<256x124xbf16>,
    %c0_5 = arith.constant 0 : index
    %c772 = arith.constant 772 : index
    %7 = vector.load %arg7[%c0_5, %c772] : memref<256x1152xbf16, #tpu.memory_space<vmem>>, vector<256x124xbf16>
    tpu.vector_store %arg7[%c0_5, %c772], %0 {strides = array<i32>} : memref<256x1152xbf16, #tpu.memory_space<vmem>>, vector<256x124xbf16>,
    %c0_6 = arith.constant 0 : index
    %c900 = arith.constant 900 : index
    %8 = vector.load %arg7[%c0_6, %c900] : memref<256x1152xbf16, #tpu.memory_space<vmem>>, vector<256x124xbf16>
    tpu.vector_store %arg7[%c0_6, %c900], %0 {strides = array<i32>} : memref<256x1152xbf16, #tpu.memory_space<vmem>>, vector<256x124xbf16>,
    %c0_7 = arith.constant 0 : index
    %c1028 = arith.constant 1028 : index
    %9 = vector.load %arg7[%c0_7, %c1028] : memref<256x1152xbf16, #tpu.memory_space<vmem>>, vector<256x124xbf16>
    tpu.vector_store %arg7[%c0_7, %c1028], %0 {strides = array<i32>} : memref<256x1152xbf16, #tpu.memory_space<vmem>>, vector<256x124xbf16>,
    %c0_8 = arith.constant 0 : index
    %c0_9 = arith.constant 0 : index
    %c0_10 = arith.constant 0 : index
    %10 = vector.load %arg4[%c0_8, %c0_9, %c0_10] : memref<1x4x4xf32, #tpu.memory_space<vmem>>, vector<1x4x4xf32>
    %11 = vector.shape_cast %10 : vector<1x4x4xf32> to vector<4x4xf32>
    %12 = vector.extract_strided_slice %11 {offsets = [0, 0], sizes = [1, 4], strides = [1, 1]} : vector<4x4xf32> to vector<1x4xf32>
    %13 = vector.extract_strided_slice %11 {offsets = [1, 0], sizes = [1, 4], strides = [1, 1]} : vector<4x4xf32> to vector<1x4xf32>
    %14 = vector.extract_strided_slice %11 {offsets = [2, 0], sizes = [1, 4], strides = [1, 1]} : vector<4x4xf32> to vector<1x4xf32>
    %15 = vector.extract_strided_slice %11 {offsets = [3, 0], sizes = [1, 4], strides = [1, 1]} : vector<4x4xf32> to vector<1x4xf32>
    %c0_11 = arith.constant 0 : index
    %c0_12 = arith.constant 0 : index
    %c0_13 = arith.constant 0 : index
    %c0_14 = arith.constant 0 : index
    %16 = vector.load %arg1[%c0_11, %c0_12, %c0_13, %c0_14] : memref<1x16x16x4xf32, #tpu.memory_space<vmem>>, vector<1x16x16x4xf32>
    %17 = vector.shape_cast %16 : vector<1x16x16x4xf32> to vector<16x16x4xf32>
    %18 = arith.truncf %17 : vector<16x16x4xf32> to vector<16x16x4xbf16>
    %c1 = arith.constant 1 : index
    %c1_15 = arith.constant 1 : index
    %c0_16 = arith.constant 0 : index
    %19 = vector.load %arg6[%c1, %c1_15, %c0_16] : memref<18x18x4xbf16, #tpu.memory_space<vmem>>, vector<16x16x4xbf16>
    tpu.vector_store %arg6[%c1, %c1_15, %c0_16], %18 {strides = array<i32>} : memref<18x18x4xbf16, #tpu.memory_space<vmem>>, vector<16x16x4xbf16>,
    %c2 = arith.constant 2 : index
    %c1_17 = arith.constant 1 : index
    %c0_18 = arith.constant 0 : index
    %20 = vector.load %arg6[%c2, %c1_17, %c0_18] : memref<18x18x4xbf16, #tpu.memory_space<vmem>>, vector<1x16x4xbf16>
    %c0_19 = arith.constant 0 : index
    %c1_20 = arith.constant 1 : index
    %c0_21 = arith.constant 0 : index
    %21 = vector.load %arg6[%c0_19, %c1_20, %c0_21] : memref<18x18x4xbf16, #tpu.memory_space<vmem>>, vector<1x16x4xbf16>
    tpu.vector_store %arg6[%c0_19, %c1_20, %c0_21], %20 {strides = array<i32>} : memref<18x18x4xbf16, #tpu.memory_space<vmem>>, vector<1x16x4xbf16>,
    %c15 = arith.constant 15 : index
    %c1_22 = arith.constant 1 : index
    %c0_23 = arith.constant 0 : index
    %22 = vector.load %arg6[%c15, %c1_22, %c0_23] : memref<18x18x4xbf16, #tpu.memory_space<vmem>>, vector<1x16x4xbf16>
    %c17 = arith.constant 17 : index
    %c1_24 = arith.constant 1 : index
    %c0_25 = arith.constant 0 : index
    %23 = vector.load %arg6[%c17, %c1_24, %c0_25] : memref<18x18x4xbf16, #tpu.memory_space<vmem>>, vector<1x16x4xbf16>
    tpu.vector_store %arg6[%c17, %c1_24, %c0_25], %22 {strides = array<i32>} : memref<18x18x4xbf16, #tpu.memory_space<vmem>>, vector<1x16x4xbf16>,
    %c0_26 = arith.constant 0 : index
    %c2_27 = arith.constant 2 : index
    %c0_28 = arith.constant 0 : index
    %24 = vector.load %arg6[%c0_26, %c2_27, %c0_28] : memref<18x18x4xbf16, #tpu.memory_space<vmem>>, vector<18x1x4xbf16>
    %c0_29 = arith.constant 0 : index
    %c0_30 = arith.constant 0 : index
    %c0_31 = arith.constant 0 : index
    %25 = vector.load %arg6[%c0_29, %c0_30, %c0_31] : memref<18x18x4xbf16, #tpu.memory_space<vmem>>, vector<18x1x4xbf16>
    tpu.vector_store %arg6[%c0_29, %c0_30, %c0_31], %24 {strides = array<i32>} : memref<18x18x4xbf16, #tpu.memory_space<vmem>>, vector<18x1x4xbf16>,
    %c0_32 = arith.constant 0 : index
    %c15_33 = arith.constant 15 : index
    %c0_34 = arith.constant 0 : index
    %26 = vector.load %arg6[%c0_32, %c15_33, %c0_34] : memref<18x18x4xbf16, #tpu.memory_space<vmem>>, vector<18x1x4xbf16>
    %c0_35 = arith.constant 0 : index
    %c17_36 = arith.constant 17 : index
    %c0_37 = arith.constant 0 : index
    %27 = vector.load %arg6[%c0_35, %c17_36, %c0_37] : memref<18x18x4xbf16, #tpu.memory_space<vmem>>, vector<18x1x4xbf16>
    tpu.vector_store %arg6[%c0_35, %c17_36, %c0_37], %26 {strides = array<i32>} : memref<18x18x4xbf16, #tpu.memory_space<vmem>>, vector<18x1x4xbf16>,
    %cst_38 = arith.constant 0.000000e+00 : f32
    %28 = vector.broadcast %cst_38 : f32 to vector<1x4xf32>
    %cst_39 = arith.constant 0.000000e+00 : f32
    %29 = vector.broadcast %cst_39 : f32 to vector<1x4xf32>
    %c0_40 = arith.constant 0 : index
    %c0_41 = arith.constant 0 : index
    %c0_42 = arith.constant 0 : index
    %30 = vector.load %arg6[%c0_40, %c0_41, %c0_42] : memref<18x18x4xbf16, #tpu.memory_space<vmem>>, vector<16x16x4xbf16>
    %31 = vector.shape_cast %30 : vector<16x16x4xbf16> to vector<256x4xbf16>
    %c0_43 = arith.constant 0 : index
    %c0_44 = arith.constant 0 : index
    %32 = vector.load %arg7[%c0_43, %c0_44] : memref<256x1152xbf16, #tpu.memory_space<vmem>>, vector<256x4xbf16>
    tpu.vector_store %arg7[%c0_43, %c0_44], %31 {strides = array<i32>} : memref<256x1152xbf16, #tpu.memory_space<vmem>>, vector<256x4xbf16>,
    %c0_45 = arith.constant 0 : index
    %c1_46 = arith.constant 1 : index
    %c0_47 = arith.constant 0 : index
    %33 = vector.load %arg6[%c0_45, %c1_46, %c0_47] : memref<18x18x4xbf16, #tpu.memory_space<vmem>>, vector<16x16x4xbf16>
    %34 = vector.shape_cast %33 : vector<16x16x4xbf16> to vector<256x4xbf16>
    %c0_48 = arith.constant 0 : index
    %c128 = arith.constant 128 : index
    %35 = vector.load %arg7[%c0_48, %c128] : memref<256x1152xbf16, #tpu.memory_space<vmem>>, vector<256x4xbf16>
    tpu.vector_store %arg7[%c0_48, %c128], %34 {strides = array<i32>} : memref<256x1152xbf16, #tpu.memory_space<vmem>>, vector<256x4xbf16>,
    %c0_49 = arith.constant 0 : index
    %c2_50 = arith.constant 2 : index
    %c0_51 = arith.constant 0 : index
    %36 = vector.load %arg6[%c0_49, %c2_50, %c0_51] : memref<18x18x4xbf16, #tpu.memory_space<vmem>>, vector<16x16x4xbf16>
    %37 = vector.shape_cast %36 : vector<16x16x4xbf16> to vector<256x4xbf16>
    %c0_52 = arith.constant 0 : index
    %c256 = arith.constant 256 : index
    %38 = vector.load %arg7[%c0_52, %c256] : memref<256x1152xbf16, #tpu.memory_space<vmem>>, vector<256x4xbf16>
    tpu.vector_store %arg7[%c0_52, %c256], %37 {strides = array<i32>} : memref<256x1152xbf16, #tpu.memory_space<vmem>>, vector<256x4xbf16>,
    %c1_53 = arith.constant 1 : index
    %c0_54 = arith.constant 0 : index
    %c0_55 = arith.constant 0 : index
    %39 = vector.load %arg6[%c1_53, %c0_54, %c0_55] : memref<18x18x4xbf16, #tpu.memory_space<vmem>>, vector<16x16x4xbf16>
    %40 = vector.shape_cast %39 : vector<16x16x4xbf16> to vector<256x4xbf16>
    %c0_56 = arith.constant 0 : index
    %c384 = arith.constant 384 : index
    %41 = vector.load %arg7[%c0_56, %c384] : memref<256x1152xbf16, #tpu.memory_space<vmem>>, vector<256x4xbf16>
    tpu.vector_store %arg7[%c0_56, %c384], %40 {strides = array<i32>} : memref<256x1152xbf16, #tpu.memory_space<vmem>>, vector<256x4xbf16>,
    %c1_57 = arith.constant 1 : index
    %c1_58 = arith.constant 1 : index
    %c0_59 = arith.constant 0 : index
    %42 = vector.load %arg6[%c1_57, %c1_58, %c0_59] : memref<18x18x4xbf16, #tpu.memory_space<vmem>>, vector<16x16x4xbf16>
    %43 = vector.shape_cast %42 : vector<16x16x4xbf16> to vector<256x4xbf16>
    %c0_60 = arith.constant 0 : index
    %c512 = arith.constant 512 : index
    %44 = vector.load %arg7[%c0_60, %c512] : memref<256x1152xbf16, #tpu.memory_space<vmem>>, vector<256x4xbf16>
    tpu.vector_store %arg7[%c0_60, %c512], %43 {strides = array<i32>} : memref<256x1152xbf16, #tpu.memory_space<vmem>>, vector<256x4xbf16>,
    %c1_61 = arith.constant 1 : index
    %c2_62 = arith.constant 2 : index
    %c0_63 = arith.constant 0 : index
    %45 = vector.load %arg6[%c1_61, %c2_62, %c0_63] : memref<18x18x4xbf16, #tpu.memory_space<vmem>>, vector<16x16x4xbf16>
    %46 = vector.shape_cast %45 : vector<16x16x4xbf16> to vector<256x4xbf16>
    %c0_64 = arith.constant 0 : index
    %c640 = arith.constant 640 : index
    %47 = vector.load %arg7[%c0_64, %c640] : memref<256x1152xbf16, #tpu.memory_space<vmem>>, vector<256x4xbf16>
    tpu.vector_store %arg7[%c0_64, %c640], %46 {strides = array<i32>} : memref<256x1152xbf16, #tpu.memory_space<vmem>>, vector<256x4xbf16>,
    %c2_65 = arith.constant 2 : index
    %c0_66 = arith.constant 0 : index
    %c0_67 = arith.constant 0 : index
    %48 = vector.load %arg6[%c2_65, %c0_66, %c0_67] : memref<18x18x4xbf16, #tpu.memory_space<vmem>>, vector<16x16x4xbf16>
    %49 = vector.shape_cast %48 : vector<16x16x4xbf16> to vector<256x4xbf16>
    %c0_68 = arith.constant 0 : index
    %c768 = arith.constant 768 : index
    %50 = vector.load %arg7[%c0_68, %c768] : memref<256x1152xbf16, #tpu.memory_space<vmem>>, vector<256x4xbf16>
    tpu.vector_store %arg7[%c0_68, %c768], %49 {strides = array<i32>} : memref<256x1152xbf16, #tpu.memory_space<vmem>>, vector<256x4xbf16>,
    %c2_69 = arith.constant 2 : index
    %c1_70 = arith.constant 1 : index
    %c0_71 = arith.constant 0 : index
    %51 = vector.load %arg6[%c2_69, %c1_70, %c0_71] : memref<18x18x4xbf16, #tpu.memory_space<vmem>>, vector<16x16x4xbf16>
    %52 = vector.shape_cast %51 : vector<16x16x4xbf16> to vector<256x4xbf16>
    %c0_72 = arith.constant 0 : index
    %c896 = arith.constant 896 : index
    %53 = vector.load %arg7[%c0_72, %c896] : memref<256x1152xbf16, #tpu.memory_space<vmem>>, vector<256x4xbf16>
    tpu.vector_store %arg7[%c0_72, %c896], %52 {strides = array<i32>} : memref<256x1152xbf16, #tpu.memory_space<vmem>>, vector<256x4xbf16>,
    %c2_73 = arith.constant 2 : index
    %c2_74 = arith.constant 2 : index
    %c0_75 = arith.constant 0 : index
    %54 = vector.load %arg6[%c2_73, %c2_74, %c0_75] : memref<18x18x4xbf16, #tpu.memory_space<vmem>>, vector<16x16x4xbf16>
    %55 = vector.shape_cast %54 : vector<16x16x4xbf16> to vector<256x4xbf16>
    %c0_76 = arith.constant 0 : index
    %c1024 = arith.constant 1024 : index
    %56 = vector.load %arg7[%c0_76, %c1024] : memref<256x1152xbf16, #tpu.memory_space<vmem>>, vector<256x4xbf16>
    tpu.vector_store %arg7[%c0_76, %c1024], %55 {strides = array<i32>} : memref<256x1152xbf16, #tpu.memory_space<vmem>>, vector<256x4xbf16>,
    %c0_77 = arith.constant 0 : index
    %c0_78 = arith.constant 0 : index
    %57 = vector.load %arg7[%c0_77, %c0_78] : memref<256x1152xbf16, #tpu.memory_space<vmem>>, vector<256x1152xbf16>
    %c0_79 = arith.constant 0 : index
    %c0_80 = arith.constant 0 : index
    %58 = vector.load %arg2[%c0_79, %c0_80] : memref<1152x4xbf16, #tpu.memory_space<vmem>>, vector<1152x4xbf16>
    %cst_81 = arith.constant dense<0.000000e+00> : vector<256x4xf32>
    %59 = tpu.matmul %57, %58, %cst_81 {dimension_numbers = #tpu.dot_dimension_numbers<[1], [0], [0], [1], [0, 0, 1, 1], [], []>} : vector<256x1152xbf16>, vector<1152x4xbf16>, vector<256x4xf32> -> vector<256x4xf32>
    %c0_82 = arith.constant 0 : index
    %c0_83 = arith.constant 0 : index
    %60 = vector.load %arg8[%c0_82, %c0_83] : memref<256x4xf32, #tpu.memory_space<vmem>>, vector<256x4xf32>
    tpu.vector_store %arg8[%c0_82, %c0_83], %59 {strides = array<i32>} : memref<256x4xf32, #tpu.memory_space<vmem>>, vector<256x4xf32>,
    %cst_84 = arith.constant dense<0.000000e+00> : vector<4xf32>
    %61 = vector.multi_reduction <add>, %59, %cst_84 [0] : vector<256x4xf32> to vector<4xf32>
    %62 = vector.shape_cast %61 : vector<4xf32> to vector<1x4xf32>
    %63 = arith.addf %28, %62 : vector<1x4xf32>
    %64 = arith.mulf %59, %59 : vector<256x4xf32>
    %cst_85 = arith.constant dense<0.000000e+00> : vector<4xf32>
    %65 = vector.multi_reduction <add>, %64, %cst_85 [0] : vector<256x4xf32> to vector<4xf32>
    %66 = vector.shape_cast %65 : vector<4xf32> to vector<1x4xf32>
    %67 = arith.addf %29, %66 : vector<1x4xf32>
    %cst_86 = arith.constant 3.906250e-03 : f32
    %68 = vector.broadcast %cst_86 : f32 to vector<1x4xf32>
    %69 = arith.mulf %63, %68 : vector<1x4xf32>
    %cst_87 = arith.constant 3.906250e-03 : f32
    %70 = vector.broadcast %cst_87 : f32 to vector<1x4xf32>
    %71 = arith.mulf %67, %70 : vector<1x4xf32>
    %72 = arith.mulf %69, %69 : vector<1x4xf32>
    %73 = arith.subf %71, %72 : vector<1x4xf32>
    %cst_88 = arith.constant 0.000000e+00 : f32
    %74 = vector.broadcast %cst_88 : f32 to vector<1x4xf32>
    %75 = arith.maximumf %73, %74 : vector<1x4xf32>
    %cst_89 = arith.constant 9.99999974E-6 : f32
    %76 = vector.broadcast %cst_89 : f32 to vector<1x4xf32>
    %77 = arith.addf %75, %76 : vector<1x4xf32>
    %78 = math.rsqrt %77 : vector<1x4xf32>
    %79 = arith.mulf %78, %12 : vector<1x4xf32>
    %80 = arith.mulf %69, %79 : vector<1x4xf32>
    %81 = arith.subf %13, %80 : vector<1x4xf32>
    %c0_90 = arith.constant 0 : index
    %c0_91 = arith.constant 0 : index
    %82 = vector.load %arg8[%c0_90, %c0_91] : memref<256x4xf32, #tpu.memory_space<vmem>>, vector<256x4xf32>
    %83 = vector.broadcast %79 : vector<1x4xf32> to vector<256x4xf32>
    %84 = arith.mulf %82, %83 : vector<256x4xf32>
    %85 = vector.broadcast %81 : vector<1x4xf32> to vector<256x4xf32>
    %86 = arith.addf %84, %85 : vector<256x4xf32>
    %cst_92 = arith.constant 0.000000e+00 : f32
    %87 = vector.broadcast %cst_92 : f32 to vector<256x4xf32>
    %88 = arith.maximumf %86, %87 : vector<256x4xf32>
    %89 = vector.shape_cast %88 : vector<256x4xf32> to vector<16x16x4xf32>
    %90 = arith.truncf %89 : vector<16x16x4xf32> to vector<16x16x4xbf16>
    %c1_93 = arith.constant 1 : index
    %c1_94 = arith.constant 1 : index
    %c0_95 = arith.constant 0 : index
    %91 = vector.load %arg6[%c1_93, %c1_94, %c0_95] : memref<18x18x4xbf16, #tpu.memory_space<vmem>>, vector<16x16x4xbf16>
    tpu.vector_store %arg6[%c1_93, %c1_94, %c0_95], %90 {strides = array<i32>} : memref<18x18x4xbf16, #tpu.memory_space<vmem>>, vector<16x16x4xbf16>,
    %c2_96 = arith.constant 2 : index
    %c1_97 = arith.constant 1 : index
    %c0_98 = arith.constant 0 : index
    %92 = vector.load %arg6[%c2_96, %c1_97, %c0_98] : memref<18x18x4xbf16, #tpu.memory_space<vmem>>, vector<1x16x4xbf16>
    %c0_99 = arith.constant 0 : index
    %c1_100 = arith.constant 1 : index
    %c0_101 = arith.constant 0 : index
    %93 = vector.load %arg6[%c0_99, %c1_100, %c0_101] : memref<18x18x4xbf16, #tpu.memory_space<vmem>>, vector<1x16x4xbf16>
    tpu.vector_store %arg6[%c0_99, %c1_100, %c0_101], %92 {strides = array<i32>} : memref<18x18x4xbf16, #tpu.memory_space<vmem>>, vector<1x16x4xbf16>,
    %c15_102 = arith.constant 15 : index
    %c1_103 = arith.constant 1 : index
    %c0_104 = arith.constant 0 : index
    %94 = vector.load %arg6[%c15_102, %c1_103, %c0_104] : memref<18x18x4xbf16, #tpu.memory_space<vmem>>, vector<1x16x4xbf16>
    %c17_105 = arith.constant 17 : index
    %c1_106 = arith.constant 1 : index
    %c0_107 = arith.constant 0 : index
    %95 = vector.load %arg6[%c17_105, %c1_106, %c0_107] : memref<18x18x4xbf16, #tpu.memory_space<vmem>>, vector<1x16x4xbf16>
    tpu.vector_store %arg6[%c17_105, %c1_106, %c0_107], %94 {strides = array<i32>} : memref<18x18x4xbf16, #tpu.memory_space<vmem>>, vector<1x16x4xbf16>,
    %c0_108 = arith.constant 0 : index
    %c2_109 = arith.constant 2 : index
    %c0_110 = arith.constant 0 : index
    %96 = vector.load %arg6[%c0_108, %c2_109, %c0_110] : memref<18x18x4xbf16, #tpu.memory_space<vmem>>, vector<18x1x4xbf16>
    %c0_111 = arith.constant 0 : index
    %c0_112 = arith.constant 0 : index
    %c0_113 = arith.constant 0 : index
    %97 = vector.load %arg6[%c0_111, %c0_112, %c0_113] : memref<18x18x4xbf16, #tpu.memory_space<vmem>>, vector<18x1x4xbf16>
    tpu.vector_store %arg6[%c0_111, %c0_112, %c0_113], %96 {strides = array<i32>} : memref<18x18x4xbf16, #tpu.memory_space<vmem>>, vector<18x1x4xbf16>,
    %c0_114 = arith.constant 0 : index
    %c15_115 = arith.constant 15 : index
    %c0_116 = arith.constant 0 : index
    %98 = vector.load %arg6[%c0_114, %c15_115, %c0_116] : memref<18x18x4xbf16, #tpu.memory_space<vmem>>, vector<18x1x4xbf16>
    %c0_117 = arith.constant 0 : index
    %c17_118 = arith.constant 17 : index
    %c0_119 = arith.constant 0 : index
    %99 = vector.load %arg6[%c0_117, %c17_118, %c0_119] : memref<18x18x4xbf16, #tpu.memory_space<vmem>>, vector<18x1x4xbf16>
    tpu.vector_store %arg6[%c0_117, %c17_118, %c0_119], %98 {strides = array<i32>} : memref<18x18x4xbf16, #tpu.memory_space<vmem>>, vector<18x1x4xbf16>,
    %cst_120 = arith.constant 0.000000e+00 : f32
    %100 = vector.broadcast %cst_120 : f32 to vector<1x4xf32>
    %cst_121 = arith.constant 0.000000e+00 : f32
    %101 = vector.broadcast %cst_121 : f32 to vector<1x4xf32>
    %c0_122 = arith.constant 0 : index
    %c0_123 = arith.constant 0 : index
    %c0_124 = arith.constant 0 : index
    %102 = vector.load %arg6[%c0_122, %c0_123, %c0_124] : memref<18x18x4xbf16, #tpu.memory_space<vmem>>, vector<16x16x4xbf16>
    %103 = vector.shape_cast %102 : vector<16x16x4xbf16> to vector<256x4xbf16>
    %c0_125 = arith.constant 0 : index
    %c0_126 = arith.constant 0 : index
    %104 = vector.load %arg7[%c0_125, %c0_126] : memref<256x1152xbf16, #tpu.memory_space<vmem>>, vector<256x4xbf16>
    tpu.vector_store %arg7[%c0_125, %c0_126], %103 {strides = array<i32>} : memref<256x1152xbf16, #tpu.memory_space<vmem>>, vector<256x4xbf16>,
    %c0_127 = arith.constant 0 : index
    %c1_128 = arith.constant 1 : index
    %c0_129 = arith.constant 0 : index
    %105 = vector.load %arg6[%c0_127, %c1_128, %c0_129] : memref<18x18x4xbf16, #tpu.memory_space<vmem>>, vector<16x16x4xbf16>
    %106 = vector.shape_cast %105 : vector<16x16x4xbf16> to vector<256x4xbf16>
    %c0_130 = arith.constant 0 : index
    %c128_131 = arith.constant 128 : index
    %107 = vector.load %arg7[%c0_130, %c128_131] : memref<256x1152xbf16, #tpu.memory_space<vmem>>, vector<256x4xbf16>
    tpu.vector_store %arg7[%c0_130, %c128_131], %106 {strides = array<i32>} : memref<256x1152xbf16, #tpu.memory_space<vmem>>, vector<256x4xbf16>,
    %c0_132 = arith.constant 0 : index
    %c2_133 = arith.constant 2 : index
    %c0_134 = arith.constant 0 : index
    %108 = vector.load %arg6[%c0_132, %c2_133, %c0_134] : memref<18x18x4xbf16, #tpu.memory_space<vmem>>, vector<16x16x4xbf16>
    %109 = vector.shape_cast %108 : vector<16x16x4xbf16> to vector<256x4xbf16>
    %c0_135 = arith.constant 0 : index
    %c256_136 = arith.constant 256 : index
    %110 = vector.load %arg7[%c0_135, %c256_136] : memref<256x1152xbf16, #tpu.memory_space<vmem>>, vector<256x4xbf16>
    tpu.vector_store %arg7[%c0_135, %c256_136], %109 {strides = array<i32>} : memref<256x1152xbf16, #tpu.memory_space<vmem>>, vector<256x4xbf16>,
    %c1_137 = arith.constant 1 : index
    %c0_138 = arith.constant 0 : index
    %c0_139 = arith.constant 0 : index
    %111 = vector.load %arg6[%c1_137, %c0_138, %c0_139] : memref<18x18x4xbf16, #tpu.memory_space<vmem>>, vector<16x16x4xbf16>
    %112 = vector.shape_cast %111 : vector<16x16x4xbf16> to vector<256x4xbf16>
    %c0_140 = arith.constant 0 : index
    %c384_141 = arith.constant 384 : index
    %113 = vector.load %arg7[%c0_140, %c384_141] : memref<256x1152xbf16, #tpu.memory_space<vmem>>, vector<256x4xbf16>
    tpu.vector_store %arg7[%c0_140, %c384_141], %112 {strides = array<i32>} : memref<256x1152xbf16, #tpu.memory_space<vmem>>, vector<256x4xbf16>,
    %c1_142 = arith.constant 1 : index
    %c1_143 = arith.constant 1 : index
    %c0_144 = arith.constant 0 : index
    %114 = vector.load %arg6[%c1_142, %c1_143, %c0_144] : memref<18x18x4xbf16, #tpu.memory_space<vmem>>, vector<16x16x4xbf16>
    %115 = vector.shape_cast %114 : vector<16x16x4xbf16> to vector<256x4xbf16>
    %c0_145 = arith.constant 0 : index
    %c512_146 = arith.constant 512 : index
    %116 = vector.load %arg7[%c0_145, %c512_146] : memref<256x1152xbf16, #tpu.memory_space<vmem>>, vector<256x4xbf16>
    tpu.vector_store %arg7[%c0_145, %c512_146], %115 {strides = array<i32>} : memref<256x1152xbf16, #tpu.memory_space<vmem>>, vector<256x4xbf16>,
    %c1_147 = arith.constant 1 : index
    %c2_148 = arith.constant 2 : index
    %c0_149 = arith.constant 0 : index
    %117 = vector.load %arg6[%c1_147, %c2_148, %c0_149] : memref<18x18x4xbf16, #tpu.memory_space<vmem>>, vector<16x16x4xbf16>
    %118 = vector.shape_cast %117 : vector<16x16x4xbf16> to vector<256x4xbf16>
    %c0_150 = arith.constant 0 : index
    %c640_151 = arith.constant 640 : index
    %119 = vector.load %arg7[%c0_150, %c640_151] : memref<256x1152xbf16, #tpu.memory_space<vmem>>, vector<256x4xbf16>
    tpu.vector_store %arg7[%c0_150, %c640_151], %118 {strides = array<i32>} : memref<256x1152xbf16, #tpu.memory_space<vmem>>, vector<256x4xbf16>,
    %c2_152 = arith.constant 2 : index
    %c0_153 = arith.constant 0 : index
    %c0_154 = arith.constant 0 : index
    %120 = vector.load %arg6[%c2_152, %c0_153, %c0_154] : memref<18x18x4xbf16, #tpu.memory_space<vmem>>, vector<16x16x4xbf16>
    %121 = vector.shape_cast %120 : vector<16x16x4xbf16> to vector<256x4xbf16>
    %c0_155 = arith.constant 0 : index
    %c768_156 = arith.constant 768 : index
    %122 = vector.load %arg7[%c0_155, %c768_156] : memref<256x1152xbf16, #tpu.memory_space<vmem>>, vector<256x4xbf16>
    tpu.vector_store %arg7[%c0_155, %c768_156], %121 {strides = array<i32>} : memref<256x1152xbf16, #tpu.memory_space<vmem>>, vector<256x4xbf16>,
    %c2_157 = arith.constant 2 : index
    %c1_158 = arith.constant 1 : index
    %c0_159 = arith.constant 0 : index
    %123 = vector.load %arg6[%c2_157, %c1_158, %c0_159] : memref<18x18x4xbf16, #tpu.memory_space<vmem>>, vector<16x16x4xbf16>
    %124 = vector.shape_cast %123 : vector<16x16x4xbf16> to vector<256x4xbf16>
    %c0_160 = arith.constant 0 : index
    %c896_161 = arith.constant 896 : index
    %125 = vector.load %arg7[%c0_160, %c896_161] : memref<256x1152xbf16, #tpu.memory_space<vmem>>, vector<256x4xbf16>
    tpu.vector_store %arg7[%c0_160, %c896_161], %124 {strides = array<i32>} : memref<256x1152xbf16, #tpu.memory_space<vmem>>, vector<256x4xbf16>,
    %c2_162 = arith.constant 2 : index
    %c2_163 = arith.constant 2 : index
    %c0_164 = arith.constant 0 : index
    %126 = vector.load %arg6[%c2_162, %c2_163, %c0_164] : memref<18x18x4xbf16, #tpu.memory_space<vmem>>, vector<16x16x4xbf16>
    %127 = vector.shape_cast %126 : vector<16x16x4xbf16> to vector<256x4xbf16>
    %c0_165 = arith.constant 0 : index
    %c1024_166 = arith.constant 1024 : index
    %128 = vector.load %arg7[%c0_165, %c1024_166] : memref<256x1152xbf16, #tpu.memory_space<vmem>>, vector<256x4xbf16>
    tpu.vector_store %arg7[%c0_165, %c1024_166], %127 {strides = array<i32>} : memref<256x1152xbf16, #tpu.memory_space<vmem>>, vector<256x4xbf16>,
    %c0_167 = arith.constant 0 : index
    %c0_168 = arith.constant 0 : index
    %129 = vector.load %arg7[%c0_167, %c0_168] : memref<256x1152xbf16, #tpu.memory_space<vmem>>, vector<256x1152xbf16>
    %c0_169 = arith.constant 0 : index
    %c0_170 = arith.constant 0 : index
    %130 = vector.load %arg3[%c0_169, %c0_170] : memref<1152x4xbf16, #tpu.memory_space<vmem>>, vector<1152x4xbf16>
    %cst_171 = arith.constant dense<0.000000e+00> : vector<256x4xf32>
    %131 = tpu.matmul %129, %130, %cst_171 {dimension_numbers = #tpu.dot_dimension_numbers<[1], [0], [0], [1], [0, 0, 1, 1], [], []>} : vector<256x1152xbf16>, vector<1152x4xbf16>, vector<256x4xf32> -> vector<256x4xf32>
    %c0_172 = arith.constant 0 : index
    %c0_173 = arith.constant 0 : index
    %132 = vector.load %arg8[%c0_172, %c0_173] : memref<256x4xf32, #tpu.memory_space<vmem>>, vector<256x4xf32>
    tpu.vector_store %arg8[%c0_172, %c0_173], %131 {strides = array<i32>} : memref<256x4xf32, #tpu.memory_space<vmem>>, vector<256x4xf32>,
    %cst_174 = arith.constant dense<0.000000e+00> : vector<4xf32>
    %133 = vector.multi_reduction <add>, %131, %cst_174 [0] : vector<256x4xf32> to vector<4xf32>
    %134 = vector.shape_cast %133 : vector<4xf32> to vector<1x4xf32>
    %135 = arith.addf %100, %134 : vector<1x4xf32>
    %136 = arith.mulf %131, %131 : vector<256x4xf32>
    %cst_175 = arith.constant dense<0.000000e+00> : vector<4xf32>
    %137 = vector.multi_reduction <add>, %136, %cst_175 [0] : vector<256x4xf32> to vector<4xf32>
    %138 = vector.shape_cast %137 : vector<4xf32> to vector<1x4xf32>
    %139 = arith.addf %101, %138 : vector<1x4xf32>
    %cst_176 = arith.constant 3.906250e-03 : f32
    %140 = vector.broadcast %cst_176 : f32 to vector<1x4xf32>
    %141 = arith.mulf %135, %140 : vector<1x4xf32>
    %cst_177 = arith.constant 3.906250e-03 : f32
    %142 = vector.broadcast %cst_177 : f32 to vector<1x4xf32>
    %143 = arith.mulf %139, %142 : vector<1x4xf32>
    %144 = arith.mulf %141, %141 : vector<1x4xf32>
    %145 = arith.subf %143, %144 : vector<1x4xf32>
    %cst_178 = arith.constant 0.000000e+00 : f32
    %146 = vector.broadcast %cst_178 : f32 to vector<1x4xf32>
    %147 = arith.maximumf %145, %146 : vector<1x4xf32>
    %cst_179 = arith.constant 9.99999974E-6 : f32
    %148 = vector.broadcast %cst_179 : f32 to vector<1x4xf32>
    %149 = arith.addf %147, %148 : vector<1x4xf32>
    %150 = math.rsqrt %149 : vector<1x4xf32>
    %151 = arith.mulf %150, %14 : vector<1x4xf32>
    %152 = arith.mulf %141, %151 : vector<1x4xf32>
    %153 = arith.subf %15, %152 : vector<1x4xf32>
    %c0_180 = arith.constant 0 : index
    %c0_181 = arith.constant 0 : index
    %154 = vector.load %arg8[%c0_180, %c0_181] : memref<256x4xf32, #tpu.memory_space<vmem>>, vector<256x4xf32>
    %155 = vector.broadcast %151 : vector<1x4xf32> to vector<256x4xf32>
    %156 = arith.mulf %154, %155 : vector<256x4xf32>
    %157 = vector.broadcast %153 : vector<1x4xf32> to vector<256x4xf32>
    %158 = arith.addf %156, %157 : vector<256x4xf32>
    %c0_182 = arith.constant 0 : index
    %c0_183 = arith.constant 0 : index
    %c0_184 = arith.constant 0 : index
    %c0_185 = arith.constant 0 : index
    %159 = vector.load %arg1[%c0_182, %c0_183, %c0_184, %c0_185] : memref<1x16x16x4xf32, #tpu.memory_space<vmem>>, vector<1x16x16x4xf32>
    %160 = vector.shape_cast %159 : vector<1x16x16x4xf32> to vector<16x16x4xf32>
    %161 = vector.shape_cast %158 : vector<256x4xf32> to vector<16x16x4xf32>
    %162 = arith.addf %160, %161 : vector<16x16x4xf32>
    %c0_186 = arith.constant 0 : index
    %c0_187 = arith.constant 0 : index
    %c0_188 = arith.constant 0 : index
    %c0_189 = arith.constant 0 : index
    %163 = vector.load %arg5[%c0_186, %c0_187, %c0_188, %c0_189] : memref<1x16x16x4xf32, #tpu.memory_space<vmem>>, vector<1x16x16x4xf32>
    %164 = vector.shape_cast %163 : vector<1x16x16x4xf32> to vector<16x16x4xf32>
    %165 = vector.shape_cast %162 : vector<16x16x4xf32> to vector<1x16x16x4xf32>
    tpu.vector_store %arg5[%c0_186, %c0_187, %c0_188, %c0_189], %165 {strides = array<i32>} : memref<1x16x16x4xf32, #tpu.memory_space<vmem>>, vector<1x16x16x4xf32>,
    return
  }
  func.func @transform_0(%arg0: i32) -> (i32, i32, i32, i32) {
    %c0_i32 = arith.constant 0 : i32
    %c0_i32_0 = arith.constant 0 : i32
    %c0_i32_1 = arith.constant 0 : i32
    %c0_i32_2 = arith.constant 0 : i32
    return %arg0, %c0_i32, %c0_i32_0, %c0_i32_1 : i32, i32, i32, i32
  }
  func.func @transform_1(%arg0: i32) -> (i32, i32) {
    %c0_i32 = arith.constant 0 : i32
    %c0_i32_0 = arith.constant 0 : i32
    %c0_i32_1 = arith.constant 0 : i32
    return %c0_i32, %c0_i32_0 : i32, i32
  }
  func.func @transform_2(%arg0: i32) -> (i32, i32) {
    %c0_i32 = arith.constant 0 : i32
    %c0_i32_0 = arith.constant 0 : i32
    %c0_i32_1 = arith.constant 0 : i32
    return %c0_i32, %c0_i32_0 : i32, i32
  }
  func.func @transform_3(%arg0: i32) -> (i32, i32, i32) {
    %c0_i32 = arith.constant 0 : i32
    %c0_i32_0 = arith.constant 0 : i32
    %c0_i32_1 = arith.constant 0 : i32
    return %arg0, %c0_i32, %c0_i32_0 : i32, i32, i32
  }
  func.func @transform_4(%arg0: i32) -> (i32, i32, i32, i32) {
    %c0_i32 = arith.constant 0 : i32
    %c0_i32_0 = arith.constant 0 : i32
    %c0_i32_1 = arith.constant 0 : i32
    %c0_i32_2 = arith.constant 0 : i32
    return %arg0, %c0_i32, %c0_i32_0, %c0_i32_1 : i32, i32, i32, i32
  }
}

</mosaic_0001>

<llo_original>
// kernel: tpu_custom_call.1
$region0: #{tpu_custom_call.1}
  #allocation0 [shape = 'u32[]', space=smem, size = 0x4, offset = 0x4, fixed_abs, tag = 'smem constant byte address 0x4 - core index']
  #allocation1 [shape = 'u32[144,128]{1,0:T(1,128)}', space=vmem, size = 0x12000, scoped, tag = 'internal scratch']
  #allocation2 [shape = 'bf16[18,18,4]{2,1,0:T(8,128)(2,1)}', space=vmem, size = 0x1b000, scoped, tag = 'scratch operand']
  #allocation3 [shape = 'bf16[256,1152]{1,0:T(8,128)(2,1)}', space=vmem, size = 0x90000, scoped, tag = 'scratch operand']
  #allocation4 [shape = 'f32[256,4]{1,0:T(8,128)}', space=vmem, size = 0x20000, scoped, tag = 'scratch operand']
  %s0 = inlined_call_operand.vmem [shape: f32[2,16,16,4], index: 0, kind: input, shape index: {}]
  %s1 = inlined_call_operand.vmem [shape: bf16[1152,4], index: 1, kind: input, shape index: {}]
  %s2 = inlined_call_operand.vmem [shape: bf16[1152,4], index: 2, kind: input, shape index: {}]
  %s3 = inlined_call_operand.vmem [shape: f32[2,4,4], index: 3, kind: input, shape index: {}]
  %s4 = inlined_call_operand.vmem [shape: f32[2,16,16,4], index: 4, kind: output, shape index: {}]
  %s5 = sld [smem:[#allocation0]]
  $region49: #{tpu_custom_call.1} parent=0
    _
  %s7 = ssub.s32 1, %s5
  %s8 = scalar_select 0, %s7, %s5
  loop: start=0, step=1, limit=4
  $region2: #{tpu_custom_call.1} parent=0 // loop_pre_header
    _
  $region3: #{tpu_custom_call.1} parent=0 // loop_header
    %s10 = sphi 0, %s14
    %p11 = scmp.ge.s32.totalorder %s10, 4
    %s20 = sphi 0, %s22
    %s23 = sphi 0, %s20
    %s24 = sphi 0, %s23
    %s40 = sphi 0, %s24
    %s44 = sphi 0, %s44
    %s46 = sphi 0, %s44
    %s47 = sphi 0, %s46
    %s61 = sphi 0, %s47
    %s65 = sphi 0, %s65
    %s67 = sphi 0, %s65
    %s68 = sphi 0, %s67
    %s82 = sphi 0, %s68
    %s88 = sphi 0, %s90
    %s91 = sphi 0, %s88
    %s92 = sphi 0, %s91
    %s108 = sphi 0, %s92
    %s114 = sphi 0, %s116
    %s117 = sphi 0, %s114
    %s118 = sphi 0, %s117
    %s134 = sphi 0, %s118
  $region4: #{tpu_custom_call.1} parent=0 // loop_header_branch
    %13 = sbr.rel (%p11) target = $region8
  $region5: #{tpu_custom_call.1} parent=0 // loop_body
    %s15 = ssub.s32 %s10, 1
    %s16 = ssub.s32 %s10, 2
    %s17 = sadd.s32 %s10, 1
    %s18 = ssub.s32 %s10, %s17
    %p19 = scmp.eq.s32.totalorder %s18, 0
    %s21 = sadd.s32 %s20, 1
    %s22 = scalar_select %p19, %s20, %s21
    %p25 = pneg %p19
    %p26 = scmp.eq.s32.totalorder %s10, 1
    %p27 = por %p25, %p26
    %p28 = scmp.ne.s32.totalorder %s20, %s23
    %p29 = scmp.eq.s32.totalorder %s10, 0
    %p30 = por %p28, %p29
    %p31 = scmp.ne.s32.totalorder %s20, %s23
    %p32 = scmp.eq.s32.totalorder %s15, 1
    %p33 = por %p31, %p32
    %p34 = scmp.ne.s32.totalorder %s23, %s24
    %p35 = scmp.eq.s32.totalorder %s15, 0
    %p36 = por %p34, %p35
    %p37 = scmp.ne.s32.totalorder %s23, %s24
    %p38 = scmp.eq.s32.totalorder %s16, 1
    %p39 = por %p37, %p38
    %p41 = scmp.ne.s32.totalorder %s24, %s40
    %p42 = scmp.eq.s32.totalorder %s16, 0
    %p43 = por %p41, %p42
    %s45 = sadd.s32 %s44, 1
    %p48 = scmp.eq.s32.totalorder %s10, 1
    %p49 = scmp.ne.s32.totalorder %s44, %s46
    %p50 = scmp.eq.s32.totalorder %s10, 0
    %p51 = por %p49, %p50
    %p52 = scmp.ne.s32.totalorder %s44, %s46
    %p53 = scmp.eq.s32.totalorder %s15, 1
    %p54 = por %p52, %p53
    %p55 = scmp.ne.s32.totalorder %s46, %s47
    %p56 = scmp.eq.s32.totalorder %s15, 0
    %p57 = por %p55, %p56
    %p58 = scmp.ne.s32.totalorder %s46, %s47
    %p59 = scmp.eq.s32.totalorder %s16, 1
    %p60 = por %p58, %p59
    %p62 = scmp.ne.s32.totalorder %s47, %s61
    %p63 = scmp.eq.s32.totalorder %s16, 0
    %p64 = por %p62, %p63
    %s66 = sadd.s32 %s65, 1
    %p69 = scmp.eq.s32.totalorder %s10, 1
    %p70 = scmp.ne.s32.totalorder %s65, %s67
    %p71 = scmp.eq.s32.totalorder %s10, 0
    %p72 = por %p70, %p71
    %p73 = scmp.ne.s32.totalorder %s65, %s67
    %p74 = scmp.eq.s32.totalorder %s15, 1
    %p75 = por %p73, %p74
    %p76 = scmp.ne.s32.totalorder %s67, %s68
    %p77 = scmp.eq.s32.totalorder %s15, 0
    %p78 = por %p76, %p77
    %p79 = scmp.ne.s32.totalorder %s67, %s68
    %p80 = scmp.eq.s32.totalorder %s16, 1
    %p81 = por %p79, %p80
    %p83 = scmp.ne.s32.totalorder %s68, %s82
    %p84 = scmp.eq.s32.totalorder %s16, 0
    %p85 = por %p83, %p84
    %s86 = ssub.s32 %s10, %s17
    %p87 = scmp.eq.s32.totalorder %s86, 0
    %s89 = sadd.s32 %s88, 1
    %s90 = scalar_select %p87, %s88, %s89
    %p93 = pneg %p87
    %p94 = scmp.eq.s32.totalorder %s10, 1
    %p95 = por %p93, %p94
    %p96 = scmp.ne.s32.totalorder %s88, %s91
    %p97 = scmp.eq.s32.totalorder %s10, 0
    %p98 = por %p96, %p97
    %p99 = scmp.ne.s32.totalorder %s88, %s91
    %p100 = scmp.eq.s32.totalorder %s15, 1
    %p101 = por %p99, %p100
    %p102 = scmp.ne.s32.totalorder %s91, %s92
    %p103 = scmp.eq.s32.totalorder %s15, 0
    %p104 = por %p102, %p103
    %p105 = scmp.ne.s32.totalorder %s91, %s92
    %p106 = scmp.eq.s32.totalorder %s16, 1
    %p107 = por %p105, %p106
    %p109 = scmp.ne.s32.totalorder %s92, %s108
    %p110 = scmp.eq.s32.totalorder %s16, 0
    %p111 = por %p109, %p110
    %s112 = ssub.s32 %s10, %s17
    %p113 = scmp.eq.s32.totalorder %s112, 0
    %s115 = sadd.s32 %s114, 1
    %s116 = scalar_select %p113, %s114, %s115
    %p119 = pneg %p113
    %p120 = scmp.eq.s32.totalorder %s10, 1
    %p121 = por %p119, %p120
    %p122 = scmp.ne.s32.totalorder %s114, %s117
    %p123 = scmp.eq.s32.totalorder %s10, 0
    %p124 = por %p122, %p123
    %p125 = scmp.ne.s32.totalorder %s114, %s117
    %p126 = scmp.eq.s32.totalorder %s15, 1
    %p127 = por %p125, %p126
    %p128 = scmp.ne.s32.totalorder %s117, %s118
    %p129 = scmp.eq.s32.totalorder %s15, 0
    %p130 = por %p128, %p129
    %p131 = scmp.ne.s32.totalorder %s117, %s118
    %p132 = scmp.eq.s32.totalorder %s16, 1
    %p133 = por %p131, %p132
    %p135 = scmp.ne.s32.totalorder %s118, %s134
    %p136 = scmp.eq.s32.totalorder %s16, 0
    %p137 = por %p135, %p136
    %p138 = scmp.le.s32.totalorder 1, %s10
    %p139 = scmp.lt.s32.totalorder %s10, 3
    %p140 = pnand %p138, %p139
    %p141 = pneg %p140
    // Predicated region
    $region9: #{tpu_custom_call.1} parent=5 // pred_check
      _
    $region10: #{tpu_custom_call.1} parent=5 // pred_check_branch
      %143 = sbr.rel (%p140) target = $region12
    $region11: #{tpu_custom_call.1} parent=5 // pred_region
      %s144 = ssub.s32 %s10, 1
      // Predicated region
      $region13: #{tpu_custom_call.1} parent=11 // pred_check
        %p145 = pneg %p57
      $region14: #{tpu_custom_call.1} parent=11 // pred_check_branch
        %147 = sbr.rel (%p145) target = $region16
      $region15: #{tpu_custom_call.1} parent=11 // pred_region
        _
      $region16: #{tpu_custom_call.1} parent=11 // pred_fallthru
        _
      // Predicated region
      $region17: #{tpu_custom_call.1} parent=11 // pred_check
        %p148 = pneg %p78
      $region18: #{tpu_custom_call.1} parent=11 // pred_check_branch
        %150 = sbr.rel (%p148) target = $region20
      $region19: #{tpu_custom_call.1} parent=11 // pred_region
        _
      $region20: #{tpu_custom_call.1} parent=11 // pred_fallthru
        _
    $region12: #{tpu_custom_call.1} parent=5 // pred_fallthru
      _
    %p151 = scmp.lt.s32.totalorder %s10, 2
    // Predicated region
    $region21: #{tpu_custom_call.1} parent=5 // pred_check
      %p152 = pneg %p151
    $region22: #{tpu_custom_call.1} parent=5 // pred_check_branch
      %154 = sbr.rel (%p152) target = $region24
    $region23: #{tpu_custom_call.1} parent=5 // pred_region
      // Predicated region
      $region25: #{tpu_custom_call.1} parent=23 // pred_check
        %p155 = pneg %p30
      $region26: #{tpu_custom_call.1} parent=23 // pred_check_branch
        %157 = sbr.rel (%p155) target = $region28
      $region27: #{tpu_custom_call.1} parent=23 // pred_region
        %p158 = scmp.lt.s32.totalorder %s10, 1
        %s159 = scalar_select %p158, %s10, 1
        %s160 = smul.addr %s159, 32
        %s161 = smul.addr %s160, 8
        %s162 = scalar_lea.vmem %s0, %s161
      $region28: #{tpu_custom_call.1} parent=23 // pred_fallthru
        _
      // Predicated region
      $region29: #{tpu_custom_call.1} parent=23 // pred_check
        %p163 = pneg %p98
      $region30: #{tpu_custom_call.1} parent=23 // pred_check_branch
        %165 = sbr.rel (%p163) target = $region32
      $region31: #{tpu_custom_call.1} parent=23 // pred_region
        %p166 = scmp.lt.s32.totalorder %s10, 1
        %s167 = scalar_select %p166, %s10, 1
        %s168 = smul.addr %s167, 4
        %s169 = scalar_lea.vmem %s3, %s168
      $region32: #{tpu_custom_call.1} parent=23 // pred_fallthru
        _
    $region24: #{tpu_custom_call.1} parent=5 // pred_fallthru
      _
    %p170 = scmp.le.s32.totalorder 1, %s10
    %p171 = scmp.lt.s32.totalorder %s10, 3
    %p172 = pnand %p170, %p171
    %p173 = pneg %p172
    // Predicated region
    $region33: #{tpu_custom_call.1} parent=5 // pred_check
      _
    $region34: #{tpu_custom_call.1} parent=5 // pred_check_branch
      %175 = sbr.rel (%p172) target = $region36
    $region35: #{tpu_custom_call.1} parent=5 // pred_region
      %s176 = ssub.s32 %s10, 1
      %p177 = scmp.lt.s32.totalorder %s15, 1
      %s178 = scalar_select %p177, %s15, 1
      %s179 = smul.addr %s178, 32
      %s180 = smul.addr %s179, 8
      %s181 = scalar_lea.vmem %s0, %s180
      %p182 = pneg %p36
      %p183 = pneg %p33
      %p184 = pneg %p57
      %p185 = pneg %p54
      %p186 = pneg %p78
      %p187 = pneg %p75
      %p188 = scmp.lt.s32.totalorder %s15, 1
      %s189 = scalar_select %p188, %s15, 1
      %s190 = smul.addr %s189, 4
      %s191 = scalar_lea.vmem %s3, %s190
      %p192 = pneg %p104
      %p193 = pneg %p101
      %p194 = pneg %p130
      %p195 = pneg %p127
      %p196 = scmp.lt.s32.totalorder %s15, 1
      %s197 = scalar_select %p196, %s15, 1
      %s198 = smul.addr %s197, 32
      %s199 = smul.addr %s198, 8
      %s200 = scalar_lea.vmem %s4, %s199
      %p201 = scmp.lt.s32.totalorder %s15, 1
      %s202 = scalar_select %p201, %s15, 1
      %s203 = smul.addr %s202, 32
      %s204 = smul.addr %s203, 8
      %s205 = scalar_lea.vmem %s0, %s204
      %p206 = scmp.lt.s32.totalorder %s15, 1
      %s207 = scalar_select %p206, %s15, 1
      %s208 = smul.addr %s207, 4
      %s209 = scalar_lea.vmem %s3, %s208
      %p210 = scmp.lt.s32.totalorder %s15, 1
      %s211 = scalar_select %p210, %s15, 1
      %s212 = smul.addr %s211, 32
      %s213 = smul.addr %s212, 8
      %s214 = scalar_lea.vmem %s4, %s213
      %vm216 = vcmask 1043488
      %217 = vst.msk [vmem:[#allocation3] sm:$0xf] %vm216, 0
      %218 = vst.msk [vmem:[#allocation3 + $0x24] sm:$0xf] %vm216, 0
      %219 = vst.msk [vmem:[#allocation3 + $0x48] sm:$0xf] %vm216, 0
      %220 = vst.msk [vmem:[#allocation3 + $0x6c] sm:$0xf] %vm216, 0
      %221 = vst.msk [vmem:[#allocation3 + $0x90] sm:$0xf] %vm216, 0
      %222 = vst.msk [vmem:[#allocation3 + $0xb4] sm:$0xf] %vm216, 0
      %223 = vst.msk [vmem:[#allocation3 + $0xd8] sm:$0xf] %vm216, 0
      %224 = vst.msk [vmem:[#allocation3 + $0xfc] sm:$0xf] %vm216, 0
      %225 = vst.msk [vmem:[#allocation3 + $0x120] sm:$0xf] %vm216, 0
      %226 = vst.msk [vmem:[#allocation3 + $0x144] sm:$0xf] %vm216, 0
      %227 = vst.msk [vmem:[#allocation3 + $0x168] sm:$0xf] %vm216, 0
      %228 = vst.msk [vmem:[#allocation3 + $0x18c] sm:$0xf] %vm216, 0
      %229 = vst.msk [vmem:[#allocation3 + $0x1b0] sm:$0xf] %vm216, 0
      %230 = vst.msk [vmem:[#allocation3 + $0x1d4] sm:$0xf] %vm216, 0
      %231 = vst.msk [vmem:[#allocation3 + $0x1f8] sm:$0xf] %vm216, 0
      %232 = vst.msk [vmem:[#allocation3 + $0x21c] sm:$0xf] %vm216, 0
      %233 = vst.msk [vmem:[#allocation3 + $0x240] sm:$0xf] %vm216, 0
      %234 = vst.msk [vmem:[#allocation3 + $0x264] sm:$0xf] %vm216, 0
      %235 = vst.msk [vmem:[#allocation3 + $0x288] sm:$0xf] %vm216, 0
      %236 = vst.msk [vmem:[#allocation3 + $0x2ac] sm:$0xf] %vm216, 0
      %237 = vst.msk [vmem:[#allocation3 + $0x2d0] sm:$0xf] %vm216, 0
      %238 = vst.msk [vmem:[#allocation3 + $0x2f4] sm:$0xf] %vm216, 0
      %239 = vst.msk [vmem:[#allocation3 + $0x318] sm:$0xf] %vm216, 0
      %240 = vst.msk [vmem:[#allocation3 + $0x33c] sm:$0xf] %vm216, 0
      %241 = vst.msk [vmem:[#allocation3 + $0x360] sm:$0xf] %vm216, 0
      %242 = vst.msk [vmem:[#allocation3 + $0x384] sm:$0xf] %vm216, 0
      %243 = vst.msk [vmem:[#allocation3 + $0x3a8] sm:$0xf] %vm216, 0
      %244 = vst.msk [vmem:[#allocation3 + $0x3cc] sm:$0xf] %vm216, 0
      %245 = vst.msk [vmem:[#allocation3 + $0x3f0] sm:$0xf] %vm216, 0
      %246 = vst.msk [vmem:[#allocation3 + $0x414] sm:$0xf] %vm216, 0
      %247 = vst.msk [vmem:[#allocation3 + $0x438] sm:$0xf] %vm216, 0
      %248 = vst.msk [vmem:[#allocation3 + $0x45c] sm:$0xf] %vm216, 0
      %249 = vst.msk [vmem:[#allocation3 + $0x4] sm:$0xf] %vm216, 0
      %250 = vst.msk [vmem:[#allocation3 + $0x28] sm:$0xf] %vm216, 0
      %251 = vst.msk [vmem:[#allocation3 + $0x4c] sm:$0xf] %vm216, 0
      %252 = vst.msk [vmem:[#allocation3 + $0x70] sm:$0xf] %vm216, 0
      %253 = vst.msk [vmem:[#allocation3 + $0x94] sm:$0xf] %vm216, 0
      %254 = vst.msk [vmem:[#allocation3 + $0xb8] sm:$0xf] %vm216, 0
      %255 = vst.msk [vmem:[#allocation3 + $0xdc] sm:$0xf] %vm216, 0
      %256 = vst.msk [vmem:[#allocation3 + $0x100] sm:$0xf] %vm216, 0
      %257 = vst.msk [vmem:[#allocation3 + $0x124] sm:$0xf] %vm216, 0
      %258 = vst.msk [vmem:[#allocation3 + $0x148] sm:$0xf] %vm216, 0
      %259 = vst.msk [vmem:[#allocation3 + $0x16c] sm:$0xf] %vm216, 0
      %260 = vst.msk [vmem:[#allocation3 + $0x190] sm:$0xf] %vm216, 0
      %261 = vst.msk [vmem:[#allocation3 + $0x1b4] sm:$0xf] %vm216, 0
      %262 = vst.msk [vmem:[#allocation3 + $0x1d8] sm:$0xf] %vm216, 0
      %263 = vst.msk [vmem:[#allocation3 + $0x1fc] sm:$0xf] %vm216, 0
      %264 = vst.msk [vmem:[#allocation3 + $0x220] sm:$0xf] %vm216, 0
      %265 = vst.msk [vmem:[#allocation3 + $0x244] sm:$0xf] %vm216, 0
      %266 = vst.msk [vmem:[#allocation3 + $0x268] sm:$0xf] %vm216, 0
      %267 = vst.msk [vmem:[#allocation3 + $0x28c] sm:$0xf] %vm216, 0
      %268 = vst.msk [vmem:[#allocation3 + $0x2b0] sm:$0xf] %vm216, 0
      %269 = vst.msk [vmem:[#allocation3 + $0x2d4] sm:$0xf] %vm216, 0
      %270 = vst.msk [vmem:[#allocation3 + $0x2f8] sm:$0xf] %vm216, 0
      %271 = vst.msk [vmem:[#allocation3 + $0x31c] sm:$0xf] %vm216, 0
      %272 = vst.msk [vmem:[#allocation3 + $0x340] sm:$0xf] %vm216, 0
      %273 = vst.msk [vmem:[#allocation3 + $0x364] sm:$0xf] %vm216, 0
      %274 = vst.msk [vmem:[#allocation3 + $0x388] sm:$0xf] %vm216, 0
      %275 = vst.msk [vmem:[#allocation3 + $0x3ac] sm:$0xf] %vm216, 0
      %276 = vst.msk [vmem:[#allocation3 + $0x3d0] sm:$0xf] %vm216, 0
      %277 = vst.msk [vmem:[#allocation3 + $0x3f4] sm:$0xf] %vm216, 0
      %278 = vst.msk [vmem:[#allocation3 + $0x418] sm:$0xf] %vm216, 0
      %279 = vst.msk [vmem:[#allocation3 + $0x43c] sm:$0xf] %vm216, 0
      %280 = vst.msk [vmem:[#allocation3 + $0x460] sm:$0xf] %vm216, 0
      %281 = vst.msk [vmem:[#allocation3 + $0x8] sm:$0xf] %vm216, 0
      %282 = vst.msk [vmem:[#allocation3 + $0x2c] sm:$0xf] %vm216, 0
      %283 = vst.msk [vmem:[#allocation3 + $0x50] sm:$0xf] %vm216, 0
      %284 = vst.msk [vmem:[#allocation3 + $0x74] sm:$0xf] %vm216, 0
      %285 = vst.msk [vmem:[#allocation3 + $0x98] sm:$0xf] %vm216, 0
      %286 = vst.msk [vmem:[#allocation3 + $0xbc] sm:$0xf] %vm216, 0
      %287 = vst.msk [vmem:[#allocation3 + $0xe0] sm:$0xf] %vm216, 0
      %288 = vst.msk [vmem:[#allocation3 + $0x104] sm:$0xf] %vm216, 0
      %289 = vst.msk [vmem:[#allocation3 + $0x128] sm:$0xf] %vm216, 0
      %290 = vst.msk [vmem:[#allocation3 + $0x14c] sm:$0xf] %vm216, 0
      %291 = vst.msk [vmem:[#allocation3 + $0x170] sm:$0xf] %vm216, 0
      %292 = vst.msk [vmem:[#allocation3 + $0x194] sm:$0xf] %vm216, 0
      %293 = vst.msk [vmem:[#allocation3 + $0x1b8] sm:$0xf] %vm216, 0
      %294 = vst.msk [vmem:[#allocation3 + $0x1dc] sm:$0xf] %vm216, 0
      %295 = vst.msk [vmem:[#allocation3 + $0x200] sm:$0xf] %vm216, 0
      %296 = vst.msk [vmem:[#allocation3 + $0x224] sm:$0xf] %vm216, 0
      %297 = vst.msk [vmem:[#allocation3 + $0x248] sm:$0xf] %vm216, 0
      %298 = vst.msk [vmem:[#allocation3 + $0x26c] sm:$0xf] %vm216, 0
      %299 = vst.msk [vmem:[#allocation3 + $0x290] sm:$0xf] %vm216, 0
      %300 = vst.msk [vmem:[#allocation3 + $0x2b4] sm:$0xf] %vm216, 0
      %301 = vst.msk [vmem:[#allocation3 + $0x2d8] sm:$0xf] %vm216, 0
      %302 = vst.msk [vmem:[#allocation3 + $0x2fc] sm:$0xf] %vm216, 0
      %303 = vst.msk [vmem:[#allocation3 + $0x320] sm:$0xf] %vm216, 0
      %304 = vst.msk [vmem:[#allocation3 + $0x344] sm:$0xf] %vm216, 0
      %305 = vst.msk [vmem:[#allocation3 + $0x368] sm:$0xf] %vm216, 0
      %306 = vst.msk [vmem:[#allocation3 + $0x38c] sm:$0xf] %vm216, 0
      %307 = vst.msk [vmem:[#allocation3 + $0x3b0] sm:$0xf] %vm216, 0
      %308 = vst.msk [vmem:[#allocation3 + $0x3d4] sm:$0xf] %vm216, 0
      %309 = vst.msk [vmem:[#allocation3 + $0x3f8] sm:$0xf] %vm216, 0
      %310 = vst.msk [vmem:[#allocation3 + $0x41c] sm:$0xf] %vm216, 0
      %311 = vst.msk [vmem:[#allocation3 + $0x440] sm:$0xf] %vm216, 0
      %312 = vst.msk [vmem:[#allocation3 + $0x464] sm:$0xf] %vm216, 0
      %313 = vst.msk [vmem:[#allocation3 + $0xc] sm:$0xf] %vm216, 0
      %314 = vst.msk [vmem:[#allocation3 + $0x30] sm:$0xf] %vm216, 0
      %315 = vst.msk [vmem:[#allocation3 + $0x54] sm:$0xf] %vm216, 0
      %316 = vst.msk [vmem:[#allocation3 + $0x78] sm:$0xf] %vm216, 0
      %317 = vst.msk [vmem:[#allocation3 + $0x9c] sm:$0xf] %vm216, 0
      %318 = vst.msk [vmem:[#allocation3 + $0xc0] sm:$0xf] %vm216, 0
      %319 = vst.msk [vmem:[#allocation3 + $0xe4] sm:$0xf] %vm216, 0
      %320 = vst.msk [vmem:[#allocation3 + $0x108] sm:$0xf] %vm216, 0
      %321 = vst.msk [vmem:[#allocation3 + $0x12c] sm:$0xf] %vm216, 0
      %322 = vst.msk [vmem:[#allocation3 + $0x150] sm:$0xf] %vm216, 0
      %323 = vst.msk [vmem:[#allocation3 + $0x174] sm:$0xf] %vm216, 0
      %324 = vst.msk [vmem:[#allocation3 + $0x198] sm:$0xf] %vm216, 0
      %325 = vst.msk [vmem:[#allocation3 + $0x1bc] sm:$0xf] %vm216, 0
      %326 = vst.msk [vmem:[#allocation3 + $0x1e0] sm:$0xf] %vm216, 0
      %327 = vst.msk [vmem:[#allocation3 + $0x204] sm:$0xf] %vm216, 0
      %328 = vst.msk [vmem:[#allocation3 + $0x228] sm:$0xf] %vm216, 0
      %329 = vst.msk [vmem:[#allocation3 + $0x24c] sm:$0xf] %vm216, 0
      %330 = vst.msk [vmem:[#allocation3 + $0x270] sm:$0xf] %vm216, 0
      %331 = vst.msk [vmem:[#allocation3 + $0x294] sm:$0xf] %vm216, 0
      %332 = vst.msk [vmem:[#allocation3 + $0x2b8] sm:$0xf] %vm216, 0
      %333 = vst.msk [vmem:[#allocation3 + $0x2dc] sm:$0xf] %vm216, 0
      %334 = vst.msk [vmem:[#allocation3 + $0x300] sm:$0xf] %vm216, 0
      %335 = vst.msk [vmem:[#allocation3 + $0x324] sm:$0xf] %vm216, 0
      %336 = vst.msk [vmem:[#allocation3 + $0x348] sm:$0xf] %vm216, 0
      %337 = vst.msk [vmem:[#allocation3 + $0x36c] sm:$0xf] %vm216, 0
      %338 = vst.msk [vmem:[#allocation3 + $0x390] sm:$0xf] %vm216, 0
      %339 = vst.msk [vmem:[#allocation3 + $0x3b4] sm:$0xf] %vm216, 0
      %340 = vst.msk [vmem:[#allocation3 + $0x3d8] sm:$0xf] %vm216, 0
      %341 = vst.msk [vmem:[#allocation3 + $0x3fc] sm:$0xf] %vm216, 0
      %342 = vst.msk [vmem:[#allocation3 + $0x420] sm:$0xf] %vm216, 0
      %343 = vst.msk [vmem:[#allocation3 + $0x444] sm:$0xf] %vm216, 0
      %344 = vst.msk [vmem:[#allocation3 + $0x468] sm:$0xf] %vm216, 0
      %345 = vst.msk [vmem:[#allocation3 + $0x10] sm:$0xf] %vm216, 0
      %346 = vst.msk [vmem:[#allocation3 + $0x34] sm:$0xf] %vm216, 0
      %347 = vst.msk [vmem:[#allocation3 + $0x58] sm:$0xf] %vm216, 0
      %348 = vst.msk [vmem:[#allocation3 + $0x7c] sm:$0xf] %vm216, 0
      %349 = vst.msk [vmem:[#allocation3 + $0xa0] sm:$0xf] %vm216, 0
      %350 = vst.msk [vmem:[#allocation3 + $0xc4] sm:$0xf] %vm216, 0
      %351 = vst.msk [vmem:[#allocation3 + $0xe8] sm:$0xf] %vm216, 0
      %352 = vst.msk [vmem:[#allocation3 + $0x10c] sm:$0xf] %vm216, 0
      %353 = vst.msk [vmem:[#allocation3 + $0x130] sm:$0xf] %vm216, 0
      %354 = vst.msk [vmem:[#allocation3 + $0x154] sm:$0xf] %vm216, 0
      %355 = vst.msk [vmem:[#allocation3 + $0x178] sm:$0xf] %vm216, 0
      %356 = vst.msk [vmem:[#allocation3 + $0x19c] sm:$0xf] %vm216, 0
      %357 = vst.msk [vmem:[#allocation3 + $0x1c0] sm:$0xf] %vm216, 0
      %358 = vst.msk [vmem:[#allocation3 + $0x1e4] sm:$0xf] %vm216, 0
      %359 = vst.msk [vmem:[#allocation3 + $0x208] sm:$0xf] %vm216, 0
      %360 = vst.msk [vmem:[#allocation3 + $0x22c] sm:$0xf] %vm216, 0
      %361 = vst.msk [vmem:[#allocation3 + $0x250] sm:$0xf] %vm216, 0
      %362 = vst.msk [vmem:[#allocation3 + $0x274] sm:$0xf] %vm216, 0
      %363 = vst.msk [vmem:[#allocation3 + $0x298] sm:$0xf] %vm216, 0
      %364 = vst.msk [vmem:[#allocation3 + $0x2bc] sm:$0xf] %vm216, 0
      %365 = vst.msk [vmem:[#allocation3 + $0x2e0] sm:$0xf] %vm216, 0
      %366 = vst.msk [vmem:[#allocation3 + $0x304] sm:$0xf] %vm216, 0
      %367 = vst.msk [vmem:[#allocation3 + $0x328] sm:$0xf] %vm216, 0
      %368 = vst.msk [vmem:[#allocation3 + $0x34c] sm:$0xf] %vm216, 0
      %369 = vst.msk [vmem:[#allocation3 + $0x370] sm:$0xf] %vm216, 0
      %370 = vst.msk [vmem:[#allocation3 + $0x394] sm:$0xf] %vm216, 0
      %371 = vst.msk [vmem:[#allocation3 + $0x3b8] sm:$0xf] %vm216, 0
      %372 = vst.msk [vmem:[#allocation3 + $0x3dc] sm:$0xf] %vm216, 0
      %373 = vst.msk [vmem:[#allocation3 + $0x400] sm:$0xf] %vm216, 0
      %374 = vst.msk [vmem:[#allocation3 + $0x424] sm:$0xf] %vm216, 0
      %375 = vst.msk [vmem:[#allocation3 + $0x448] sm:$0xf] %vm216, 0
      %376 = vst.msk [vmem:[#allocation3 + $0x46c] sm:$0xf] %vm216, 0
      %377 = vst.msk [vmem:[#allocation3 + $0x14] sm:$0xf] %vm216, 0
      %378 = vst.msk [vmem:[#allocation3 + $0x38] sm:$0xf] %vm216, 0
      %379 = vst.msk [vmem:[#allocation3 + $0x5c] sm:$0xf] %vm216, 0
      %380 = vst.msk [vmem:[#allocation3 + $0x80] sm:$0xf] %vm216, 0
      %381 = vst.msk [vmem:[#allocation3 + $0xa4] sm:$0xf] %vm216, 0
      %382 = vst.msk [vmem:[#allocation3 + $0xc8] sm:$0xf] %vm216, 0
      %383 = vst.msk [vmem:[#allocation3 + $0xec] sm:$0xf] %vm216, 0
      %384 = vst.msk [vmem:[#allocation3 + $0x110] sm:$0xf] %vm216, 0
      %385 = vst.msk [vmem:[#allocation3 + $0x134] sm:$0xf] %vm216, 0
      %386 = vst.msk [vmem:[#allocation3 + $0x158] sm:$0xf] %vm216, 0
      %387 = vst.msk [vmem:[#allocation3 + $0x17c] sm:$0xf] %vm216, 0
      %388 = vst.msk [vmem:[#allocation3 + $0x1a0] sm:$0xf] %vm216, 0
      %389 = vst.msk [vmem:[#allocation3 + $0x1c4] sm:$0xf] %vm216, 0
      %390 = vst.msk [vmem:[#allocation3 + $0x1e8] sm:$0xf] %vm216, 0
      %391 = vst.msk [vmem:[#allocation3 + $0x20c] sm:$0xf] %vm216, 0
      %392 = vst.msk [vmem:[#allocation3 + $0x230] sm:$0xf] %vm216, 0
      %393 = vst.msk [vmem:[#allocation3 + $0x254] sm:$0xf] %vm216, 0
      %394 = vst.msk [vmem:[#allocation3 + $0x278] sm:$0xf] %vm216, 0
      %395 = vst.msk [vmem:[#allocation3 + $0x29c] sm:$0xf] %vm216, 0
      %396 = vst.msk [vmem:[#allocation3 + $0x2c0] sm:$0xf] %vm216, 0
      %397 = vst.msk [vmem:[#allocation3 + $0x2e4] sm:$0xf] %vm216, 0
      %398 = vst.msk [vmem:[#allocation3 + $0x308] sm:$0xf] %vm216, 0
      %399 = vst.msk [vmem:[#allocation3 + $0x32c] sm:$0xf] %vm216, 0
      %400 = vst.msk [vmem:[#allocation3 + $0x350] sm:$0xf] %vm216, 0
      %401 = vst.msk [vmem:[#allocation3 + $0x374] sm:$0xf] %vm216, 0
      %402 = vst.msk [vmem:[#allocation3 + $0x398] sm:$0xf] %vm216, 0
      %403 = vst.msk [vmem:[#allocation3 + $0x3bc] sm:$0xf] %vm216, 0
      %404 = vst.msk [vmem:[#allocation3 + $0x3e0] sm:$0xf] %vm216, 0
      %405 = vst.msk [vmem:[#allocation3 + $0x404] sm:$0xf] %vm216, 0
      %406 = vst.msk [vmem:[#allocation3 + $0x428] sm:$0xf] %vm216, 0
      %407 = vst.msk [vmem:[#allocation3 + $0x44c] sm:$0xf] %vm216, 0
      %408 = vst.msk [vmem:[#allocation3 + $0x470] sm:$0xf] %vm216, 0
      %409 = vst.msk [vmem:[#allocation3 + $0x18] sm:$0xf] %vm216, 0
      %410 = vst.msk [vmem:[#allocation3 + $0x3c] sm:$0xf] %vm216, 0
      %411 = vst.msk [vmem:[#allocation3 + $0x60] sm:$0xf] %vm216, 0
      %412 = vst.msk [vmem:[#allocation3 + $0x84] sm:$0xf] %vm216, 0
      %413 = vst.msk [vmem:[#allocation3 + $0xa8] sm:$0xf] %vm216, 0
      %414 = vst.msk [vmem:[#allocation3 + $0xcc] sm:$0xf] %vm216, 0
      %415 = vst.msk [vmem:[#allocation3 + $0xf0] sm:$0xf] %vm216, 0
      %416 = vst.msk [vmem:[#allocation3 + $0x114] sm:$0xf] %vm216, 0
      %417 = vst.msk [vmem:[#allocation3 + $0x138] sm:$0xf] %vm216, 0
      %418 = vst.msk [vmem:[#allocation3 + $0x15c] sm:$0xf] %vm216, 0
      %419 = vst.msk [vmem:[#allocation3 + $0x180] sm:$0xf] %vm216, 0
      %420 = vst.msk [vmem:[#allocation3 + $0x1a4] sm:$0xf] %vm216, 0
      %421 = vst.msk [vmem:[#allocation3 + $0x1c8] sm:$0xf] %vm216, 0
      %422 = vst.msk [vmem:[#allocation3 + $0x1ec] sm:$0xf] %vm216, 0
      %423 = vst.msk [vmem:[#allocation3 + $0x210] sm:$0xf] %vm216, 0
      %424 = vst.msk [vmem:[#allocation3 + $0x234] sm:$0xf] %vm216, 0
      %425 = vst.msk [vmem:[#allocation3 + $0x258] sm:$0xf] %vm216, 0
      %426 = vst.msk [vmem:[#allocation3 + $0x27c] sm:$0xf] %vm216, 0
      %427 = vst.msk [vmem:[#allocation3 + $0x2a0] sm:$0xf] %vm216, 0
      %428 = vst.msk [vmem:[#allocation3 + $0x2c4] sm:$0xf] %vm216, 0
      %429 = vst.msk [vmem:[#allocation3 + $0x2e8] sm:$0xf] %vm216, 0
      %430 = vst.msk [vmem:[#allocation3 + $0x30c] sm:$0xf] %vm216, 0
      %431 = vst.msk [vmem:[#allocation3 + $0x330] sm:$0xf] %vm216, 0
      %432 = vst.msk [vmem:[#allocation3 + $0x354] sm:$0xf] %vm216, 0
      %433 = vst.msk [vmem:[#allocation3 + $0x378] sm:$0xf] %vm216, 0
      %434 = vst.msk [vmem:[#allocation3 + $0x39c] sm:$0xf] %vm216, 0
      %435 = vst.msk [vmem:[#allocation3 + $0x3c0] sm:$0xf] %vm216, 0
      %436 = vst.msk [vmem:[#allocation3 + $0x3e4] sm:$0xf] %vm216, 0
      %437 = vst.msk [vmem:[#allocation3 + $0x408] sm:$0xf] %vm216, 0
      %438 = vst.msk [vmem:[#allocation3 + $0x42c] sm:$0xf] %vm216, 0
      %439 = vst.msk [vmem:[#allocation3 + $0x450] sm:$0xf] %vm216, 0
      %440 = vst.msk [vmem:[#allocation3 + $0x474] sm:$0xf] %vm216, 0
      %441 = vst.msk [vmem:[#allocation3 + $0x1c] sm:$0xf] %vm216, 0
      %442 = vst.msk [vmem:[#allocation3 + $0x40] sm:$0xf] %vm216, 0
      %443 = vst.msk [vmem:[#allocation3 + $0x64] sm:$0xf] %vm216, 0
      %444 = vst.msk [vmem:[#allocation3 + $0x88] sm:$0xf] %vm216, 0
      %445 = vst.msk [vmem:[#allocation3 + $0xac] sm:$0xf] %vm216, 0
      %446 = vst.msk [vmem:[#allocation3 + $0xd0] sm:$0xf] %vm216, 0
      %447 = vst.msk [vmem:[#allocation3 + $0xf4] sm:$0xf] %vm216, 0
      %448 = vst.msk [vmem:[#allocation3 + $0x118] sm:$0xf] %vm216, 0
      %449 = vst.msk [vmem:[#allocation3 + $0x13c] sm:$0xf] %vm216, 0
      %450 = vst.msk [vmem:[#allocation3 + $0x160] sm:$0xf] %vm216, 0
      %451 = vst.msk [vmem:[#allocation3 + $0x184] sm:$0xf] %vm216, 0
      %452 = vst.msk [vmem:[#allocation3 + $0x1a8] sm:$0xf] %vm216, 0
      %453 = vst.msk [vmem:[#allocation3 + $0x1cc] sm:$0xf] %vm216, 0
      %454 = vst.msk [vmem:[#allocation3 + $0x1f0] sm:$0xf] %vm216, 0
      %455 = vst.msk [vmem:[#allocation3 + $0x214] sm:$0xf] %vm216, 0
      %456 = vst.msk [vmem:[#allocation3 + $0x238] sm:$0xf] %vm216, 0
      %457 = vst.msk [vmem:[#allocation3 + $0x25c] sm:$0xf] %vm216, 0
      %458 = vst.msk [vmem:[#allocation3 + $0x280] sm:$0xf] %vm216, 0
      %459 = vst.msk [vmem:[#allocation3 + $0x2a4] sm:$0xf] %vm216, 0
      %460 = vst.msk [vmem:[#allocation3 + $0x2c8] sm:$0xf] %vm216, 0
      %461 = vst.msk [vmem:[#allocation3 + $0x2ec] sm:$0xf] %vm216, 0
      %462 = vst.msk [vmem:[#allocation3 + $0x310] sm:$0xf] %vm216, 0
      %463 = vst.msk [vmem:[#allocation3 + $0x334] sm:$0xf] %vm216, 0
      %464 = vst.msk [vmem:[#allocation3 + $0x358] sm:$0xf] %vm216, 0
      %465 = vst.msk [vmem:[#allocation3 + $0x37c] sm:$0xf] %vm216, 0
      %466 = vst.msk [vmem:[#allocation3 + $0x3a0] sm:$0xf] %vm216, 0
      %467 = vst.msk [vmem:[#allocation3 + $0x3c4] sm:$0xf] %vm216, 0
      %468 = vst.msk [vmem:[#allocation3 + $0x3e8] sm:$0xf] %vm216, 0
      %469 = vst.msk [vmem:[#allocation3 + $0x40c] sm:$0xf] %vm216, 0
      %470 = vst.msk [vmem:[#allocation3 + $0x430] sm:$0xf] %vm216, 0
      %471 = vst.msk [vmem:[#allocation3 + $0x454] sm:$0xf] %vm216, 0
      %472 = vst.msk [vmem:[#allocation3 + $0x478] sm:$0xf] %vm216, 0
      %473 = vst.msk [vmem:[#allocation3 + $0x20] sm:$0xf] %vm216, 0
      %474 = vst.msk [vmem:[#allocation3 + $0x44] sm:$0xf] %vm216, 0
      %475 = vst.msk [vmem:[#allocation3 + $0x68] sm:$0xf] %vm216, 0
      %476 = vst.msk [vmem:[#allocation3 + $0x8c] sm:$0xf] %vm216, 0
      %477 = vst.msk [vmem:[#allocation3 + $0xb0] sm:$0xf] %vm216, 0
      %478 = vst.msk [vmem:[#allocation3 + $0xd4] sm:$0xf] %vm216, 0
      %479 = vst.msk [vmem:[#allocation3 + $0xf8] sm:$0xf] %vm216, 0
      %480 = vst.msk [vmem:[#allocation3 + $0x11c] sm:$0xf] %vm216, 0
      %481 = vst.msk [vmem:[#allocation3 + $0x140] sm:$0xf] %vm216, 0
      %482 = vst.msk [vmem:[#allocation3 + $0x164] sm:$0xf] %vm216, 0
      %483 = vst.msk [vmem:[#allocation3 + $0x188] sm:$0xf] %vm216, 0
      %484 = vst.msk [vmem:[#allocation3 + $0x1ac] sm:$0xf] %vm216, 0
      %485 = vst.msk [vmem:[#allocation3 + $0x1d0] sm:$0xf] %vm216, 0
      %486 = vst.msk [vmem:[#allocation3 + $0x1f4] sm:$0xf] %vm216, 0
      %487 = vst.msk [vmem:[#allocation3 + $0x218] sm:$0xf] %vm216, 0
      %488 = vst.msk [vmem:[#allocation3 + $0x23c] sm:$0xf] %vm216, 0
      %489 = vst.msk [vmem:[#allocation3 + $0x260] sm:$0xf] %vm216, 0
      %490 = vst.msk [vmem:[#allocation3 + $0x284] sm:$0xf] %vm216, 0
      %491 = vst.msk [vmem:[#allocation3 + $0x2a8] sm:$0xf] %vm216, 0
      %492 = vst.msk [vmem:[#allocation3 + $0x2cc] sm:$0xf] %vm216, 0
      %493 = vst.msk [vmem:[#allocation3 + $0x2f0] sm:$0xf] %vm216, 0
      %494 = vst.msk [vmem:[#allocation3 + $0x314] sm:$0xf] %vm216, 0
      %495 = vst.msk [vmem:[#allocation3 + $0x338] sm:$0xf] %vm216, 0
      %496 = vst.msk [vmem:[#allocation3 + $0x35c] sm:$0xf] %vm216, 0
      %497 = vst.msk [vmem:[#allocation3 + $0x380] sm:$0xf] %vm216, 0
      %498 = vst.msk [vmem:[#allocation3 + $0x3a4] sm:$0xf] %vm216, 0
      %499 = vst.msk [vmem:[#allocation3 + $0x3c8] sm:$0xf] %vm216, 0
      %500 = vst.msk [vmem:[#allocation3 + $0x3ec] sm:$0xf] %vm216, 0
      %501 = vst.msk [vmem:[#allocation3 + $0x410] sm:$0xf] %vm216, 0
      %502 = vst.msk [vmem:[#allocation3 + $0x434] sm:$0xf] %vm216, 0
      %503 = vst.msk [vmem:[#allocation3 + $0x458] sm:$0xf] %vm216, 0
      %504 = vst.msk [vmem:[#allocation3 + $0x47c] sm:$0xf] %vm216, 0
      %v505 = vld [vmem:[%s209] sm:$0xf]
      %v506 = vld [vmem:[%s205] sm:$0xff]
      %v507 = vld [vmem:[%s205 + $0x8] sm:$0xff]
      %v508 = vld [vmem:[%s205 + $0x10] sm:$0xff]
      %v509 = vld [vmem:[%s205 + $0x18] sm:$0xff]
      %v510 = vld [vmem:[%s205 + $0x20] sm:$0xff]
      %v511 = vld [vmem:[%s205 + $0x28] sm:$0xff]
      %v512 = vld [vmem:[%s205 + $0x30] sm:$0xff]
      %v513 = vld [vmem:[%s205 + $0x38] sm:$0xff]
      %v514 = vld [vmem:[%s205 + $0x40] sm:$0xff]
      %v515 = vld [vmem:[%s205 + $0x48] sm:$0xff]
      %v516 = vld [vmem:[%s205 + $0x50] sm:$0xff]
      %v517 = vld [vmem:[%s205 + $0x58] sm:$0xff]
      %v518 = vld [vmem:[%s205 + $0x60] sm:$0xff]
      %v519 = vld [vmem:[%s205 + $0x68] sm:$0xff]
      %v520 = vld [vmem:[%s205 + $0x70] sm:$0xff]
      %v521 = vld [vmem:[%s205 + $0x78] sm:$0xff]
      %v522 = vld [vmem:[%s205 + $0x80] sm:$0xff]
      %v523 = vld [vmem:[%s205 + $0x88] sm:$0xff]
      %v524 = vld [vmem:[%s205 + $0x90] sm:$0xff]
      %v525 = vld [vmem:[%s205 + $0x98] sm:$0xff]
      %v526 = vld [vmem:[%s205 + $0xa0] sm:$0xff]
      %v527 = vld [vmem:[%s205 + $0xa8] sm:$0xff]
      %v528 = vld [vmem:[%s205 + $0xb0] sm:$0xff]
      %v529 = vld [vmem:[%s205 + $0xb8] sm:$0xff]
      %v530 = vld [vmem:[%s205 + $0xc0] sm:$0xff]
      %v531 = vld [vmem:[%s205 + $0xc8] sm:$0xff]
      %v532 = vld [vmem:[%s205 + $0xd0] sm:$0xff]
      %v533 = vld [vmem:[%s205 + $0xd8] sm:$0xff]
      %v534 = vld [vmem:[%s205 + $0xe0] sm:$0xff]
      %v535 = vld [vmem:[%s205 + $0xe8] sm:$0xff]
      %v536 = vld [vmem:[%s205 + $0xf0] sm:$0xff]
      %v537 = vld [vmem:[%s205 + $0xf8] sm:$0xff]
      %v538 = vpack.c.bf16 %v507, %v506
      %v539 = vpack.c.bf16 %v509, %v508
      %v540 = vpack.c.bf16 %v511, %v510
      %v541 = vpack.c.bf16 %v513, %v512
      %v542 = vpack.c.bf16 %v515, %v514
      %v543 = vpack.c.bf16 %v517, %v516
      %v544 = vpack.c.bf16 %v519, %v518
      %v545 = vpack.c.bf16 %v521, %v520
      %v546 = vpack.c.bf16 %v523, %v522
      %v547 = vpack.c.bf16 %v525, %v524
      %v548 = vpack.c.bf16 %v527, %v526
      %v549 = vpack.c.bf16 %v529, %v528
      %v550 = vpack.c.bf16 %v531, %v530
      %v551 = vpack.c.bf16 %v533, %v532
      %v552 = vpack.c.bf16 %v535, %v534
      %v553 = vpack.c.bf16 %v537, %v536
      %v570 = vunpack.c.l.b16 %v538
      %v571 = vunpack.c.h.b16 %v538
      %v572 = vunpack.c.l.b16 %v539
      %v573 = vunpack.c.h.b16 %v539
      %v574 = vunpack.c.l.b16 %v540
      %v575 = vunpack.c.h.b16 %v540
      %v576 = vunpack.c.l.b16 %v541
      %v577 = vunpack.c.h.b16 %v541
      %v578 = vunpack.c.l.b16 %v542
      %v579 = vunpack.c.h.b16 %v542
      %v580 = vunpack.c.l.b16 %v543
      %v581 = vunpack.c.h.b16 %v543
      %v582 = vunpack.c.l.b16 %v544
      %v583 = vunpack.c.h.b16 %v544
      %v584 = vunpack.c.l.b16 %v545
      %v585 = vunpack.c.h.b16 %v545
      %v586 = vunpack.c.l.b16 %v546
      %v587 = vunpack.c.h.b16 %v546
      %v588 = vunpack.c.l.b16 %v547
      %v589 = vunpack.c.h.b16 %v547
      %v590 = vunpack.c.l.b16 %v548
      %v591 = vunpack.c.h.b16 %v548
      %v592 = vunpack.c.l.b16 %v549
      %v593 = vunpack.c.h.b16 %v549
      %v594 = vunpack.c.l.b16 %v550
      %v595 = vunpack.c.h.b16 %v550
      %v596 = vunpack.c.l.b16 %v551
      %v597 = vunpack.c.h.b16 %v551
      %v598 = vunpack.c.l.b16 %v552
      %v599 = vunpack.c.h.b16 %v552
      %v600 = vunpack.c.l.b16 %v553
      %v601 = vunpack.c.h.b16 %v553
      %v602 = vpack.c.b16 %v570, %v570
      %v603 = vpack.c.b16 %v571, %v571
      %v604 = vpack.c.b16 %v572, %v572
      %v605 = vpack.c.b16 %v573, %v573
      %v606 = vpack.c.b16 %v574, %v574
      %v607 = vpack.c.b16 %v575, %v575
      %v608 = vpack.c.b16 %v576, %v576
      %v609 = vpack.c.b16 %v577, %v577
      %v610 = vpack.c.b16 %v578, %v578
      %v611 = vpack.c.b16 %v579, %v579
      %v612 = vpack.c.b16 %v580, %v580
      %v613 = vpack.c.b16 %v581, %v581
      %v614 = vpack.c.b16 %v582, %v582
      %v615 = vpack.c.b16 %v583, %v583
      %v616 = vpack.c.b16 %v584, %v584
      %v617 = vpack.c.b16 %v585, %v585
      %v618 = vpack.c.b16 %v586, %v586
      %v619 = vpack.c.b16 %v587, %v587
      %v620 = vpack.c.b16 %v588, %v588
      %v621 = vpack.c.b16 %v589, %v589
      %v622 = vpack.c.b16 %v590, %v590
      %v623 = vpack.c.b16 %v591, %v591
      %v624 = vpack.c.b16 %v592, %v592
      %v625 = vpack.c.b16 %v593, %v593
      %v626 = vpack.c.b16 %v594, %v594
      %v627 = vpack.c.b16 %v595, %v595
      %v628 = vpack.c.b16 %v596, %v596
      %v629 = vpack.c.b16 %v597, %v597
      %v630 = vpack.c.b16 %v598, %v598
      %v631 = vpack.c.b16 %v599, %v599
      %v632 = vpack.c.b16 %v600, %v600
      %v633 = vpack.c.b16 %v601, %v601
      %vm634 = vsmask.f32 256
      %vm635 = vsmask.f32 4368
      %vm636 = vmor %vm634, %vm635
      %v638 = vshrl.u32 %v602, 16
      %v640 = vrot.slane %v638, 7
      %v641 = vshll.u32 %v602, 16
      %v643 = vor.u32 %v640, %v641
      %v644 = vrot.slane %v640, 4
      %v646 = vshrl.u32 %v603, 16
      %v648 = vrot.slane %v646, 7
      %v649 = vshll.u32 %v603, 16
      %v651 = vor.u32 %v648, %v649
      %v652 = vsel %vm636, %v644, %v651
      %v653 = vrot.slane %v648, 4
      %v655 = vshrl.u32 %v604, 16
      %v657 = vrot.slane %v655, 7
      %v658 = vshll.u32 %v604, 16
      %v660 = vor.u32 %v657, %v658
      %v661 = vrot.slane %v657, 4
      %v663 = vshrl.u32 %v605, 16
      %v665 = vrot.slane %v663, 7
      %v666 = vshll.u32 %v605, 16
      %v668 = vor.u32 %v665, %v666
      %v669 = vsel %vm636, %v661, %v668
      %v670 = vrot.slane %v665, 4
      %v672 = vshrl.u32 %v606, 16
      %v674 = vrot.slane %v672, 7
      %v675 = vshll.u32 %v606, 16
      %v677 = vor.u32 %v674, %v675
      %v678 = vrot.slane %v674, 4
      %v680 = vshrl.u32 %v607, 16
      %v682 = vrot.slane %v680, 7
      %v683 = vshll.u32 %v607, 16
      %v685 = vor.u32 %v682, %v683
      %v686 = vsel %vm636, %v678, %v685
      %v687 = vrot.slane %v682, 4
      %v689 = vshrl.u32 %v608, 16
      %v691 = vrot.slane %v689, 7
      %v692 = vshll.u32 %v608, 16
      %v694 = vor.u32 %v691, %v692
      %v695 = vrot.slane %v691, 4
      %v697 = vshrl.u32 %v609, 16
      %v699 = vrot.slane %v697, 7
      %v700 = vshll.u32 %v609, 16
      %v702 = vor.u32 %v699, %v700
      %v703 = vsel %vm636, %v695, %v702
      %v704 = vrot.slane %v699, 4
      %v706 = vshrl.u32 %v610, 16
      %v708 = vrot.slane %v706, 7
      %v709 = vshll.u32 %v610, 16
      %v711 = vor.u32 %v708, %v709
      %v712 = vrot.slane %v708, 4
      %v714 = vshrl.u32 %v611, 16
      %v716 = vrot.slane %v714, 7
      %v717 = vshll.u32 %v611, 16
      %v719 = vor.u32 %v716, %v717
      %v720 = vsel %vm636, %v712, %v719
      %v721 = vrot.slane %v716, 4
      %v723 = vshrl.u32 %v612, 16
      %v725 = vrot.slane %v723, 7
      %v726 = vshll.u32 %v612, 16
      %v728 = vor.u32 %v725, %v726
      %v729 = vrot.slane %v725, 4
      %v731 = vshrl.u32 %v613, 16
      %v733 = vrot.slane %v731, 7
      %v734 = vshll.u32 %v613, 16
      %v736 = vor.u32 %v733, %v734
      %v737 = vsel %vm636, %v729, %v736
      %v738 = vrot.slane %v733, 4
      %v740 = vshrl.u32 %v614, 16
      %v742 = vrot.slane %v740, 7
      %v743 = vshll.u32 %v614, 16
      %v745 = vor.u32 %v742, %v743
      %v746 = vrot.slane %v742, 4
      %v748 = vshrl.u32 %v615, 16
      %v750 = vrot.slane %v748, 7
      %v751 = vshll.u32 %v615, 16
      %v753 = vor.u32 %v750, %v751
      %v754 = vsel %vm636, %v746, %v753
      %v755 = vrot.slane %v750, 4
      %v757 = vshrl.u32 %v616, 16
      %v759 = vrot.slane %v757, 7
      %v760 = vshll.u32 %v616, 16
      %v762 = vor.u32 %v759, %v760
      %v763 = vrot.slane %v759, 4
      %v765 = vshrl.u32 %v617, 16
      %v767 = vrot.slane %v765, 7
      %v768 = vshll.u32 %v617, 16
      %v770 = vor.u32 %v767, %v768
      %v771 = vsel %vm636, %v763, %v770
      %v772 = vrot.slane %v767, 4
      %v774 = vshrl.u32 %v618, 16
      %v776 = vrot.slane %v774, 7
      %v777 = vshll.u32 %v618, 16
      %v779 = vor.u32 %v776, %v777
      %v780 = vrot.slane %v776, 4
      %v782 = vshrl.u32 %v619, 16
      %v784 = vrot.slane %v782, 7
      %v785 = vshll.u32 %v619, 16
      %v787 = vor.u32 %v784, %v785
      %v788 = vsel %vm636, %v780, %v787
      %v789 = vrot.slane %v784, 4
      %v791 = vshrl.u32 %v620, 16
      %v793 = vrot.slane %v791, 7
      %v794 = vshll.u32 %v620, 16
      %v796 = vor.u32 %v793, %v794
      %v797 = vrot.slane %v793, 4
      %v799 = vshrl.u32 %v621, 16
      %v801 = vrot.slane %v799, 7
      %v802 = vshll.u32 %v621, 16
      %v804 = vor.u32 %v801, %v802
      %v805 = vsel %vm636, %v797, %v804
      %v806 = vrot.slane %v801, 4
      %v808 = vshrl.u32 %v622, 16
      %v810 = vrot.slane %v808, 7
      %v811 = vshll.u32 %v622, 16
      %v813 = vor.u32 %v810, %v811
      %v814 = vrot.slane %v810, 4
      %v816 = vshrl.u32 %v623, 16
      %v818 = vrot.slane %v816, 7
      %v819 = vshll.u32 %v623, 16
      %v821 = vor.u32 %v818, %v819
      %v822 = vsel %vm636, %v814, %v821
      %v823 = vrot.slane %v818, 4
      %v825 = vshrl.u32 %v624, 16
      %v827 = vrot.slane %v825, 7
      %v828 = vshll.u32 %v624, 16
      %v830 = vor.u32 %v827, %v828
      %v831 = vrot.slane %v827, 4
      %v833 = vshrl.u32 %v625, 16
      %v835 = vrot.slane %v833, 7
      %v836 = vshll.u32 %v625, 16
      %v838 = vor.u32 %v835, %v836
      %v839 = vsel %vm636, %v831, %v838
      %v840 = vrot.slane %v835, 4
      %v842 = vshrl.u32 %v626, 16
      %v844 = vrot.slane %v842, 7
      %v845 = vshll.u32 %v626, 16
      %v847 = vor.u32 %v844, %v845
      %v848 = vrot.slane %v844, 4
      %v850 = vshrl.u32 %v627, 16
      %v852 = vrot.slane %v850, 7
      %v853 = vshll.u32 %v627, 16
      %v855 = vor.u32 %v852, %v853
      %v856 = vsel %vm636, %v848, %v855
      %v857 = vrot.slane %v852, 4
      %v859 = vshrl.u32 %v628, 16
      %v861 = vrot.slane %v859, 7
      %v862 = vshll.u32 %v628, 16
      %v864 = vor.u32 %v861, %v862
      %v865 = vrot.slane %v861, 4
      %v867 = vshrl.u32 %v629, 16
      %v869 = vrot.slane %v867, 7
      %v870 = vshll.u32 %v629, 16
      %v872 = vor.u32 %v869, %v870
      %v873 = vsel %vm636, %v865, %v872
      %v874 = vrot.slane %v869, 4
      %v876 = vshrl.u32 %v630, 16
      %v878 = vrot.slane %v876, 7
      %v879 = vshll.u32 %v630, 16
      %v881 = vor.u32 %v878, %v879
      %v882 = vrot.slane %v878, 4
      %v884 = vshrl.u32 %v631, 16
      %v886 = vrot.slane %v884, 7
      %v887 = vshll.u32 %v631, 16
      %v889 = vor.u32 %v886, %v887
      %v890 = vsel %vm636, %v882, %v889
      %v891 = vrot.slane %v886, 4
      %v893 = vshrl.u32 %v632, 16
      %v895 = vrot.slane %v893, 7
      %v896 = vshll.u32 %v632, 16
      %v898 = vor.u32 %v895, %v896
      %v899 = vrot.slane %v895, 4
      %v901 = vshrl.u32 %v633, 16
      %v903 = vrot.slane %v901, 7
      %v904 = vshll.u32 %v633, 16
      %v906 = vor.u32 %v903, %v904
      %v907 = vsel %vm636, %v899, %v906
      %v908 = vrot.slane %v903, 4
      %s957 = scalar_lea.vmem [#allocation2], 12
      %vm958 = vcmask 27648
      %vm959 = vsmask.f32 7938
      %vm960 = vmand %vm958, %vm959
      %v961 = vld [vmem:[%s957] sm:$0xf]
      %v962 = vsel %vm960, %v643, %v961
      %963 = vst [vmem:[%s957] sm:$0xf] %v962
      %vm964 = vcmask 27648
      %965 = vst.msk [vmem:[%s957 + $0x4] sm:$0xf] %vm964, %v652
      %vm966 = vcmask 24576
      %vm967 = vmand %vm966, %vm634
      %v968 = vld [vmem:[%s957 + $0x8] sm:$0x1]
      %v969 = vsel %vm967, %v653, %v968
      %970 = vst [vmem:[%s957 + $0x8] sm:$0x1] %v969
      %v971 = vld [vmem:[%s957 + $0xc] sm:$0xf]
      %v972 = vsel %vm960, %v660, %v971
      %973 = vst [vmem:[%s957 + $0xc] sm:$0xf] %v972
      %974 = vst.msk [vmem:[%s957 + $0x10] sm:$0xf] %vm964, %v669
      %v975 = vld [vmem:[%s957 + $0x14] sm:$0x1]
      %v976 = vsel %vm967, %v670, %v975
      %977 = vst [vmem:[%s957 + $0x14] sm:$0x1] %v976
      %v978 = vld [vmem:[%s957 + $0x18] sm:$0xf]
      %v979 = vsel %vm960, %v677, %v978
      %980 = vst [vmem:[%s957 + $0x18] sm:$0xf] %v979
      %981 = vst.msk [vmem:[%s957 + $0x1c] sm:$0xf] %vm964, %v686
      %v982 = vld [vmem:[%s957 + $0x20] sm:$0x1]
      %v983 = vsel %vm967, %v687, %v982
      %984 = vst [vmem:[%s957 + $0x20] sm:$0x1] %v983
      %v985 = vld [vmem:[%s957 + $0x24] sm:$0xf]
      %v986 = vsel %vm960, %v694, %v985
      %987 = vst [vmem:[%s957 + $0x24] sm:$0xf] %v986
      %988 = vst.msk [vmem:[%s957 + $0x28] sm:$0xf] %vm964, %v703
      %v989 = vld [vmem:[%s957 + $0x2c] sm:$0x1]
      %v990 = vsel %vm967, %v704, %v989
      %991 = vst [vmem:[%s957 + $0x2c] sm:$0x1] %v990
      %v992 = vld [vmem:[%s957 + $0x30] sm:$0xf]
      %v993 = vsel %vm960, %v711, %v992
      %994 = vst [vmem:[%s957 + $0x30] sm:$0xf] %v993
      %995 = vst.msk [vmem:[%s957 + $0x34] sm:$0xf] %vm964, %v720
      %v996 = vld [vmem:[%s957 + $0x38] sm:$0x1]
      %v997 = vsel %vm967, %v721, %v996
      %998 = vst [vmem:[%s957 + $0x38] sm:$0x1] %v997
      %v999 = vld [vmem:[%s957 + $0x3c] sm:$0xf]
      %v1000 = vsel %vm960, %v728, %v999
      %1001 = vst [vmem:[%s957 + $0x3c] sm:$0xf] %v1000
      %1002 = vst.msk [vmem:[%s957 + $0x40] sm:$0xf] %vm964, %v737
      %v1003 = vld [vmem:[%s957 + $0x44] sm:$0x1]
      %v1004 = vsel %vm967, %v738, %v1003
      %1005 = vst [vmem:[%s957 + $0x44] sm:$0x1] %v1004
      %v1006 = vld [vmem:[%s957 + $0x48] sm:$0xf]
      %v1007 = vsel %vm960, %v745, %v1006
      %1008 = vst [vmem:[%s957 + $0x48] sm:$0xf] %v1007
      %1009 = vst.msk [vmem:[%s957 + $0x4c] sm:$0xf] %vm964, %v754
      %v1010 = vld [vmem:[%s957 + $0x50] sm:$0x1]
      %v1011 = vsel %vm967, %v755, %v1010
      %1012 = vst [vmem:[%s957 + $0x50] sm:$0x1] %v1011
      %v1013 = vld [vmem:[%s957 + $0x54] sm:$0xf]
      %v1014 = vsel %vm960, %v762, %v1013
      %1015 = vst [vmem:[%s957 + $0x54] sm:$0xf] %v1014
      %1016 = vst.msk [vmem:[%s957 + $0x58] sm:$0xf] %vm964, %v771
      %v1017 = vld [vmem:[%s957 + $0x5c] sm:$0x1]
      %v1018 = vsel %vm967, %v772, %v1017
      %1019 = vst [vmem:[%s957 + $0x5c] sm:$0x1] %v1018
      %v1020 = vld [vmem:[%s957 + $0x60] sm:$0xf]
      %v1021 = vsel %vm960, %v779, %v1020
      %1022 = vst [vmem:[%s957 + $0x60] sm:$0xf] %v1021
      %1023 = vst.msk [vmem:[%s957 + $0x64] sm:$0xf] %vm964, %v788
      %v1024 = vld [vmem:[%s957 + $0x68] sm:$0x1]
      %v1025 = vsel %vm967, %v789, %v1024
      %1026 = vst [vmem:[%s957 + $0x68] sm:$0x1] %v1025
      %v1027 = vld [vmem:[%s957 + $0x6c] sm:$0xf]
      %v1028 = vsel %vm960, %v796, %v1027
      %1029 = vst [vmem:[%s957 + $0x6c] sm:$0xf] %v1028
      %1030 = vst.msk [vmem:[%s957 + $0x70] sm:$0xf] %vm964, %v805
      %v1031 = vld [vmem:[%s957 + $0x74] sm:$0x1]
      %v1032 = vsel %vm967, %v806, %v1031
      %1033 = vst [vmem:[%s957 + $0x74] sm:$0x1] %v1032
      %v1034 = vld [vmem:[%s957 + $0x78] sm:$0xf]
      %v1035 = vsel %vm960, %v813, %v1034
      %1036 = vst [vmem:[%s957 + $0x78] sm:$0xf] %v1035
      %1037 = vst.msk [vmem:[%s957 + $0x7c] sm:$0xf] %vm964, %v822
      %v1038 = vld [vmem:[%s957 + $0x80] sm:$0x1]
      %v1039 = vsel %vm967, %v823, %v1038
      %1040 = vst [vmem:[%s957 + $0x80] sm:$0x1] %v1039
      %v1041 = vld [vmem:[%s957 + $0x84] sm:$0xf]
      %v1042 = vsel %vm960, %v830, %v1041
      %1043 = vst [vmem:[%s957 + $0x84] sm:$0xf] %v1042
      %1044 = vst.msk [vmem:[%s957 + $0x88] sm:$0xf] %vm964, %v839
      %v1045 = vld [vmem:[%s957 + $0x8c] sm:$0x1]
      %v1046 = vsel %vm967, %v840, %v1045
      %1047 = vst [vmem:[%s957 + $0x8c] sm:$0x1] %v1046
      %v1048 = vld [vmem:[%s957 + $0x90] sm:$0xf]
      %v1049 = vsel %vm960, %v847, %v1048
      %1050 = vst [vmem:[%s957 + $0x90] sm:$0xf] %v1049
      %1051 = vst.msk [vmem:[%s957 + $0x94] sm:$0xf] %vm964, %v856
      %v1052 = vld [vmem:[%s957 + $0x98] sm:$0x1]
      %v1053 = vsel %vm967, %v857, %v1052
      %1054 = vst [vmem:[%s957 + $0x98] sm:$0x1] %v1053
      %v1055 = vld [vmem:[%s957 + $0x9c] sm:$0xf]
      %v1056 = vsel %vm960, %v864, %v1055
      %1057 = vst [vmem:[%s957 + $0x9c] sm:$0xf] %v1056
      %1058 = vst.msk [vmem:[%s957 + $0xa0] sm:$0xf] %vm964, %v873
      %v1059 = vld [vmem:[%s957 + $0xa4] sm:$0x1]
      %v1060 = vsel %vm967, %v874, %v1059
      %1061 = vst [vmem:[%s957 + $0xa4] sm:$0x1] %v1060
      %v1062 = vld [vmem:[%s957 + $0xa8] sm:$0xf]
      %v1063 = vsel %vm960, %v881, %v1062
      %1064 = vst [vmem:[%s957 + $0xa8] sm:$0xf] %v1063
      %1065 = vst.msk [vmem:[%s957 + $0xac] sm:$0xf] %vm964, %v890
      %v1066 = vld [vmem:[%s957 + $0xb0] sm:$0x1]
      %v1067 = vsel %vm967, %v891, %v1066
      %1068 = vst [vmem:[%s957 + $0xb0] sm:$0x1] %v1067
      %v1069 = vld [vmem:[%s957 + $0xb4] sm:$0xf]
      %v1070 = vsel %vm960, %v898, %v1069
      %1071 = vst [vmem:[%s957 + $0xb4] sm:$0xf] %v1070
      %1072 = vst.msk [vmem:[%s957 + $0xb8] sm:$0xf] %vm964, %v907
      %v1073 = vld [vmem:[%s957 + $0xbc] sm:$0x1]
      %v1074 = vsel %vm967, %v908, %v1073
      %1075 = vst [vmem:[%s957 + $0xbc] sm:$0x1] %v1074
      %s1076 = scalar_lea.vmem [#allocation2], 24
      %v1077 = vld [vmem:[%s1076] sm:$0xf]
      %v1078 = vld [vmem:[%s1076 + $0x4] sm:$0xf]
      %v1079 = vld [vmem:[%s1076 + $0x8] sm:$0x1]
      %v1080 = vld [vmem:[#allocation2] sm:$0xf]
      %v1081 = vsel %vm960, %v1077, %v1080
      %1082 = vst [vmem:[#allocation2] sm:$0xf] %v1081
      %1083 = vst.msk [vmem:[#allocation2 + $0x4] sm:$0xf] %vm964, %v1078
      %v1084 = vld [vmem:[#allocation2 + $0x8] sm:$0x1]
      %v1085 = vsel %vm967, %v1079, %v1084
      %1086 = vst [vmem:[#allocation2 + $0x8] sm:$0x1] %v1085
      %s1087 = scalar_lea.vmem [#allocation2], 180
      %v1088 = vld [vmem:[%s1087] sm:$0xf]
      %v1089 = vld [vmem:[%s1087 + $0x4] sm:$0xf]
      %v1090 = vld [vmem:[%s1087 + $0x8] sm:$0x1]
      %s1091 = scalar_lea.vmem [#allocation2], 204
      %v1092 = vld [vmem:[%s1091] sm:$0xf]
      %v1093 = vsel %vm960, %v1088, %v1092
      %1094 = vst [vmem:[%s1091] sm:$0xf] %v1093
      %1095 = vst.msk [vmem:[%s1091 + $0x4] sm:$0xf] %vm964, %v1089
      %v1096 = vld [vmem:[%s1091 + $0x8] sm:$0x1]
      %v1097 = vsel %vm967, %v1090, %v1096
      %1098 = vst [vmem:[%s1091 + $0x8] sm:$0x1] %v1097
      %v1099 = vld [vmem:[#allocation2] sm:$0x2]
      %v1100 = vld [vmem:[#allocation2 + $0xc] sm:$0x2]
      %v1101 = vld [vmem:[#allocation2 + $0x18] sm:$0x2]
      %v1102 = vld [vmem:[#allocation2 + $0x24] sm:$0x2]
      %v1103 = vld [vmem:[#allocation2 + $0x30] sm:$0x2]
      %v1104 = vld [vmem:[#allocation2 + $0x3c] sm:$0x2]
      %v1105 = vld [vmem:[#allocation2 + $0x48] sm:$0x2]
      %v1106 = vld [vmem:[#allocation2 + $0x54] sm:$0x2]
      %v1107 = vld [vmem:[#allocation2 + $0x60] sm:$0x2]
      %v1108 = vld [vmem:[#allocation2 + $0x6c] sm:$0x2]
      %v1109 = vld [vmem:[#allocation2 + $0x78] sm:$0x2]
      %v1110 = vld [vmem:[#allocation2 + $0x84] sm:$0x2]
      %v1111 = vld [vmem:[#allocation2 + $0x90] sm:$0x2]
      %v1112 = vld [vmem:[#allocation2 + $0x9c] sm:$0x2]
      %v1113 = vld [vmem:[#allocation2 + $0xa8] sm:$0x2]
      %v1114 = vld [vmem:[#allocation2 + $0xb4] sm:$0x2]
      %v1115 = vld [vmem:[#allocation2 + $0xc0] sm:$0x2]
      %v1116 = vld [vmem:[#allocation2 + $0xcc] sm:$0x2]
      %v1135 = vrot.slane %v1099, 5
      %v1136 = vrot.slane %v1135, 4
      %v1137 = vrot.slane %v1100, 5
      %v1138 = vrot.slane %v1137, 4
      %v1139 = vrot.slane %v1101, 5
      %v1140 = vrot.slane %v1139, 4
      %v1141 = vrot.slane %v1102, 5
      %v1142 = vrot.slane %v1141, 4
      %v1143 = vrot.slane %v1103, 5
      %v1144 = vrot.slane %v1143, 4
      %v1145 = vrot.slane %v1104, 5
      %v1146 = vrot.slane %v1145, 4
      %v1147 = vrot.slane %v1105, 5
      %v1148 = vrot.slane %v1147, 4
      %v1149 = vrot.slane %v1106, 5
      %v1150 = vrot.slane %v1149, 4
      %v1151 = vrot.slane %v1107, 5
      %v1152 = vrot.slane %v1151, 4
      %v1153 = vrot.slane %v1108, 5
      %v1154 = vrot.slane %v1153, 4
      %v1155 = vrot.slane %v1109, 5
      %v1156 = vrot.slane %v1155, 4
      %v1157 = vrot.slane %v1110, 5
      %v1158 = vrot.slane %v1157, 4
      %v1159 = vrot.slane %v1111, 5
      %v1160 = vrot.slane %v1159, 4
      %v1161 = vrot.slane %v1112, 5
      %v1162 = vrot.slane %v1161, 4
      %v1163 = vrot.slane %v1113, 5
      %v1164 = vrot.slane %v1163, 4
      %v1165 = vrot.slane %v1114, 5
      %v1166 = vrot.slane %v1165, 4
      %v1167 = vrot.slane %v1115, 5
      %v1168 = vrot.slane %v1167, 4
      %v1169 = vrot.slane %v1116, 5
      %v1170 = vrot.slane %v1169, 4
      %v1189 = vld [vmem:[#allocation2] sm:$0x1]
      %v1190 = vsel %vm967, %v1136, %v1189
      %1191 = vst [vmem:[#allocation2] sm:$0x1] %v1190
      %v1192 = vld [vmem:[#allocation2 + $0xc] sm:$0x1]
      %v1193 = vsel %vm967, %v1138, %v1192
      %1194 = vst [vmem:[#allocation2 + $0xc] sm:$0x1] %v1193
      %v1195 = vld [vmem:[#allocation2 + $0x18] sm:$0x1]
      %v1196 = vsel %vm967, %v1140, %v1195
      %1197 = vst [vmem:[#allocation2 + $0x18] sm:$0x1] %v1196
      %v1198 = vld [vmem:[#allocation2 + $0x24] sm:$0x1]
      %v1199 = vsel %vm967, %v1142, %v1198
      %1200 = vst [vmem:[#allocation2 + $0x24] sm:$0x1] %v1199
      %v1201 = vld [vmem:[#allocation2 + $0x30] sm:$0x1]
      %v1202 = vsel %vm967, %v1144, %v1201
      %1203 = vst [vmem:[#allocation2 + $0x30] sm:$0x1] %v1202
      %v1204 = vld [vmem:[#allocation2 + $0x3c] sm:$0x1]
      %v1205 = vsel %vm967, %v1146, %v1204
      %1206 = vst [vmem:[#allocation2 + $0x3c] sm:$0x1] %v1205
      %v1207 = vld [vmem:[#allocation2 + $0x48] sm:$0x1]
      %v1208 = vsel %vm967, %v1148, %v1207
      %1209 = vst [vmem:[#allocation2 + $0x48] sm:$0x1] %v1208
      %v1210 = vld [vmem:[#allocation2 + $0x54] sm:$0x1]
      %v1211 = vsel %vm967, %v1150, %v1210
      %1212 = vst [vmem:[#allocation2 + $0x54] sm:$0x1] %v1211
      %v1213 = vld [vmem:[#allocation2 + $0x60] sm:$0x1]
      %v1214 = vsel %vm967, %v1152, %v1213
      %1215 = vst [vmem:[#allocation2 + $0x60] sm:$0x1] %v1214
      %v1216 = vld [vmem:[#allocation2 + $0x6c] sm:$0x1]
      %v1217 = vsel %vm967, %v1154, %v1216
      %1218 = vst [vmem:[#allocation2 + $0x6c] sm:$0x1] %v1217
      %v1219 = vld [vmem:[#allocation2 + $0x78] sm:$0x1]
      %v1220 = vsel %vm967, %v1156, %v1219
      %1221 = vst [vmem:[#allocation2 + $0x78] sm:$0x1] %v1220
      %v1222 = vld [vmem:[#allocation2 + $0x84] sm:$0x1]
      %v1223 = vsel %vm967, %v1158, %v1222
      %1224 = vst [vmem:[#allocation2 + $0x84] sm:$0x1] %v1223
      %v1225 = vld [vmem:[#allocation2 + $0x90] sm:$0x1]
      %v1226 = vsel %vm967, %v1160, %v1225
      %1227 = vst [vmem:[#allocation2 + $0x90] sm:$0x1] %v1226
      %v1228 = vld [vmem:[#allocation2 + $0x9c] sm:$0x1]
      %v1229 = vsel %vm967, %v1162, %v1228
      %1230 = vst [vmem:[#allocation2 + $0x9c] sm:$0x1] %v1229
      %v1231 = vld [vmem:[#allocation2 + $0xa8] sm:$0x1]
      %v1232 = vsel %vm967, %v1164, %v1231
      %1233 = vst [vmem:[#allocation2 + $0xa8] sm:$0x1] %v1232
      %v1234 = vld [vmem:[#allocation2 + $0xb4] sm:$0x1]
      %v1235 = vsel %vm967, %v1166, %v1234
      %1236 = vst [vmem:[#allocation2 + $0xb4] sm:$0x1] %v1235
      %v1237 = vld [vmem:[#allocation2 + $0xc0] sm:$0x1]
      %v1238 = vsel %vm967, %v1168, %v1237
      %1239 = vst [vmem:[#allocation2 + $0xc0] sm:$0x1] %v1238
      %v1240 = vld [vmem:[#allocation2 + $0xcc] sm:$0x1]
      %v1241 = vsel %vm967, %v1170, %v1240
      %1242 = vst [vmem:[#allocation2 + $0xcc] sm:$0x1] %v1241
      %v1243 = vld [vmem:[#allocation2 + $0x4] sm:$0x8]
      %v1244 = vld [vmem:[#allocation2 + $0x10] sm:$0x8]
      %v1245 = vld [vmem:[#allocation2 + $0x1c] sm:$0x8]
      %v1246 = vld [vmem:[#allocation2 + $0x28] sm:$0x8]
      %v1247 = vld [vmem:[#allocation2 + $0x34] sm:$0x8]
      %v1248 = vld [vmem:[#allocation2 + $0x40] sm:$0x8]
      %v1249 = vld [vmem:[#allocation2 + $0x4c] sm:$0x8]
      %v1250 = vld [vmem:[#allocation2 + $0x58] sm:$0x8]
      %v1251 = vld [vmem:[#allocation2 + $0x64] sm:$0x8]
      %v1252 = vld [vmem:[#allocation2 + $0x70] sm:$0x8]
      %v1253 = vld [vmem:[#allocation2 + $0x7c] sm:$0x8]
      %v1254 = vld [vmem:[#allocation2 + $0x88] sm:$0x8]
      %v1255 = vld [vmem:[#allocation2 + $0x94] sm:$0x8]
      %v1256 = vld [vmem:[#allocation2 + $0xa0] sm:$0x8]
      %v1257 = vld [vmem:[#allocation2 + $0xac] sm:$0x8]
      %v1258 = vld [vmem:[#allocation2 + $0xb8] sm:$0x8]
      %v1259 = vld [vmem:[#allocation2 + $0xc4] sm:$0x8]
      %v1260 = vld [vmem:[#allocation2 + $0xd0] sm:$0x8]
      %v1279 = vrot.slane %v1243, 7
      %v1280 = vrot.slane %v1279, 4
      %v1281 = vrot.slane %v1244, 7
      %v1282 = vrot.slane %v1281, 4
      %v1283 = vrot.slane %v1245, 7
      %v1284 = vrot.slane %v1283, 4
      %v1285 = vrot.slane %v1246, 7
      %v1286 = vrot.slane %v1285, 4
      %v1287 = vrot.slane %v1247, 7
      %v1288 = vrot.slane %v1287, 4
      %v1289 = vrot.slane %v1248, 7
      %v1290 = vrot.slane %v1289, 4
      %v1291 = vrot.slane %v1249, 7
      %v1292 = vrot.slane %v1291, 4
      %v1293 = vrot.slane %v1250, 7
      %v1294 = vrot.slane %v1293, 4
      %v1295 = vrot.slane %v1251, 7
      %v1296 = vrot.slane %v1295, 4
      %v1297 = vrot.slane %v1252, 7
      %v1298 = vrot.slane %v1297, 4
      %v1299 = vrot.slane %v1253, 7
      %v1300 = vrot.slane %v1299, 4
      %v1301 = vrot.slane %v1254, 7
      %v1302 = vrot.slane %v1301, 4
      %v1303 = vrot.slane %v1255, 7
      %v1304 = vrot.slane %v1303, 4
      %v1305 = vrot.slane %v1256, 7
      %v1306 = vrot.slane %v1305, 4
      %v1307 = vrot.slane %v1257, 7
      %v1308 = vrot.slane %v1307, 4
      %v1309 = vrot.slane %v1258, 7
      %v1310 = vrot.slane %v1309, 4
      %v1311 = vrot.slane %v1259, 7
      %v1312 = vrot.slane %v1311, 4
      %v1313 = vrot.slane %v1260, 7
      %v1314 = vrot.slane %v1313, 4
      %vm1333 = vmand %vm966, %vm959
      %v1334 = vld [vmem:[#allocation2 + $0x8] sm:$0x1]
      %v1335 = vsel %vm1333, %v1280, %v1334
      %1336 = vst [vmem:[#allocation2 + $0x8] sm:$0x1] %v1335
      %v1337 = vld [vmem:[#allocation2 + $0x14] sm:$0x1]
      %v1338 = vsel %vm1333, %v1282, %v1337
      %1339 = vst [vmem:[#allocation2 + $0x14] sm:$0x1] %v1338
      %v1340 = vld [vmem:[#allocation2 + $0x20] sm:$0x1]
      %v1341 = vsel %vm1333, %v1284, %v1340
      %1342 = vst [vmem:[#allocation2 + $0x20] sm:$0x1] %v1341
      %v1343 = vld [vmem:[#allocation2 + $0x2c] sm:$0x1]
      %v1344 = vsel %vm1333, %v1286, %v1343
      %1345 = vst [vmem:[#allocation2 + $0x2c] sm:$0x1] %v1344
      %v1346 = vld [vmem:[#allocation2 + $0x38] sm:$0x1]
      %v1347 = vsel %vm1333, %v1288, %v1346
      %1348 = vst [vmem:[#allocation2 + $0x38] sm:$0x1] %v1347
      %v1349 = vld [vmem:[#allocation2 + $0x44] sm:$0x1]
      %v1350 = vsel %vm1333, %v1290, %v1349
      %1351 = vst [vmem:[#allocation2 + $0x44] sm:$0x1] %v1350
      %v1352 = vld [vmem:[#allocation2 + $0x50] sm:$0x1]
      %v1353 = vsel %vm1333, %v1292, %v1352
      %1354 = vst [vmem:[#allocation2 + $0x50] sm:$0x1] %v1353
      %v1355 = vld [vmem:[#allocation2 + $0x5c] sm:$0x1]
      %v1356 = vsel %vm1333, %v1294, %v1355
      %1357 = vst [vmem:[#allocation2 + $0x5c] sm:$0x1] %v1356
      %v1358 = vld [vmem:[#allocation2 + $0x68] sm:$0x1]
      %v1359 = vsel %vm1333, %v1296, %v1358
      %1360 = vst [vmem:[#allocation2 + $0x68] sm:$0x1] %v1359
      %v1361 = vld [vmem:[#allocation2 + $0x74] sm:$0x1]
      %v1362 = vsel %vm1333, %v1298, %v1361
      %1363 = vst [vmem:[#allocation2 + $0x74] sm:$0x1] %v1362
      %v1364 = vld [vmem:[#allocation2 + $0x80] sm:$0x1]
      %v1365 = vsel %vm1333, %v1300, %v1364
      %1366 = vst [vmem:[#allocation2 + $0x80] sm:$0x1] %v1365
      %v1367 = vld [vmem:[#allocation2 + $0x8c] sm:$0x1]
      %v1368 = vsel %vm1333, %v1302, %v1367
      %1369 = vst [vmem:[#allocation2 + $0x8c] sm:$0x1] %v1368
      %v1370 = vld [vmem:[#allocation2 + $0x98] sm:$0x1]
      %v1371 = vsel %vm1333, %v1304, %v1370
      %1372 = vst [vmem:[#allocation2 + $0x98] sm:$0x1] %v1371
      %v1373 = vld [vmem:[#allocation2 + $0xa4] sm:$0x1]
      %v1374 = vsel %vm1333, %v1306, %v1373
      %1375 = vst [vmem:[#allocation2 + $0xa4] sm:$0x1] %v1374
      %v1376 = vld [vmem:[#allocation2 + $0xb0] sm:$0x1]
      %v1377 = vsel %vm1333, %v1308, %v1376
      %1378 = vst [vmem:[#allocation2 + $0xb0] sm:$0x1] %v1377
      %v1379 = vld [vmem:[#allocation2 + $0xbc] sm:$0x1]
      %v1380 = vsel %vm1333, %v1310, %v1379
      %1381 = vst [vmem:[#allocation2 + $0xbc] sm:$0x1] %v1380
      %v1382 = vld [vmem:[#allocation2 + $0xc8] sm:$0x1]
      %v1383 = vsel %vm1333, %v1312, %v1382
      %1384 = vst [vmem:[#allocation2 + $0xc8] sm:$0x1] %v1383
      %v1385 = vld [vmem:[#allocation2 + $0xd4] sm:$0x1]
      %v1386 = vsel %vm1333, %v1314, %v1385
      %1387 = vst [vmem:[#allocation2 + $0xd4] sm:$0x1] %v1386
      %v1388 = vld [vmem:[#allocation2] sm:$0xf]
      %v1389 = vld [vmem:[#allocation2 + $0x4] sm:$0xf]
      %v1390 = vld [vmem:[#allocation2 + $0xc] sm:$0xf]
      %v1391 = vld [vmem:[#allocation2 + $0x10] sm:$0xf]
      %v1392 = vld [vmem:[#allocation2 + $0x18] sm:$0xf]
      %v1393 = vld [vmem:[#allocation2 + $0x1c] sm:$0xf]
      %v1394 = vld [vmem:[#allocation2 + $0x24] sm:$0xf]
      %v1395 = vld [vmem:[#allocation2 + $0x28] sm:$0xf]
      %v1396 = vld [vmem:[#allocation2 + $0x30] sm:$0xf]
      %v1397 = vld [vmem:[#allocation2 + $0x34] sm:$0xf]
      %v1398 = vld [vmem:[#allocation2 + $0x3c] sm:$0xf]
      %v1399 = vld [vmem:[#allocation2 + $0x40] sm:$0xf]
      %v1400 = vld [vmem:[#allocation2 + $0x48] sm:$0xf]
      %v1401 = vld [vmem:[#allocation2 + $0x4c] sm:$0xf]
      %v1402 = vld [vmem:[#allocation2 + $0x54] sm:$0xf]
      %v1403 = vld [vmem:[#allocation2 + $0x58] sm:$0xf]
      %v1404 = vld [vmem:[#allocation2 + $0x60] sm:$0xf]
      %v1405 = vld [vmem:[#allocation2 + $0x64] sm:$0xf]
      %v1406 = vld [vmem:[#allocation2 + $0x6c] sm:$0xf]
      %v1407 = vld [vmem:[#allocation2 + $0x70] sm:$0xf]
      %v1408 = vld [vmem:[#allocation2 + $0x78] sm:$0xf]
      %v1409 = vld [vmem:[#allocation2 + $0x7c] sm:$0xf]
      %v1410 = vld [vmem:[#allocation2 + $0x84] sm:$0xf]
      %v1411 = vld [vmem:[#allocation2 + $0x88] sm:$0xf]
      %v1412 = vld [vmem:[#allocation2 + $0x90] sm:$0xf]
      %v1413 = vld [vmem:[#allocation2 + $0x94] sm:$0xf]
      %v1414 = vld [vmem:[#allocation2 + $0x9c] sm:$0xf]
      %v1415 = vld [vmem:[#allocation2 + $0xa0] sm:$0xf]
      %v1416 = vld [vmem:[#allocation2 + $0xa8] sm:$0xf]
      %v1417 = vld [vmem:[#allocation2 + $0xac] sm:$0xf]
      %v1418 = vld [vmem:[#allocation2 + $0xb4] sm:$0xf]
      %v1419 = vld [vmem:[#allocation2 + $0xb8] sm:$0xf]
      %1420 = vst.msk [vmem:[#allocation3] sm:$0xf] %vm964, %v1388
      %1421 = vst.msk [vmem:[#allocation3 + $0x24] sm:$0xf] %vm964, %v1389
      %1422 = vst.msk [vmem:[#allocation3 + $0x48] sm:$0xf] %vm964, %v1390
      %1423 = vst.msk [vmem:[#allocation3 + $0x6c] sm:$0xf] %vm964, %v1391
      %1424 = vst.msk [vmem:[#allocation3 + $0x90] sm:$0xf] %vm964, %v1392
      %1425 = vst.msk [vmem:[#allocation3 + $0xb4] sm:$0xf] %vm964, %v1393
      %1426 = vst.msk [vmem:[#allocation3 + $0xd8] sm:$0xf] %vm964, %v1394
      %1427 = vst.msk [vmem:[#allocation3 + $0xfc] sm:$0xf] %vm964, %v1395
      %1428 = vst.msk [vmem:[#allocation3 + $0x120] sm:$0xf] %vm964, %v1396
      %1429 = vst.msk [vmem:[#allocation3 + $0x144] sm:$0xf] %vm964, %v1397
      %1430 = vst.msk [vmem:[#allocation3 + $0x168] sm:$0xf] %vm964, %v1398
      %1431 = vst.msk [vmem:[#allocation3 + $0x18c] sm:$0xf] %vm964, %v1399
      %1432 = vst.msk [vmem:[#allocation3 + $0x1b0] sm:$0xf] %vm964, %v1400
      %1433 = vst.msk [vmem:[#allocation3 + $0x1d4] sm:$0xf] %vm964, %v1401
      %1434 = vst.msk [vmem:[#allocation3 + $0x1f8] sm:$0xf] %vm964, %v1402
      %1435 = vst.msk [vmem:[#allocation3 + $0x21c] sm:$0xf] %vm964, %v1403
      %1436 = vst.msk [vmem:[#allocation3 + $0x240] sm:$0xf] %vm964, %v1404
      %1437 = vst.msk [vmem:[#allocation3 + $0x264] sm:$0xf] %vm964, %v1405
      %1438 = vst.msk [vmem:[#allocation3 + $0x288] sm:$0xf] %vm964, %v1406
      %1439 = vst.msk [vmem:[#allocation3 + $0x2ac] sm:$0xf] %vm964, %v1407
      %1440 = vst.msk [vmem:[#allocation3 + $0x2d0] sm:$0xf] %vm964, %v1408
      %1441 = vst.msk [vmem:[#allocation3 + $0x2f4] sm:$0xf] %vm964, %v1409
      %1442 = vst.msk [vmem:[#allocation3 + $0x318] sm:$0xf] %vm964, %v1410
      %1443 = vst.msk [vmem:[#allocation3 + $0x33c] sm:$0xf] %vm964, %v1411
      %1444 = vst.msk [vmem:[#allocation3 + $0x360] sm:$0xf] %vm964, %v1412
      %1445 = vst.msk [vmem:[#allocation3 + $0x384] sm:$0xf] %vm964, %v1413
      %1446 = vst.msk [vmem:[#allocation3 + $0x3a8] sm:$0xf] %vm964, %v1414
      %1447 = vst.msk [vmem:[#allocation3 + $0x3cc] sm:$0xf] %vm964, %v1415
      %1448 = vst.msk [vmem:[#allocation3 + $0x3f0] sm:$0xf] %vm964, %v1416
      %1449 = vst.msk [vmem:[#allocation3 + $0x414] sm:$0xf] %vm964, %v1417
      %1450 = vst.msk [vmem:[#allocation3 + $0x438] sm:$0xf] %vm964, %v1418
      %1451 = vst.msk [vmem:[#allocation3 + $0x45c] sm:$0xf] %vm964, %v1419
      %v1452 = vld [vmem:[#allocation2] sm:$0xf]
      %v1453 = vld [vmem:[#allocation2 + $0x4] sm:$0xf]
      %v1454 = vld [vmem:[#allocation2 + $0x8] sm:$0x1]
      %v1455 = vld [vmem:[#allocation2 + $0xc] sm:$0xf]
      %v1456 = vld [vmem:[#allocation2 + $0x10] sm:$0xf]
      %v1457 = vld [vmem:[#allocation2 + $0x14] sm:$0x1]
      %v1458 = vld [vmem:[#allocation2 + $0x18] sm:$0xf]
      %v1459 = vld [vmem:[#allocation2 + $0x1c] sm:$0xf]
      %v1460 = vld [vmem:[#allocation2 + $0x20] sm:$0x1]
      %v1461 = vld [vmem:[#allocation2 + $0x24] sm:$0xf]
      %v1462 = vld [vmem:[#allocation2 + $0x28] sm:$0xf]
      %v1463 = vld [vmem:[#allocation2 + $0x2c] sm:$0x1]
      %v1464 = vld [vmem:[#allocation2 + $0x30] sm:$0xf]
      %v1465 = vld [vmem:[#allocation2 + $0x34] sm:$0xf]
      %v1466 = vld [vmem:[#allocation2 + $0x38] sm:$0x1]
      %v1467 = vld [vmem:[#allocation2 + $0x3c] sm:$0xf]
      %v1468 = vld [vmem:[#allocation2 + $0x40] sm:$0xf]
      %v1469 = vld [vmem:[#allocation2 + $0x44] sm:$0x1]
      %v1470 = vld [vmem:[#allocation2 + $0x48] sm:$0xf]
      %v1471 = vld [vmem:[#allocation2 + $0x4c] sm:$0xf]
      %v1472 = vld [vmem:[#allocation2 + $0x50] sm:$0x1]
      %v1473 = vld [vmem:[#allocation2 + $0x54] sm:$0xf]
      %v1474 = vld [vmem:[#allocation2 + $0x58] sm:$0xf]
      %v1475 = vld [vmem:[#allocation2 + $0x5c] sm:$0x1]
      %v1476 = vld [vmem:[#allocation2 + $0x60] sm:$0xf]
      %v1477 = vld [vmem:[#allocation2 + $0x64] sm:$0xf]
      %v1478 = vld [vmem:[#allocation2 + $0x68] sm:$0x1]
      %v1479 = vld [vmem:[#allocation2 + $0x6c] sm:$0xf]
      %v1480 = vld [vmem:[#allocation2 + $0x70] sm:$0xf]
      %v1481 = vld [vmem:[#allocation2 + $0x74] sm:$0x1]
      %v1482 = vld [vmem:[#allocation2 + $0x78] sm:$0xf]
      %v1483 = vld [vmem:[#allocation2 + $0x7c] sm:$0xf]
      %v1484 = vld [vmem:[#allocation2 + $0x80] sm:$0x1]
      %v1485 = vld [vmem:[#allocation2 + $0x84] sm:$0xf]
      %v1486 = vld [vmem:[#allocation2 + $0x88] sm:$0xf]
      %v1487 = vld [vmem:[#allocation2 + $0x8c] sm:$0x1]
      %v1488 = vld [vmem:[#allocation2 + $0x90] sm:$0xf]
      %v1489 = vld [vmem:[#allocation2 + $0x94] sm:$0xf]
      %v1490 = vld [vmem:[#allocation2 + $0x98] sm:$0x1]
      %v1491 = vld [vmem:[#allocation2 + $0x9c] sm:$0xf]
      %v1492 = vld [vmem:[#allocation2 + $0xa0] sm:$0xf]
      %v1493 = vld [vmem:[#allocation2 + $0xa4] sm:$0x1]
      %v1494 = vld [vmem:[#allocation2 + $0xa8] sm:$0xf]
      %v1495 = vld [vmem:[#allocation2 + $0xac] sm:$0xf]
      %v1496 = vld [vmem:[#allocation2 + $0xb0] sm:$0x1]
      %v1497 = vld [vmem:[#allocation2 + $0xb4] sm:$0xf]
      %v1498 = vld [vmem:[#allocation2 + $0xb8] sm:$0xf]
      %v1499 = vld [vmem:[#allocation2 + $0xbc] sm:$0x1]
      %vm1500 = vsmask.f32 3328
      %vm1501 = vsmask.f32 7440
      %vm1502 = vmor %vm1500, %vm1501
      %v1504 = vshrl.u32 %v1452, 16
      %v1506 = vrot.slane %v1504, 4
      %v1507 = vshll.u32 %v1452, 16
      %v1509 = vrot.slane %v1507, 5
      %v1510 = vor.u32 %v1506, %v1509
      %v1511 = vrot.slane %v1510, 4
      %v1513 = vshll.u32 %v1453, 16
      %v1515 = vrot.slane %v1513, 5
      %v1516 = vsel %vm1502, %v1511, %v1515
      %v1517 = vshrl.u32 %v1453, 16
      %v1519 = vrot.slane %v1517, 4
      %v1520 = vor.u32 %v1519, %v1515
      %v1521 = vrot.slane %v1520, 4
      %v1523 = vshll.u32 %v1454, 16
      %v1525 = vrot.slane %v1523, 5
      %v1526 = vsel %vm1502, %v1521, %v1525
      %v1528 = vshrl.u32 %v1455, 16
      %v1530 = vrot.slane %v1528, 4
      %v1531 = vshll.u32 %v1455, 16
      %v1533 = vrot.slane %v1531, 5
      %v1534 = vor.u32 %v1530, %v1533
      %v1535 = vrot.slane %v1534, 4
      %v1537 = vshll.u32 %v1456, 16
      %v1539 = vrot.slane %v1537, 5
      %v1540 = vsel %vm1502, %v1535, %v1539
      %v1541 = vshrl.u32 %v1456, 16
      %v1543 = vrot.slane %v1541, 4
      %v1544 = vor.u32 %v1543, %v1539
      %v1545 = vrot.slane %v1544, 4
      %v1547 = vshll.u32 %v1457, 16
      %v1549 = vrot.slane %v1547, 5
      %v1550 = vsel %vm1502, %v1545, %v1549
      %v1552 = vshrl.u32 %v1458, 16
      %v1554 = vrot.slane %v1552, 4
      %v1555 = vshll.u32 %v1458, 16
      %v1557 = vrot.slane %v1555, 5
      %v1558 = vor.u32 %v1554, %v1557
      %v1559 = vrot.slane %v1558, 4
      %v1561 = vshll.u32 %v1459, 16
      %v1563 = vrot.slane %v1561, 5
      %v1564 = vsel %vm1502, %v1559, %v1563
      %v1565 = vshrl.u32 %v1459, 16
      %v1567 = vrot.slane %v1565, 4
      %v1568 = vor.u32 %v1567, %v1563
      %v1569 = vrot.slane %v1568, 4
      %v1571 = vshll.u32 %v1460, 16
      %v1573 = vrot.slane %v1571, 5
      %v1574 = vsel %vm1502, %v1569, %v1573
      %v1576 = vshrl.u32 %v1461, 16
      %v1578 = vrot.slane %v1576, 4
      %v1579 = vshll.u32 %v1461, 16
      %v1581 = vrot.slane %v1579, 5
      %v1582 = vor.u32 %v1578, %v1581
      %v1583 = vrot.slane %v1582, 4
      %v1585 = vshll.u32 %v1462, 16
      %v1587 = vrot.slane %v1585, 5
      %v1588 = vsel %vm1502, %v1583, %v1587
      %v1589 = vshrl.u32 %v1462, 16
      %v1591 = vrot.slane %v1589, 4
      %v1592 = vor.u32 %v1591, %v1587
      %v1593 = vrot.slane %v1592, 4
      %v1595 = vshll.u32 %v1463, 16
      %v1597 = vrot.slane %v1595, 5
      %v1598 = vsel %vm1502, %v1593, %v1597
      %v1600 = vshrl.u32 %v1464, 16
      %v1602 = vrot.slane %v1600, 4
      %v1603 = vshll.u32 %v1464, 16
      %v1605 = vrot.slane %v1603, 5
      %v1606 = vor.u32 %v1602, %v1605
      %v1607 = vrot.slane %v1606, 4
      %v1609 = vshll.u32 %v1465, 16
      %v1611 = vrot.slane %v1609, 5
      %v1612 = vsel %vm1502, %v1607, %v1611
      %v1613 = vshrl.u32 %v1465, 16
      %v1615 = vrot.slane %v1613, 4
      %v1616 = vor.u32 %v1615, %v1611
      %v1617 = vrot.slane %v1616, 4
      %v1619 = vshll.u32 %v1466, 16
      %v1621 = vrot.slane %v1619, 5
      %v1622 = vsel %vm1502, %v1617, %v1621
      %v1624 = vshrl.u32 %v1467, 16
      %v1626 = vrot.slane %v1624, 4
      %v1627 = vshll.u32 %v1467, 16
      %v1629 = vrot.slane %v1627, 5
      %v1630 = vor.u32 %v1626, %v1629
      %v1631 = vrot.slane %v1630, 4
      %v1633 = vshll.u32 %v1468, 16
      %v1635 = vrot.slane %v1633, 5
      %v1636 = vsel %vm1502, %v1631, %v1635
      %v1637 = vshrl.u32 %v1468, 16
      %v1639 = vrot.slane %v1637, 4
      %v1640 = vor.u32 %v1639, %v1635
      %v1641 = vrot.slane %v1640, 4
      %v1643 = vshll.u32 %v1469, 16
      %v1645 = vrot.slane %v1643, 5
      %v1646 = vsel %vm1502, %v1641, %v1645
      %v1648 = vshrl.u32 %v1470, 16
      %v1650 = vrot.slane %v1648, 4
      %v1651 = vshll.u32 %v1470, 16
      %v1653 = vrot.slane %v1651, 5
      %v1654 = vor.u32 %v1650, %v1653
      %v1655 = vrot.slane %v1654, 4
      %v1657 = vshll.u32 %v1471, 16
      %v1659 = vrot.slane %v1657, 5
      %v1660 = vsel %vm1502, %v1655, %v1659
      %v1661 = vshrl.u32 %v1471, 16
      %v1663 = vrot.slane %v1661, 4
      %v1664 = vor.u32 %v1663, %v1659
      %v1665 = vrot.slane %v1664, 4
      %v1667 = vshll.u32 %v1472, 16
      %v1669 = vrot.slane %v1667, 5
      %v1670 = vsel %vm1502, %v1665, %v1669
      %v1672 = vshrl.u32 %v1473, 16
      %v1674 = vrot.slane %v1672, 4
      %v1675 = vshll.u32 %v1473, 16
      %v1677 = vrot.slane %v1675, 5
      %v1678 = vor.u32 %v1674, %v1677
      %v1679 = vrot.slane %v1678, 4
      %v1681 = vshll.u32 %v1474, 16
      %v1683 = vrot.slane %v1681, 5
      %v1684 = vsel %vm1502, %v1679, %v1683
      %v1685 = vshrl.u32 %v1474, 16
      %v1687 = vrot.slane %v1685, 4
      %v1688 = vor.u32 %v1687, %v1683
      %v1689 = vrot.slane %v1688, 4
      %v1691 = vshll.u32 %v1475, 16
      %v1693 = vrot.slane %v1691, 5
      %v1694 = vsel %vm1502, %v1689, %v1693
      %v1696 = vshrl.u32 %v1476, 16
      %v1698 = vrot.slane %v1696, 4
      %v1699 = vshll.u32 %v1476, 16
      %v1701 = vrot.slane %v1699, 5
      %v1702 = vor.u32 %v1698, %v1701
      %v1703 = vrot.slane %v1702, 4
      %v1705 = vshll.u32 %v1477, 16
      %v1707 = vrot.slane %v1705, 5
      %v1708 = vsel %vm1502, %v1703, %v1707
      %v1709 = vshrl.u32 %v1477, 16
      %v1711 = vrot.slane %v1709, 4
      %v1712 = vor.u32 %v1711, %v1707
      %v1713 = vrot.slane %v1712, 4
      %v1715 = vshll.u32 %v1478, 16
      %v1717 = vrot.slane %v1715, 5
      %v1718 = vsel %vm1502, %v1713, %v1717
      %v1720 = vshrl.u32 %v1479, 16
      %v1722 = vrot.slane %v1720, 4
      %v1723 = vshll.u32 %v1479, 16
      %v1725 = vrot.slane %v1723, 5
      %v1726 = vor.u32 %v1722, %v1725
      %v1727 = vrot.slane %v1726, 4
      %v1729 = vshll.u32 %v1480, 16
      %v1731 = vrot.slane %v1729, 5
      %v1732 = vsel %vm1502, %v1727, %v1731
      %v1733 = vshrl.u32 %v1480, 16
      %v1735 = vrot.slane %v1733, 4
      %v1736 = vor.u32 %v1735, %v1731
      %v1737 = vrot.slane %v1736, 4
      %v1739 = vshll.u32 %v1481, 16
      %v1741 = vrot.slane %v1739, 5
      %v1742 = vsel %vm1502, %v1737, %v1741
      %v1744 = vshrl.u32 %v1482, 16
      %v1746 = vrot.slane %v1744, 4
      %v1747 = vshll.u32 %v1482, 16
      %v1749 = vrot.slane %v1747, 5
      %v1750 = vor.u32 %v1746, %v1749
      %v1751 = vrot.slane %v1750, 4
      %v1753 = vshll.u32 %v1483, 16
      %v1755 = vrot.slane %v1753, 5
      %v1756 = vsel %vm1502, %v1751, %v1755
      %v1757 = vshrl.u32 %v1483, 16
      %v1759 = vrot.slane %v1757, 4
      %v1760 = vor.u32 %v1759, %v1755
      %v1761 = vrot.slane %v1760, 4
      %v1763 = vshll.u32 %v1484, 16
      %v1765 = vrot.slane %v1763, 5
      %v1766 = vsel %vm1502, %v1761, %v1765
      %v1768 = vshrl.u32 %v1485, 16
      %v1770 = vrot.slane %v1768, 4
      %v1771 = vshll.u32 %v1485, 16
      %v1773 = vrot.slane %v1771, 5
      %v1774 = vor.u32 %v1770, %v1773
      %v1775 = vrot.slane %v1774, 4
      %v1777 = vshll.u32 %v1486, 16
      %v1779 = vrot.slane %v1777, 5
      %v1780 = vsel %vm1502, %v1775, %v1779
      %v1781 = vshrl.u32 %v1486, 16
      %v1783 = vrot.slane %v1781, 4
      %v1784 = vor.u32 %v1783, %v1779
      %v1785 = vrot.slane %v1784, 4
      %v1787 = vshll.u32 %v1487, 16
      %v1789 = vrot.slane %v1787, 5
      %v1790 = vsel %vm1502, %v1785, %v1789
      %v1792 = vshrl.u32 %v1488, 16
      %v1794 = vrot.slane %v1792, 4
      %v1795 = vshll.u32 %v1488, 16
      %v1797 = vrot.slane %v1795, 5
      %v1798 = vor.u32 %v1794, %v1797
      %v1799 = vrot.slane %v1798, 4
      %v1801 = vshll.u32 %v1489, 16
      %v1803 = vrot.slane %v1801, 5
      %v1804 = vsel %vm1502, %v1799, %v1803
      %v1805 = vshrl.u32 %v1489, 16
      %v1807 = vrot.slane %v1805, 4
      %v1808 = vor.u32 %v1807, %v1803
      %v1809 = vrot.slane %v1808, 4
      %v1811 = vshll.u32 %v1490, 16
      %v1813 = vrot.slane %v1811, 5
      %v1814 = vsel %vm1502, %v1809, %v1813
      %v1816 = vshrl.u32 %v1491, 16
      %v1818 = vrot.slane %v1816, 4
      %v1819 = vshll.u32 %v1491, 16
      %v1821 = vrot.slane %v1819, 5
      %v1822 = vor.u32 %v1818, %v1821
      %v1823 = vrot.slane %v1822, 4
      %v1825 = vshll.u32 %v1492, 16
      %v1827 = vrot.slane %v1825, 5
      %v1828 = vsel %vm1502, %v1823, %v1827
      %v1829 = vshrl.u32 %v1492, 16
      %v1831 = vrot.slane %v1829, 4
      %v1832 = vor.u32 %v1831, %v1827
      %v1833 = vrot.slane %v1832, 4
      %v1835 = vshll.u32 %v1493, 16
      %v1837 = vrot.slane %v1835, 5
      %v1838 = vsel %vm1502, %v1833, %v1837
      %v1840 = vshrl.u32 %v1494, 16
      %v1842 = vrot.slane %v1840, 4
      %v1843 = vshll.u32 %v1494, 16
      %v1845 = vrot.slane %v1843, 5
      %v1846 = vor.u32 %v1842, %v1845
      %v1847 = vrot.slane %v1846, 4
      %v1849 = vshll.u32 %v1495, 16
      %v1851 = vrot.slane %v1849, 5
      %v1852 = vsel %vm1502, %v1847, %v1851
      %v1853 = vshrl.u32 %v1495, 16
      %v1855 = vrot.slane %v1853, 4
      %v1856 = vor.u32 %v1855, %v1851
      %v1857 = vrot.slane %v1856, 4
      %v1859 = vshll.u32 %v1496, 16
      %v1861 = vrot.slane %v1859, 5
      %v1862 = vsel %vm1502, %v1857, %v1861
      %v1864 = vshrl.u32 %v1497, 16
      %v1866 = vrot.slane %v1864, 4
      %v1867 = vshll.u32 %v1497, 16
      %v1869 = vrot.slane %v1867, 5
      %v1870 = vor.u32 %v1866, %v1869
      %v1871 = vrot.slane %v1870, 4
      %v1873 = vshll.u32 %v1498, 16
      %v1875 = vrot.slane %v1873, 5
      %v1876 = vsel %vm1502, %v1871, %v1875
      %v1877 = vshrl.u32 %v1498, 16
      %v1879 = vrot.slane %v1877, 4
      %v1880 = vor.u32 %v1879, %v1875
      %v1881 = vrot.slane %v1880, 4
      %v1883 = vshll.u32 %v1499, 16
      %v1885 = vrot.slane %v1883, 5
      %v1886 = vsel %vm1502, %v1881, %v1885
      %1919 = vst.msk [vmem:[#allocation3 + $0x4] sm:$0xf] %vm964, %v1516
      %1920 = vst.msk [vmem:[#allocation3 + $0x28] sm:$0xf] %vm964, %v1526
      %1921 = vst.msk [vmem:[#allocation3 + $0x4c] sm:$0xf] %vm964, %v1540
      %1922 = vst.msk [vmem:[#allocation3 + $0x70] sm:$0xf] %vm964, %v1550
      %1923 = vst.msk [vmem:[#allocation3 + $0x94] sm:$0xf] %vm964, %v1564
      %1924 = vst.msk [vmem:[#allocation3 + $0xb8] sm:$0xf] %vm964, %v1574
      %1925 = vst.msk [vmem:[#allocation3 + $0xdc] sm:$0xf] %vm964, %v1588
      %1926 = vst.msk [vmem:[#allocation3 + $0x100] sm:$0xf] %vm964, %v1598
      %1927 = vst.msk [vmem:[#allocation3 + $0x124] sm:$0xf] %vm964, %v1612
      %1928 = vst.msk [vmem:[#allocation3 + $0x148] sm:$0xf] %vm964, %v1622
      %1929 = vst.msk [vmem:[#allocation3 + $0x16c] sm:$0xf] %vm964, %v1636
      %1930 = vst.msk [vmem:[#allocation3 + $0x190] sm:$0xf] %vm964, %v1646
      %1931 = vst.msk [vmem:[#allocation3 + $0x1b4] sm:$0xf] %vm964, %v1660
      %1932 = vst.msk [vmem:[#allocation3 + $0x1d8] sm:$0xf] %vm964, %v1670
      %1933 = vst.msk [vmem:[#allocation3 + $0x1fc] sm:$0xf] %vm964, %v1684
      %1934 = vst.msk [vmem:[#allocation3 + $0x220] sm:$0xf] %vm964, %v1694
      %1935 = vst.msk [vmem:[#allocation3 + $0x244] sm:$0xf] %vm964, %v1708
      %1936 = vst.msk [vmem:[#allocation3 + $0x268] sm:$0xf] %vm964, %v1718
      %1937 = vst.msk [vmem:[#allocation3 + $0x28c] sm:$0xf] %vm964, %v1732
      %1938 = vst.msk [vmem:[#allocation3 + $0x2b0] sm:$0xf] %vm964, %v1742
      %1939 = vst.msk [vmem:[#allocation3 + $0x2d4] sm:$0xf] %vm964, %v1756
      %1940 = vst.msk [vmem:[#allocation3 + $0x2f8] sm:$0xf] %vm964, %v1766
      %1941 = vst.msk [vmem:[#allocation3 + $0x31c] sm:$0xf] %vm964, %v1780
      %1942 = vst.msk [vmem:[#allocation3 + $0x340] sm:$0xf] %vm964, %v1790
      %1943 = vst.msk [vmem:[#allocation3 + $0x364] sm:$0xf] %vm964, %v1804
      %1944 = vst.msk [vmem:[#allocation3 + $0x388] sm:$0xf] %vm964, %v1814
      %1945 = vst.msk [vmem:[#allocation3 + $0x3ac] sm:$0xf] %vm964, %v1828
      %1946 = vst.msk [vmem:[#allocation3 + $0x3d0] sm:$0xf] %vm964, %v1838
      %1947 = vst.msk [vmem:[#allocation3 + $0x3f4] sm:$0xf] %vm964, %v1852
      %1948 = vst.msk [vmem:[#allocation3 + $0x418] sm:$0xf] %vm964, %v1862
      %1949 = vst.msk [vmem:[#allocation3 + $0x43c] sm:$0xf] %vm964, %v1876
      %1950 = vst.msk [vmem:[#allocation3 + $0x460] sm:$0xf] %vm964, %v1886
      %v1951 = vld [vmem:[#allocation2] sm:$0xe]
      %v1952 = vld [vmem:[#allocation2 + $0x4] sm:$0xf]
      %v1953 = vld [vmem:[#allocation2 + $0x8] sm:$0x1]
      %v1954 = vld [vmem:[#allocation2 + $0xc] sm:$0xe]
      %v1955 = vld [vmem:[#allocation2 + $0x10] sm:$0xf]
      %v1956 = vld [vmem:[#allocation2 + $0x14] sm:$0x1]
      %v1957 = vld [vmem:[#allocation2 + $0x18] sm:$0xe]
      %v1958 = vld [vmem:[#allocation2 + $0x1c] sm:$0xf]
      %v1959 = vld [vmem:[#allocation2 + $0x20] sm:$0x1]
      %v1960 = vld [vmem:[#allocation2 + $0x24] sm:$0xe]
      %v1961 = vld [vmem:[#allocation2 + $0x28] sm:$0xf]
      %v1962 = vld [vmem:[#allocation2 + $0x2c] sm:$0x1]
      %v1963 = vld [vmem:[#allocation2 + $0x30] sm:$0xe]
      %v1964 = vld [vmem:[#allocation2 + $0x34] sm:$0xf]
      %v1965 = vld [vmem:[#allocation2 + $0x38] sm:$0x1]
      %v1966 = vld [vmem:[#allocation2 + $0x3c] sm:$0xe]
      %v1967 = vld [vmem:[#allocation2 + $0x40] sm:$0xf]
      %v1968 = vld [vmem:[#allocation2 + $0x44] sm:$0x1]
      %v1969 = vld [vmem:[#allocation2 + $0x48] sm:$0xe]
      %v1970 = vld [vmem:[#allocation2 + $0x4c] sm:$0xf]
      %v1971 = vld [vmem:[#allocation2 + $0x50] sm:$0x1]
      %v1972 = vld [vmem:[#allocation2 + $0x54] sm:$0xe]
      %v1973 = vld [vmem:[#allocation2 + $0x58] sm:$0xf]
      %v1974 = vld [vmem:[#allocation2 + $0x5c] sm:$0x1]
      %v1975 = vld [vmem:[#allocation2 + $0x60] sm:$0xe]
      %v1976 = vld [vmem:[#allocation2 + $0x64] sm:$0xf]
      %v1977 = vld [vmem:[#allocation2 + $0x68] sm:$0x1]
      %v1978 = vld [vmem:[#allocation2 + $0x6c] sm:$0xe]
      %v1979 = vld [vmem:[#allocation2 + $0x70] sm:$0xf]
      %v1980 = vld [vmem:[#allocation2 + $0x74] sm:$0x1]
      %v1981 = vld [vmem:[#allocation2 + $0x78] sm:$0xe]
      %v1982 = vld [vmem:[#allocation2 + $0x7c] sm:$0xf]
      %v1983 = vld [vmem:[#allocation2 + $0x80] sm:$0x1]
      %v1984 = vld [vmem:[#allocation2 + $0x84] sm:$0xe]
      %v1985 = vld [vmem:[#allocation2 + $0x88] sm:$0xf]
      %v1986 = vld [vmem:[#allocation2 + $0x8c] sm:$0x1]
      %v1987 = vld [vmem:[#allocation2 + $0x90] sm:$0xe]
      %v1988 = vld [vmem:[#allocation2 + $0x94] sm:$0xf]
      %v1989 = vld [vmem:[#allocation2 + $0x98] sm:$0x1]
      %v1990 = vld [vmem:[#allocation2 + $0x9c] sm:$0xe]
      %v1991 = vld [vmem:[#allocation2 + $0xa0] sm:$0xf]
      %v1992 = vld [vmem:[#allocation2 + $0xa4] sm:$0x1]
      %v1993 = vld [vmem:[#allocation2 + $0xa8] sm:$0xe]
      %v1994 = vld [vmem:[#allocation2 + $0xac] sm:$0xf]
      %v1995 = vld [vmem:[#allocation2 + $0xb0] sm:$0x1]
      %v1996 = vld [vmem:[#allocation2 + $0xb4] sm:$0xe]
      %v1997 = vld [vmem:[#allocation2 + $0xb8] sm:$0xf]
      %v1998 = vld [vmem:[#allocation2 + $0xbc] sm:$0x1]
      %vm2047 = vcmask 1042432
      %vm2048 = vcmask 1046532
      %vm2049 = vmor %vm2047, %vm2048
      %v2050 = vrot.slane %v1951, 5
      %v2051 = vrot.slane %v2050, 4
      %v2052 = vrot.slane %v1952, 5
      %v2053 = vsel %vm2049, %v2051, %v2052
      %v2054 = vrot.slane %v2052, 4
      %v2055 = vrot.slane %v1953, 5
      %v2056 = vsel %vm2049, %v2054, %v2055
      %v2057 = vrot.slane %v1954, 5
      %v2058 = vrot.slane %v2057, 4
      %v2059 = vrot.slane %v1955, 5
      %v2060 = vsel %vm2049, %v2058, %v2059
      %v2061 = vrot.slane %v2059, 4
      %v2062 = vrot.slane %v1956, 5
      %v2063 = vsel %vm2049, %v2061, %v2062
      %v2064 = vrot.slane %v1957, 5
      %v2065 = vrot.slane %v2064, 4
      %v2066 = vrot.slane %v1958, 5
      %v2067 = vsel %vm2049, %v2065, %v2066
      %v2068 = vrot.slane %v2066, 4
      %v2069 = vrot.slane %v1959, 5
      %v2070 = vsel %vm2049, %v2068, %v2069
      %v2071 = vrot.slane %v1960, 5
      %v2072 = vrot.slane %v2071, 4
      %v2073 = vrot.slane %v1961, 5
      %v2074 = vsel %vm2049, %v2072, %v2073
      %v2075 = vrot.slane %v2073, 4
      %v2076 = vrot.slane %v1962, 5
      %v2077 = vsel %vm2049, %v2075, %v2076
      %v2078 = vrot.slane %v1963, 5
      %v2079 = vrot.slane %v2078, 4
      %v2080 = vrot.slane %v1964, 5
      %v2081 = vsel %vm2049, %v2079, %v2080
      %v2082 = vrot.slane %v2080, 4
      %v2083 = vrot.slane %v1965, 5
      %v2084 = vsel %vm2049, %v2082, %v2083
      %v2085 = vrot.slane %v1966, 5
      %v2086 = vrot.slane %v2085, 4
      %v2087 = vrot.slane %v1967, 5
      %v2088 = vsel %vm2049, %v2086, %v2087
      %v2089 = vrot.slane %v2087, 4
      %v2090 = vrot.slane %v1968, 5
      %v2091 = vsel %vm2049, %v2089, %v2090
      %v2092 = vrot.slane %v1969, 5
      %v2093 = vrot.slane %v2092, 4
      %v2094 = vrot.slane %v1970, 5
      %v2095 = vsel %vm2049, %v2093, %v2094
      %v2096 = vrot.slane %v2094, 4
      %v2097 = vrot.slane %v1971, 5
      %v2098 = vsel %vm2049, %v2096, %v2097
      %v2099 = vrot.slane %v1972, 5
      %v2100 = vrot.slane %v2099, 4
      %v2101 = vrot.slane %v1973, 5
      %v2102 = vsel %vm2049, %v2100, %v2101
      %v2103 = vrot.slane %v2101, 4
      %v2104 = vrot.slane %v1974, 5
      %v2105 = vsel %vm2049, %v2103, %v2104
      %v2106 = vrot.slane %v1975, 5
      %v2107 = vrot.slane %v2106, 4
      %v2108 = vrot.slane %v1976, 5
      %v2109 = vsel %vm2049, %v2107, %v2108
      %v2110 = vrot.slane %v2108, 4
      %v2111 = vrot.slane %v1977, 5
      %v2112 = vsel %vm2049, %v2110, %v2111
      %v2113 = vrot.slane %v1978, 5
      %v2114 = vrot.slane %v2113, 4
      %v2115 = vrot.slane %v1979, 5
      %v2116 = vsel %vm2049, %v2114, %v2115
      %v2117 = vrot.slane %v2115, 4
      %v2118 = vrot.slane %v1980, 5
      %v2119 = vsel %vm2049, %v2117, %v2118
      %v2120 = vrot.slane %v1981, 5
      %v2121 = vrot.slane %v2120, 4
      %v2122 = vrot.slane %v1982, 5
      %v2123 = vsel %vm2049, %v2121, %v2122
      %v2124 = vrot.slane %v2122, 4
      %v2125 = vrot.slane %v1983, 5
      %v2126 = vsel %vm2049, %v2124, %v2125
      %v2127 = vrot.slane %v1984, 5
      %v2128 = vrot.slane %v2127, 4
      %v2129 = vrot.slane %v1985, 5
      %v2130 = vsel %vm2049, %v2128, %v2129
      %v2131 = vrot.slane %v2129, 4
      %v2132 = vrot.slane %v1986, 5
      %v2133 = vsel %vm2049, %v2131, %v2132
      %v2134 = vrot.slane %v1987, 5
      %v2135 = vrot.slane %v2134, 4
      %v2136 = vrot.slane %v1988, 5
      %v2137 = vsel %vm2049, %v2135, %v2136
      %v2138 = vrot.slane %v2136, 4
      %v2139 = vrot.slane %v1989, 5
      %v2140 = vsel %vm2049, %v2138, %v2139
      %v2141 = vrot.slane %v1990, 5
      %v2142 = vrot.slane %v2141, 4
      %v2143 = vrot.slane %v1991, 5
      %v2144 = vsel %vm2049, %v2142, %v2143
      %v2145 = vrot.slane %v2143, 4
      %v2146 = vrot.slane %v1992, 5
      %v2147 = vsel %vm2049, %v2145, %v2146
      %v2148 = vrot.slane %v1993, 5
      %v2149 = vrot.slane %v2148, 4
      %v2150 = vrot.slane %v1994, 5
      %v2151 = vsel %vm2049, %v2149, %v2150
      %v2152 = vrot.slane %v2150, 4
      %v2153 = vrot.slane %v1995, 5
      %v2154 = vsel %vm2049, %v2152, %v2153
      %v2155 = vrot.slane %v1996, 5
      %v2156 = vrot.slane %v2155, 4
      %v2157 = vrot.slane %v1997, 5
      %v2158 = vsel %vm2049, %v2156, %v2157
      %v2159 = vrot.slane %v2157, 4
      %v2160 = vrot.slane %v1998, 5
      %v2161 = vsel %vm2049, %v2159, %v2160
      %2194 = vst.msk [vmem:[#allocation3 + $0x8] sm:$0xf] %vm964, %v2053
      %2195 = vst.msk [vmem:[#allocation3 + $0x2c] sm:$0xf] %vm964, %v2056
      %2196 = vst.msk [vmem:[#allocation3 + $0x50] sm:$0xf] %vm964, %v2060
      %2197 = vst.msk [vmem:[#allocation3 + $0x74] sm:$0xf] %vm964, %v2063
      %2198 = vst.msk [vmem:[#allocation3 + $0x98] sm:$0xf] %vm964, %v2067
      %2199 = vst.msk [vmem:[#allocation3 + $0xbc] sm:$0xf] %vm964, %v2070
      %2200 = vst.msk [vmem:[#allocation3 + $0xe0] sm:$0xf] %vm964, %v2074
      %2201 = vst.msk [vmem:[#allocation3 + $0x104] sm:$0xf] %vm964, %v2077
      %2202 = vst.msk [vmem:[#allocation3 + $0x128] sm:$0xf] %vm964, %v2081
      %2203 = vst.msk [vmem:[#allocation3 + $0x14c] sm:$0xf] %vm964, %v2084
      %2204 = vst.msk [vmem:[#allocation3 + $0x170] sm:$0xf] %vm964, %v2088
      %2205 = vst.msk [vmem:[#allocation3 + $0x194] sm:$0xf] %vm964, %v2091
      %2206 = vst.msk [vmem:[#allocation3 + $0x1b8] sm:$0xf] %vm964, %v2095
      %2207 = vst.msk [vmem:[#allocation3 + $0x1dc] sm:$0xf] %vm964, %v2098
      %2208 = vst.msk [vmem:[#allocation3 + $0x200] sm:$0xf] %vm964, %v2102
      %2209 = vst.msk [vmem:[#allocation3 + $0x224] sm:$0xf] %vm964, %v2105
      %2210 = vst.msk [vmem:[#allocation3 + $0x248] sm:$0xf] %vm964, %v2109
      %2211 = vst.msk [vmem:[#allocation3 + $0x26c] sm:$0xf] %vm964, %v2112
      %2212 = vst.msk [vmem:[#allocation3 + $0x290] sm:$0xf] %vm964, %v2116
      %2213 = vst.msk [vmem:[#allocation3 + $0x2b4] sm:$0xf] %vm964, %v2119
      %2214 = vst.msk [vmem:[#allocation3 + $0x2d8] sm:$0xf] %vm964, %v2123
      %2215 = vst.msk [vmem:[#allocation3 + $0x2fc] sm:$0xf] %vm964, %v2126
      %2216 = vst.msk [vmem:[#allocation3 + $0x320] sm:$0xf] %vm964, %v2130
      %2217 = vst.msk [vmem:[#allocation3 + $0x344] sm:$0xf] %vm964, %v2133
      %2218 = vst.msk [vmem:[#allocation3 + $0x368] sm:$0xf] %vm964, %v2137
      %2219 = vst.msk [vmem:[#allocation3 + $0x38c] sm:$0xf] %vm964, %v2140
      %2220 = vst.msk [vmem:[#allocation3 + $0x3b0] sm:$0xf] %vm964, %v2144
      %2221 = vst.msk [vmem:[#allocation3 + $0x3d4] sm:$0xf] %vm964, %v2147
      %2222 = vst.msk [vmem:[#allocation3 + $0x3f8] sm:$0xf] %vm964, %v2151
      %2223 = vst.msk [vmem:[#allocation3 + $0x41c] sm:$0xf] %vm964, %v2154
      %2224 = vst.msk [vmem:[#allocation3 + $0x440] sm:$0xf] %vm964, %v2158
      %2225 = vst.msk [vmem:[#allocation3 + $0x464] sm:$0xf] %vm964, %v2161
      %v2226 = vld [vmem:[%s957] sm:$0xf]
      %v2227 = vld [vmem:[%s957 + $0x4] sm:$0xf]
      %v2228 = vld [vmem:[%s957 + $0xc] sm:$0xf]
      %v2229 = vld [vmem:[%s957 + $0x10] sm:$0xf]
      %v2230 = vld [vmem:[%s957 + $0x18] sm:$0xf]
      %v2231 = vld [vmem:[%s957 + $0x1c] sm:$0xf]
      %v2232 = vld [vmem:[%s957 + $0x24] sm:$0xf]
      %v2233 = vld [vmem:[%s957 + $0x28] sm:$0xf]
      %v2234 = vld [vmem:[%s957 + $0x30] sm:$0xf]
      %v2235 = vld [vmem:[%s957 + $0x34] sm:$0xf]
      %v2236 = vld [vmem:[%s957 + $0x3c] sm:$0xf]
      %v2237 = vld [vmem:[%s957 + $0x40] sm:$0xf]
      %v2238 = vld [vmem:[%s957 + $0x48] sm:$0xf]
      %v2239 = vld [vmem:[%s957 + $0x4c] sm:$0xf]
      %v2240 = vld [vmem:[%s957 + $0x54] sm:$0xf]
      %v2241 = vld [vmem:[%s957 + $0x58] sm:$0xf]
      %v2242 = vld [vmem:[%s957 + $0x60] sm:$0xf]
      %v2243 = vld [vmem:[%s957 + $0x64] sm:$0xf]
      %v2244 = vld [vmem:[%s957 + $0x6c] sm:$0xf]
      %v2245 = vld [vmem:[%s957 + $0x70] sm:$0xf]
      %v2246 = vld [vmem:[%s957 + $0x78] sm:$0xf]
      %v2247 = vld [vmem:[%s957 + $0x7c] sm:$0xf]
      %v2248 = vld [vmem:[%s957 + $0x84] sm:$0xf]
      %v2249 = vld [vmem:[%s957 + $0x88] sm:$0xf]
      %v2250 = vld [vmem:[%s957 + $0x90] sm:$0xf]
      %v2251 = vld [vmem:[%s957 + $0x94] sm:$0xf]
      %v2252 = vld [vmem:[%s957 + $0x9c] sm:$0xf]
      %v2253 = vld [vmem:[%s957 + $0xa0] sm:$0xf]
      %v2254 = vld [vmem:[%s957 + $0xa8] sm:$0xf]
      %v2255 = vld [vmem:[%s957 + $0xac] sm:$0xf]
      %v2256 = vld [vmem:[%s957 + $0xb4] sm:$0xf]
      %v2257 = vld [vmem:[%s957 + $0xb8] sm:$0xf]
      %2258 = vst.msk [vmem:[#allocation3 + $0xc] sm:$0xf] %vm964, %v2226
      %2259 = vst.msk [vmem:[#allocation3 + $0x30] sm:$0xf] %vm964, %v2227
      %2260 = vst.msk [vmem:[#allocation3 + $0x54] sm:$0xf] %vm964, %v2228
      %2261 = vst.msk [vmem:[#allocation3 + $0x78] sm:$0xf] %vm964, %v2229
      %2262 = vst.msk [vmem:[#allocation3 + $0x9c] sm:$0xf] %vm964, %v2230
      %2263 = vst.msk [vmem:[#allocation3 + $0xc0] sm:$0xf] %vm964, %v2231
      %2264 = vst.msk [vmem:[#allocation3 + $0xe4] sm:$0xf] %vm964, %v2232
      %2265 = vst.msk [vmem:[#allocation3 + $0x108] sm:$0xf] %vm964, %v2233
      %2266 = vst.msk [vmem:[#allocation3 + $0x12c] sm:$0xf] %vm964, %v2234
      %2267 = vst.msk [vmem:[#allocation3 + $0x150] sm:$0xf] %vm964, %v2235
      %2268 = vst.msk [vmem:[#allocation3 + $0x174] sm:$0xf] %vm964, %v2236
      %2269 = vst.msk [vmem:[#allocation3 + $0x198] sm:$0xf] %vm964, %v2237
      %2270 = vst.msk [vmem:[#allocation3 + $0x1bc] sm:$0xf] %vm964, %v2238
      %2271 = vst.msk [vmem:[#allocation3 + $0x1e0] sm:$0xf] %vm964, %v2239
      %2272 = vst.msk [vmem:[#allocation3 + $0x204] sm:$0xf] %vm964, %v2240
      %2273 = vst.msk [vmem:[#allocation3 + $0x228] sm:$0xf] %vm964, %v2241
      %2274 = vst.msk [vmem:[#allocation3 + $0x24c] sm:$0xf] %vm964, %v2242
      %2275 = vst.msk [vmem:[#allocation3 + $0x270] sm:$0xf] %vm964, %v2243
      %2276 = vst.msk [vmem:[#allocation3 + $0x294] sm:$0xf] %vm964, %v2244
      %2277 = vst.msk [vmem:[#allocation3 + $0x2b8] sm:$0xf] %vm964, %v2245
      %2278 = vst.msk [vmem:[#allocation3 + $0x2dc] sm:$0xf] %vm964, %v2246
      %2279 = vst.msk [vmem:[#allocation3 + $0x300] sm:$0xf] %vm964, %v2247
      %2280 = vst.msk [vmem:[#allocation3 + $0x324] sm:$0xf] %vm964, %v2248
      %2281 = vst.msk [vmem:[#allocation3 + $0x348] sm:$0xf] %vm964, %v2249
      %2282 = vst.msk [vmem:[#allocation3 + $0x36c] sm:$0xf] %vm964, %v2250
      %2283 = vst.msk [vmem:[#allocation3 + $0x390] sm:$0xf] %vm964, %v2251
      %2284 = vst.msk [vmem:[#allocation3 + $0x3b4] sm:$0xf] %vm964, %v2252
      %2285 = vst.msk [vmem:[#allocation3 + $0x3d8] sm:$0xf] %vm964, %v2253
      %2286 = vst.msk [vmem:[#allocation3 + $0x3fc] sm:$0xf] %vm964, %v2254
      %2287 = vst.msk [vmem:[#allocation3 + $0x420] sm:$0xf] %vm964, %v2255
      %2288 = vst.msk [vmem:[#allocation3 + $0x444] sm:$0xf] %vm964, %v2256
      %2289 = vst.msk [vmem:[#allocation3 + $0x468] sm:$0xf] %vm964, %v2257
      %v2290 = vld [vmem:[%s957] sm:$0xf]
      %v2291 = vld [vmem:[%s957 + $0x4] sm:$0xf]
      %v2292 = vld [vmem:[%s957 + $0x8] sm:$0x1]
      %v2293 = vld [vmem:[%s957 + $0xc] sm:$0xf]
      %v2294 = vld [vmem:[%s957 + $0x10] sm:$0xf]
      %v2295 = vld [vmem:[%s957 + $0x14] sm:$0x1]
      %v2296 = vld [vmem:[%s957 + $0x18] sm:$0xf]
      %v2297 = vld [vmem:[%s957 + $0x1c] sm:$0xf]
      %v2298 = vld [vmem:[%s957 + $0x20] sm:$0x1]
      %v2299 = vld [vmem:[%s957 + $0x24] sm:$0xf]
      %v2300 = vld [vmem:[%s957 + $0x28] sm:$0xf]
      %v2301 = vld [vmem:[%s957 + $0x2c] sm:$0x1]
      %v2302 = vld [vmem:[%s957 + $0x30] sm:$0xf]
      %v2303 = vld [vmem:[%s957 + $0x34] sm:$0xf]
      %v2304 = vld [vmem:[%s957 + $0x38] sm:$0x1]
      %v2305 = vld [vmem:[%s957 + $0x3c] sm:$0xf]
      %v2306 = vld [vmem:[%s957 + $0x40] sm:$0xf]
      %v2307 = vld [vmem:[%s957 + $0x44] sm:$0x1]
      %v2308 = vld [vmem:[%s957 + $0x48] sm:$0xf]
      %v2309 = vld [vmem:[%s957 + $0x4c] sm:$0xf]
      %v2310 = vld [vmem:[%s957 + $0x50] sm:$0x1]
      %v2311 = vld [vmem:[%s957 + $0x54] sm:$0xf]
      %v2312 = vld [vmem:[%s957 + $0x58] sm:$0xf]
      %v2313 = vld [vmem:[%s957 + $0x5c] sm:$0x1]
      %v2314 = vld [vmem:[%s957 + $0x60] sm:$0xf]
      %v2315 = vld [vmem:[%s957 + $0x64] sm:$0xf]
      %v2316 = vld [vmem:[%s957 + $0x68] sm:$0x1]
      %v2317 = vld [vmem:[%s957 + $0x6c] sm:$0xf]
      %v2318 = vld [vmem:[%s957 + $0x70] sm:$0xf]
      %v2319 = vld [vmem:[%s957 + $0x74] sm:$0x1]
      %v2320 = vld [vmem:[%s957 + $0x78] sm:$0xf]
      %v2321 = vld [vmem:[%s957 + $0x7c] sm:$0xf]
      %v2322 = vld [vmem:[%s957 + $0x80] sm:$0x1]
      %v2323 = vld [vmem:[%s957 + $0x84] sm:$0xf]
      %v2324 = vld [vmem:[%s957 + $0x88] sm:$0xf]
      %v2325 = vld [vmem:[%s957 + $0x8c] sm:$0x1]
      %v2326 = vld [vmem:[%s957 + $0x90] sm:$0xf]
      %v2327 = vld [vmem:[%s957 + $0x94] sm:$0xf]
      %v2328 = vld [vmem:[%s957 + $0x98] sm:$0x1]
      %v2329 = vld [vmem:[%s957 + $0x9c] sm:$0xf]
      %v2330 = vld [vmem:[%s957 + $0xa0] sm:$0xf]
      %v2331 = vld [vmem:[%s957 + $0xa4] sm:$0x1]
      %v2332 = vld [vmem:[%s957 + $0xa8] sm:$0xf]
      %v2333 = vld [vmem:[%s957 + $0xac] sm:$0xf]
      %v2334 = vld [vmem:[%s957 + $0xb0] sm:$0x1]
      %v2335 = vld [vmem:[%s957 + $0xb4] sm:$0xf]
      %v2336 = vld [vmem:[%s957 + $0xb8] sm:$0xf]
      %v2337 = vld [vmem:[%s957 + $0xbc] sm:$0x1]
      %v2339 = vshrl.u32 %v2290, 16
      %v2341 = vrot.slane %v2339, 4
      %v2342 = vshll.u32 %v2290, 16
      %v2344 = vrot.slane %v2342, 5
      %v2345 = vor.u32 %v2341, %v2344
      %v2346 = vrot.slane %v2345, 4
      %v2348 = vshll.u32 %v2291, 16
      %v2350 = vrot.slane %v2348, 5
      %v2351 = vsel %vm1502, %v2346, %v2350
      %v2352 = vshrl.u32 %v2291, 16
      %v2354 = vrot.slane %v2352, 4
      %v2355 = vor.u32 %v2354, %v2350
      %v2356 = vrot.slane %v2355, 4
      %v2358 = vshll.u32 %v2292, 16
      %v2360 = vrot.slane %v2358, 5
      %v2361 = vsel %vm1502, %v2356, %v2360
      %v2363 = vshrl.u32 %v2293, 16
      %v2365 = vrot.slane %v2363, 4
      %v2366 = vshll.u32 %v2293, 16
      %v2368 = vrot.slane %v2366, 5
      %v2369 = vor.u32 %v2365, %v2368
      %v2370 = vrot.slane %v2369, 4
      %v2372 = vshll.u32 %v2294, 16
      %v2374 = vrot.slane %v2372, 5
      %v2375 = vsel %vm1502, %v2370, %v2374
      %v2376 = vshrl.u32 %v2294, 16
      %v2378 = vrot.slane %v2376, 4
      %v2379 = vor.u32 %v2378, %v2374
      %v2380 = vrot.slane %v2379, 4
      %v2382 = vshll.u32 %v2295, 16
      %v2384 = vrot.slane %v2382, 5
      %v2385 = vsel %vm1502, %v2380, %v2384
      %v2387 = vshrl.u32 %v2296, 16
      %v2389 = vrot.slane %v2387, 4
      %v2390 = vshll.u32 %v2296, 16
      %v2392 = vrot.slane %v2390, 5
      %v2393 = vor.u32 %v2389, %v2392
      %v2394 = vrot.slane %v2393, 4
      %v2396 = vshll.u32 %v2297, 16
      %v2398 = vrot.slane %v2396, 5
      %v2399 = vsel %vm1502, %v2394, %v2398
      %v2400 = vshrl.u32 %v2297, 16
      %v2402 = vrot.slane %v2400, 4
      %v2403 = vor.u32 %v2402, %v2398
      %v2404 = vrot.slane %v2403, 4
      %v2406 = vshll.u32 %v2298, 16
      %v2408 = vrot.slane %v2406, 5
      %v2409 = vsel %vm1502, %v2404, %v2408
      %v2411 = vshrl.u32 %v2299, 16
      %v2413 = vrot.slane %v2411, 4
      %v2414 = vshll.u32 %v2299, 16
      %v2416 = vrot.slane %v2414, 5
      %v2417 = vor.u32 %v2413, %v2416
      %v2418 = vrot.slane %v2417, 4
      %v2420 = vshll.u32 %v2300, 16
      %v2422 = vrot.slane %v2420, 5
      %v2423 = vsel %vm1502, %v2418, %v2422
      %v2424 = vshrl.u32 %v2300, 16
      %v2426 = vrot.slane %v2424, 4
      %v2427 = vor.u32 %v2426, %v2422
      %v2428 = vrot.slane %v2427, 4
      %v2430 = vshll.u32 %v2301, 16
      %v2432 = vrot.slane %v2430, 5
      %v2433 = vsel %vm1502, %v2428, %v2432
      %v2435 = vshrl.u32 %v2302, 16
      %v2437 = vrot.slane %v2435, 4
      %v2438 = vshll.u32 %v2302, 16
      %v2440 = vrot.slane %v2438, 5
      %v2441 = vor.u32 %v2437, %v2440
      %v2442 = vrot.slane %v2441, 4
      %v2444 = vshll.u32 %v2303, 16
      %v2446 = vrot.slane %v2444, 5
      %v2447 = vsel %vm1502, %v2442, %v2446
      %v2448 = vshrl.u32 %v2303, 16
      %v2450 = vrot.slane %v2448, 4
      %v2451 = vor.u32 %v2450, %v2446
      %v2452 = vrot.slane %v2451, 4
      %v2454 = vshll.u32 %v2304, 16
      %v2456 = vrot.slane %v2454, 5
      %v2457 = vsel %vm1502, %v2452, %v2456
      %v2459 = vshrl.u32 %v2305, 16
      %v2461 = vrot.slane %v2459, 4
      %v2462 = vshll.u32 %v2305, 16
      %v2464 = vrot.slane %v2462, 5
      %v2465 = vor.u32 %v2461, %v2464
      %v2466 = vrot.slane %v2465, 4
      %v2468 = vshll.u32 %v2306, 16
      %v2470 = vrot.slane %v2468, 5
      %v2471 = vsel %vm1502, %v2466, %v2470
      %v2472 = vshrl.u32 %v2306, 16
      %v2474 = vrot.slane %v2472, 4
      %v2475 = vor.u32 %v2474, %v2470
      %v2476 = vrot.slane %v2475, 4
      %v2478 = vshll.u32 %v2307, 16
      %v2480 = vrot.slane %v2478, 5
      %v2481 = vsel %vm1502, %v2476, %v2480
      %v2483 = vshrl.u32 %v2308, 16
      %v2485 = vrot.slane %v2483, 4
      %v2486 = vshll.u32 %v2308, 16
      %v2488 = vrot.slane %v2486, 5
      %v2489 = vor.u32 %v2485, %v2488
      %v2490 = vrot.slane %v2489, 4
      %v2492 = vshll.u32 %v2309, 16
      %v2494 = vrot.slane %v2492, 5
      %v2495 = vsel %vm1502, %v2490, %v2494
      %v2496 = vshrl.u32 %v2309, 16
      %v2498 = vrot.slane %v2496, 4
      %v2499 = vor.u32 %v2498, %v2494
      %v2500 = vrot.slane %v2499, 4
      %v2502 = vshll.u32 %v2310, 16
      %v2504 = vrot.slane %v2502, 5
      %v2505 = vsel %vm1502, %v2500, %v2504
      %v2507 = vshrl.u32 %v2311, 16
      %v2509 = vrot.slane %v2507, 4
      %v2510 = vshll.u32 %v2311, 16
      %v2512 = vrot.slane %v2510, 5
      %v2513 = vor.u32 %v2509, %v2512
      %v2514 = vrot.slane %v2513, 4
      %v2516 = vshll.u32 %v2312, 16
      %v2518 = vrot.slane %v2516, 5
      %v2519 = vsel %vm1502, %v2514, %v2518
      %v2520 = vshrl.u32 %v2312, 16
      %v2522 = vrot.slane %v2520, 4
      %v2523 = vor.u32 %v2522, %v2518
      %v2524 = vrot.slane %v2523, 4
      %v2526 = vshll.u32 %v2313, 16
      %v2528 = vrot.slane %v2526, 5
      %v2529 = vsel %vm1502, %v2524, %v2528
      %v2531 = vshrl.u32 %v2314, 16
      %v2533 = vrot.slane %v2531, 4
      %v2534 = vshll.u32 %v2314, 16
      %v2536 = vrot.slane %v2534, 5
      %v2537 = vor.u32 %v2533, %v2536
      %v2538 = vrot.slane %v2537, 4
      %v2540 = vshll.u32 %v2315, 16
      %v2542 = vrot.slane %v2540, 5
      %v2543 = vsel %vm1502, %v2538, %v2542
      %v2544 = vshrl.u32 %v2315, 16
      %v2546 = vrot.slane %v2544, 4
      %v2547 = vor.u32 %v2546, %v2542
      %v2548 = vrot.slane %v2547, 4
      %v2550 = vshll.u32 %v2316, 16
      %v2552 = vrot.slane %v2550, 5
      %v2553 = vsel %vm1502, %v2548, %v2552
      %v2555 = vshrl.u32 %v2317, 16
      %v2557 = vrot.slane %v2555, 4
      %v2558 = vshll.u32 %v2317, 16
      %v2560 = vrot.slane %v2558, 5
      %v2561 = vor.u32 %v2557, %v2560
      %v2562 = vrot.slane %v2561, 4
      %v2564 = vshll.u32 %v2318, 16
      %v2566 = vrot.slane %v2564, 5
      %v2567 = vsel %vm1502, %v2562, %v2566
      %v2568 = vshrl.u32 %v2318, 16
      %v2570 = vrot.slane %v2568, 4
      %v2571 = vor.u32 %v2570, %v2566
      %v2572 = vrot.slane %v2571, 4
      %v2574 = vshll.u32 %v2319, 16
      %v2576 = vrot.slane %v2574, 5
      %v2577 = vsel %vm1502, %v2572, %v2576
      %v2579 = vshrl.u32 %v2320, 16
      %v2581 = vrot.slane %v2579, 4
      %v2582 = vshll.u32 %v2320, 16
      %v2584 = vrot.slane %v2582, 5
      %v2585 = vor.u32 %v2581, %v2584
      %v2586 = vrot.slane %v2585, 4
      %v2588 = vshll.u32 %v2321, 16
      %v2590 = vrot.slane %v2588, 5
      %v2591 = vsel %vm1502, %v2586, %v2590
      %v2592 = vshrl.u32 %v2321, 16
      %v2594 = vrot.slane %v2592, 4
      %v2595 = vor.u32 %v2594, %v2590
      %v2596 = vrot.slane %v2595, 4
      %v2598 = vshll.u32 %v2322, 16
      %v2600 = vrot.slane %v2598, 5
      %v2601 = vsel %vm1502, %v2596, %v2600
      %v2603 = vshrl.u32 %v2323, 16
      %v2605 = vrot.slane %v2603, 4
      %v2606 = vshll.u32 %v2323, 16
      %v2608 = vrot.slane %v2606, 5
      %v2609 = vor.u32 %v2605, %v2608
      %v2610 = vrot.slane %v2609, 4
      %v2612 = vshll.u32 %v2324, 16
      %v2614 = vrot.slane %v2612, 5
      %v2615 = vsel %vm1502, %v2610, %v2614
      %v2616 = vshrl.u32 %v2324, 16
      %v2618 = vrot.slane %v2616, 4
      %v2619 = vor.u32 %v2618, %v2614
      %v2620 = vrot.slane %v2619, 4
      %v2622 = vshll.u32 %v2325, 16
      %v2624 = vrot.slane %v2622, 5
      %v2625 = vsel %vm1502, %v2620, %v2624
      %v2627 = vshrl.u32 %v2326, 16
      %v2629 = vrot.slane %v2627, 4
      %v2630 = vshll.u32 %v2326, 16
      %v2632 = vrot.slane %v2630, 5
      %v2633 = vor.u32 %v2629, %v2632
      %v2634 = vrot.slane %v2633, 4
      %v2636 = vshll.u32 %v2327, 16
      %v2638 = vrot.slane %v2636, 5
      %v2639 = vsel %vm1502, %v2634, %v2638
      %v2640 = vshrl.u32 %v2327, 16
      %v2642 = vrot.slane %v2640, 4
      %v2643 = vor.u32 %v2642, %v2638
      %v2644 = vrot.slane %v2643, 4
      %v2646 = vshll.u32 %v2328, 16
      %v2648 = vrot.slane %v2646, 5
      %v2649 = vsel %vm1502, %v2644, %v2648
      %v2651 = vshrl.u32 %v2329, 16
      %v2653 = vrot.slane %v2651, 4
      %v2654 = vshll.u32 %v2329, 16
      %v2656 = vrot.slane %v2654, 5
      %v2657 = vor.u32 %v2653, %v2656
      %v2658 = vrot.slane %v2657, 4
      %v2660 = vshll.u32 %v2330, 16
      %v2662 = vrot.slane %v2660, 5
      %v2663 = vsel %vm1502, %v2658, %v2662
      %v2664 = vshrl.u32 %v2330, 16
      %v2666 = vrot.slane %v2664, 4
      %v2667 = vor.u32 %v2666, %v2662
      %v2668 = vrot.slane %v2667, 4
      %v2670 = vshll.u32 %v2331, 16
      %v2672 = vrot.slane %v2670, 5
      %v2673 = vsel %vm1502, %v2668, %v2672
      %v2675 = vshrl.u32 %v2332, 16
      %v2677 = vrot.slane %v2675, 4
      %v2678 = vshll.u32 %v2332, 16
      %v2680 = vrot.slane %v2678, 5
      %v2681 = vor.u32 %v2677, %v2680
      %v2682 = vrot.slane %v2681, 4
      %v2684 = vshll.u32 %v2333, 16
      %v2686 = vrot.slane %v2684, 5
      %v2687 = vsel %vm1502, %v2682, %v2686
      %v2688 = vshrl.u32 %v2333, 16
      %v2690 = vrot.slane %v2688, 4
      %v2691 = vor.u32 %v2690, %v2686
      %v2692 = vrot.slane %v2691, 4
      %v2694 = vshll.u32 %v2334, 16
      %v2696 = vrot.slane %v2694, 5
      %v2697 = vsel %vm1502, %v2692, %v2696
      %v2699 = vshrl.u32 %v2335, 16
      %v2701 = vrot.slane %v2699, 4
      %v2702 = vshll.u32 %v2335, 16
      %v2704 = vrot.slane %v2702, 5
      %v2705 = vor.u32 %v2701, %v2704
      %v2706 = vrot.slane %v2705, 4
      %v2708 = vshll.u32 %v2336, 16
      %v2710 = vrot.slane %v2708, 5
      %v2711 = vsel %vm1502, %v2706, %v2710
      %v2712 = vshrl.u32 %v2336, 16
      %v2714 = vrot.slane %v2712, 4
      %v2715 = vor.u32 %v2714, %v2710
      %v2716 = vrot.slane %v2715, 4
      %v2718 = vshll.u32 %v2337, 16
      %v2720 = vrot.slane %v2718, 5
      %v2721 = vsel %vm1502, %v2716, %v2720
      %2754 = vst.msk [vmem:[#allocation3 + $0x10] sm:$0xf] %vm964, %v2351
      %2755 = vst.msk [vmem:[#allocation3 + $0x34] sm:$0xf] %vm964, %v2361
      %2756 = vst.msk [vmem:[#allocation3 + $0x58] sm:$0xf] %vm964, %v2375
      %2757 = vst.msk [vmem:[#allocation3 + $0x7c] sm:$0xf] %vm964, %v2385
      %2758 = vst.msk [vmem:[#allocation3 + $0xa0] sm:$0xf] %vm964, %v2399
      %2759 = vst.msk [vmem:[#allocation3 + $0xc4] sm:$0xf] %vm964, %v2409
      %2760 = vst.msk [vmem:[#allocation3 + $0xe8] sm:$0xf] %vm964, %v2423
      %2761 = vst.msk [vmem:[#allocation3 + $0x10c] sm:$0xf] %vm964, %v2433
      %2762 = vst.msk [vmem:[#allocation3 + $0x130] sm:$0xf] %vm964, %v2447
      %2763 = vst.msk [vmem:[#allocation3 + $0x154] sm:$0xf] %vm964, %v2457
      %2764 = vst.msk [vmem:[#allocation3 + $0x178] sm:$0xf] %vm964, %v2471
      %2765 = vst.msk [vmem:[#allocation3 + $0x19c] sm:$0xf] %vm964, %v2481
      %2766 = vst.msk [vmem:[#allocation3 + $0x1c0] sm:$0xf] %vm964, %v2495
      %2767 = vst.msk [vmem:[#allocation3 + $0x1e4] sm:$0xf] %vm964, %v2505
      %2768 = vst.msk [vmem:[#allocation3 + $0x208] sm:$0xf] %vm964, %v2519
      %2769 = vst.msk [vmem:[#allocation3 + $0x22c] sm:$0xf] %vm964, %v2529
      %2770 = vst.msk [vmem:[#allocation3 + $0x250] sm:$0xf] %vm964, %v2543
      %2771 = vst.msk [vmem:[#allocation3 + $0x274] sm:$0xf] %vm964, %v2553
      %2772 = vst.msk [vmem:[#allocation3 + $0x298] sm:$0xf] %vm964, %v2567
      %2773 = vst.msk [vmem:[#allocation3 + $0x2bc] sm:$0xf] %vm964, %v2577
      %2774 = vst.msk [vmem:[#allocation3 + $0x2e0] sm:$0xf] %vm964, %v2591
      %2775 = vst.msk [vmem:[#allocation3 + $0x304] sm:$0xf] %vm964, %v2601
      %2776 = vst.msk [vmem:[#allocation3 + $0x328] sm:$0xf] %vm964, %v2615
      %2777 = vst.msk [vmem:[#allocation3 + $0x34c] sm:$0xf] %vm964, %v2625
      %2778 = vst.msk [vmem:[#allocation3 + $0x370] sm:$0xf] %vm964, %v2639
      %2779 = vst.msk [vmem:[#allocation3 + $0x394] sm:$0xf] %vm964, %v2649
      %2780 = vst.msk [vmem:[#allocation3 + $0x3b8] sm:$0xf] %vm964, %v2663
      %2781 = vst.msk [vmem:[#allocation3 + $0x3dc] sm:$0xf] %vm964, %v2673
      %2782 = vst.msk [vmem:[#allocation3 + $0x400] sm:$0xf] %vm964, %v2687
      %2783 = vst.msk [vmem:[#allocation3 + $0x424] sm:$0xf] %vm964, %v2697
      %2784 = vst.msk [vmem:[#allocation3 + $0x448] sm:$0xf] %vm964, %v2711
      %2785 = vst.msk [vmem:[#allocation3 + $0x46c] sm:$0xf] %vm964, %v2721
      %v2786 = vld [vmem:[%s957] sm:$0xe]
      %v2787 = vld [vmem:[%s957 + $0x4] sm:$0xf]
      %v2788 = vld [vmem:[%s957 + $0x8] sm:$0x1]
      %v2789 = vld [vmem:[%s957 + $0xc] sm:$0xe]
      %v2790 = vld [vmem:[%s957 + $0x10] sm:$0xf]
      %v2791 = vld [vmem:[%s957 + $0x14] sm:$0x1]
      %v2792 = vld [vmem:[%s957 + $0x18] sm:$0xe]
      %v2793 = vld [vmem:[%s957 + $0x1c] sm:$0xf]
      %v2794 = vld [vmem:[%s957 + $0x20] sm:$0x1]
      %v2795 = vld [vmem:[%s957 + $0x24] sm:$0xe]
      %v2796 = vld [vmem:[%s957 + $0x28] sm:$0xf]
      %v2797 = vld [vmem:[%s957 + $0x2c] sm:$0x1]
      %v2798 = vld [vmem:[%s957 + $0x30] sm:$0xe]
      %v2799 = vld [vmem:[%s957 + $0x34] sm:$0xf]
      %v2800 = vld [vmem:[%s957 + $0x38] sm:$0x1]
      %v2801 = vld [vmem:[%s957 + $0x3c] sm:$0xe]
      %v2802 = vld [vmem:[%s957 + $0x40] sm:$0xf]
      %v2803 = vld [vmem:[%s957 + $0x44] sm:$0x1]
      %v2804 = vld [vmem:[%s957 + $0x48] sm:$0xe]
      %v2805 = vld [vmem:[%s957 + $0x4c] sm:$0xf]
      %v2806 = vld [vmem:[%s957 + $0x50] sm:$0x1]
      %v2807 = vld [vmem:[%s957 + $0x54] sm:$0xe]
      %v2808 = vld [vmem:[%s957 + $0x58] sm:$0xf]
      %v2809 = vld [vmem:[%s957 + $0x5c] sm:$0x1]
      %v2810 = vld [vmem:[%s957 + $0x60] sm:$0xe]
      %v2811 = vld [vmem:[%s957 + $0x64] sm:$0xf]
      %v2812 = vld [vmem:[%s957 + $0x68] sm:$0x1]
      %v2813 = vld [vmem:[%s957 + $0x6c] sm:$0xe]
      %v2814 = vld [vmem:[%s957 + $0x70] sm:$0xf]
      %v2815 = vld [vmem:[%s957 + $0x74] sm:$0x1]
      %v2816 = vld [vmem:[%s957 + $0x78] sm:$0xe]
      %v2817 = vld [vmem:[%s957 + $0x7c] sm:$0xf]
      %v2818 = vld [vmem:[%s957 + $0x80] sm:$0x1]
      %v2819 = vld [vmem:[%s957 + $0x84] sm:$0xe]
      %v2820 = vld [vmem:[%s957 + $0x88] sm:$0xf]
      %v2821 = vld [vmem:[%s957 + $0x8c] sm:$0x1]
      %v2822 = vld [vmem:[%s957 + $0x90] sm:$0xe]
      %v2823 = vld [vmem:[%s957 + $0x94] sm:$0xf]
      %v2824 = vld [vmem:[%s957 + $0x98] sm:$0x1]
      %v2825 = vld [vmem:[%s957 + $0x9c] sm:$0xe]
      %v2826 = vld [vmem:[%s957 + $0xa0] sm:$0xf]
      %v2827 = vld [vmem:[%s957 + $0xa4] sm:$0x1]
      %v2828 = vld [vmem:[%s957 + $0xa8] sm:$0xe]
      %v2829 = vld [vmem:[%s957 + $0xac] sm:$0xf]
      %v2830 = vld [vmem:[%s957 + $0xb0] sm:$0x1]
      %v2831 = vld [vmem:[%s957 + $0xb4] sm:$0xe]
      %v2832 = vld [vmem:[%s957 + $0xb8] sm:$0xf]
      %v2833 = vld [vmem:[%s957 + $0xbc] sm:$0x1]
      %v2882 = vrot.slane %v2786, 5
      %v2883 = vrot.slane %v2882, 4
      %v2884 = vrot.slane %v2787, 5
      %v2885 = vsel %vm2049, %v2883, %v2884
      %v2886 = vrot.slane %v2884, 4
      %v2887 = vrot.slane %v2788, 5
      %v2888 = vsel %vm2049, %v2886, %v2887
      %v2889 = vrot.slane %v2789, 5
      %v2890 = vrot.slane %v2889, 4
      %v2891 = vrot.slane %v2790, 5
      %v2892 = vsel %vm2049, %v2890, %v2891
      %v2893 = vrot.slane %v2891, 4
      %v2894 = vrot.slane %v2791, 5
      %v2895 = vsel %vm2049, %v2893, %v2894
      %v2896 = vrot.slane %v2792, 5
      %v2897 = vrot.slane %v2896, 4
      %v2898 = vrot.slane %v2793, 5
      %v2899 = vsel %vm2049, %v2897, %v2898
      %v2900 = vrot.slane %v2898, 4
      %v2901 = vrot.slane %v2794, 5
      %v2902 = vsel %vm2049, %v2900, %v2901
      %v2903 = vrot.slane %v2795, 5
      %v2904 = vrot.slane %v2903, 4
      %v2905 = vrot.slane %v2796, 5
      %v2906 = vsel %vm2049, %v2904, %v2905
      %v2907 = vrot.slane %v2905, 4
      %v2908 = vrot.slane %v2797, 5
      %v2909 = vsel %vm2049, %v2907, %v2908
      %v2910 = vrot.slane %v2798, 5
      %v2911 = vrot.slane %v2910, 4
      %v2912 = vrot.slane %v2799, 5
      %v2913 = vsel %vm2049, %v2911, %v2912
      %v2914 = vrot.slane %v2912, 4
      %v2915 = vrot.slane %v2800, 5
      %v2916 = vsel %vm2049, %v2914, %v2915
      %v2917 = vrot.slane %v2801, 5
      %v2918 = vrot.slane %v2917, 4
      %v2919 = vrot.slane %v2802, 5
      %v2920 = vsel %vm2049, %v2918, %v2919
      %v2921 = vrot.slane %v2919, 4
      %v2922 = vrot.slane %v2803, 5
      %v2923 = vsel %vm2049, %v2921, %v2922
      %v2924 = vrot.slane %v2804, 5
      %v2925 = vrot.slane %v2924, 4
      %v2926 = vrot.slane %v2805, 5
      %v2927 = vsel %vm2049, %v2925, %v2926
      %v2928 = vrot.slane %v2926, 4
      %v2929 = vrot.slane %v2806, 5
      %v2930 = vsel %vm2049, %v2928, %v2929
      %v2931 = vrot.slane %v2807, 5
      %v2932 = vrot.slane %v2931, 4
      %v2933 = vrot.slane %v2808, 5
      %v2934 = vsel %vm2049, %v2932, %v2933
      %v2935 = vrot.slane %v2933, 4
      %v2936 = vrot.slane %v2809, 5
      %v2937 = vsel %vm2049, %v2935, %v2936
      %v2938 = vrot.slane %v2810, 5
      %v2939 = vrot.slane %v2938, 4
      %v2940 = vrot.slane %v2811, 5
      %v2941 = vsel %vm2049, %v2939, %v2940
      %v2942 = vrot.slane %v2940, 4
      %v2943 = vrot.slane %v2812, 5
      %v2944 = vsel %vm2049, %v2942, %v2943
      %v2945 = vrot.slane %v2813, 5
      %v2946 = vrot.slane %v2945, 4
      %v2947 = vrot.slane %v2814, 5
      %v2948 = vsel %vm2049, %v2946, %v2947
      %v2949 = vrot.slane %v2947, 4
      %v2950 = vrot.slane %v2815, 5
      %v2951 = vsel %vm2049, %v2949, %v2950
      %v2952 = vrot.slane %v2816, 5
      %v2953 = vrot.slane %v2952, 4
      %v2954 = vrot.slane %v2817, 5
      %v2955 = vsel %vm2049, %v2953, %v2954
      %v2956 = vrot.slane %v2954, 4
      %v2957 = vrot.slane %v2818, 5
      %v2958 = vsel %vm2049, %v2956, %v2957
      %v2959 = vrot.slane %v2819, 5
      %v2960 = vrot.slane %v2959, 4
      %v2961 = vrot.slane %v2820, 5
      %v2962 = vsel %vm2049, %v2960, %v2961
      %v2963 = vrot.slane %v2961, 4
      %v2964 = vrot.slane %v2821, 5
      %v2965 = vsel %vm2049, %v2963, %v2964
      %v2966 = vrot.slane %v2822, 5
      %v2967 = vrot.slane %v2966, 4
      %v2968 = vrot.slane %v2823, 5
      %v2969 = vsel %vm2049, %v2967, %v2968
      %v2970 = vrot.slane %v2968, 4
      %v2971 = vrot.slane %v2824, 5
      %v2972 = vsel %vm2049, %v2970, %v2971
      %v2973 = vrot.slane %v2825, 5
      %v2974 = vrot.slane %v2973, 4
      %v2975 = vrot.slane %v2826, 5
      %v2976 = vsel %vm2049, %v2974, %v2975
      %v2977 = vrot.slane %v2975, 4
      %v2978 = vrot.slane %v2827, 5
      %v2979 = vsel %vm2049, %v2977, %v2978
      %v2980 = vrot.slane %v2828, 5
      %v2981 = vrot.slane %v2980, 4
      %v2982 = vrot.slane %v2829, 5
      %v2983 = vsel %vm2049, %v2981, %v2982
      %v2984 = vrot.slane %v2982, 4
      %v2985 = vrot.slane %v2830, 5
      %v2986 = vsel %vm2049, %v2984, %v2985
      %v2987 = vrot.slane %v2831, 5
      %v2988 = vrot.slane %v2987, 4
      %v2989 = vrot.slane %v2832, 5
      %v2990 = vsel %vm2049, %v2988, %v2989
      %v2991 = vrot.slane %v2989, 4
      %v2992 = vrot.slane %v2833, 5
      %v2993 = vsel %vm2049, %v2991, %v2992
      %3026 = vst.msk [vmem:[#allocation3 + $0x14] sm:$0xf] %vm964, %v2885
      %3027 = vst.msk [vmem:[#allocation3 + $0x38] sm:$0xf] %vm964, %v2888
      %3028 = vst.msk [vmem:[#allocation3 + $0x5c] sm:$0xf] %vm964, %v2892
      %3029 = vst.msk [vmem:[#allocation3 + $0x80] sm:$0xf] %vm964, %v2895
      %3030 = vst.msk [vmem:[#allocation3 + $0xa4] sm:$0xf] %vm964, %v2899
      %3031 = vst.msk [vmem:[#allocation3 + $0xc8] sm:$0xf] %vm964, %v2902
      %3032 = vst.msk [vmem:[#allocation3 + $0xec] sm:$0xf] %vm964, %v2906
      %3033 = vst.msk [vmem:[#allocation3 + $0x110] sm:$0xf] %vm964, %v2909
      %3034 = vst.msk [vmem:[#allocation3 + $0x134] sm:$0xf] %vm964, %v2913
      %3035 = vst.msk [vmem:[#allocation3 + $0x158] sm:$0xf] %vm964, %v2916
      %3036 = vst.msk [vmem:[#allocation3 + $0x17c] sm:$0xf] %vm964, %v2920
      %3037 = vst.msk [vmem:[#allocation3 + $0x1a0] sm:$0xf] %vm964, %v2923
      %3038 = vst.msk [vmem:[#allocation3 + $0x1c4] sm:$0xf] %vm964, %v2927
      %3039 = vst.msk [vmem:[#allocation3 + $0x1e8] sm:$0xf] %vm964, %v2930
      %3040 = vst.msk [vmem:[#allocation3 + $0x20c] sm:$0xf] %vm964, %v2934
      %3041 = vst.msk [vmem:[#allocation3 + $0x230] sm:$0xf] %vm964, %v2937
      %3042 = vst.msk [vmem:[#allocation3 + $0x254] sm:$0xf] %vm964, %v2941
      %3043 = vst.msk [vmem:[#allocation3 + $0x278] sm:$0xf] %vm964, %v2944
      %3044 = vst.msk [vmem:[#allocation3 + $0x29c] sm:$0xf] %vm964, %v2948
      %3045 = vst.msk [vmem:[#allocation3 + $0x2c0] sm:$0xf] %vm964, %v2951
      %3046 = vst.msk [vmem:[#allocation3 + $0x2e4] sm:$0xf] %vm964, %v2955
      %3047 = vst.msk [vmem:[#allocation3 + $0x308] sm:$0xf] %vm964, %v2958
      %3048 = vst.msk [vmem:[#allocation3 + $0x32c] sm:$0xf] %vm964, %v2962
      %3049 = vst.msk [vmem:[#allocation3 + $0x350] sm:$0xf] %vm964, %v2965
      %3050 = vst.msk [vmem:[#allocation3 + $0x374] sm:$0xf] %vm964, %v2969
      %3051 = vst.msk [vmem:[#allocation3 + $0x398] sm:$0xf] %vm964, %v2972
      %3052 = vst.msk [vmem:[#allocation3 + $0x3bc] sm:$0xf] %vm964, %v2976
      %3053 = vst.msk [vmem:[#allocation3 + $0x3e0] sm:$0xf] %vm964, %v2979
      %3054 = vst.msk [vmem:[#allocation3 + $0x404] sm:$0xf] %vm964, %v2983
      %3055 = vst.msk [vmem:[#allocation3 + $0x428] sm:$0xf] %vm964, %v2986
      %3056 = vst.msk [vmem:[#allocation3 + $0x44c] sm:$0xf] %vm964, %v2990
      %3057 = vst.msk [vmem:[#allocation3 + $0x470] sm:$0xf] %vm964, %v2993
      %v3058 = vld [vmem:[%s1076] sm:$0xf]
      %v3059 = vld [vmem:[%s1076 + $0x4] sm:$0xf]
      %v3060 = vld [vmem:[%s1076 + $0xc] sm:$0xf]
      %v3061 = vld [vmem:[%s1076 + $0x10] sm:$0xf]
      %v3062 = vld [vmem:[%s1076 + $0x18] sm:$0xf]
      %v3063 = vld [vmem:[%s1076 + $0x1c] sm:$0xf]
      %v3064 = vld [vmem:[%s1076 + $0x24] sm:$0xf]
      %v3065 = vld [vmem:[%s1076 + $0x28] sm:$0xf]
      %v3066 = vld [vmem:[%s1076 + $0x30] sm:$0xf]
      %v3067 = vld [vmem:[%s1076 + $0x34] sm:$0xf]
      %v3068 = vld [vmem:[%s1076 + $0x3c] sm:$0xf]
      %v3069 = vld [vmem:[%s1076 + $0x40] sm:$0xf]
      %v3070 = vld [vmem:[%s1076 + $0x48] sm:$0xf]
      %v3071 = vld [vmem:[%s1076 + $0x4c] sm:$0xf]
      %v3072 = vld [vmem:[%s1076 + $0x54] sm:$0xf]
      %v3073 = vld [vmem:[%s1076 + $0x58] sm:$0xf]
      %v3074 = vld [vmem:[%s1076 + $0x60] sm:$0xf]
      %v3075 = vld [vmem:[%s1076 + $0x64] sm:$0xf]
      %v3076 = vld [vmem:[%s1076 + $0x6c] sm:$0xf]
      %v3077 = vld [vmem:[%s1076 + $0x70] sm:$0xf]
      %v3078 = vld [vmem:[%s1076 + $0x78] sm:$0xf]
      %v3079 = vld [vmem:[%s1076 + $0x7c] sm:$0xf]
      %v3080 = vld [vmem:[%s1076 + $0x84] sm:$0xf]
      %v3081 = vld [vmem:[%s1076 + $0x88] sm:$0xf]
      %v3082 = vld [vmem:[%s1076 + $0x90] sm:$0xf]
      %v3083 = vld [vmem:[%s1076 + $0x94] sm:$0xf]
      %v3084 = vld [vmem:[%s1076 + $0x9c] sm:$0xf]
      %v3085 = vld [vmem:[%s1076 + $0xa0] sm:$0xf]
      %v3086 = vld [vmem:[%s1076 + $0xa8] sm:$0xf]
      %v3087 = vld [vmem:[%s1076 + $0xac] sm:$0xf]
      %v3088 = vld [vmem:[%s1076 + $0xb4] sm:$0xf]
      %v3089 = vld [vmem:[%s1076 + $0xb8] sm:$0xf]
      %3090 = vst.msk [vmem:[#allocation3 + $0x18] sm:$0xf] %vm964, %v3058
      %3091 = vst.msk [vmem:[#allocation3 + $0x3c] sm:$0xf] %vm964, %v3059
      %3092 = vst.msk [vmem:[#allocation3 + $0x60] sm:$0xf] %vm964, %v3060
      %3093 = vst.msk [vmem:[#allocation3 + $0x84] sm:$0xf] %vm964, %v3061
      %3094 = vst.msk [vmem:[#allocation3 + $0xa8] sm:$0xf] %vm964, %v3062
      %3095 = vst.msk [vmem:[#allocation3 + $0xcc] sm:$0xf] %vm964, %v3063
      %3096 = vst.msk [vmem:[#allocation3 + $0xf0] sm:$0xf] %vm964, %v3064
      %3097 = vst.msk [vmem:[#allocation3 + $0x114] sm:$0xf] %vm964, %v3065
      %3098 = vst.msk [vmem:[#allocation3 + $0x138] sm:$0xf] %vm964, %v3066
      %3099 = vst.msk [vmem:[#allocation3 + $0x15c] sm:$0xf] %vm964, %v3067
      %3100 = vst.msk [vmem:[#allocation3 + $0x180] sm:$0xf] %vm964, %v3068
      %3101 = vst.msk [vmem:[#allocation3 + $0x1a4] sm:$0xf] %vm964, %v3069
      %3102 = vst.msk [vmem:[#allocation3 + $0x1c8] sm:$0xf] %vm964, %v3070
      %3103 = vst.msk [vmem:[#allocation3 + $0x1ec] sm:$0xf] %vm964, %v3071
      %3104 = vst.msk [vmem:[#allocation3 + $0x210] sm:$0xf] %vm964, %v3072
      %3105 = vst.msk [vmem:[#allocation3 + $0x234] sm:$0xf] %vm964, %v3073
      %3106 = vst.msk [vmem:[#allocation3 + $0x258] sm:$0xf] %vm964, %v3074
      %3107 = vst.msk [vmem:[#allocation3 + $0x27c] sm:$0xf] %vm964, %v3075
      %3108 = vst.msk [vmem:[#allocation3 + $0x2a0] sm:$0xf] %vm964, %v3076
      %3109 = vst.msk [vmem:[#allocation3 + $0x2c4] sm:$0xf] %vm964, %v3077
      %3110 = vst.msk [vmem:[#allocation3 + $0x2e8] sm:$0xf] %vm964, %v3078
      %3111 = vst.msk [vmem:[#allocation3 + $0x30c] sm:$0xf] %vm964, %v3079
      %3112 = vst.msk [vmem:[#allocation3 + $0x330] sm:$0xf] %vm964, %v3080
      %3113 = vst.msk [vmem:[#allocation3 + $0x354] sm:$0xf] %vm964, %v3081
      %3114 = vst.msk [vmem:[#allocation3 + $0x378] sm:$0xf] %vm964, %v3082
      %3115 = vst.msk [vmem:[#allocation3 + $0x39c] sm:$0xf] %vm964, %v3083
      %3116 = vst.msk [vmem:[#allocation3 + $0x3c0] sm:$0xf] %vm964, %v3084
      %3117 = vst.msk [vmem:[#allocation3 + $0x3e4] sm:$0xf] %vm964, %v3085
      %3118 = vst.msk [vmem:[#allocation3 + $0x408] sm:$0xf] %vm964, %v3086
      %3119 = vst.msk [vmem:[#allocation3 + $0x42c] sm:$0xf] %vm964, %v3087
      %3120 = vst.msk [vmem:[#allocation3 + $0x450] sm:$0xf] %vm964, %v3088
      %3121 = vst.msk [vmem:[#allocation3 + $0x474] sm:$0xf] %vm964, %v3089
      %v3122 = vld [vmem:[%s1076] sm:$0xf]
      %v3123 = vld [vmem:[%s1076 + $0x4] sm:$0xf]
      %v3124 = vld [vmem:[%s1076 + $0x8] sm:$0x1]
      %v3125 = vld [vmem:[%s1076 + $0xc] sm:$0xf]
      %v3126 = vld [vmem:[%s1076 + $0x10] sm:$0xf]
      %v3127 = vld [vmem:[%s1076 + $0x14] sm:$0x1]
      %v3128 = vld [vmem:[%s1076 + $0x18] sm:$0xf]
      %v3129 = vld [vmem:[%s1076 + $0x1c] sm:$0xf]
      %v3130 = vld [vmem:[%s1076 + $0x20] sm:$0x1]
      %v3131 = vld [vmem:[%s1076 + $0x24] sm:$0xf]
      %v3132 = vld [vmem:[%s1076 + $0x28] sm:$0xf]
      %v3133 = vld [vmem:[%s1076 + $0x2c] sm:$0x1]
      %v3134 = vld [vmem:[%s1076 + $0x30] sm:$0xf]
      %v3135 = vld [vmem:[%s1076 + $0x34] sm:$0xf]
      %v3136 = vld [vmem:[%s1076 + $0x38] sm:$0x1]
      %v3137 = vld [vmem:[%s1076 + $0x3c] sm:$0xf]
      %v3138 = vld [vmem:[%s1076 + $0x40] sm:$0xf]
      %v3139 = vld [vmem:[%s1076 + $0x44] sm:$0x1]
      %v3140 = vld [vmem:[%s1076 + $0x48] sm:$0xf]
      %v3141 = vld [vmem:[%s1076 + $0x4c] sm:$0xf]
      %v3142 = vld [vmem:[%s1076 + $0x50] sm:$0x1]
      %v3143 = vld [vmem:[%s1076 + $0x54] sm:$0xf]
      %v3144 = vld [vmem:[%s1076 + $0x58] sm:$0xf]
      %v3145 = vld [vmem:[%s1076 + $0x5c] sm:$0x1]
      %v3146 = vld [vmem:[%s1076 + $0x60] sm:$0xf]
      %v3147 = vld [vmem:[%s1076 + $0x64] sm:$0xf]
      %v3148 = vld [vmem:[%s1076 + $0x68] sm:$0x1]
      %v3149 = vld [vmem:[%s1076 + $0x6c] sm:$0xf]
      %v3150 = vld [vmem:[%s1076 + $0x70] sm:$0xf]
      %v3151 = vld [vmem:[%s1076 + $0x74] sm:$0x1]
      %v3152 = vld [vmem:[%s1076 + $0x78] sm:$0xf]
      %v3153 = vld [vmem:[%s1076 + $0x7c] sm:$0xf]
      %v3154 = vld [vmem:[%s1076 + $0x80] sm:$0x1]
      %v3155 = vld [vmem:[%s1076 + $0x84] sm:$0xf]
      %v3156 = vld [vmem:[%s1076 + $0x88] sm:$0xf]
      %v3157 = vld [vmem:[%s1076 + $0x8c] sm:$0x1]
      %v3158 = vld [vmem:[%s1076 + $0x90] sm:$0xf]
      %v3159 = vld [vmem:[%s1076 + $0x94] sm:$0xf]
      %v3160 = vld [vmem:[%s1076 + $0x98] sm:$0x1]
      %v3161 = vld [vmem:[%s1076 + $0x9c] sm:$0xf]
      %v3162 = vld [vmem:[%s1076 + $0xa0] sm:$0xf]
      %v3163 = vld [vmem:[%s1076 + $0xa4] sm:$0x1]
      %v3164 = vld [vmem:[%s1076 + $0xa8] sm:$0xf]
      %v3165 = vld [vmem:[%s1076 + $0xac] sm:$0xf]
      %v3166 = vld [vmem:[%s1076 + $0xb0] sm:$0x1]
      %v3167 = vld [vmem:[%s1076 + $0xb4] sm:$0xf]
      %v3168 = vld [vmem:[%s1076 + $0xb8] sm:$0xf]
      %v3169 = vld [vmem:[%s1076 + $0xbc] sm:$0x1]
      %v3171 = vshrl.u32 %v3122, 16
      %v3173 = vrot.slane %v3171, 4
      %v3174 = vshll.u32 %v3122, 16
      %v3176 = vrot.slane %v3174, 5
      %v3177 = vor.u32 %v3173, %v3176
      %v3178 = vrot.slane %v3177, 4
      %v3180 = vshll.u32 %v3123, 16
      %v3182 = vrot.slane %v3180, 5
      %v3183 = vsel %vm1502, %v3178, %v3182
      %v3184 = vshrl.u32 %v3123, 16
      %v3186 = vrot.slane %v3184, 4
      %v3187 = vor.u32 %v3186, %v3182
      %v3188 = vrot.slane %v3187, 4
      %v3190 = vshll.u32 %v3124, 16
      %v3192 = vrot.slane %v3190, 5
      %v3193 = vsel %vm1502, %v3188, %v3192
      %v3195 = vshrl.u32 %v3125, 16
      %v3197 = vrot.slane %v3195, 4
      %v3198 = vshll.u32 %v3125, 16
      %v3200 = vrot.slane %v3198, 5
      %v3201 = vor.u32 %v3197, %v3200
      %v3202 = vrot.slane %v3201, 4
      %v3204 = vshll.u32 %v3126, 16
      %v3206 = vrot.slane %v3204, 5
      %v3207 = vsel %vm1502, %v3202, %v3206
      %v3208 = vshrl.u32 %v3126, 16
      %v3210 = vrot.slane %v3208, 4
      %v3211 = vor.u32 %v3210, %v3206
      %v3212 = vrot.slane %v3211, 4
      %v3214 = vshll.u32 %v3127, 16
      %v3216 = vrot.slane %v3214, 5
      %v3217 = vsel %vm1502, %v3212, %v3216
      %v3219 = vshrl.u32 %v3128, 16
      %v3221 = vrot.slane %v3219, 4
      %v3222 = vshll.u32 %v3128, 16
      %v3224 = vrot.slane %v3222, 5
      %v3225 = vor.u32 %v3221, %v3224
      %v3226 = vrot.slane %v3225, 4
      %v3228 = vshll.u32 %v3129, 16
      %v3230 = vrot.slane %v3228, 5
      %v3231 = vsel %vm1502, %v3226, %v3230
      %v3232 = vshrl.u32 %v3129, 16
      %v3234 = vrot.slane %v3232, 4
      %v3235 = vor.u32 %v3234, %v3230
      %v3236 = vrot.slane %v3235, 4
      %v3238 = vshll.u32 %v3130, 16
      %v3240 = vrot.slane %v3238, 5
      %v3241 = vsel %vm1502, %v3236, %v3240
      %v3243 = vshrl.u32 %v3131, 16
      %v3245 = vrot.slane %v3243, 4
      %v3246 = vshll.u32 %v3131, 16
      %v3248 = vrot.slane %v3246, 5
      %v3249 = vor.u32 %v3245, %v3248
      %v3250 = vrot.slane %v3249, 4
      %v3252 = vshll.u32 %v3132, 16
      %v3254 = vrot.slane %v3252, 5
      %v3255 = vsel %vm1502, %v3250, %v3254
      %v3256 = vshrl.u32 %v3132, 16
      %v3258 = vrot.slane %v3256, 4
      %v3259 = vor.u32 %v3258, %v3254
      %v3260 = vrot.slane %v3259, 4
      %v3262 = vshll.u32 %v3133, 16
      %v3264 = vrot.slane %v3262, 5
      %v3265 = vsel %vm1502, %v3260, %v3264
      %v3267 = vshrl.u32 %v3134, 16
      %v3269 = vrot.slane %v3267, 4
      %v3270 = vshll.u32 %v3134, 16
      %v3272 = vrot.slane %v3270, 5
      %v3273 = vor.u32 %v3269, %v3272
      %v3274 = vrot.slane %v3273, 4
      %v3276 = vshll.u32 %v3135, 16
      %v3278 = vrot.slane %v3276, 5
      %v3279 = vsel %vm1502, %v3274, %v3278
      %v3280 = vshrl.u32 %v3135, 16
      %v3282 = vrot.slane %v3280, 4
      %v3283 = vor.u32 %v3282, %v3278
      %v3284 = vrot.slane %v3283, 4
      %v3286 = vshll.u32 %v3136, 16
      %v3288 = vrot.slane %v3286, 5
      %v3289 = vsel %vm1502, %v3284, %v3288
      %v3291 = vshrl.u32 %v3137, 16
      %v3293 = vrot.slane %v3291, 4
      %v3294 = vshll.u32 %v3137, 16
      %v3296 = vrot.slane %v3294, 5
      %v3297 = vor.u32 %v3293, %v3296
      %v3298 = vrot.slane %v3297, 4
      %v3300 = vshll.u32 %v3138, 16
      %v3302 = vrot.slane %v3300, 5
      %v3303 = vsel %vm1502, %v3298, %v3302
      %v3304 = vshrl.u32 %v3138, 16
      %v3306 = vrot.slane %v3304, 4
      %v3307 = vor.u32 %v3306, %v3302
      %v3308 = vrot.slane %v3307, 4
      %v3310 = vshll.u32 %v3139, 16
      %v3312 = vrot.slane %v3310, 5
      %v3313 = vsel %vm1502, %v3308, %v3312
      %v3315 = vshrl.u32 %v3140, 16
      %v3317 = vrot.slane %v3315, 4
      %v3318 = vshll.u32 %v3140, 16
      %v3320 = vrot.slane %v3318, 5
      %v3321 = vor.u32 %v3317, %v3320
      %v3322 = vrot.slane %v3321, 4
      %v3324 = vshll.u32 %v3141, 16
      %v3326 = vrot.slane %v3324, 5
      %v3327 = vsel %vm1502, %v3322, %v3326
      %v3328 = vshrl.u32 %v3141, 16
      %v3330 = vrot.slane %v3328, 4
      %v3331 = vor.u32 %v3330, %v3326
      %v3332 = vrot.slane %v3331, 4
      %v3334 = vshll.u32 %v3142, 16
      %v3336 = vrot.slane %v3334, 5
      %v3337 = vsel %vm1502, %v3332, %v3336
      %v3339 = vshrl.u32 %v3143, 16
      %v3341 = vrot.slane %v3339, 4
      %v3342 = vshll.u32 %v3143, 16
      %v3344 = vrot.slane %v3342, 5
      %v3345 = vor.u32 %v3341, %v3344
      %v3346 = vrot.slane %v3345, 4
      %v3348 = vshll.u32 %v3144, 16
      %v3350 = vrot.slane %v3348, 5
      %v3351 = vsel %vm1502, %v3346, %v3350
      %v3352 = vshrl.u32 %v3144, 16
      %v3354 = vrot.slane %v3352, 4
      %v3355 = vor.u32 %v3354, %v3350
      %v3356 = vrot.slane %v3355, 4
      %v3358 = vshll.u32 %v3145, 16
      %v3360 = vrot.slane %v3358, 5
      %v3361 = vsel %vm1502, %v3356, %v3360
      %v3363 = vshrl.u32 %v3146, 16
      %v3365 = vrot.slane %v3363, 4
      %v3366 = vshll.u32 %v3146, 16
      %v3368 = vrot.slane %v3366, 5
      %v3369 = vor.u32 %v3365, %v3368
      %v3370 = vrot.slane %v3369, 4
      %v3372 = vshll.u32 %v3147, 16
      %v3374 = vrot.slane %v3372, 5
      %v3375 = vsel %vm1502, %v3370, %v3374
      %v3376 = vshrl.u32 %v3147, 16
      %v3378 = vrot.slane %v3376, 4
      %v3379 = vor.u32 %v3378, %v3374
      %v3380 = vrot.slane %v3379, 4
      %v3382 = vshll.u32 %v3148, 16
      %v3384 = vrot.slane %v3382, 5
      %v3385 = vsel %vm1502, %v3380, %v3384
      %v3387 = vshrl.u32 %v3149, 16
      %v3389 = vrot.slane %v3387, 4
      %v3390 = vshll.u32 %v3149, 16
      %v3392 = vrot.slane %v3390, 5
      %v3393 = vor.u32 %v3389, %v3392
      %v3394 = vrot.slane %v3393, 4
      %v3396 = vshll.u32 %v3150, 16
      %v3398 = vrot.slane %v3396, 5
      %v3399 = vsel %vm1502, %v3394, %v3398
      %v3400 = vshrl.u32 %v3150, 16
      %v3402 = vrot.slane %v3400, 4
      %v3403 = vor.u32 %v3402, %v3398
      %v3404 = vrot.slane %v3403, 4
      %v3406 = vshll.u32 %v3151, 16
      %v3408 = vrot.slane %v3406, 5
      %v3409 = vsel %vm1502, %v3404, %v3408
      %v3411 = vshrl.u32 %v3152, 16
      %v3413 = vrot.slane %v3411, 4
      %v3414 = vshll.u32 %v3152, 16
      %v3416 = vrot.slane %v3414, 5
      %v3417 = vor.u32 %v3413, %v3416
      %v3418 = vrot.slane %v3417, 4
      %v3420 = vshll.u32 %v3153, 16
      %v3422 = vrot.slane %v3420, 5
      %v3423 = vsel %vm1502, %v3418, %v3422
      %v3424 = vshrl.u32 %v3153, 16
      %v3426 = vrot.slane %v3424, 4
      %v3427 = vor.u32 %v3426, %v3422
      %v3428 = vrot.slane %v3427, 4
      %v3430 = vshll.u32 %v3154, 16
      %v3432 = vrot.slane %v3430, 5
      %v3433 = vsel %vm1502, %v3428, %v3432
      %v3435 = vshrl.u32 %v3155, 16
      %v3437 = vrot.slane %v3435, 4
      %v3438 = vshll.u32 %v3155, 16
      %v3440 = vrot.slane %v3438, 5
      %v3441 = vor.u32 %v3437, %v3440
      %v3442 = vrot.slane %v3441, 4
      %v3444 = vshll.u32 %v3156, 16
      %v3446 = vrot.slane %v3444, 5
      %v3447 = vsel %vm1502, %v3442, %v3446
      %v3448 = vshrl.u32 %v3156, 16
      %v3450 = vrot.slane %v3448, 4
      %v3451 = vor.u32 %v3450, %v3446
      %v3452 = vrot.slane %v3451, 4
      %v3454 = vshll.u32 %v3157, 16
      %v3456 = vrot.slane %v3454, 5
      %v3457 = vsel %vm1502, %v3452, %v3456
      %v3459 = vshrl.u32 %v3158, 16
      %v3461 = vrot.slane %v3459, 4
      %v3462 = vshll.u32 %v3158, 16
      %v3464 = vrot.slane %v3462, 5
      %v3465 = vor.u32 %v3461, %v3464
      %v3466 = vrot.slane %v3465, 4
      %v3468 = vshll.u32 %v3159, 16
      %v3470 = vrot.slane %v3468, 5
      %v3471 = vsel %vm1502, %v3466, %v3470
      %v3472 = vshrl.u32 %v3159, 16
      %v3474 = vrot.slane %v3472, 4
      %v3475 = vor.u32 %v3474, %v3470
      %v3476 = vrot.slane %v3475, 4
      %v3478 = vshll.u32 %v3160, 16
      %v3480 = vrot.slane %v3478, 5
      %v3481 = vsel %vm1502, %v3476, %v3480
      %v3483 = vshrl.u32 %v3161, 16
      %v3485 = vrot.slane %v3483, 4
      %v3486 = vshll.u32 %v3161, 16
      %v3488 = vrot.slane %v3486, 5
      %v3489 = vor.u32 %v3485, %v3488
      %v3490 = vrot.slane %v3489, 4
      %v3492 = vshll.u32 %v3162, 16
      %v3494 = vrot.slane %v3492, 5
      %v3495 = vsel %vm1502, %v3490, %v3494
      %v3496 = vshrl.u32 %v3162, 16
      %v3498 = vrot.slane %v3496, 4
      %v3499 = vor.u32 %v3498, %v3494
      %v3500 = vrot.slane %v3499, 4
      %v3502 = vshll.u32 %v3163, 16
      %v3504 = vrot.slane %v3502, 5
      %v3505 = vsel %vm1502, %v3500, %v3504
      %v3507 = vshrl.u32 %v3164, 16
      %v3509 = vrot.slane %v3507, 4
      %v3510 = vshll.u32 %v3164, 16
      %v3512 = vrot.slane %v3510, 5
      %v3513 = vor.u32 %v3509, %v3512
      %v3514 = vrot.slane %v3513, 4
      %v3516 = vshll.u32 %v3165, 16
      %v3518 = vrot.slane %v3516, 5
      %v3519 = vsel %vm1502, %v3514, %v3518
      %v3520 = vshrl.u32 %v3165, 16
      %v3522 = vrot.slane %v3520, 4
      %v3523 = vor.u32 %v3522, %v3518
      %v3524 = vrot.slane %v3523, 4
      %v3526 = vshll.u32 %v3166, 16
      %v3528 = vrot.slane %v3526, 5
      %v3529 = vsel %vm1502, %v3524, %v3528
      %v3531 = vshrl.u32 %v3167, 16
      %v3533 = vrot.slane %v3531, 4
      %v3534 = vshll.u32 %v3167, 16
      %v3536 = vrot.slane %v3534, 5
      %v3537 = vor.u32 %v3533, %v3536
      %v3538 = vrot.slane %v3537, 4
      %v3540 = vshll.u32 %v3168, 16
      %v3542 = vrot.slane %v3540, 5
      %v3543 = vsel %vm1502, %v3538, %v3542
      %v3544 = vshrl.u32 %v3168, 16
      %v3546 = vrot.slane %v3544, 4
      %v3547 = vor.u32 %v3546, %v3542
      %v3548 = vrot.slane %v3547, 4
      %v3550 = vshll.u32 %v3169, 16
      %v3552 = vrot.slane %v3550, 5
      %v3553 = vsel %vm1502, %v3548, %v3552
      %3586 = vst.msk [vmem:[#allocation3 + $0x1c] sm:$0xf] %vm964, %v3183
      %3587 = vst.msk [vmem:[#allocation3 + $0x40] sm:$0xf] %vm964, %v3193
      %3588 = vst.msk [vmem:[#allocation3 + $0x64] sm:$0xf] %vm964, %v3207
      %3589 = vst.msk [vmem:[#allocation3 + $0x88] sm:$0xf] %vm964, %v3217
      %3590 = vst.msk [vmem:[#allocation3 + $0xac] sm:$0xf] %vm964, %v3231
      %3591 = vst.msk [vmem:[#allocation3 + $0xd0] sm:$0xf] %vm964, %v3241
      %3592 = vst.msk [vmem:[#allocation3 + $0xf4] sm:$0xf] %vm964, %v3255
      %3593 = vst.msk [vmem:[#allocation3 + $0x118] sm:$0xf] %vm964, %v3265
      %3594 = vst.msk [vmem:[#allocation3 + $0x13c] sm:$0xf] %vm964, %v3279
      %3595 = vst.msk [vmem:[#allocation3 + $0x160] sm:$0xf] %vm964, %v3289
      %3596 = vst.msk [vmem:[#allocation3 + $0x184] sm:$0xf] %vm964, %v3303
      %3597 = vst.msk [vmem:[#allocation3 + $0x1a8] sm:$0xf] %vm964, %v3313
      %3598 = vst.msk [vmem:[#allocation3 + $0x1cc] sm:$0xf] %vm964, %v3327
      %3599 = vst.msk [vmem:[#allocation3 + $0x1f0] sm:$0xf] %vm964, %v3337
      %3600 = vst.msk [vmem:[#allocation3 + $0x214] sm:$0xf] %vm964, %v3351
      %3601 = vst.msk [vmem:[#allocation3 + $0x238] sm:$0xf] %vm964, %v3361
      %3602 = vst.msk [vmem:[#allocation3 + $0x25c] sm:$0xf] %vm964, %v3375
      %3603 = vst.msk [vmem:[#allocation3 + $0x280] sm:$0xf] %vm964, %v3385
      %3604 = vst.msk [vmem:[#allocation3 + $0x2a4] sm:$0xf] %vm964, %v3399
      %3605 = vst.msk [vmem:[#allocation3 + $0x2c8] sm:$0xf] %vm964, %v3409
      %3606 = vst.msk [vmem:[#allocation3 + $0x2ec] sm:$0xf] %vm964, %v3423
      %3607 = vst.msk [vmem:[#allocation3 + $0x310] sm:$0xf] %vm964, %v3433
      %3608 = vst.msk [vmem:[#allocation3 + $0x334] sm:$0xf] %vm964, %v3447
      %3609 = vst.msk [vmem:[#allocation3 + $0x358] sm:$0xf] %vm964, %v3457
      %3610 = vst.msk [vmem:[#allocation3 + $0x37c] sm:$0xf] %vm964, %v3471
      %3611 = vst.msk [vmem:[#allocation3 + $0x3a0] sm:$0xf] %vm964, %v3481
      %3612 = vst.msk [vmem:[#allocation3 + $0x3c4] sm:$0xf] %vm964, %v3495
      %3613 = vst.msk [vmem:[#allocation3 + $0x3e8] sm:$0xf] %vm964, %v3505
      %3614 = vst.msk [vmem:[#allocation3 + $0x40c] sm:$0xf] %vm964, %v3519
      %3615 = vst.msk [vmem:[#allocation3 + $0x430] sm:$0xf] %vm964, %v3529
      %3616 = vst.msk [vmem:[#allocation3 + $0x454] sm:$0xf] %vm964, %v3543
      %3617 = vst.msk [vmem:[#allocation3 + $0x478] sm:$0xf] %vm964, %v3553
      %v3618 = vld [vmem:[%s1076] sm:$0xe]
      %v3619 = vld [vmem:[%s1076 + $0x4] sm:$0xf]
      %v3620 = vld [vmem:[%s1076 + $0x8] sm:$0x1]
      %v3621 = vld [vmem:[%s1076 + $0xc] sm:$0xe]
      %v3622 = vld [vmem:[%s1076 + $0x10] sm:$0xf]
      %v3623 = vld [vmem:[%s1076 + $0x14] sm:$0x1]
      %v3624 = vld [vmem:[%s1076 + $0x18] sm:$0xe]
      %v3625 = vld [vmem:[%s1076 + $0x1c] sm:$0xf]
      %v3626 = vld [vmem:[%s1076 + $0x20] sm:$0x1]
      %v3627 = vld [vmem:[%s1076 + $0x24] sm:$0xe]
      %v3628 = vld [vmem:[%s1076 + $0x28] sm:$0xf]
      %v3629 = vld [vmem:[%s1076 + $0x2c] sm:$0x1]
      %v3630 = vld [vmem:[%s1076 + $0x30] sm:$0xe]
      %v3631 = vld [vmem:[%s1076 + $0x34] sm:$0xf]
      %v3632 = vld [vmem:[%s1076 + $0x38] sm:$0x1]
      %v3633 = vld [vmem:[%s1076 + $0x3c] sm:$0xe]
      %v3634 = vld [vmem:[%s1076 + $0x40] sm:$0xf]
      %v3635 = vld [vmem:[%s1076 + $0x44] sm:$0x1]
      %v3636 = vld [vmem:[%s1076 + $0x48] sm:$0xe]
      %v3637 = vld [vmem:[%s1076 + $0x4c] sm:$0xf]
      %v3638 = vld [vmem:[%s1076 + $0x50] sm:$0x1]
      %v3639 = vld [vmem:[%s1076 + $0x54] sm:$0xe]
      %v3640 = vld [vmem:[%s1076 + $0x58] sm:$0xf]
      %v3641 = vld [vmem:[%s1076 + $0x5c] sm:$0x1]
      %v3642 = vld [vmem:[%s1076 + $0x60] sm:$0xe]
      %v3643 = vld [vmem:[%s1076 + $0x64] sm:$0xf]
      %v3644 = vld [vmem:[%s1076 + $0x68] sm:$0x1]
      %v3645 = vld [vmem:[%s1076 + $0x6c] sm:$0xe]
      %v3646 = vld [vmem:[%s1076 + $0x70] sm:$0xf]
      %v3647 = vld [vmem:[%s1076 + $0x74] sm:$0x1]
      %v3648 = vld [vmem:[%s1076 + $0x78] sm:$0xe]
      %v3649 = vld [vmem:[%s1076 + $0x7c] sm:$0xf]
      %v3650 = vld [vmem:[%s1076 + $0x80] sm:$0x1]
      %v3651 = vld [vmem:[%s1076 + $0x84] sm:$0xe]
      %v3652 = vld [vmem:[%s1076 + $0x88] sm:$0xf]
      %v3653 = vld [vmem:[%s1076 + $0x8c] sm:$0x1]
      %v3654 = vld [vmem:[%s1076 + $0x90] sm:$0xe]
      %v3655 = vld [vmem:[%s1076 + $0x94] sm:$0xf]
      %v3656 = vld [vmem:[%s1076 + $0x98] sm:$0x1]
      %v3657 = vld [vmem:[%s1076 + $0x9c] sm:$0xe]
      %v3658 = vld [vmem:[%s1076 + $0xa0] sm:$0xf]
      %v3659 = vld [vmem:[%s1076 + $0xa4] sm:$0x1]
      %v3660 = vld [vmem:[%s1076 + $0xa8] sm:$0xe]
      %v3661 = vld [vmem:[%s1076 + $0xac] sm:$0xf]
      %v3662 = vld [vmem:[%s1076 + $0xb0] sm:$0x1]
      %v3663 = vld [vmem:[%s1076 + $0xb4] sm:$0xe]
      %v3664 = vld [vmem:[%s1076 + $0xb8] sm:$0xf]
      %v3665 = vld [vmem:[%s1076 + $0xbc] sm:$0x1]
      %v3714 = vrot.slane %v3618, 5
      %v3715 = vrot.slane %v3714, 4
      %v3716 = vrot.slane %v3619, 5
      %v3717 = vsel %vm2049, %v3715, %v3716
      %v3718 = vrot.slane %v3716, 4
      %v3719 = vrot.slane %v3620, 5
      %v3720 = vsel %vm2049, %v3718, %v3719
      %v3721 = vrot.slane %v3621, 5
      %v3722 = vrot.slane %v3721, 4
      %v3723 = vrot.slane %v3622, 5
      %v3724 = vsel %vm2049, %v3722, %v3723
      %v3725 = vrot.slane %v3723, 4
      %v3726 = vrot.slane %v3623, 5
      %v3727 = vsel %vm2049, %v3725, %v3726
      %v3728 = vrot.slane %v3624, 5
      %v3729 = vrot.slane %v3728, 4
      %v3730 = vrot.slane %v3625, 5
      %v3731 = vsel %vm2049, %v3729, %v3730
      %v3732 = vrot.slane %v3730, 4
      %v3733 = vrot.slane %v3626, 5
      %v3734 = vsel %vm2049, %v3732, %v3733
      %v3735 = vrot.slane %v3627, 5
      %v3736 = vrot.slane %v3735, 4
      %v3737 = vrot.slane %v3628, 5
      %v3738 = vsel %vm2049, %v3736, %v3737
      %v3739 = vrot.slane %v3737, 4
      %v3740 = vrot.slane %v3629, 5
      %v3741 = vsel %vm2049, %v3739, %v3740
      %v3742 = vrot.slane %v3630, 5
      %v3743 = vrot.slane %v3742, 4
      %v3744 = vrot.slane %v3631, 5
      %v3745 = vsel %vm2049, %v3743, %v3744
      %v3746 = vrot.slane %v3744, 4
      %v3747 = vrot.slane %v3632, 5
      %v3748 = vsel %vm2049, %v3746, %v3747
      %v3749 = vrot.slane %v3633, 5
      %v3750 = vrot.slane %v3749, 4
      %v3751 = vrot.slane %v3634, 5
      %v3752 = vsel %vm2049, %v3750, %v3751
      %v3753 = vrot.slane %v3751, 4
      %v3754 = vrot.slane %v3635, 5
      %v3755 = vsel %vm2049, %v3753, %v3754
      %v3756 = vrot.slane %v3636, 5
      %v3757 = vrot.slane %v3756, 4
      %v3758 = vrot.slane %v3637, 5
      %v3759 = vsel %vm2049, %v3757, %v3758
      %v3760 = vrot.slane %v3758, 4
      %v3761 = vrot.slane %v3638, 5
      %v3762 = vsel %vm2049, %v3760, %v3761
      %v3763 = vrot.slane %v3639, 5
      %v3764 = vrot.slane %v3763, 4
      %v3765 = vrot.slane %v3640, 5
      %v3766 = vsel %vm2049, %v3764, %v3765
      %v3767 = vrot.slane %v3765, 4
      %v3768 = vrot.slane %v3641, 5
      %v3769 = vsel %vm2049, %v3767, %v3768
      %v3770 = vrot.slane %v3642, 5
      %v3771 = vrot.slane %v3770, 4
      %v3772 = vrot.slane %v3643, 5
      %v3773 = vsel %vm2049, %v3771, %v3772
      %v3774 = vrot.slane %v3772, 4
      %v3775 = vrot.slane %v3644, 5
      %v3776 = vsel %vm2049, %v3774, %v3775
      %v3777 = vrot.slane %v3645, 5
      %v3778 = vrot.slane %v3777, 4
      %v3779 = vrot.slane %v3646, 5
      %v3780 = vsel %vm2049, %v3778, %v3779
      %v3781 = vrot.slane %v3779, 4
      %v3782 = vrot.slane %v3647, 5
      %v3783 = vsel %vm2049, %v3781, %v3782
      %v3784 = vrot.slane %v3648, 5
      %v3785 = vrot.slane %v3784, 4
      %v3786 = vrot.slane %v3649, 5
      %v3787 = vsel %vm2049, %v3785, %v3786
      %v3788 = vrot.slane %v3786, 4
      %v3789 = vrot.slane %v3650, 5
      %v3790 = vsel %vm2049, %v3788, %v3789
      %v3791 = vrot.slane %v3651, 5
      %v3792 = vrot.slane %v3791, 4
      %v3793 = vrot.slane %v3652, 5
      %v3794 = vsel %vm2049, %v3792, %v3793
      %v3795 = vrot.slane %v3793, 4
      %v3796 = vrot.slane %v3653, 5
      %v3797 = vsel %vm2049, %v3795, %v3796
      %v3798 = vrot.slane %v3654, 5
      %v3799 = vrot.slane %v3798, 4
      %v3800 = vrot.slane %v3655, 5
      %v3801 = vsel %vm2049, %v3799, %v3800
      %v3802 = vrot.slane %v3800, 4
      %v3803 = vrot.slane %v3656, 5
      %v3804 = vsel %vm2049, %v3802, %v3803
      %v3805 = vrot.slane %v3657, 5
      %v3806 = vrot.slane %v3805, 4
      %v3807 = vrot.slane %v3658, 5
      %v3808 = vsel %vm2049, %v3806, %v3807
      %v3809 = vrot.slane %v3807, 4
      %v3810 = vrot.slane %v3659, 5
      %v3811 = vsel %vm2049, %v3809, %v3810
      %v3812 = vrot.slane %v3660, 5
      %v3813 = vrot.slane %v3812, 4
      %v3814 = vrot.slane %v3661, 5
      %v3815 = vsel %vm2049, %v3813, %v3814
      %v3816 = vrot.slane %v3814, 4
      %v3817 = vrot.slane %v3662, 5
      %v3818 = vsel %vm2049, %v3816, %v3817
      %v3819 = vrot.slane %v3663, 5
      %v3820 = vrot.slane %v3819, 4
      %v3821 = vrot.slane %v3664, 5
      %v3822 = vsel %vm2049, %v3820, %v3821
      %v3823 = vrot.slane %v3821, 4
      %v3824 = vrot.slane %v3665, 5
      %v3825 = vsel %vm2049, %v3823, %v3824
      %3858 = vst.msk [vmem:[#allocation3 + $0x20] sm:$0xf] %vm964, %v3717
      %3859 = vst.msk [vmem:[#allocation3 + $0x44] sm:$0xf] %vm964, %v3720
      %3860 = vst.msk [vmem:[#allocation3 + $0x68] sm:$0xf] %vm964, %v3724
      %3861 = vst.msk [vmem:[#allocation3 + $0x8c] sm:$0xf] %vm964, %v3727
      %3862 = vst.msk [vmem:[#allocation3 + $0xb0] sm:$0xf] %vm964, %v3731
      %3863 = vst.msk [vmem:[#allocation3 + $0xd4] sm:$0xf] %vm964, %v3734
      %3864 = vst.msk [vmem:[#allocation3 + $0xf8] sm:$0xf] %vm964, %v3738
      %3865 = vst.msk [vmem:[#allocation3 + $0x11c] sm:$0xf] %vm964, %v3741
      %3866 = vst.msk [vmem:[#allocation3 + $0x140] sm:$0xf] %vm964, %v3745
      %3867 = vst.msk [vmem:[#allocation3 + $0x164] sm:$0xf] %vm964, %v3748
      %3868 = vst.msk [vmem:[#allocation3 + $0x188] sm:$0xf] %vm964, %v3752
      %3869 = vst.msk [vmem:[#allocation3 + $0x1ac] sm:$0xf] %vm964, %v3755
      %3870 = vst.msk [vmem:[#allocation3 + $0x1d0] sm:$0xf] %vm964, %v3759
      %3871 = vst.msk [vmem:[#allocation3 + $0x1f4] sm:$0xf] %vm964, %v3762
      %3872 = vst.msk [vmem:[#allocation3 + $0x218] sm:$0xf] %vm964, %v3766
      %3873 = vst.msk [vmem:[#allocation3 + $0x23c] sm:$0xf] %vm964, %v3769
      %3874 = vst.msk [vmem:[#allocation3 + $0x260] sm:$0xf] %vm964, %v3773
      %3875 = vst.msk [vmem:[#allocation3 + $0x284] sm:$0xf] %vm964, %v3776
      %3876 = vst.msk [vmem:[#allocation3 + $0x2a8] sm:$0xf] %vm964, %v3780
      %3877 = vst.msk [vmem:[#allocation3 + $0x2cc] sm:$0xf] %vm964, %v3783
      %3878 = vst.msk [vmem:[#allocation3 + $0x2f0] sm:$0xf] %vm964, %v3787
      %3879 = vst.msk [vmem:[#allocation3 + $0x314] sm:$0xf] %vm964, %v3790
      %3880 = vst.msk [vmem:[#allocation3 + $0x338] sm:$0xf] %vm964, %v3794
      %3881 = vst.msk [vmem:[#allocation3 + $0x35c] sm:$0xf] %vm964, %v3797
      %3882 = vst.msk [vmem:[#allocation3 + $0x380] sm:$0xf] %vm964, %v3801
      %3883 = vst.msk [vmem:[#allocation3 + $0x3a4] sm:$0xf] %vm964, %v3804
      %3884 = vst.msk [vmem:[#allocation3 + $0x3c8] sm:$0xf] %vm964, %v3808
      %3885 = vst.msk [vmem:[#allocation3 + $0x3ec] sm:$0xf] %vm964, %v3811
      %3886 = vst.msk [vmem:[#allocation3 + $0x410] sm:$0xf] %vm964, %v3815
      %3887 = vst.msk [vmem:[#allocation3 + $0x434] sm:$0xf] %vm964, %v3818
      %3888 = vst.msk [vmem:[#allocation3 + $0x458] sm:$0xf] %vm964, %v3822
      %3889 = vst.msk [vmem:[#allocation3 + $0x47c] sm:$0xf] %vm964, %v3825
      %v3890 = vld [vmem:[#allocation3] sm:$0xff]
      %v3891 = vld [vmem:[#allocation3 + $0x8] sm:$0xff]
      %v3892 = vld [vmem:[#allocation3 + $0x10] sm:$0xff]
      %v3893 = vld [vmem:[#allocation3 + $0x18] sm:$0xff]
      %v3894 = vld [vmem:[#allocation3 + $0x20] sm:$0xf]
      %v3895 = vld [vmem:[#allocation3 + $0x24] sm:$0xff]
      %v3896 = vld [vmem:[#allocation3 + $0x2c] sm:$0xff]
      %v3897 = vld [vmem:[#allocation3 + $0x34] sm:$0xff]
      %v3898 = vld [vmem:[#allocation3 + $0x3c] sm:$0xff]
      %v3899 = vld [vmem:[#allocation3 + $0x44] sm:$0xf]
      %v3900 = vld [vmem:[#allocation3 + $0x48] sm:$0xff]
      %v3901 = vld [vmem:[#allocation3 + $0x50] sm:$0xff]
      %v3902 = vld [vmem:[#allocation3 + $0x58] sm:$0xff]
      %v3903 = vld [vmem:[#allocation3 + $0x60] sm:$0xff]
      %v3904 = vld [vmem:[#allocation3 + $0x68] sm:$0xf]
      %v3905 = vld [vmem:[#allocation3 + $0x6c] sm:$0xff]
      %v3906 = vld [vmem:[#allocation3 + $0x74] sm:$0xff]
      %v3907 = vld [vmem:[#allocation3 + $0x7c] sm:$0xff]
      %v3908 = vld [vmem:[#allocation3 + $0x84] sm:$0xff]
      %v3909 = vld [vmem:[#allocation3 + $0x8c] sm:$0xf]
      %v3910 = vld [vmem:[#allocation3 + $0x90] sm:$0xff]
      %v3911 = vld [vmem:[#allocation3 + $0x98] sm:$0xff]
      %v3912 = vld [vmem:[#allocation3 + $0xa0] sm:$0xff]
      %v3913 = vld [vmem:[#allocation3 + $0xa8] sm:$0xff]
      %v3914 = vld [vmem:[#allocation3 + $0xb0] sm:$0xf]
      %v3915 = vld [vmem:[#allocation3 + $0xb4] sm:$0xff]
      %v3916 = vld [vmem:[#allocation3 + $0xbc] sm:$0xff]
      %v3917 = vld [vmem:[#allocation3 + $0xc4] sm:$0xff]
      %v3918 = vld [vmem:[#allocation3 + $0xcc] sm:$0xff]
      %v3919 = vld [vmem:[#allocation3 + $0xd4] sm:$0xf]
      %v3920 = vld [vmem:[#allocation3 + $0xd8] sm:$0xff]
      %v3921 = vld [vmem:[#allocation3 + $0xe0] sm:$0xff]
      %v3922 = vld [vmem:[#allocation3 + $0xe8] sm:$0xff]
      %v3923 = vld [vmem:[#allocation3 + $0xf0] sm:$0xff]
      %v3924 = vld [vmem:[#allocation3 + $0xf8] sm:$0xf]
      %v3925 = vld [vmem:[#allocation3 + $0xfc] sm:$0xff]
      %v3926 = vld [vmem:[#allocation3 + $0x104] sm:$0xff]
      %v3927 = vld [vmem:[#allocation3 + $0x10c] sm:$0xff]
      %v3928 = vld [vmem:[#allocation3 + $0x114] sm:$0xff]
      %v3929 = vld [vmem:[#allocation3 + $0x11c] sm:$0xf]
      %v3930 = vld [vmem:[#allocation3 + $0x120] sm:$0xff]
      %v3931 = vld [vmem:[#allocation3 + $0x128] sm:$0xff]
      %v3932 = vld [vmem:[#allocation3 + $0x130] sm:$0xff]
      %v3933 = vld [vmem:[#allocation3 + $0x138] sm:$0xff]
      %v3934 = vld [vmem:[#allocation3 + $0x140] sm:$0xf]
      %v3935 = vld [vmem:[#allocation3 + $0x144] sm:$0xff]
      %v3936 = vld [vmem:[#allocation3 + $0x14c] sm:$0xff]
      %v3937 = vld [vmem:[#allocation3 + $0x154] sm:$0xff]
      %v3938 = vld [vmem:[#allocation3 + $0x15c] sm:$0xff]
      %v3939 = vld [vmem:[#allocation3 + $0x164] sm:$0xf]
      %v3940 = vld [vmem:[#allocation3 + $0x168] sm:$0xff]
      %v3941 = vld [vmem:[#allocation3 + $0x170] sm:$0xff]
      %v3942 = vld [vmem:[#allocation3 + $0x178] sm:$0xff]
      %v3943 = vld [vmem:[#allocation3 + $0x180] sm:$0xff]
      %v3944 = vld [vmem:[#allocation3 + $0x188] sm:$0xf]
      %v3945 = vld [vmem:[#allocation3 + $0x18c] sm:$0xff]
      %v3946 = vld [vmem:[#allocation3 + $0x194] sm:$0xff]
      %v3947 = vld [vmem:[#allocation3 + $0x19c] sm:$0xff]
      %v3948 = vld [vmem:[#allocation3 + $0x1a4] sm:$0xff]
      %v3949 = vld [vmem:[#allocation3 + $0x1ac] sm:$0xf]
      %v3950 = vld [vmem:[#allocation3 + $0x1b0] sm:$0xff]
      %v3951 = vld [vmem:[#allocation3 + $0x1b8] sm:$0xff]
      %v3952 = vld [vmem:[#allocation3 + $0x1c0] sm:$0xff]
      %v3953 = vld [vmem:[#allocation3 + $0x1c8] sm:$0xff]
      %v3954 = vld [vmem:[#allocation3 + $0x1d0] sm:$0xf]
      %v3955 = vld [vmem:[#allocation3 + $0x1d4] sm:$0xff]
      %v3956 = vld [vmem:[#allocation3 + $0x1dc] sm:$0xff]
      %v3957 = vld [vmem:[#allocation3 + $0x1e4] sm:$0xff]
      %v3958 = vld [vmem:[#allocation3 + $0x1ec] sm:$0xff]
      %v3959 = vld [vmem:[#allocation3 + $0x1f4] sm:$0xf]
      %v3960 = vld [vmem:[#allocation3 + $0x1f8] sm:$0xff]
      %v3961 = vld [vmem:[#allocation3 + $0x200] sm:$0xff]
      %v3962 = vld [vmem:[#allocation3 + $0x208] sm:$0xff]
      %v3963 = vld [vmem:[#allocation3 + $0x210] sm:$0xff]
      %v3964 = vld [vmem:[#allocation3 + $0x218] sm:$0xf]
      %v3965 = vld [vmem:[#allocation3 + $0x21c] sm:$0xff]
      %v3966 = vld [vmem:[#allocation3 + $0x224] sm:$0xff]
      %v3967 = vld [vmem:[#allocation3 + $0x22c] sm:$0xff]
      %v3968 = vld [vmem:[#allocation3 + $0x234] sm:$0xff]
      %v3969 = vld [vmem:[#allocation3 + $0x23c] sm:$0xf]
      %v3970 = vld [vmem:[#allocation3 + $0x240] sm:$0xff]
      %v3971 = vld [vmem:[#allocation3 + $0x248] sm:$0xff]
      %v3972 = vld [vmem:[#allocation3 + $0x250] sm:$0xff]
      %v3973 = vld [vmem:[#allocation3 + $0x258] sm:$0xff]
      %v3974 = vld [vmem:[#allocation3 + $0x260] sm:$0xf]
      %v3975 = vld [vmem:[#allocation3 + $0x264] sm:$0xff]
      %v3976 = vld [vmem:[#allocation3 + $0x26c] sm:$0xff]
      %v3977 = vld [vmem:[#allocation3 + $0x274] sm:$0xff]
      %v3978 = vld [vmem:[#allocation3 + $0x27c] sm:$0xff]
      %v3979 = vld [vmem:[#allocation3 + $0x284] sm:$0xf]
      %v3980 = vld [vmem:[#allocation3 + $0x288] sm:$0xff]
      %v3981 = vld [vmem:[#allocation3 + $0x290] sm:$0xff]
      %v3982 = vld [vmem:[#allocation3 + $0x298] sm:$0xff]
      %v3983 = vld [vmem:[#allocation3 + $0x2a0] sm:$0xff]
      %v3984 = vld [vmem:[#allocation3 + $0x2a8] sm:$0xf]
      %v3985 = vld [vmem:[#allocation3 + $0x2ac] sm:$0xff]
      %v3986 = vld [vmem:[#allocation3 + $0x2b4] sm:$0xff]
      %v3987 = vld [vmem:[#allocation3 + $0x2bc] sm:$0xff]
      %v3988 = vld [vmem:[#allocation3 + $0x2c4] sm:$0xff]
      %v3989 = vld [vmem:[#allocation3 + $0x2cc] sm:$0xf]
      %v3990 = vld [vmem:[#allocation3 + $0x2d0] sm:$0xff]
      %v3991 = vld [vmem:[#allocation3 + $0x2d8] sm:$0xff]
      %v3992 = vld [vmem:[#allocation3 + $0x2e0] sm:$0xff]
      %v3993 = vld [vmem:[#allocation3 + $0x2e8] sm:$0xff]
      %v3994 = vld [vmem:[#allocation3 + $0x2f0] sm:$0xf]
      %v3995 = vld [vmem:[#allocation3 + $0x2f4] sm:$0xff]
      %v3996 = vld [vmem:[#allocation3 + $0x2fc] sm:$0xff]
      %v3997 = vld [vmem:[#allocation3 + $0x304] sm:$0xff]
      %v3998 = vld [vmem:[#allocation3 + $0x30c] sm:$0xff]
      %v3999 = vld [vmem:[#allocation3 + $0x314] sm:$0xf]
      %v4000 = vld [vmem:[#allocation3 + $0x318] sm:$0xff]
      %v4001 = vld [vmem:[#allocation3 + $0x320] sm:$0xff]
      %v4002 = vld [vmem:[#allocation3 + $0x328] sm:$0xff]
      %v4003 = vld [vmem:[#allocation3 + $0x330] sm:$0xff]
      %v4004 = vld [vmem:[#allocation3 + $0x338] sm:$0xf]
      %v4005 = vld [vmem:[#allocation3 + $0x33c] sm:$0xff]
      %v4006 = vld [vmem:[#allocation3 + $0x344] sm:$0xff]
      %v4007 = vld [vmem:[#allocation3 + $0x34c] sm:$0xff]
      %v4008 = vld [vmem:[#allocation3 + $0x354] sm:$0xff]
      %v4009 = vld [vmem:[#allocation3 + $0x35c] sm:$0xf]
      %v4010 = vld [vmem:[#allocation3 + $0x360] sm:$0xff]
      %v4011 = vld [vmem:[#allocation3 + $0x368] sm:$0xff]
      %v4012 = vld [vmem:[#allocation3 + $0x370] sm:$0xff]
      %v4013 = vld [vmem:[#allocation3 + $0x378] sm:$0xff]
      %v4014 = vld [vmem:[#allocation3 + $0x380] sm:$0xf]
      %v4015 = vld [vmem:[#allocation3 + $0x384] sm:$0xff]
      %v4016 = vld [vmem:[#allocation3 + $0x38c] sm:$0xff]
      %v4017 = vld [vmem:[#allocation3 + $0x394] sm:$0xff]
      %v4018 = vld [vmem:[#allocation3 + $0x39c] sm:$0xff]
      %v4019 = vld [vmem:[#allocation3 + $0x3a4] sm:$0xf]
      %v4020 = vld [vmem:[#allocation3 + $0x3a8] sm:$0xff]
      %v4021 = vld [vmem:[#allocation3 + $0x3b0] sm:$0xff]
      %v4022 = vld [vmem:[#allocation3 + $0x3b8] sm:$0xff]
      %v4023 = vld [vmem:[#allocation3 + $0x3c0] sm:$0xff]
      %v4024 = vld [vmem:[#allocation3 + $0x3c8] sm:$0xf]
      %v4025 = vld [vmem:[#allocation3 + $0x3cc] sm:$0xff]
      %v4026 = vld [vmem:[#allocation3 + $0x3d4] sm:$0xff]
      %v4027 = vld [vmem:[#allocation3 + $0x3dc] sm:$0xff]
      %v4028 = vld [vmem:[#allocation3 + $0x3e4] sm:$0xff]
      %v4029 = vld [vmem:[#allocation3 + $0x3ec] sm:$0xf]
      %v4030 = vld [vmem:[#allocation3 + $0x3f0] sm:$0xff]
      %v4031 = vld [vmem:[#allocation3 + $0x3f8] sm:$0xff]
      %v4032 = vld [vmem:[#allocation3 + $0x400] sm:$0xff]
      %v4033 = vld [vmem:[#allocation3 + $0x408] sm:$0xff]
      %v4034 = vld [vmem:[#allocation3 + $0x410] sm:$0xf]
      %v4035 = vld [vmem:[#allocation3 + $0x414] sm:$0xff]
      %v4036 = vld [vmem:[#allocation3 + $0x41c] sm:$0xff]
      %v4037 = vld [vmem:[#allocation3 + $0x424] sm:$0xff]
      %v4038 = vld [vmem:[#allocation3 + $0x42c] sm:$0xff]
      %v4039 = vld [vmem:[#allocation3 + $0x434] sm:$0xf]
      %v4040 = vld [vmem:[#allocation3 + $0x438] sm:$0xff]
      %v4041 = vld [vmem:[#allocation3 + $0x440] sm:$0xff]
      %v4042 = vld [vmem:[#allocation3 + $0x448] sm:$0xff]
      %v4043 = vld [vmem:[#allocation3 + $0x450] sm:$0xff]
      %v4044 = vld [vmem:[#allocation3 + $0x458] sm:$0xf]
      %v4045 = vld [vmem:[#allocation3 + $0x45c] sm:$0xff]
      %v4046 = vld [vmem:[#allocation3 + $0x464] sm:$0xff]
      %v4047 = vld [vmem:[#allocation3 + $0x46c] sm:$0xff]
      %v4048 = vld [vmem:[#allocation3 + $0x474] sm:$0xff]
      %v4049 = vld [vmem:[#allocation3 + $0x47c] sm:$0xf]
      %v4050 = vld [vmem:[%s1] sm:$0xf]
      %v4051 = vld [vmem:[%s1 + $0x4] sm:$0xf]
      %v4052 = vld [vmem:[%s1 + $0x8] sm:$0xf]
      %v4053 = vld [vmem:[%s1 + $0xc] sm:$0xf]
      %v4054 = vld [vmem:[%s1 + $0x10] sm:$0xf]
      %v4055 = vld [vmem:[%s1 + $0x14] sm:$0xf]
      %v4056 = vld [vmem:[%s1 + $0x18] sm:$0xf]
      %v4057 = vld [vmem:[%s1 + $0x1c] sm:$0xf]
      %v4058 = vld [vmem:[%s1 + $0x20] sm:$0xf]
      %v4059 = vld [vmem:[%s1 + $0x24] sm:$0xf]
      %v4060 = vld [vmem:[%s1 + $0x28] sm:$0xf]
      %v4061 = vld [vmem:[%s1 + $0x2c] sm:$0xf]
      %v4062 = vld [vmem:[%s1 + $0x30] sm:$0xf]
      %v4063 = vld [vmem:[%s1 + $0x34] sm:$0xf]
      %v4064 = vld [vmem:[%s1 + $0x38] sm:$0xf]
      %v4065 = vld [vmem:[%s1 + $0x3c] sm:$0xf]
      %v4066 = vld [vmem:[%s1 + $0x40] sm:$0xf]
      %v4067 = vld [vmem:[%s1 + $0x44] sm:$0xf]
      %v4068 = vld [vmem:[%s1 + $0x48] sm:$0xf]
      %v4069 = vld [vmem:[%s1 + $0x4c] sm:$0xf]
      %v4070 = vld [vmem:[%s1 + $0x50] sm:$0xf]
      %v4071 = vld [vmem:[%s1 + $0x54] sm:$0xf]
      %v4072 = vld [vmem:[%s1 + $0x58] sm:$0xf]
      %v4073 = vld [vmem:[%s1 + $0x5c] sm:$0xf]
      %v4074 = vld [vmem:[%s1 + $0x60] sm:$0xf]
      %v4075 = vld [vmem:[%s1 + $0x64] sm:$0xf]
      %v4076 = vld [vmem:[%s1 + $0x68] sm:$0xf]
      %v4077 = vld [vmem:[%s1 + $0x6c] sm:$0xf]
      %v4078 = vld [vmem:[%s1 + $0x70] sm:$0xf]
      %v4079 = vld [vmem:[%s1 + $0x74] sm:$0xf]
      %v4080 = vld [vmem:[%s1 + $0x78] sm:$0xf]
      %v4081 = vld [vmem:[%s1 + $0x7c] sm:$0xf]
      %v4082 = vld [vmem:[%s1 + $0x80] sm:$0xf]
      %v4083 = vld [vmem:[%s1 + $0x84] sm:$0xf]
      %v4084 = vld [vmem:[%s1 + $0x88] sm:$0xf]
      %v4085 = vld [vmem:[%s1 + $0x8c] sm:$0xf]
      %v4086 = vld [vmem:[%s1 + $0x90] sm:$0xf]
      %v4087 = vld [vmem:[%s1 + $0x94] sm:$0xf]
      %v4088 = vld [vmem:[%s1 + $0x98] sm:$0xf]
      %v4089 = vld [vmem:[%s1 + $0x9c] sm:$0xf]
      %v4090 = vld [vmem:[%s1 + $0xa0] sm:$0xf]
      %v4091 = vld [vmem:[%s1 + $0xa4] sm:$0xf]
      %v4092 = vld [vmem:[%s1 + $0xa8] sm:$0xf]
      %v4093 = vld [vmem:[%s1 + $0xac] sm:$0xf]
      %v4094 = vld [vmem:[%s1 + $0xb0] sm:$0xf]
      %v4095 = vld [vmem:[%s1 + $0xb4] sm:$0xf]
      %v4096 = vld [vmem:[%s1 + $0xb8] sm:$0xf]
      %v4097 = vld [vmem:[%s1 + $0xbc] sm:$0xf]
      %v4098 = vld [vmem:[%s1 + $0xc0] sm:$0xf]
      %v4099 = vld [vmem:[%s1 + $0xc4] sm:$0xf]
      %v4100 = vld [vmem:[%s1 + $0xc8] sm:$0xf]
      %v4101 = vld [vmem:[%s1 + $0xcc] sm:$0xf]
      %v4102 = vld [vmem:[%s1 + $0xd0] sm:$0xf]
      %v4103 = vld [vmem:[%s1 + $0xd4] sm:$0xf]
      %v4104 = vld [vmem:[%s1 + $0xd8] sm:$0xf]
      %v4105 = vld [vmem:[%s1 + $0xdc] sm:$0xf]
      %v4106 = vld [vmem:[%s1 + $0xe0] sm:$0xf]
      %v4107 = vld [vmem:[%s1 + $0xe4] sm:$0xf]
      %v4108 = vld [vmem:[%s1 + $0xe8] sm:$0xf]
      %v4109 = vld [vmem:[%s1 + $0xec] sm:$0xf]
      %v4110 = vld [vmem:[%s1 + $0xf0] sm:$0xf]
      %v4111 = vld [vmem:[%s1 + $0xf4] sm:$0xf]
      %v4112 = vld [vmem:[%s1 + $0xf8] sm:$0xf]
      %v4113 = vld [vmem:[%s1 + $0xfc] sm:$0xf]
      %v4114 = vld [vmem:[%s1 + $0x100] sm:$0xf]
      %v4115 = vld [vmem:[%s1 + $0x104] sm:$0xf]
      %v4116 = vld [vmem:[%s1 + $0x108] sm:$0xf]
      %v4117 = vld [vmem:[%s1 + $0x10c] sm:$0xf]
      %v4118 = vld [vmem:[%s1 + $0x110] sm:$0xf]
      %v4119 = vld [vmem:[%s1 + $0x114] sm:$0xf]
      %v4120 = vld [vmem:[%s1 + $0x118] sm:$0xf]
      %v4121 = vld [vmem:[%s1 + $0x11c] sm:$0xf]
      %v4122 = vld [vmem:[%s1 + $0x120] sm:$0xf]
      %v4123 = vld [vmem:[%s1 + $0x124] sm:$0xf]
      %v4124 = vld [vmem:[%s1 + $0x128] sm:$0xf]
      %v4125 = vld [vmem:[%s1 + $0x12c] sm:$0xf]
      %v4126 = vld [vmem:[%s1 + $0x130] sm:$0xf]
      %v4127 = vld [vmem:[%s1 + $0x134] sm:$0xf]
      %v4128 = vld [vmem:[%s1 + $0x138] sm:$0xf]
      %v4129 = vld [vmem:[%s1 + $0x13c] sm:$0xf]
      %v4130 = vld [vmem:[%s1 + $0x140] sm:$0xf]
      %v4131 = vld [vmem:[%s1 + $0x144] sm:$0xf]
      %v4132 = vld [vmem:[%s1 + $0x148] sm:$0xf]
      %v4133 = vld [vmem:[%s1 + $0x14c] sm:$0xf]
      %v4134 = vld [vmem:[%s1 + $0x150] sm:$0xf]
      %v4135 = vld [vmem:[%s1 + $0x154] sm:$0xf]
      %v4136 = vld [vmem:[%s1 + $0x158] sm:$0xf]
      %v4137 = vld [vmem:[%s1 + $0x15c] sm:$0xf]
      %v4138 = vld [vmem:[%s1 + $0x160] sm:$0xf]
      %v4139 = vld [vmem:[%s1 + $0x164] sm:$0xf]
      %v4140 = vld [vmem:[%s1 + $0x168] sm:$0xf]
      %v4141 = vld [vmem:[%s1 + $0x16c] sm:$0xf]
      %v4142 = vld [vmem:[%s1 + $0x170] sm:$0xf]
      %v4143 = vld [vmem:[%s1 + $0x174] sm:$0xf]
      %v4144 = vld [vmem:[%s1 + $0x178] sm:$0xf]
      %v4145 = vld [vmem:[%s1 + $0x17c] sm:$0xf]
      %v4146 = vld [vmem:[%s1 + $0x180] sm:$0xf]
      %v4147 = vld [vmem:[%s1 + $0x184] sm:$0xf]
      %v4148 = vld [vmem:[%s1 + $0x188] sm:$0xf]
      %v4149 = vld [vmem:[%s1 + $0x18c] sm:$0xf]
      %v4150 = vld [vmem:[%s1 + $0x190] sm:$0xf]
      %v4151 = vld [vmem:[%s1 + $0x194] sm:$0xf]
      %v4152 = vld [vmem:[%s1 + $0x198] sm:$0xf]
      %v4153 = vld [vmem:[%s1 + $0x19c] sm:$0xf]
      %v4154 = vld [vmem:[%s1 + $0x1a0] sm:$0xf]
      %v4155 = vld [vmem:[%s1 + $0x1a4] sm:$0xf]
      %v4156 = vld [vmem:[%s1 + $0x1a8] sm:$0xf]
      %v4157 = vld [vmem:[%s1 + $0x1ac] sm:$0xf]
      %v4158 = vld [vmem:[%s1 + $0x1b0] sm:$0xf]
      %v4159 = vld [vmem:[%s1 + $0x1b4] sm:$0xf]
      %v4160 = vld [vmem:[%s1 + $0x1b8] sm:$0xf]
      %v4161 = vld [vmem:[%s1 + $0x1bc] sm:$0xf]
      %v4162 = vld [vmem:[%s1 + $0x1c0] sm:$0xf]
      %v4163 = vld [vmem:[%s1 + $0x1c4] sm:$0xf]
      %v4164 = vld [vmem:[%s1 + $0x1c8] sm:$0xf]
      %v4165 = vld [vmem:[%s1 + $0x1cc] sm:$0xf]
      %v4166 = vld [vmem:[%s1 + $0x1d0] sm:$0xf]
      %v4167 = vld [vmem:[%s1 + $0x1d4] sm:$0xf]
      %v4168 = vld [vmem:[%s1 + $0x1d8] sm:$0xf]
      %v4169 = vld [vmem:[%s1 + $0x1dc] sm:$0xf]
      %v4170 = vld [vmem:[%s1 + $0x1e0] sm:$0xf]
      %v4171 = vld [vmem:[%s1 + $0x1e4] sm:$0xf]
      %v4172 = vld [vmem:[%s1 + $0x1e8] sm:$0xf]
      %v4173 = vld [vmem:[%s1 + $0x1ec] sm:$0xf]
      %v4174 = vld [vmem:[%s1 + $0x1f0] sm:$0xf]
      %v4175 = vld [vmem:[%s1 + $0x1f4] sm:$0xf]
      %v4176 = vld [vmem:[%s1 + $0x1f8] sm:$0xf]
      %v4177 = vld [vmem:[%s1 + $0x1fc] sm:$0xf]
      %v4178 = vld [vmem:[%s1 + $0x200] sm:$0xf]
      %v4179 = vld [vmem:[%s1 + $0x204] sm:$0xf]
      %v4180 = vld [vmem:[%s1 + $0x208] sm:$0xf]
      %v4181 = vld [vmem:[%s1 + $0x20c] sm:$0xf]
      %v4182 = vld [vmem:[%s1 + $0x210] sm:$0xf]
      %v4183 = vld [vmem:[%s1 + $0x214] sm:$0xf]
      %v4184 = vld [vmem:[%s1 + $0x218] sm:$0xf]
      %v4185 = vld [vmem:[%s1 + $0x21c] sm:$0xf]
      %v4186 = vld [vmem:[%s1 + $0x220] sm:$0xf]
      %v4187 = vld [vmem:[%s1 + $0x224] sm:$0xf]
      %v4188 = vld [vmem:[%s1 + $0x228] sm:$0xf]
      %v4189 = vld [vmem:[%s1 + $0x22c] sm:$0xf]
      %v4190 = vld [vmem:[%s1 + $0x230] sm:$0xf]
      %v4191 = vld [vmem:[%s1 + $0x234] sm:$0xf]
      %v4192 = vld [vmem:[%s1 + $0x238] sm:$0xf]
      %v4193 = vld [vmem:[%s1 + $0x23c] sm:$0xf]
      %v4354 = vunpack.c.l.b16 %v3890
      %v4355 = vunpack.c.h.b16 %v3890
      %v4356 = vunpack.c.l.b16 %v3891
      %v4357 = vunpack.c.h.b16 %v3891
      %v4358 = vunpack.c.l.b16 %v3892
      %v4359 = vunpack.c.h.b16 %v3892
      %v4360 = vunpack.c.l.b16 %v3893
      %v4361 = vunpack.c.h.b16 %v3893
      %v4362 = vunpack.c.l.b16 %v3894
      %v4363 = vunpack.c.l.b16 %v3895
      %v4364 = vunpack.c.h.b16 %v3895
      %v4365 = vunpack.c.l.b16 %v3896
      %v4366 = vunpack.c.h.b16 %v3896
      %v4367 = vunpack.c.l.b16 %v3897
      %v4368 = vunpack.c.h.b16 %v3897
      %v4369 = vunpack.c.l.b16 %v3898
      %v4370 = vunpack.c.h.b16 %v3898
      %v4371 = vunpack.c.l.b16 %v3899
      %v4372 = vunpack.c.l.b16 %v3900
      %v4373 = vunpack.c.h.b16 %v3900
      %v4374 = vunpack.c.l.b16 %v3901
      %v4375 = vunpack.c.h.b16 %v3901
      %v4376 = vunpack.c.l.b16 %v3902
      %v4377 = vunpack.c.h.b16 %v3902
      %v4378 = vunpack.c.l.b16 %v3903
      %v4379 = vunpack.c.h.b16 %v3903
      %v4380 = vunpack.c.l.b16 %v3904
      %v4381 = vunpack.c.l.b16 %v3905
      %v4382 = vunpack.c.h.b16 %v3905
      %v4383 = vunpack.c.l.b16 %v3906
      %v4384 = vunpack.c.h.b16 %v3906
      %v4385 = vunpack.c.l.b16 %v3907
      %v4386 = vunpack.c.h.b16 %v3907
      %v4387 = vunpack.c.l.b16 %v3908
      %v4388 = vunpack.c.h.b16 %v3908
      %v4389 = vunpack.c.l.b16 %v3909
      %v4390 = vunpack.c.l.b16 %v3910
      %v4391 = vunpack.c.h.b16 %v3910
      %v4392 = vunpack.c.l.b16 %v3911
      %v4393 = vunpack.c.h.b16 %v3911
      %v4394 = vunpack.c.l.b16 %v3912
      %v4395 = vunpack.c.h.b16 %v3912
      %v4396 = vunpack.c.l.b16 %v3913
      %v4397 = vunpack.c.h.b16 %v3913
      %v4398 = vunpack.c.l.b16 %v3914
      %v4399 = vunpack.c.l.b16 %v3915
      %v4400 = vunpack.c.h.b16 %v3915
      %v4401 = vunpack.c.l.b16 %v3916
      %v4402 = vunpack.c.h.b16 %v3916
      %v4403 = vunpack.c.l.b16 %v3917
      %v4404 = vunpack.c.h.b16 %v3917
      %v4405 = vunpack.c.l.b16 %v3918
      %v4406 = vunpack.c.h.b16 %v3918
      %v4407 = vunpack.c.l.b16 %v3919
      %v4408 = vunpack.c.l.b16 %v3920
      %v4409 = vunpack.c.h.b16 %v3920
      %v4410 = vunpack.c.l.b16 %v3921
      %v4411 = vunpack.c.h.b16 %v3921
      %v4412 = vunpack.c.l.b16 %v3922
      %v4413 = vunpack.c.h.b16 %v3922
      %v4414 = vunpack.c.l.b16 %v3923
      %v4415 = vunpack.c.h.b16 %v3923
      %v4416 = vunpack.c.l.b16 %v3924
      %v4417 = vunpack.c.l.b16 %v3925
      %v4418 = vunpack.c.h.b16 %v3925
      %v4419 = vunpack.c.l.b16 %v3926
      %v4420 = vunpack.c.h.b16 %v3926
      %v4421 = vunpack.c.l.b16 %v3927
      %v4422 = vunpack.c.h.b16 %v3927
      %v4423 = vunpack.c.l.b16 %v3928
      %v4424 = vunpack.c.h.b16 %v3928
      %v4425 = vunpack.c.l.b16 %v3929
      %v4426 = vunpack.c.l.b16 %v3930
      %v4427 = vunpack.c.h.b16 %v3930
      %v4428 = vunpack.c.l.b16 %v3931
      %v4429 = vunpack.c.h.b16 %v3931
      %v4430 = vunpack.c.l.b16 %v3932
      %v4431 = vunpack.c.h.b16 %v3932
      %v4432 = vunpack.c.l.b16 %v3933
      %v4433 = vunpack.c.h.b16 %v3933
      %v4434 = vunpack.c.l.b16 %v3934
      %v4435 = vunpack.c.l.b16 %v3935
      %v4436 = vunpack.c.h.b16 %v3935
      %v4437 = vunpack.c.l.b16 %v3936
      %v4438 = vunpack.c.h.b16 %v3936
      %v4439 = vunpack.c.l.b16 %v3937
      %v4440 = vunpack.c.h.b16 %v3937
      %v4441 = vunpack.c.l.b16 %v3938
      %v4442 = vunpack.c.h.b16 %v3938
      %v4443 = vunpack.c.l.b16 %v3939
      %v4444 = vunpack.c.l.b16 %v3940
      %v4445 = vunpack.c.h.b16 %v3940
      %v4446 = vunpack.c.l.b16 %v3941
      %v4447 = vunpack.c.h.b16 %v3941
      %v4448 = vunpack.c.l.b16 %v3942
      %v4449 = vunpack.c.h.b16 %v3942
      %v4450 = vunpack.c.l.b16 %v3943
      %v4451 = vunpack.c.h.b16 %v3943
      %v4452 = vunpack.c.l.b16 %v3944
      %v4453 = vunpack.c.l.b16 %v3945
      %v4454 = vunpack.c.h.b16 %v3945
      %v4455 = vunpack.c.l.b16 %v3946
      %v4456 = vunpack.c.h.b16 %v3946
      %v4457 = vunpack.c.l.b16 %v3947
      %v4458 = vunpack.c.h.b16 %v3947
      %v4459 = vunpack.c.l.b16 %v3948
      %v4460 = vunpack.c.h.b16 %v3948
      %v4461 = vunpack.c.l.b16 %v3949
      %v4462 = vunpack.c.l.b16 %v3950
      %v4463 = vunpack.c.h.b16 %v3950
      %v4464 = vunpack.c.l.b16 %v3951
      %v4465 = vunpack.c.h.b16 %v3951
      %v4466 = vunpack.c.l.b16 %v3952
      %v4467 = vunpack.c.h.b16 %v3952
      %v4468 = vunpack.c.l.b16 %v3953
      %v4469 = vunpack.c.h.b16 %v3953
      %v4470 = vunpack.c.l.b16 %v3954
      %v4471 = vunpack.c.l.b16 %v3955
      %v4472 = vunpack.c.h.b16 %v3955
      %v4473 = vunpack.c.l.b16 %v3956
      %v4474 = vunpack.c.h.b16 %v3956
      %v4475 = vunpack.c.l.b16 %v3957
      %v4476 = vunpack.c.h.b16 %v3957
      %v4477 = vunpack.c.l.b16 %v3958
      %v4478 = vunpack.c.h.b16 %v3958
      %v4479 = vunpack.c.l.b16 %v3959
      %v4480 = vunpack.c.l.b16 %v3960
      %v4481 = vunpack.c.h.b16 %v3960
      %v4482 = vunpack.c.l.b16 %v3961
      %v4483 = vunpack.c.h.b16 %v3961
      %v4484 = vunpack.c.l.b16 %v3962
      %v4485 = vunpack.c.h.b16 %v3962
      %v4486 = vunpack.c.l.b16 %v3963
      %v4487 = vunpack.c.h.b16 %v3963
      %v4488 = vunpack.c.l.b16 %v3964
      %v4489 = vunpack.c.l.b16 %v3965
      %v4490 = vunpack.c.h.b16 %v3965
      %v4491 = vunpack.c.l.b16 %v3966
      %v4492 = vunpack.c.h.b16 %v3966
      %v4493 = vunpack.c.l.b16 %v3967
      %v4494 = vunpack.c.h.b16 %v3967
      %v4495 = vunpack.c.l.b16 %v3968
      %v4496 = vunpack.c.h.b16 %v3968
      %v4497 = vunpack.c.l.b16 %v3969
      %v4498 = vunpack.c.l.b16 %v3970
      %v4499 = vunpack.c.h.b16 %v3970
      %v4500 = vunpack.c.l.b16 %v3971
      %v4501 = vunpack.c.h.b16 %v3971
      %v4502 = vunpack.c.l.b16 %v3972
      %v4503 = vunpack.c.h.b16 %v3972
      %v4504 = vunpack.c.l.b16 %v3973
      %v4505 = vunpack.c.h.b16 %v3973
      %v4506 = vunpack.c.l.b16 %v3974
      %v4507 = vunpack.c.l.b16 %v3975
      %v4508 = vunpack.c.h.b16 %v3975
      %v4509 = vunpack.c.l.b16 %v3976
      %v4510 = vunpack.c.h.b16 %v3976
      %v4511 = vunpack.c.l.b16 %v3977
      %v4512 = vunpack.c.h.b16 %v3977
      %v4513 = vunpack.c.l.b16 %v3978
      %v4514 = vunpack.c.h.b16 %v3978
      %v4515 = vunpack.c.l.b16 %v3979
      %v4516 = vunpack.c.l.b16 %v3980
      %v4517 = vunpack.c.h.b16 %v3980
      %v4518 = vunpack.c.l.b16 %v3981
      %v4519 = vunpack.c.h.b16 %v3981
      %v4520 = vunpack.c.l.b16 %v3982
      %v4521 = vunpack.c.h.b16 %v3982
      %v4522 = vunpack.c.l.b16 %v3983
      %v4523 = vunpack.c.h.b16 %v3983
      %v4524 = vunpack.c.l.b16 %v3984
      %v4525 = vunpack.c.l.b16 %v3985
      %v4526 = vunpack.c.h.b16 %v3985
      %v4527 = vunpack.c.l.b16 %v3986
      %v4528 = vunpack.c.h.b16 %v3986
      %v4529 = vunpack.c.l.b16 %v3987
      %v4530 = vunpack.c.h.b16 %v3987
      %v4531 = vunpack.c.l.b16 %v3988
      %v4532 = vunpack.c.h.b16 %v3988
      %v4533 = vunpack.c.l.b16 %v3989
      %v4534 = vunpack.c.l.b16 %v3990
      %v4535 = vunpack.c.h.b16 %v3990
      %v4536 = vunpack.c.l.b16 %v3991
      %v4537 = vunpack.c.h.b16 %v3991
      %v4538 = vunpack.c.l.b16 %v3992
      %v4539 = vunpack.c.h.b16 %v3992
      %v4540 = vunpack.c.l.b16 %v3993
      %v4541 = vunpack.c.h.b16 %v3993
      %v4542 = vunpack.c.l.b16 %v3994
      %v4543 = vunpack.c.l.b16 %v3995
      %v4544 = vunpack.c.h.b16 %v3995
      %v4545 = vunpack.c.l.b16 %v3996
      %v4546 = vunpack.c.h.b16 %v3996
      %v4547 = vunpack.c.l.b16 %v3997
      %v4548 = vunpack.c.h.b16 %v3997
      %v4549 = vunpack.c.l.b16 %v3998
      %v4550 = vunpack.c.h.b16 %v3998
      %v4551 = vunpack.c.l.b16 %v3999
      %v4552 = vunpack.c.l.b16 %v4000
      %v4553 = vunpack.c.h.b16 %v4000
      %v4554 = vunpack.c.l.b16 %v4001
      %v4555 = vunpack.c.h.b16 %v4001
      %v4556 = vunpack.c.l.b16 %v4002
      %v4557 = vunpack.c.h.b16 %v4002
      %v4558 = vunpack.c.l.b16 %v4003
      %v4559 = vunpack.c.h.b16 %v4003
      %v4560 = vunpack.c.l.b16 %v4004
      %v4561 = vunpack.c.l.b16 %v4005
      %v4562 = vunpack.c.h.b16 %v4005
      %v4563 = vunpack.c.l.b16 %v4006
      %v4564 = vunpack.c.h.b16 %v4006
      %v4565 = vunpack.c.l.b16 %v4007
      %v4566 = vunpack.c.h.b16 %v4007
      %v4567 = vunpack.c.l.b16 %v4008
      %v4568 = vunpack.c.h.b16 %v4008
      %v4569 = vunpack.c.l.b16 %v4009
      %v4570 = vunpack.c.l.b16 %v4010
      %v4571 = vunpack.c.h.b16 %v4010
      %v4572 = vunpack.c.l.b16 %v4011
      %v4573 = vunpack.c.h.b16 %v4011
      %v4574 = vunpack.c.l.b16 %v4012
      %v4575 = vunpack.c.h.b16 %v4012
      %v4576 = vunpack.c.l.b16 %v4013
      %v4577 = vunpack.c.h.b16 %v4013
      %v4578 = vunpack.c.l.b16 %v4014
      %v4579 = vunpack.c.l.b16 %v4015
      %v4580 = vunpack.c.h.b16 %v4015
      %v4581 = vunpack.c.l.b16 %v4016
      %v4582 = vunpack.c.h.b16 %v4016
      %v4583 = vunpack.c.l.b16 %v4017
      %v4584 = vunpack.c.h.b16 %v4017
      %v4585 = vunpack.c.l.b16 %v4018
      %v4586 = vunpack.c.h.b16 %v4018
      %v4587 = vunpack.c.l.b16 %v4019
      %v4588 = vunpack.c.l.b16 %v4020
      %v4589 = vunpack.c.h.b16 %v4020
      %v4590 = vunpack.c.l.b16 %v4021
      %v4591 = vunpack.c.h.b16 %v4021
      %v4592 = vunpack.c.l.b16 %v4022
      %v4593 = vunpack.c.h.b16 %v4022
      %v4594 = vunpack.c.l.b16 %v4023
      %v4595 = vunpack.c.h.b16 %v4023
      %v4596 = vunpack.c.l.b16 %v4024
      %v4597 = vunpack.c.l.b16 %v4025
      %v4598 = vunpack.c.h.b16 %v4025
      %v4599 = vunpack.c.l.b16 %v4026
      %v4600 = vunpack.c.h.b16 %v4026
      %v4601 = vunpack.c.l.b16 %v4027
      %v4602 = vunpack.c.h.b16 %v4027
      %v4603 = vunpack.c.l.b16 %v4028
      %v4604 = vunpack.c.h.b16 %v4028
      %v4605 = vunpack.c.l.b16 %v4029
      %v4606 = vunpack.c.l.b16 %v4030
      %v4607 = vunpack.c.h.b16 %v4030
      %v4608 = vunpack.c.l.b16 %v4031
      %v4609 = vunpack.c.h.b16 %v4031
      %v4610 = vunpack.c.l.b16 %v4032
      %v4611 = vunpack.c.h.b16 %v4032
      %v4612 = vunpack.c.l.b16 %v4033
      %v4613 = vunpack.c.h.b16 %v4033
      %v4614 = vunpack.c.l.b16 %v4034
      %v4615 = vunpack.c.l.b16 %v4035
      %v4616 = vunpack.c.h.b16 %v4035
      %v4617 = vunpack.c.l.b16 %v4036
      %v4618 = vunpack.c.h.b16 %v4036
      %v4619 = vunpack.c.l.b16 %v4037
      %v4620 = vunpack.c.h.b16 %v4037
      %v4621 = vunpack.c.l.b16 %v4038
      %v4622 = vunpack.c.h.b16 %v4038
      %v4623 = vunpack.c.l.b16 %v4039
      %v4624 = vunpack.c.l.b16 %v4040
      %v4625 = vunpack.c.h.b16 %v4040
      %v4626 = vunpack.c.l.b16 %v4041
      %v4627 = vunpack.c.h.b16 %v4041
      %v4628 = vunpack.c.l.b16 %v4042
      %v4629 = vunpack.c.h.b16 %v4042
      %v4630 = vunpack.c.l.b16 %v4043
      %v4631 = vunpack.c.h.b16 %v4043
      %v4632 = vunpack.c.l.b16 %v4044
      %v4633 = vunpack.c.l.b16 %v4045
      %v4634 = vunpack.c.h.b16 %v4045
      %v4635 = vunpack.c.l.b16 %v4046
      %v4636 = vunpack.c.h.b16 %v4046
      %v4637 = vunpack.c.l.b16 %v4047
      %v4638 = vunpack.c.h.b16 %v4047
      %v4639 = vunpack.c.l.b16 %v4048
      %v4640 = vunpack.c.h.b16 %v4048
      %v4641 = vunpack.c.l.b16 %v4049
      %v4642 = vpack.c.b16 %v4363, %v4354
      %v4643 = vpack.c.b16 %v4364, %v4355
      %v4644 = vpack.c.b16 %v4365, %v4356
      %v4645 = vpack.c.b16 %v4366, %v4357
      %v4646 = vpack.c.b16 %v4367, %v4358
      %v4647 = vpack.c.b16 %v4368, %v4359
      %v4648 = vpack.c.b16 %v4369, %v4360
      %v4649 = vpack.c.b16 %v4370, %v4361
      %v4650 = vpack.c.b16 %v4371, %v4362
      %v4651 = vpack.c.b16 %v4381, %v4372
      %v4652 = vpack.c.b16 %v4382, %v4373
      %v4653 = vpack.c.b16 %v4383, %v4374
      %v4654 = vpack.c.b16 %v4384, %v4375
      %v4655 = vpack.c.b16 %v4385, %v4376
      %v4656 = vpack.c.b16 %v4386, %v4377
      %v4657 = vpack.c.b16 %v4387, %v4378
      %v4658 = vpack.c.b16 %v4388, %v4379
      %v4659 = vpack.c.b16 %v4389, %v4380
      %v4660 = vpack.c.b16 %v4399, %v4390
      %v4661 = vpack.c.b16 %v4400, %v4391
      %v4662 = vpack.c.b16 %v4401, %v4392
      %v4663 = vpack.c.b16 %v4402, %v4393
      %v4664 = vpack.c.b16 %v4403, %v4394
      %v4665 = vpack.c.b16 %v4404, %v4395
      %v4666 = vpack.c.b16 %v4405, %v4396
      %v4667 = vpack.c.b16 %v4406, %v4397
      %v4668 = vpack.c.b16 %v4407, %v4398
      %v4669 = vpack.c.b16 %v4417, %v4408
      %v4670 = vpack.c.b16 %v4418, %v4409
      %v4671 = vpack.c.b16 %v4419, %v4410
      %v4672 = vpack.c.b16 %v4420, %v4411
      %v4673 = vpack.c.b16 %v4421, %v4412
      %v4674 = vpack.c.b16 %v4422, %v4413
      %v4675 = vpack.c.b16 %v4423, %v4414
      %v4676 = vpack.c.b16 %v4424, %v4415
      %v4677 = vpack.c.b16 %v4425, %v4416
      %v4678 = vpack.c.b16 %v4435, %v4426
      %v4679 = vpack.c.b16 %v4436, %v4427
      %v4680 = vpack.c.b16 %v4437, %v4428
      %v4681 = vpack.c.b16 %v4438, %v4429
      %v4682 = vpack.c.b16 %v4439, %v4430
      %v4683 = vpack.c.b16 %v4440, %v4431
      %v4684 = vpack.c.b16 %v4441, %v4432
      %v4685 = vpack.c.b16 %v4442, %v4433
      %v4686 = vpack.c.b16 %v4443, %v4434
      %v4687 = vpack.c.b16 %v4453, %v4444
      %v4688 = vpack.c.b16 %v4454, %v4445
      %v4689 = vpack.c.b16 %v4455, %v4446
      %v4690 = vpack.c.b16 %v4456, %v4447
      %v4691 = vpack.c.b16 %v4457, %v4448
      %v4692 = vpack.c.b16 %v4458, %v4449
      %v4693 = vpack.c.b16 %v4459, %v4450
      %v4694 = vpack.c.b16 %v4460, %v4451
      %v4695 = vpack.c.b16 %v4461, %v4452
      %v4696 = vpack.c.b16 %v4471, %v4462
      %v4697 = vpack.c.b16 %v4472, %v4463
      %v4698 = vpack.c.b16 %v4473, %v4464
      %v4699 = vpack.c.b16 %v4474, %v4465
      %v4700 = vpack.c.b16 %v4475, %v4466
      %v4701 = vpack.c.b16 %v4476, %v4467
      %v4702 = vpack.c.b16 %v4477, %v4468
      %v4703 = vpack.c.b16 %v4478, %v4469
      %v4704 = vpack.c.b16 %v4479, %v4470
      %v4705 = vpack.c.b16 %v4489, %v4480
      %v4706 = vpack.c.b16 %v4490, %v4481
      %v4707 = vpack.c.b16 %v4491, %v4482
      %v4708 = vpack.c.b16 %v4492, %v4483
      %v4709 = vpack.c.b16 %v4493, %v4484
      %v4710 = vpack.c.b16 %v4494, %v4485
      %v4711 = vpack.c.b16 %v4495, %v4486
      %v4712 = vpack.c.b16 %v4496, %v4487
      %v4713 = vpack.c.b16 %v4497, %v4488
      %v4714 = vpack.c.b16 %v4507, %v4498
      %v4715 = vpack.c.b16 %v4508, %v4499
      %v4716 = vpack.c.b16 %v4509, %v4500
      %v4717 = vpack.c.b16 %v4510, %v4501
      %v4718 = vpack.c.b16 %v4511, %v4502
      %v4719 = vpack.c.b16 %v4512, %v4503
      %v4720 = vpack.c.b16 %v4513, %v4504
      %v4721 = vpack.c.b16 %v4514, %v4505
      %v4722 = vpack.c.b16 %v4515, %v4506
      %v4723 = vpack.c.b16 %v4525, %v4516
      %v4724 = vpack.c.b16 %v4526, %v4517
      %v4725 = vpack.c.b16 %v4527, %v4518
      %v4726 = vpack.c.b16 %v4528, %v4519
      %v4727 = vpack.c.b16 %v4529, %v4520
      %v4728 = vpack.c.b16 %v4530, %v4521
      %v4729 = vpack.c.b16 %v4531, %v4522
      %v4730 = vpack.c.b16 %v4532, %v4523
      %v4731 = vpack.c.b16 %v4533, %v4524
      %v4732 = vpack.c.b16 %v4543, %v4534
      %v4733 = vpack.c.b16 %v4544, %v4535
      %v4734 = vpack.c.b16 %v4545, %v4536
      %v4735 = vpack.c.b16 %v4546, %v4537
      %v4736 = vpack.c.b16 %v4547, %v4538
      %v4737 = vpack.c.b16 %v4548, %v4539
      %v4738 = vpack.c.b16 %v4549, %v4540
      %v4739 = vpack.c.b16 %v4550, %v4541
      %v4740 = vpack.c.b16 %v4551, %v4542
      %v4741 = vpack.c.b16 %v4561, %v4552
      %v4742 = vpack.c.b16 %v4562, %v4553
      %v4743 = vpack.c.b16 %v4563, %v4554
      %v4744 = vpack.c.b16 %v4564, %v4555
      %v4745 = vpack.c.b16 %v4565, %v4556
      %v4746 = vpack.c.b16 %v4566, %v4557
      %v4747 = vpack.c.b16 %v4567, %v4558
      %v4748 = vpack.c.b16 %v4568, %v4559
      %v4749 = vpack.c.b16 %v4569, %v4560
      %v4750 = vpack.c.b16 %v4579, %v4570
      %v4751 = vpack.c.b16 %v4580, %v4571
      %v4752 = vpack.c.b16 %v4581, %v4572
      %v4753 = vpack.c.b16 %v4582, %v4573
      %v4754 = vpack.c.b16 %v4583, %v4574
      %v4755 = vpack.c.b16 %v4584, %v4575
      %v4756 = vpack.c.b16 %v4585, %v4576
      %v4757 = vpack.c.b16 %v4586, %v4577
      %v4758 = vpack.c.b16 %v4587, %v4578
      %v4759 = vpack.c.b16 %v4597, %v4588
      %v4760 = vpack.c.b16 %v4598, %v4589
      %v4761 = vpack.c.b16 %v4599, %v4590
      %v4762 = vpack.c.b16 %v4600, %v4591
      %v4763 = vpack.c.b16 %v4601, %v4592
      %v4764 = vpack.c.b16 %v4602, %v4593
      %v4765 = vpack.c.b16 %v4603, %v4594
      %v4766 = vpack.c.b16 %v4604, %v4595
      %v4767 = vpack.c.b16 %v4605, %v4596
      %v4768 = vpack.c.b16 %v4615, %v4606
      %v4769 = vpack.c.b16 %v4616, %v4607
      %v4770 = vpack.c.b16 %v4617, %v4608
      %v4771 = vpack.c.b16 %v4618, %v4609
      %v4772 = vpack.c.b16 %v4619, %v4610
      %v4773 = vpack.c.b16 %v4620, %v4611
      %v4774 = vpack.c.b16 %v4621, %v4612
      %v4775 = vpack.c.b16 %v4622, %v4613
      %v4776 = vpack.c.b16 %v4623, %v4614
      %v4777 = vpack.c.b16 %v4633, %v4624
      %v4778 = vpack.c.b16 %v4634, %v4625
      %v4779 = vpack.c.b16 %v4635, %v4626
      %v4780 = vpack.c.b16 %v4636, %v4627
      %v4781 = vpack.c.b16 %v4637, %v4628
      %v4782 = vpack.c.b16 %v4638, %v4629
      %v4783 = vpack.c.b16 %v4639, %v4630
      %v4784 = vpack.c.b16 %v4640, %v4631
      %v4785 = vpack.c.b16 %v4641, %v4632
      %v5074 = vunpack.c.l.b16 %v4050
      %v5075 = vunpack.c.l.b16 %v4051
      %v5076 = vunpack.c.l.b16 %v4052
      %v5077 = vunpack.c.l.b16 %v4053
      %v5078 = vunpack.c.l.b16 %v4054
      %v5079 = vunpack.c.l.b16 %v4055
      %v5080 = vunpack.c.l.b16 %v4056
      %v5081 = vunpack.c.l.b16 %v4057
      %v5082 = vunpack.c.l.b16 %v4058
      %v5083 = vunpack.c.l.b16 %v4059
      %v5084 = vunpack.c.l.b16 %v4060
      %v5085 = vunpack.c.l.b16 %v4061
      %v5086 = vunpack.c.l.b16 %v4062
      %v5087 = vunpack.c.l.b16 %v4063
      %v5088 = vunpack.c.l.b16 %v4064
      %v5089 = vunpack.c.l.b16 %v4065
      %v5090 = vunpack.c.l.b16 %v4066
      %v5091 = vunpack.c.l.b16 %v4067
      %v5092 = vunpack.c.l.b16 %v4068
      %v5093 = vunpack.c.l.b16 %v4069
      %v5094 = vunpack.c.l.b16 %v4070
      %v5095 = vunpack.c.l.b16 %v4071
      %v5096 = vunpack.c.l.b16 %v4072
      %v5097 = vunpack.c.l.b16 %v4073
      %v5098 = vunpack.c.l.b16 %v4074
      %v5099 = vunpack.c.l.b16 %v4075
      %v5100 = vunpack.c.l.b16 %v4076
      %v5101 = vunpack.c.l.b16 %v4077
      %v5102 = vunpack.c.l.b16 %v4078
      %v5103 = vunpack.c.l.b16 %v4079
      %v5104 = vunpack.c.l.b16 %v4080
      %v5105 = vunpack.c.l.b16 %v4081
      %v5106 = vunpack.c.l.b16 %v4082
      %v5107 = vunpack.c.l.b16 %v4083
      %v5108 = vunpack.c.l.b16 %v4084
      %v5109 = vunpack.c.l.b16 %v4085
      %v5110 = vunpack.c.l.b16 %v4086
      %v5111 = vunpack.c.l.b16 %v4087
      %v5112 = vunpack.c.l.b16 %v4088
      %v5113 = vunpack.c.l.b16 %v4089
      %v5114 = vunpack.c.l.b16 %v4090
      %v5115 = vunpack.c.l.b16 %v4091
      %v5116 = vunpack.c.l.b16 %v4092
      %v5117 = vunpack.c.l.b16 %v4093
      %v5118 = vunpack.c.l.b16 %v4094
      %v5119 = vunpack.c.l.b16 %v4095
      %v5120 = vunpack.c.l.b16 %v4096
      %v5121 = vunpack.c.l.b16 %v4097
      %v5122 = vunpack.c.l.b16 %v4098
      %v5123 = vunpack.c.l.b16 %v4099
      %v5124 = vunpack.c.l.b16 %v4100
      %v5125 = vunpack.c.l.b16 %v4101
      %v5126 = vunpack.c.l.b16 %v4102
      %v5127 = vunpack.c.l.b16 %v4103
      %v5128 = vunpack.c.l.b16 %v4104
      %v5129 = vunpack.c.l.b16 %v4105
      %v5130 = vunpack.c.l.b16 %v4106
      %v5131 = vunpack.c.l.b16 %v4107
      %v5132 = vunpack.c.l.b16 %v4108
      %v5133 = vunpack.c.l.b16 %v4109
      %v5134 = vunpack.c.l.b16 %v4110
      %v5135 = vunpack.c.l.b16 %v4111
      %v5136 = vunpack.c.l.b16 %v4112
      %v5137 = vunpack.c.l.b16 %v4113
      %v5138 = vunpack.c.l.b16 %v4114
      %v5139 = vunpack.c.l.b16 %v4115
      %v5140 = vunpack.c.l.b16 %v4116
      %v5141 = vunpack.c.l.b16 %v4117
      %v5142 = vunpack.c.l.b16 %v4118
      %v5143 = vunpack.c.l.b16 %v4119
      %v5144 = vunpack.c.l.b16 %v4120
      %v5145 = vunpack.c.l.b16 %v4121
      %v5146 = vunpack.c.l.b16 %v4122
      %v5147 = vunpack.c.l.b16 %v4123
      %v5148 = vunpack.c.l.b16 %v4124
      %v5149 = vunpack.c.l.b16 %v4125
      %v5150 = vunpack.c.l.b16 %v4126
      %v5151 = vunpack.c.l.b16 %v4127
      %v5152 = vunpack.c.l.b16 %v4128
      %v5153 = vunpack.c.l.b16 %v4129
      %v5154 = vunpack.c.l.b16 %v4130
      %v5155 = vunpack.c.l.b16 %v4131
      %v5156 = vunpack.c.l.b16 %v4132
      %v5157 = vunpack.c.l.b16 %v4133
      %v5158 = vunpack.c.l.b16 %v4134
      %v5159 = vunpack.c.l.b16 %v4135
      %v5160 = vunpack.c.l.b16 %v4136
      %v5161 = vunpack.c.l.b16 %v4137
      %v5162 = vunpack.c.l.b16 %v4138
      %v5163 = vunpack.c.l.b16 %v4139
      %v5164 = vunpack.c.l.b16 %v4140
      %v5165 = vunpack.c.l.b16 %v4141
      %v5166 = vunpack.c.l.b16 %v4142
      %v5167 = vunpack.c.l.b16 %v4143
      %v5168 = vunpack.c.l.b16 %v4144
      %v5169 = vunpack.c.l.b16 %v4145
      %v5170 = vunpack.c.l.b16 %v4146
      %v5171 = vunpack.c.l.b16 %v4147
      %v5172 = vunpack.c.l.b16 %v4148
      %v5173 = vunpack.c.l.b16 %v4149
      %v5174 = vunpack.c.l.b16 %v4150
      %v5175 = vunpack.c.l.b16 %v4151
      %v5176 = vunpack.c.l.b16 %v4152
      %v5177 = vunpack.c.l.b16 %v4153
      %v5178 = vunpack.c.l.b16 %v4154
      %v5179 = vunpack.c.l.b16 %v4155
      %v5180 = vunpack.c.l.b16 %v4156
      %v5181 = vunpack.c.l.b16 %v4157
      %v5182 = vunpack.c.l.b16 %v4158
      %v5183 = vunpack.c.l.b16 %v4159
      %v5184 = vunpack.c.l.b16 %v4160
      %v5185 = vunpack.c.l.b16 %v4161
      %v5186 = vunpack.c.l.b16 %v4162
      %v5187 = vunpack.c.l.b16 %v4163
      %v5188 = vunpack.c.l.b16 %v4164
      %v5189 = vunpack.c.l.b16 %v4165
      %v5190 = vunpack.c.l.b16 %v4166
      %v5191 = vunpack.c.l.b16 %v4167
      %v5192 = vunpack.c.l.b16 %v4168
      %v5193 = vunpack.c.l.b16 %v4169
      %v5194 = vunpack.c.l.b16 %v4170
      %v5195 = vunpack.c.l.b16 %v4171
      %v5196 = vunpack.c.l.b16 %v4172
      %v5197 = vunpack.c.l.b16 %v4173
      %v5198 = vunpack.c.l.b16 %v4174
      %v5199 = vunpack.c.l.b16 %v4175
      %v5200 = vunpack.c.l.b16 %v4176
      %v5201 = vunpack.c.l.b16 %v4177
      %v5202 = vunpack.c.l.b16 %v4178
      %v5203 = vunpack.c.l.b16 %v4179
      %v5204 = vunpack.c.l.b16 %v4180
      %v5205 = vunpack.c.l.b16 %v4181
      %v5206 = vunpack.c.l.b16 %v4182
      %v5207 = vunpack.c.l.b16 %v4183
      %v5208 = vunpack.c.l.b16 %v4184
      %v5209 = vunpack.c.l.b16 %v4185
      %v5210 = vunpack.c.l.b16 %v4186
      %v5211 = vunpack.c.l.b16 %v4187
      %v5212 = vunpack.c.l.b16 %v4188
      %v5213 = vunpack.c.l.b16 %v4189
      %v5214 = vunpack.c.l.b16 %v4190
      %v5215 = vunpack.c.l.b16 %v4191
      %v5216 = vunpack.c.l.b16 %v4192
      %v5217 = vunpack.c.l.b16 %v4193
      %v5218 = vpack.c.b16 %v5075, %v5074
      %v5219 = vpack.c.b16 %v5077, %v5076
      %v5220 = vpack.c.b16 %v5079, %v5078
      %v5221 = vpack.c.b16 %v5081, %v5080
      %v5222 = vpack.c.b16 %v5083, %v5082
      %v5223 = vpack.c.b16 %v5085, %v5084
      %v5224 = vpack.c.b16 %v5087, %v5086
      %v5225 = vpack.c.b16 %v5089, %v5088
      %v5226 = vpack.c.b16 %v5091, %v5090
      %v5227 = vpack.c.b16 %v5093, %v5092
      %v5228 = vpack.c.b16 %v5095, %v5094
      %v5229 = vpack.c.b16 %v5097, %v5096
      %v5230 = vpack.c.b16 %v5099, %v5098
      %v5231 = vpack.c.b16 %v5101, %v5100
      %v5232 = vpack.c.b16 %v5103, %v5102
      %v5233 = vpack.c.b16 %v5105, %v5104
      %v5234 = vpack.c.b16 %v5107, %v5106
      %v5235 = vpack.c.b16 %v5109, %v5108
      %v5236 = vpack.c.b16 %v5111, %v5110
      %v5237 = vpack.c.b16 %v5113, %v5112
      %v5238 = vpack.c.b16 %v5115, %v5114
      %v5239 = vpack.c.b16 %v5117, %v5116
      %v5240 = vpack.c.b16 %v5119, %v5118
      %v5241 = vpack.c.b16 %v5121, %v5120
      %v5242 = vpack.c.b16 %v5123, %v5122
      %v5243 = vpack.c.b16 %v5125, %v5124
      %v5244 = vpack.c.b16 %v5127, %v5126
      %v5245 = vpack.c.b16 %v5129, %v5128
      %v5246 = vpack.c.b16 %v5131, %v5130
      %v5247 = vpack.c.b16 %v5133, %v5132
      %v5248 = vpack.c.b16 %v5135, %v5134
      %v5249 = vpack.c.b16 %v5137, %v5136
      %v5250 = vpack.c.b16 %v5139, %v5138
      %v5251 = vpack.c.b16 %v5141, %v5140
      %v5252 = vpack.c.b16 %v5143, %v5142
      %v5253 = vpack.c.b16 %v5145, %v5144
      %v5254 = vpack.c.b16 %v5147, %v5146
      %v5255 = vpack.c.b16 %v5149, %v5148
      %v5256 = vpack.c.b16 %v5151, %v5150
      %v5257 = vpack.c.b16 %v5153, %v5152
      %v5258 = vpack.c.b16 %v5155, %v5154
      %v5259 = vpack.c.b16 %v5157, %v5156
      %v5260 = vpack.c.b16 %v5159, %v5158
      %v5261 = vpack.c.b16 %v5161, %v5160
      %v5262 = vpack.c.b16 %v5163, %v5162
      %v5263 = vpack.c.b16 %v5165, %v5164
      %v5264 = vpack.c.b16 %v5167, %v5166
      %v5265 = vpack.c.b16 %v5169, %v5168
      %v5266 = vpack.c.b16 %v5171, %v5170
      %v5267 = vpack.c.b16 %v5173, %v5172
      %v5268 = vpack.c.b16 %v5175, %v5174
      %v5269 = vpack.c.b16 %v5177, %v5176
      %v5270 = vpack.c.b16 %v5179, %v5178
      %v5271 = vpack.c.b16 %v5181, %v5180
      %v5272 = vpack.c.b16 %v5183, %v5182
      %v5273 = vpack.c.b16 %v5185, %v5184
      %v5274 = vpack.c.b16 %v5187, %v5186
      %v5275 = vpack.c.b16 %v5189, %v5188
      %v5276 = vpack.c.b16 %v5191, %v5190
      %v5277 = vpack.c.b16 %v5193, %v5192
      %v5278 = vpack.c.b16 %v5195, %v5194
      %v5279 = vpack.c.b16 %v5197, %v5196
      %v5280 = vpack.c.b16 %v5199, %v5198
      %v5281 = vpack.c.b16 %v5201, %v5200
      %v5282 = vpack.c.b16 %v5203, %v5202
      %v5283 = vpack.c.b16 %v5205, %v5204
      %v5284 = vpack.c.b16 %v5207, %v5206
      %v5285 = vpack.c.b16 %v5209, %v5208
      %v5286 = vpack.c.b16 %v5211, %v5210
      %v5287 = vpack.c.b16 %v5213, %v5212
      %v5288 = vpack.c.b16 %v5215, %v5214
      %v5289 = vpack.c.b16 %v5217, %v5216
      %5362 = vmatprep.subr.bf16.mxu0 0
      %5363 = vmatpush1.bf16.msra.mxu0 %v5225
      %5364 = vmatprep.subr.bf16.mxu0 0
      %5365 = vmatpush1.bf16.msra.mxu0 %v5224
      %5366 = vmatprep.subr.bf16.mxu0 0
      %5367 = vmatpush1.bf16.msra.mxu0 %v5223
      %5368 = vmatprep.subr.bf16.mxu0 0
      %5369 = vmatpush1.bf16.msra.mxu0 %v5222
      %5370 = vmatprep.subr.bf16.mxu0 0
      %5371 = vmatpush1.bf16.msra.mxu0 %v5221
      %5372 = vmatprep.subr.bf16.mxu0 0
      %5373 = vmatpush1.bf16.msra.mxu0 %v5220
      %5374 = vmatprep.subr.bf16.mxu0 0
      %5375 = vmatpush1.bf16.msra.mxu0 %v5219
      %5376 = vmatprep.subr.bf16.mxu0 0
      %5377 = vmatpush1.bf16.msra.mxu0 %v5218
      %5378 = vmatprep.subr.bf16.mxu0 0
      %5379 = vmatpush2.bf16.msra.mxu0 %v5233
      %5380 = vmatprep.subr.bf16.mxu0 0
      %5381 = vmatpush2.bf16.msra.mxu0 %v5232
      %5382 = vmatprep.subr.bf16.mxu0 0
      %5383 = vmatpush2.bf16.msra.mxu0 %v5231
      %5384 = vmatprep.subr.bf16.mxu0 0
      %5385 = vmatpush2.bf16.msra.mxu0 %v5230
      %5386 = vmatprep.subr.bf16.mxu0 0
      %5387 = vmatpush2.bf16.msra.mxu0 %v5229
      %5388 = vmatprep.subr.bf16.mxu0 0
      %5389 = vmatpush2.bf16.msra.mxu0 %v5228
      %5390 = vmatprep.subr.bf16.mxu0 0
      %5391 = vmatpush2.bf16.msra.mxu0 %v5227
      %5392 = vmatprep.subr.bf16.mxu0 0
      %5393 = vmatpush2.bf16.msra.mxu0 %v5226
      %5394 = vmatprep.mubr.bf16.mxu0 %v4643
      %5395 = vmatmul.mubr.bf16.gmra.mxu0 %v4642
      %v5396 = vpop.f32.mrf.mxu0
      %v5397 = vadd.f32 0.0, %v5396
      %v5398 = vpop.f32.mrf.mxu0
      %v5399 = vpop.f32.mrf.mxu0
      %v5400 = vadd.f32 0.0, %v5399
      %v5401 = vpop.f32.mrf.mxu0
      %5402 = vmatprep.mubr.bf16.mxu0 %v4652
      %5403 = vmatmul.mubr.bf16.gmra.mxu0 %v4651
      %v5404 = vpop.f32.mrf.mxu0
      %v5405 = vadd.f32 0.0, %v5404
      %v5406 = vpop.f32.mrf.mxu0
      %v5407 = vpop.f32.mrf.mxu0
      %v5408 = vadd.f32 0.0, %v5407
      %v5409 = vpop.f32.mrf.mxu0
      %5410 = vmatprep.mubr.bf16.mxu0 %v4661
      %5411 = vmatmul.mubr.bf16.gmra.mxu0 %v4660
      %v5412 = vpop.f32.mrf.mxu0
      %v5413 = vadd.f32 0.0, %v5412
      %v5414 = vpop.f32.mrf.mxu0
      %v5415 = vpop.f32.mrf.mxu0
      %v5416 = vadd.f32 0.0, %v5415
      %v5417 = vpop.f32.mrf.mxu0
      %5418 = vmatprep.mubr.bf16.mxu0 %v4670
      %5419 = vmatmul.mubr.bf16.gmra.mxu0 %v4669
      %v5420 = vpop.f32.mrf.mxu0
      %v5421 = vadd.f32 0.0, %v5420
      %v5422 = vpop.f32.mrf.mxu0
      %v5423 = vpop.f32.mrf.mxu0
      %v5424 = vadd.f32 0.0, %v5423
      %v5425 = vpop.f32.mrf.mxu0
      %5426 = vmatprep.mubr.bf16.mxu0 %v4679
      %5427 = vmatmul.mubr.bf16.gmra.mxu0 %v4678
      %v5428 = vpop.f32.mrf.mxu0
      %v5429 = vadd.f32 0.0, %v5428
      %v5430 = vpop.f32.mrf.mxu0
      %v5431 = vpop.f32.mrf.mxu0
      %v5432 = vadd.f32 0.0, %v5431
      %v5433 = vpop.f32.mrf.mxu0
      %5434 = vmatprep.mubr.bf16.mxu0 %v4688
      %5435 = vmatmul.mubr.bf16.gmra.mxu0 %v4687
      %v5436 = vpop.f32.mrf.mxu0
      %v5437 = vadd.f32 0.0, %v5436
      %v5438 = vpop.f32.mrf.mxu0
      %v5439 = vpop.f32.mrf.mxu0
      %v5440 = vadd.f32 0.0, %v5439
      %v5441 = vpop.f32.mrf.mxu0
      %5442 = vmatprep.mubr.bf16.mxu0 %v4697
      %5443 = vmatmul.mubr.bf16.gmra.mxu0 %v4696
      %v5444 = vpop.f32.mrf.mxu0
      %v5445 = vadd.f32 0.0, %v5444
      %v5446 = vpop.f32.mrf.mxu0
      %v5447 = vpop.f32.mrf.mxu0
      %v5448 = vadd.f32 0.0, %v5447
      %v5449 = vpop.f32.mrf.mxu0
      %5450 = vmatprep.mubr.bf16.mxu0 %v4706
      %5451 = vmatmul.mubr.bf16.gmra.mxu0 %v4705
      %v5452 = vpop.f32.mrf.mxu0
      %v5453 = vadd.f32 0.0, %v5452
      %v5454 = vpop.f32.mrf.mxu0
      %v5455 = vpop.f32.mrf.mxu0
      %v5456 = vadd.f32 0.0, %v5455
      %v5457 = vpop.f32.mrf.mxu0
      %5458 = vmatprep.mubr.bf16.mxu0 %v4715
      %5459 = vmatmul.mubr.bf16.gmra.mxu0 %v4714
      %v5460 = vpop.f32.mrf.mxu0
      %v5461 = vadd.f32 0.0, %v5460
      %v5462 = vpop.f32.mrf.mxu0
      %v5463 = vpop.f32.mrf.mxu0
      %v5464 = vadd.f32 0.0, %v5463
      %v5465 = vpop.f32.mrf.mxu0
      %5466 = vmatprep.mubr.bf16.mxu0 %v4724
      %5467 = vmatmul.mubr.bf16.gmra.mxu0 %v4723
      %v5468 = vpop.f32.mrf.mxu0
      %v5469 = vadd.f32 0.0, %v5468
      %v5470 = vpop.f32.mrf.mxu0
      %v5471 = vpop.f32.mrf.mxu0
      %v5472 = vadd.f32 0.0, %v5471
      %v5473 = vpop.f32.mrf.mxu0
      %5474 = vmatprep.mubr.bf16.mxu0 %v4733
      %5475 = vmatmul.mubr.bf16.gmra.mxu0 %v4732
      %v5476 = vpop.f32.mrf.mxu0
      %v5477 = vadd.f32 0.0, %v5476
      %v5478 = vpop.f32.mrf.mxu0
      %v5479 = vpop.f32.mrf.mxu0
      %v5480 = vadd.f32 0.0, %v5479
      %v5481 = vpop.f32.mrf.mxu0
      %5482 = vmatprep.mubr.bf16.mxu0 %v4742
      %5483 = vmatmul.mubr.bf16.gmra.mxu0 %v4741
      %v5484 = vpop.f32.mrf.mxu0
      %v5485 = vadd.f32 0.0, %v5484
      %v5486 = vpop.f32.mrf.mxu0
      %v5487 = vpop.f32.mrf.mxu0
      %v5488 = vadd.f32 0.0, %v5487
      %v5489 = vpop.f32.mrf.mxu0
      %5490 = vmatprep.mubr.bf16.mxu0 %v4751
      %5491 = vmatmul.mubr.bf16.gmra.mxu0 %v4750
      %v5492 = vpop.f32.mrf.mxu0
      %v5493 = vadd.f32 0.0, %v5492
      %v5494 = vpop.f32.mrf.mxu0
      %v5495 = vpop.f32.mrf.mxu0
      %v5496 = vadd.f32 0.0, %v5495
      %v5497 = vpop.f32.mrf.mxu0
      %5498 = vmatprep.mubr.bf16.mxu0 %v4760
      %5499 = vmatmul.mubr.bf16.gmra.mxu0 %v4759
      %v5500 = vpop.f32.mrf.mxu0
      %v5501 = vadd.f32 0.0, %v5500
      %v5502 = vpop.f32.mrf.mxu0
      %v5503 = vpop.f32.mrf.mxu0
      %v5504 = vadd.f32 0.0, %v5503
      %v5505 = vpop.f32.mrf.mxu0
      %5506 = vmatprep.mubr.bf16.mxu0 %v4769
      %5507 = vmatmul.mubr.bf16.gmra.mxu0 %v4768
      %v5508 = vpop.f32.mrf.mxu0
      %v5509 = vadd.f32 0.0, %v5508
      %v5510 = vpop.f32.mrf.mxu0
      %v5511 = vpop.f32.mrf.mxu0
      %v5512 = vadd.f32 0.0, %v5511
      %v5513 = vpop.f32.mrf.mxu0
      %5514 = vmatprep.mubr.bf16.mxu0 %v4778
      %5515 = vmatmul.mubr.bf16.gmra.mxu0 %v4777
      %v5516 = vpop.f32.mrf.mxu0
      %v5517 = vadd.f32 0.0, %v5516
      %v5518 = vpop.f32.mrf.mxu0
      %v5519 = vpop.f32.mrf.mxu0
      %v5520 = vadd.f32 0.0, %v5519
      %v5521 = vpop.f32.mrf.mxu0
      %5522 = vdwg.mxu0
      %5523 = vmatprep.subr.bf16.mxu0 0
      %5524 = vmatpush1.bf16.msra.mxu0 %v5241
      %5525 = vmatprep.subr.bf16.mxu0 0
      %5526 = vmatpush1.bf16.msra.mxu0 %v5240
      %5527 = vmatprep.subr.bf16.mxu0 0
      %5528 = vmatpush1.bf16.msra.mxu0 %v5239
      %5529 = vmatprep.subr.bf16.mxu0 0
      %5530 = vmatpush1.bf16.msra.mxu0 %v5238
      %5531 = vmatprep.subr.bf16.mxu0 0
      %5532 = vmatpush1.bf16.msra.mxu0 %v5237
      %5533 = vmatprep.subr.bf16.mxu0 0
      %5534 = vmatpush1.bf16.msra.mxu0 %v5236
      %5535 = vmatprep.subr.bf16.mxu0 0
      %5536 = vmatpush1.bf16.msra.mxu0 %v5235
      %5537 = vmatprep.subr.bf16.mxu0 0
      %5538 = vmatpush1.bf16.msra.mxu0 %v5234
      %5539 = vmatprep.subr.bf16.mxu0 0
      %5540 = vmatpush2.bf16.msra.mxu0 %v5249
      %5541 = vmatprep.subr.bf16.mxu0 0
      %5542 = vmatpush2.bf16.msra.mxu0 %v5248
      %5543 = vmatprep.subr.bf16.mxu0 0
      %5544 = vmatpush2.bf16.msra.mxu0 %v5247
      %5545 = vmatprep.subr.bf16.mxu0 0
      %5546 = vmatpush2.bf16.msra.mxu0 %v5246
      %5547 = vmatprep.subr.bf16.mxu0 0
      %5548 = vmatpush2.bf16.msra.mxu0 %v5245
      %5549 = vmatprep.subr.bf16.mxu0 0
      %5550 = vmatpush2.bf16.msra.mxu0 %v5244
      %5551 = vmatprep.subr.bf16.mxu0 0
      %5552 = vmatpush2.bf16.msra.mxu0 %v5243
      %5553 = vmatprep.subr.bf16.mxu0 0
      %5554 = vmatpush2.bf16.msra.mxu0 %v5242
      %5555 = vmatprep.mubr.bf16.mxu0 %v4645
      %5556 = vmatmul.mubr.bf16.gmra.mxu0 %v4644
      %v5557 = vpop.f32.mrf.mxu0
      %v5558 = vadd.f32 %v5397, %v5557
      %v5559 = vpop.f32.mrf.mxu0
      %v5560 = vpop.f32.mrf.mxu0
      %v5561 = vadd.f32 %v5400, %v5560
      %v5562 = vpop.f32.mrf.mxu0
      %5563 = vmatprep.mubr.bf16.mxu0 %v4654
      %5564 = vmatmul.mubr.bf16.gmra.mxu0 %v4653
      %v5565 = vpop.f32.mrf.mxu0
      %v5566 = vadd.f32 %v5405, %v5565
      %v5567 = vpop.f32.mrf.mxu0
      %v5568 = vpop.f32.mrf.mxu0
      %v5569 = vadd.f32 %v5408, %v5568
      %v5570 = vpop.f32.mrf.mxu0
      %5571 = vmatprep.mubr.bf16.mxu0 %v4663
      %5572 = vmatmul.mubr.bf16.gmra.mxu0 %v4662
      %v5573 = vpop.f32.mrf.mxu0
      %v5574 = vadd.f32 %v5413, %v5573
      %v5575 = vpop.f32.mrf.mxu0
      %v5576 = vpop.f32.mrf.mxu0
      %v5577 = vadd.f32 %v5416, %v5576
      %v5578 = vpop.f32.mrf.mxu0
      %5579 = vmatprep.mubr.bf16.mxu0 %v4672
      %5580 = vmatmul.mubr.bf16.gmra.mxu0 %v4671
      %v5581 = vpop.f32.mrf.mxu0
      %v5582 = vadd.f32 %v5421, %v5581
      %v5583 = vpop.f32.mrf.mxu0
      %v5584 = vpop.f32.mrf.mxu0
      %v5585 = vadd.f32 %v5424, %v5584
      %v5586 = vpop.f32.mrf.mxu0
      %5587 = vmatprep.mubr.bf16.mxu0 %v4681
      %5588 = vmatmul.mubr.bf16.gmra.mxu0 %v4680
      %v5589 = vpop.f32.mrf.mxu0
      %v5590 = vadd.f32 %v5429, %v5589
      %v5591 = vpop.f32.mrf.mxu0
      %v5592 = vpop.f32.mrf.mxu0
      %v5593 = vadd.f32 %v5432, %v5592
      %v5594 = vpop.f32.mrf.mxu0
      %5595 = vmatprep.mubr.bf16.mxu0 %v4690
      %5596 = vmatmul.mubr.bf16.gmra.mxu0 %v4689
      %v5597 = vpop.f32.mrf.mxu0
      %v5598 = vadd.f32 %v5437, %v5597
      %v5599 = vpop.f32.mrf.mxu0
      %v5600 = vpop.f32.mrf.mxu0
      %v5601 = vadd.f32 %v5440, %v5600
      %v5602 = vpop.f32.mrf.mxu0
      %5603 = vmatprep.mubr.bf16.mxu0 %v4699
      %5604 = vmatmul.mubr.bf16.gmra.mxu0 %v4698
      %v5605 = vpop.f32.mrf.mxu0
      %v5606 = vadd.f32 %v5445, %v5605
      %v5607 = vpop.f32.mrf.mxu0
      %v5608 = vpop.f32.mrf.mxu0
      %v5609 = vadd.f32 %v5448, %v5608
      %v5610 = vpop.f32.mrf.mxu0
      %5611 = vmatprep.mubr.bf16.mxu0 %v4708
      %5612 = vmatmul.mubr.bf16.gmra.mxu0 %v4707
      %v5613 = vpop.f32.mrf.mxu0
      %v5614 = vadd.f32 %v5453, %v5613
      %v5615 = vpop.f32.mrf.mxu0
      %v5616 = vpop.f32.mrf.mxu0
      %v5617 = vadd.f32 %v5456, %v5616
      %v5618 = vpop.f32.mrf.mxu0
      %5619 = vmatprep.mubr.bf16.mxu0 %v4717
      %5620 = vmatmul.mubr.bf16.gmra.mxu0 %v4716
      %v5621 = vpop.f32.mrf.mxu0
      %v5622 = vadd.f32 %v5461, %v5621
      %v5623 = vpop.f32.mrf.mxu0
      %v5624 = vpop.f32.mrf.mxu0
      %v5625 = vadd.f32 %v5464, %v5624
      %v5626 = vpop.f32.mrf.mxu0
      %5627 = vmatprep.mubr.bf16.mxu0 %v4726
      %5628 = vmatmul.mubr.bf16.gmra.mxu0 %v4725
      %v5629 = vpop.f32.mrf.mxu0
      %v5630 = vadd.f32 %v5469, %v5629
      %v5631 = vpop.f32.mrf.mxu0
      %v5632 = vpop.f32.mrf.mxu0
      %v5633 = vadd.f32 %v5472, %v5632
      %v5634 = vpop.f32.mrf.mxu0
      %5635 = vmatprep.mubr.bf16.mxu0 %v4735
      %5636 = vmatmul.mubr.bf16.gmra.mxu0 %v4734
      %v5637 = vpop.f32.mrf.mxu0
      %v5638 = vadd.f32 %v5477, %v5637
      %v5639 = vpop.f32.mrf.mxu0
      %v5640 = vpop.f32.mrf.mxu0
      %v5641 = vadd.f32 %v5480, %v5640
      %v5642 = vpop.f32.mrf.mxu0
      %5643 = vmatprep.mubr.bf16.mxu0 %v4744
      %5644 = vmatmul.mubr.bf16.gmra.mxu0 %v4743
      %v5645 = vpop.f32.mrf.mxu0
      %v5646 = vadd.f32 %v5485, %v5645
      %v5647 = vpop.f32.mrf.mxu0
      %v5648 = vpop.f32.mrf.mxu0
      %v5649 = vadd.f32 %v5488, %v5648
      %v5650 = vpop.f32.mrf.mxu0
      %5651 = vmatprep.mubr.bf16.mxu0 %v4753
      %5652 = vmatmul.mubr.bf16.gmra.mxu0 %v4752
      %v5653 = vpop.f32.mrf.mxu0
      %v5654 = vadd.f32 %v5493, %v5653
      %v5655 = vpop.f32.mrf.mxu0
      %v5656 = vpop.f32.mrf.mxu0
      %v5657 = vadd.f32 %v5496, %v5656
      %v5658 = vpop.f32.mrf.mxu0
      %5659 = vmatprep.mubr.bf16.mxu0 %v4762
      %5660 = vmatmul.mubr.bf16.gmra.mxu0 %v4761
      %v5661 = vpop.f32.mrf.mxu0
      %v5662 = vadd.f32 %v5501, %v5661
      %v5663 = vpop.f32.mrf.mxu0
      %v5664 = vpop.f32.mrf.mxu0
      %v5665 = vadd.f32 %v5504, %v5664
      %v5666 = vpop.f32.mrf.mxu0
      %5667 = vmatprep.mubr.bf16.mxu0 %v4771
      %5668 = vmatmul.mubr.bf16.gmra.mxu0 %v4770
      %v5669 = vpop.f32.mrf.mxu0
      %v5670 = vadd.f32 %v5509, %v5669
      %v5671 = vpop.f32.mrf.mxu0
      %v5672 = vpop.f32.mrf.mxu0
      %v5673 = vadd.f32 %v5512, %v5672
      %v5674 = vpop.f32.mrf.mxu0
      %5675 = vmatprep.mubr.bf16.mxu0 %v4780
      %5676 = vmatmul.mubr.bf16.gmra.mxu0 %v4779
      %v5677 = vpop.f32.mrf.mxu0
      %v5678 = vadd.f32 %v5517, %v5677
      %v5679 = vpop.f32.mrf.mxu0
      %v5680 = vpop.f32.mrf.mxu0
      %v5681 = vadd.f32 %v5520, %v5680
      %v5682 = vpop.f32.mrf.mxu0
      %5683 = vdwg.mxu0
      %5684 = vmatprep.subr.bf16.mxu0 0
      %5685 = vmatpush1.bf16.msra.mxu0 %v5257
      %5686 = vmatprep.subr.bf16.mxu0 0
      %5687 = vmatpush1.bf16.msra.mxu0 %v5256
      %5688 = vmatprep.subr.bf16.mxu0 0
      %5689 = vmatpush1.bf16.msra.mxu0 %v5255
      %5690 = vmatprep.subr.bf16.mxu0 0
      %5691 = vmatpush1.bf16.msra.mxu0 %v5254
      %5692 = vmatprep.subr.bf16.mxu0 0
      %5693 = vmatpush1.bf16.msra.mxu0 %v5253
      %5694 = vmatprep.subr.bf16.mxu0 0
      %5695 = vmatpush1.bf16.msra.mxu0 %v5252
      %5696 = vmatprep.subr.bf16.mxu0 0
      %5697 = vmatpush1.bf16.msra.mxu0 %v5251
      %5698 = vmatprep.subr.bf16.mxu0 0
      %5699 = vmatpush1.bf16.msra.mxu0 %v5250
      %5700 = vmatprep.subr.bf16.mxu0 0
      %5701 = vmatpush2.bf16.msra.mxu0 %v5265
      %5702 = vmatprep.subr.bf16.mxu0 0
      %5703 = vmatpush2.bf16.msra.mxu0 %v5264
      %5704 = vmatprep.subr.bf16.mxu0 0
      %5705 = vmatpush2.bf16.msra.mxu0 %v5263
      %5706 = vmatprep.subr.bf16.mxu0 0
      %5707 = vmatpush2.bf16.msra.mxu0 %v5262
      %5708 = vmatprep.subr.bf16.mxu0 0
      %5709 = vmatpush2.bf16.msra.mxu0 %v5261
      %5710 = vmatprep.subr.bf16.mxu0 0
      %5711 = vmatpush2.bf16.msra.mxu0 %v5260
      %5712 = vmatprep.subr.bf16.mxu0 0
      %5713 = vmatpush2.bf16.msra.mxu0 %v5259
      %5714 = vmatprep.subr.bf16.mxu0 0
      %5715 = vmatpush2.bf16.msra.mxu0 %v5258
      %5716 = vmatprep.mubr.bf16.mxu0 %v4647
      %5717 = vmatmul.mubr.bf16.gmra.mxu0 %v4646
      %v5718 = vpop.f32.mrf.mxu0
      %v5719 = vadd.f32 %v5558, %v5718
      %v5720 = vpop.f32.mrf.mxu0
      %v5721 = vpop.f32.mrf.mxu0
      %v5722 = vadd.f32 %v5561, %v5721
      %v5723 = vpop.f32.mrf.mxu0
      %5724 = vmatprep.mubr.bf16.mxu0 %v4656
      %5725 = vmatmul.mubr.bf16.gmra.mxu0 %v4655
      %v5726 = vpop.f32.mrf.mxu0
      %v5727 = vadd.f32 %v5566, %v5726
      %v5728 = vpop.f32.mrf.mxu0
      %v5729 = vpop.f32.mrf.mxu0
      %v5730 = vadd.f32 %v5569, %v5729
      %v5731 = vpop.f32.mrf.mxu0
      %5732 = vmatprep.mubr.bf16.mxu0 %v4665
      %5733 = vmatmul.mubr.bf16.gmra.mxu0 %v4664
      %v5734 = vpop.f32.mrf.mxu0
      %v5735 = vadd.f32 %v5574, %v5734
      %v5736 = vpop.f32.mrf.mxu0
      %v5737 = vpop.f32.mrf.mxu0
      %v5738 = vadd.f32 %v5577, %v5737
      %v5739 = vpop.f32.mrf.mxu0
      %5740 = vmatprep.mubr.bf16.mxu0 %v4674
      %5741 = vmatmul.mubr.bf16.gmra.mxu0 %v4673
      %v5742 = vpop.f32.mrf.mxu0
      %v5743 = vadd.f32 %v5582, %v5742
      %v5744 = vpop.f32.mrf.mxu0
      %v5745 = vpop.f32.mrf.mxu0
      %v5746 = vadd.f32 %v5585, %v5745
      %v5747 = vpop.f32.mrf.mxu0
      %5748 = vmatprep.mubr.bf16.mxu0 %v4683
      %5749 = vmatmul.mubr.bf16.gmra.mxu0 %v4682
      %v5750 = vpop.f32.mrf.mxu0
      %v5751 = vadd.f32 %v5590, %v5750
      %v5752 = vpop.f32.mrf.mxu0
      %v5753 = vpop.f32.mrf.mxu0
      %v5754 = vadd.f32 %v5593, %v5753
      %v5755 = vpop.f32.mrf.mxu0
      %5756 = vmatprep.mubr.bf16.mxu0 %v4692
      %5757 = vmatmul.mubr.bf16.gmra.mxu0 %v4691
      %v5758 = vpop.f32.mrf.mxu0
      %v5759 = vadd.f32 %v5598, %v5758
      %v5760 = vpop.f32.mrf.mxu0
      %v5761 = vpop.f32.mrf.mxu0
      %v5762 = vadd.f32 %v5601, %v5761
      %v5763 = vpop.f32.mrf.mxu0
      %5764 = vmatprep.mubr.bf16.mxu0 %v4701
      %5765 = vmatmul.mubr.bf16.gmra.mxu0 %v4700
      %v5766 = vpop.f32.mrf.mxu0
      %v5767 = vadd.f32 %v5606, %v5766
      %v5768 = vpop.f32.mrf.mxu0
      %v5769 = vpop.f32.mrf.mxu0
      %v5770 = vadd.f32 %v5609, %v5769
      %v5771 = vpop.f32.mrf.mxu0
      %5772 = vmatprep.mubr.bf16.mxu0 %v4710
      %5773 = vmatmul.mubr.bf16.gmra.mxu0 %v4709
      %v5774 = vpop.f32.mrf.mxu0
      %v5775 = vadd.f32 %v5614, %v5774
      %v5776 = vpop.f32.mrf.mxu0
      %v5777 = vpop.f32.mrf.mxu0
      %v5778 = vadd.f32 %v5617, %v5777
      %v5779 = vpop.f32.mrf.mxu0
      %5780 = vmatprep.mubr.bf16.mxu0 %v4719
      %5781 = vmatmul.mubr.bf16.gmra.mxu0 %v4718
      %v5782 = vpop.f32.mrf.mxu0
      %v5783 = vadd.f32 %v5622, %v5782
      %v5784 = vpop.f32.mrf.mxu0
      %v5785 = vpop.f32.mrf.mxu0
      %v5786 = vadd.f32 %v5625, %v5785
      %v5787 = vpop.f32.mrf.mxu0
      %5788 = vmatprep.mubr.bf16.mxu0 %v4728
      %5789 = vmatmul.mubr.bf16.gmra.mxu0 %v4727
      %v5790 = vpop.f32.mrf.mxu0
      %v5791 = vadd.f32 %v5630, %v5790
      %v5792 = vpop.f32.mrf.mxu0
      %v5793 = vpop.f32.mrf.mxu0
      %v5794 = vadd.f32 %v5633, %v5793
      %v5795 = vpop.f32.mrf.mxu0
      %5796 = vmatprep.mubr.bf16.mxu0 %v4737
      %5797 = vmatmul.mubr.bf16.gmra.mxu0 %v4736
      %v5798 = vpop.f32.mrf.mxu0
      %v5799 = vadd.f32 %v5638, %v5798
      %v5800 = vpop.f32.mrf.mxu0
      %v5801 = vpop.f32.mrf.mxu0
      %v5802 = vadd.f32 %v5641, %v5801
      %v5803 = vpop.f32.mrf.mxu0
      %5804 = vmatprep.mubr.bf16.mxu0 %v4746
      %5805 = vmatmul.mubr.bf16.gmra.mxu0 %v4745
      %v5806 = vpop.f32.mrf.mxu0
      %v5807 = vadd.f32 %v5646, %v5806
      %v5808 = vpop.f32.mrf.mxu0
      %v5809 = vpop.f32.mrf.mxu0
      %v5810 = vadd.f32 %v5649, %v5809
      %v5811 = vpop.f32.mrf.mxu0
      %5812 = vmatprep.mubr.bf16.mxu0 %v4755
      %5813 = vmatmul.mubr.bf16.gmra.mxu0 %v4754
      %v5814 = vpop.f32.mrf.mxu0
      %v5815 = vadd.f32 %v5654, %v5814
      %v5816 = vpop.f32.mrf.mxu0
      %v5817 = vpop.f32.mrf.mxu0
      %v5818 = vadd.f32 %v5657, %v5817
      %v5819 = vpop.f32.mrf.mxu0
      %5820 = vmatprep.mubr.bf16.mxu0 %v4764
      %5821 = vmatmul.mubr.bf16.gmra.mxu0 %v4763
      %v5822 = vpop.f32.mrf.mxu0
      %v5823 = vadd.f32 %v5662, %v5822
      %v5824 = vpop.f32.mrf.mxu0
      %v5825 = vpop.f32.mrf.mxu0
      %v5826 = vadd.f32 %v5665, %v5825
      %v5827 = vpop.f32.mrf.mxu0
      %5828 = vmatprep.mubr.bf16.mxu0 %v4773
      %5829 = vmatmul.mubr.bf16.gmra.mxu0 %v4772
      %v5830 = vpop.f32.mrf.mxu0
      %v5831 = vadd.f32 %v5670, %v5830
      %v5832 = vpop.f32.mrf.mxu0
      %v5833 = vpop.f32.mrf.mxu0
      %v5834 = vadd.f32 %v5673, %v5833
      %v5835 = vpop.f32.mrf.mxu0
      %5836 = vmatprep.mubr.bf16.mxu0 %v4782
      %5837 = vmatmul.mubr.bf16.gmra.mxu0 %v4781
      %v5838 = vpop.f32.mrf.mxu0
      %v5839 = vadd.f32 %v5678, %v5838
      %v5840 = vpop.f32.mrf.mxu0
      %v5841 = vpop.f32.mrf.mxu0
      %v5842 = vadd.f32 %v5681, %v5841
      %v5843 = vpop.f32.mrf.mxu0
      %5844 = vdwg.mxu0
      %5845 = vmatprep.subr.bf16.mxu0 0
      %5846 = vmatpush1.bf16.msra.mxu0 %v5273
      %5847 = vmatprep.subr.bf16.mxu0 0
      %5848 = vmatpush1.bf16.msra.mxu0 %v5272
      %5849 = vmatprep.subr.bf16.mxu0 0
      %5850 = vmatpush1.bf16.msra.mxu0 %v5271
      %5851 = vmatprep.subr.bf16.mxu0 0
      %5852 = vmatpush1.bf16.msra.mxu0 %v5270
      %5853 = vmatprep.subr.bf16.mxu0 0
      %5854 = vmatpush1.bf16.msra.mxu0 %v5269
      %5855 = vmatprep.subr.bf16.mxu0 0
      %5856 = vmatpush1.bf16.msra.mxu0 %v5268
      %5857 = vmatprep.subr.bf16.mxu0 0
      %5858 = vmatpush1.bf16.msra.mxu0 %v5267
      %5859 = vmatprep.subr.bf16.mxu0 0
      %5860 = vmatpush1.bf16.msra.mxu0 %v5266
      %5861 = vmatprep.subr.bf16.mxu0 0
      %5862 = vmatpush2.bf16.msra.mxu0 %v5281
      %5863 = vmatprep.subr.bf16.mxu0 0
      %5864 = vmatpush2.bf16.msra.mxu0 %v5280
      %5865 = vmatprep.subr.bf16.mxu0 0
      %5866 = vmatpush2.bf16.msra.mxu0 %v5279
      %5867 = vmatprep.subr.bf16.mxu0 0
      %5868 = vmatpush2.bf16.msra.mxu0 %v5278
      %5869 = vmatprep.subr.bf16.mxu0 0
      %5870 = vmatpush2.bf16.msra.mxu0 %v5277
      %5871 = vmatprep.subr.bf16.mxu0 0
      %5872 = vmatpush2.bf16.msra.mxu0 %v5276
      %5873 = vmatprep.subr.bf16.mxu0 0
      %5874 = vmatpush2.bf16.msra.mxu0 %v5275
      %5875 = vmatprep.subr.bf16.mxu0 0
      %5876 = vmatpush2.bf16.msra.mxu0 %v5274
      %5877 = vmatprep.mubr.bf16.mxu0 %v4649
      %5878 = vmatmul.mubr.bf16.gmra.mxu0 %v4648
      %v5879 = vpop.f32.mrf.mxu0
      %v5880 = vadd.f32 %v5719, %v5879
      %v5881 = vpop.f32.mrf.mxu0
      %v5882 = vpop.f32.mrf.mxu0
      %v5883 = vadd.f32 %v5722, %v5882
      %v5884 = vpop.f32.mrf.mxu0
      %5885 = vmatprep.mubr.bf16.mxu0 %v4658
      %5886 = vmatmul.mubr.bf16.gmra.mxu0 %v4657
      %v5887 = vpop.f32.mrf.mxu0
      %v5888 = vadd.f32 %v5727, %v5887
      %v5889 = vpop.f32.mrf.mxu0
      %v5890 = vpop.f32.mrf.mxu0
      %v5891 = vadd.f32 %v5730, %v5890
      %v5892 = vpop.f32.mrf.mxu0
      %5893 = vmatprep.mubr.bf16.mxu0 %v4667
      %5894 = vmatmul.mubr.bf16.gmra.mxu0 %v4666
      %v5895 = vpop.f32.mrf.mxu0
      %v5896 = vadd.f32 %v5735, %v5895
      %v5897 = vpop.f32.mrf.mxu0
      %v5898 = vpop.f32.mrf.mxu0
      %v5899 = vadd.f32 %v5738, %v5898
      %v5900 = vpop.f32.mrf.mxu0
      %5901 = vmatprep.mubr.bf16.mxu0 %v4676
      %5902 = vmatmul.mubr.bf16.gmra.mxu0 %v4675
      %v5903 = vpop.f32.mrf.mxu0
      %v5904 = vadd.f32 %v5743, %v5903
      %v5905 = vpop.f32.mrf.mxu0
      %v5906 = vpop.f32.mrf.mxu0
      %v5907 = vadd.f32 %v5746, %v5906
      %v5908 = vpop.f32.mrf.mxu0
      %5909 = vmatprep.mubr.bf16.mxu0 %v4685
      %5910 = vmatmul.mubr.bf16.gmra.mxu0 %v4684
      %v5911 = vpop.f32.mrf.mxu0
      %v5912 = vadd.f32 %v5751, %v5911
      %v5913 = vpop.f32.mrf.mxu0
      %v5914 = vpop.f32.mrf.mxu0
      %v5915 = vadd.f32 %v5754, %v5914
      %v5916 = vpop.f32.mrf.mxu0
      %5917 = vmatprep.mubr.bf16.mxu0 %v4694
      %5918 = vmatmul.mubr.bf16.gmra.mxu0 %v4693
      %v5919 = vpop.f32.mrf.mxu0
      %v5920 = vadd.f32 %v5759, %v5919
      %v5921 = vpop.f32.mrf.mxu0
      %v5922 = vpop.f32.mrf.mxu0
      %v5923 = vadd.f32 %v5762, %v5922
      %v5924 = vpop.f32.mrf.mxu0
      %5925 = vmatprep.mubr.bf16.mxu0 %v4703
      %5926 = vmatmul.mubr.bf16.gmra.mxu0 %v4702
      %v5927 = vpop.f32.mrf.mxu0
      %v5928 = vadd.f32 %v5767, %v5927
      %v5929 = vpop.f32.mrf.mxu0
      %v5930 = vpop.f32.mrf.mxu0
      %v5931 = vadd.f32 %v5770, %v5930
      %v5932 = vpop.f32.mrf.mxu0
      %5933 = vmatprep.mubr.bf16.mxu0 %v4712
      %5934 = vmatmul.mubr.bf16.gmra.mxu0 %v4711
      %v5935 = vpop.f32.mrf.mxu0
      %v5936 = vadd.f32 %v5775, %v5935
      %v5937 = vpop.f32.mrf.mxu0
      %v5938 = vpop.f32.mrf.mxu0
      %v5939 = vadd.f32 %v5778, %v5938
      %v5940 = vpop.f32.mrf.mxu0
      %5941 = vmatprep.mubr.bf16.mxu0 %v4721
      %5942 = vmatmul.mubr.bf16.gmra.mxu0 %v4720
      %v5943 = vpop.f32.mrf.mxu0
      %v5944 = vadd.f32 %v5783, %v5943
      %v5945 = vpop.f32.mrf.mxu0
      %v5946 = vpop.f32.mrf.mxu0
      %v5947 = vadd.f32 %v5786, %v5946
      %v5948 = vpop.f32.mrf.mxu0
      %5949 = vmatprep.mubr.bf16.mxu0 %v4730
      %5950 = vmatmul.mubr.bf16.gmra.mxu0 %v4729
      %v5951 = vpop.f32.mrf.mxu0
      %v5952 = vadd.f32 %v5791, %v5951
      %v5953 = vpop.f32.mrf.mxu0
      %v5954 = vpop.f32.mrf.mxu0
      %v5955 = vadd.f32 %v5794, %v5954
      %v5956 = vpop.f32.mrf.mxu0
      %5957 = vmatprep.mubr.bf16.mxu0 %v4739
      %5958 = vmatmul.mubr.bf16.gmra.mxu0 %v4738
      %v5959 = vpop.f32.mrf.mxu0
      %v5960 = vadd.f32 %v5799, %v5959
      %v5961 = vpop.f32.mrf.mxu0
      %v5962 = vpop.f32.mrf.mxu0
      %v5963 = vadd.f32 %v5802, %v5962
      %v5964 = vpop.f32.mrf.mxu0
      %5965 = vmatprep.mubr.bf16.mxu0 %v4748
      %5966 = vmatmul.mubr.bf16.gmra.mxu0 %v4747
      %v5967 = vpop.f32.mrf.mxu0
      %v5968 = vadd.f32 %v5807, %v5967
      %v5969 = vpop.f32.mrf.mxu0
      %v5970 = vpop.f32.mrf.mxu0
      %v5971 = vadd.f32 %v5810, %v5970
      %v5972 = vpop.f32.mrf.mxu0
      %5973 = vmatprep.mubr.bf16.mxu0 %v4757
      %5974 = vmatmul.mubr.bf16.gmra.mxu0 %v4756
      %v5975 = vpop.f32.mrf.mxu0
      %v5976 = vadd.f32 %v5815, %v5975
      %v5977 = vpop.f32.mrf.mxu0
      %v5978 = vpop.f32.mrf.mxu0
      %v5979 = vadd.f32 %v5818, %v5978
      %v5980 = vpop.f32.mrf.mxu0
      %5981 = vmatprep.mubr.bf16.mxu0 %v4766
      %5982 = vmatmul.mubr.bf16.gmra.mxu0 %v4765
      %v5983 = vpop.f32.mrf.mxu0
      %v5984 = vadd.f32 %v5823, %v5983
      %v5985 = vpop.f32.mrf.mxu0
      %v5986 = vpop.f32.mrf.mxu0
      %v5987 = vadd.f32 %v5826, %v5986
      %v5988 = vpop.f32.mrf.mxu0
      %5989 = vmatprep.mubr.bf16.mxu0 %v4775
      %5990 = vmatmul.mubr.bf16.gmra.mxu0 %v4774
      %v5991 = vpop.f32.mrf.mxu0
      %v5992 = vadd.f32 %v5831, %v5991
      %v5993 = vpop.f32.mrf.mxu0
      %v5994 = vpop.f32.mrf.mxu0
      %v5995 = vadd.f32 %v5834, %v5994
      %v5996 = vpop.f32.mrf.mxu0
      %5997 = vmatprep.mubr.bf16.mxu0 %v4784
      %5998 = vmatmul.mubr.bf16.gmra.mxu0 %v4783
      %v5999 = vpop.f32.mrf.mxu0
      %v6000 = vadd.f32 %v5839, %v5999
      %v6001 = vpop.f32.mrf.mxu0
      %v6002 = vpop.f32.mrf.mxu0
      %v6003 = vadd.f32 %v5842, %v6002
      %v6004 = vpop.f32.mrf.mxu0
      %6005 = vdwg.mxu0
      %6006 = vmatprep.subr.bf16.mxu0 0
      %6007 = vmatpush1.bf16.msra.mxu0 %v5289
      %6008 = vmatprep.subr.bf16.mxu0 0
      %6009 = vmatpush1.bf16.msra.mxu0 %v5288
      %6010 = vmatprep.subr.bf16.mxu0 0
      %6011 = vmatpush1.bf16.msra.mxu0 %v5287
      %6012 = vmatprep.subr.bf16.mxu0 0
      %6013 = vmatpush1.bf16.msra.mxu0 %v5286
      %6014 = vmatprep.subr.bf16.mxu0 0
      %6015 = vmatpush1.bf16.msra.mxu0 %v5285
      %6016 = vmatprep.subr.bf16.mxu0 0
      %6017 = vmatpush1.bf16.msra.mxu0 %v5284
      %6018 = vmatprep.subr.bf16.mxu0 0
      %6019 = vmatpush1.bf16.msra.mxu0 %v5283
      %6020 = vmatprep.subr.bf16.mxu0 0
      %6021 = vmatpush1.bf16.msra.mxu0 %v5282
      %6022 = vmatprep.subr.bf16.mxu0 0
      %6023 = vmatpush2.bf16.msra.mxu0 0
      %6024 = vmatprep.subr.bf16.mxu0 0
      %6025 = vmatpush2.bf16.msra.mxu0 0
      %6026 = vmatprep.subr.bf16.mxu0 0
      %6027 = vmatpush2.bf16.msra.mxu0 0
      %6028 = vmatprep.subr.bf16.mxu0 0
      %6029 = vmatpush2.bf16.msra.mxu0 0
      %6030 = vmatprep.subr.bf16.mxu0 0
      %6031 = vmatpush2.bf16.msra.mxu0 0
      %6032 = vmatprep.subr.bf16.mxu0 0
      %6033 = vmatpush2.bf16.msra.mxu0 0
      %6034 = vmatprep.subr.bf16.mxu0 0
      %6035 = vmatpush2.bf16.msra.mxu0 0
      %6036 = vmatprep.subr.bf16.mxu0 0
      %6037 = vmatpush2.bf16.msra.mxu0 0
      %6038 = vmatprep.mubr.bf16.mxu0 0
      %6039 = vmatmul.mubr.bf16.gmra.mxu0 %v4650
      %v6040 = vpop.f32.mrf.mxu0
      %v6041 = vadd.f32 %v5880, %v6040
      %v6042 = vpop.f32.mrf.mxu0
      %v6043 = vpop.f32.mrf.mxu0
      %v6044 = vadd.f32 %v5883, %v6043
      %v6045 = vpop.f32.mrf.mxu0
      %6046 = vmatprep.mubr.bf16.mxu0 0
      %6047 = vmatmul.mubr.bf16.gmra.mxu0 %v4659
      %v6048 = vpop.f32.mrf.mxu0
      %v6049 = vadd.f32 %v5888, %v6048
      %v6050 = vpop.f32.mrf.mxu0
      %v6051 = vpop.f32.mrf.mxu0
      %v6052 = vadd.f32 %v5891, %v6051
      %v6053 = vpop.f32.mrf.mxu0
      %6054 = vmatprep.mubr.bf16.mxu0 0
      %6055 = vmatmul.mubr.bf16.gmra.mxu0 %v4668
      %v6056 = vpop.f32.mrf.mxu0
      %v6057 = vadd.f32 %v5896, %v6056
      %v6058 = vpop.f32.mrf.mxu0
      %v6059 = vpop.f32.mrf.mxu0
      %v6060 = vadd.f32 %v5899, %v6059
      %v6061 = vpop.f32.mrf.mxu0
      %6062 = vmatprep.mubr.bf16.mxu0 0
      %6063 = vmatmul.mubr.bf16.gmra.mxu0 %v4677
      %v6064 = vpop.f32.mrf.mxu0
      %v6065 = vadd.f32 %v5904, %v6064
      %v6066 = vpop.f32.mrf.mxu0
      %v6067 = vpop.f32.mrf.mxu0
      %v6068 = vadd.f32 %v5907, %v6067
      %v6069 = vpop.f32.mrf.mxu0
      %6070 = vmatprep.mubr.bf16.mxu0 0
      %6071 = vmatmul.mubr.bf16.gmra.mxu0 %v4686
      %v6072 = vpop.f32.mrf.mxu0
      %v6073 = vadd.f32 %v5912, %v6072
      %v6074 = vpop.f32.mrf.mxu0
      %v6075 = vpop.f32.mrf.mxu0
      %v6076 = vadd.f32 %v5915, %v6075
      %v6077 = vpop.f32.mrf.mxu0
      %6078 = vmatprep.mubr.bf16.mxu0 0
      %6079 = vmatmul.mubr.bf16.gmra.mxu0 %v4695
      %v6080 = vpop.f32.mrf.mxu0
      %v6081 = vadd.f32 %v5920, %v6080
      %v6082 = vpop.f32.mrf.mxu0
      %v6083 = vpop.f32.mrf.mxu0
      %v6084 = vadd.f32 %v5923, %v6083
      %v6085 = vpop.f32.mrf.mxu0
      %6086 = vmatprep.mubr.bf16.mxu0 0
      %6087 = vmatmul.mubr.bf16.gmra.mxu0 %v4704
      %v6088 = vpop.f32.mrf.mxu0
      %v6089 = vadd.f32 %v5928, %v6088
      %v6090 = vpop.f32.mrf.mxu0
      %v6091 = vpop.f32.mrf.mxu0
      %v6092 = vadd.f32 %v5931, %v6091
      %v6093 = vpop.f32.mrf.mxu0
      %6094 = vmatprep.mubr.bf16.mxu0 0
      %6095 = vmatmul.mubr.bf16.gmra.mxu0 %v4713
      %v6096 = vpop.f32.mrf.mxu0
      %v6097 = vadd.f32 %v5936, %v6096
      %v6098 = vpop.f32.mrf.mxu0
      %v6099 = vpop.f32.mrf.mxu0
      %v6100 = vadd.f32 %v5939, %v6099
      %v6101 = vpop.f32.mrf.mxu0
      %6102 = vmatprep.mubr.bf16.mxu0 0
      %6103 = vmatmul.mubr.bf16.gmra.mxu0 %v4722
      %v6104 = vpop.f32.mrf.mxu0
      %v6105 = vadd.f32 %v5944, %v6104
      %v6106 = vpop.f32.mrf.mxu0
      %v6107 = vpop.f32.mrf.mxu0
      %v6108 = vadd.f32 %v5947, %v6107
      %v6109 = vpop.f32.mrf.mxu0
      %6110 = vmatprep.mubr.bf16.mxu0 0
      %6111 = vmatmul.mubr.bf16.gmra.mxu0 %v4731
      %v6112 = vpop.f32.mrf.mxu0
      %v6113 = vadd.f32 %v5952, %v6112
      %v6114 = vpop.f32.mrf.mxu0
      %v6115 = vpop.f32.mrf.mxu0
      %v6116 = vadd.f32 %v5955, %v6115
      %v6117 = vpop.f32.mrf.mxu0
      %6118 = vmatprep.mubr.bf16.mxu0 0
      %6119 = vmatmul.mubr.bf16.gmra.mxu0 %v4740
      %v6120 = vpop.f32.mrf.mxu0
      %v6121 = vadd.f32 %v5960, %v6120
      %v6122 = vpop.f32.mrf.mxu0
      %v6123 = vpop.f32.mrf.mxu0
      %v6124 = vadd.f32 %v5963, %v6123
      %v6125 = vpop.f32.mrf.mxu0
      %6126 = vmatprep.mubr.bf16.mxu0 0
      %6127 = vmatmul.mubr.bf16.gmra.mxu0 %v4749
      %v6128 = vpop.f32.mrf.mxu0
      %v6129 = vadd.f32 %v5968, %v6128
      %v6130 = vpop.f32.mrf.mxu0
      %v6131 = vpop.f32.mrf.mxu0
      %v6132 = vadd.f32 %v5971, %v6131
      %v6133 = vpop.f32.mrf.mxu0
      %6134 = vmatprep.mubr.bf16.mxu0 0
      %6135 = vmatmul.mubr.bf16.gmra.mxu0 %v4758
      %v6136 = vpop.f32.mrf.mxu0
      %v6137 = vadd.f32 %v5976, %v6136
      %v6138 = vpop.f32.mrf.mxu0
      %v6139 = vpop.f32.mrf.mxu0
      %v6140 = vadd.f32 %v5979, %v6139
      %v6141 = vpop.f32.mrf.mxu0
      %6142 = vmatprep.mubr.bf16.mxu0 0
      %6143 = vmatmul.mubr.bf16.gmra.mxu0 %v4767
      %v6144 = vpop.f32.mrf.mxu0
      %v6145 = vadd.f32 %v5984, %v6144
      %v6146 = vpop.f32.mrf.mxu0
      %v6147 = vpop.f32.mrf.mxu0
      %v6148 = vadd.f32 %v5987, %v6147
      %v6149 = vpop.f32.mrf.mxu0
      %6150 = vmatprep.mubr.bf16.mxu0 0
      %6151 = vmatmul.mubr.bf16.gmra.mxu0 %v4776
      %v6152 = vpop.f32.mrf.mxu0
      %v6153 = vadd.f32 %v5992, %v6152
      %v6154 = vpop.f32.mrf.mxu0
      %v6155 = vpop.f32.mrf.mxu0
      %v6156 = vadd.f32 %v5995, %v6155
      %v6157 = vpop.f32.mrf.mxu0
      %6158 = vmatprep.mubr.bf16.mxu0 0
      %6159 = vmatmul.mubr.bf16.gmra.mxu0 %v4785
      %v6160 = vpop.f32.mrf.mxu0
      %v6161 = vadd.f32 %v6000, %v6160
      %v6162 = vpop.f32.mrf.mxu0
      %v6163 = vpop.f32.mrf.mxu0
      %v6164 = vadd.f32 %v6003, %v6163
      %v6165 = vpop.f32.mrf.mxu0
      %6166 = vdwg.mxu0
      %vm6167 = vcmask 31744
      %6168 = vst.msk [vmem:[#allocation4] sm:$0xff] %vm6167, %v6041
      %6169 = vst.msk [vmem:[#allocation4 + $0x8] sm:$0xff] %vm6167, %v6044
      %6170 = vst.msk [vmem:[#allocation4 + $0x10] sm:$0xff] %vm6167, %v6049
      %6171 = vst.msk [vmem:[#allocation4 + $0x18] sm:$0xff] %vm6167, %v6052
      %6172 = vst.msk [vmem:[#allocation4 + $0x20] sm:$0xff] %vm6167, %v6057
      %6173 = vst.msk [vmem:[#allocation4 + $0x28] sm:$0xff] %vm6167, %v6060
      %6174 = vst.msk [vmem:[#allocation4 + $0x30] sm:$0xff] %vm6167, %v6065
      %6175 = vst.msk [vmem:[#allocation4 + $0x38] sm:$0xff] %vm6167, %v6068
      %6176 = vst.msk [vmem:[#allocation4 + $0x40] sm:$0xff] %vm6167, %v6073
      %6177 = vst.msk [vmem:[#allocation4 + $0x48] sm:$0xff] %vm6167, %v6076
      %6178 = vst.msk [vmem:[#allocation4 + $0x50] sm:$0xff] %vm6167, %v6081
      %6179 = vst.msk [vmem:[#allocation4 + $0x58] sm:$0xff] %vm6167, %v6084
      %6180 = vst.msk [vmem:[#allocation4 + $0x60] sm:$0xff] %vm6167, %v6089
      %6181 = vst.msk [vmem:[#allocation4 + $0x68] sm:$0xff] %vm6167, %v6092
      %6182 = vst.msk [vmem:[#allocation4 + $0x70] sm:$0xff] %vm6167, %v6097
      %6183 = vst.msk [vmem:[#allocation4 + $0x78] sm:$0xff] %vm6167, %v6100
      %6184 = vst.msk [vmem:[#allocation4 + $0x80] sm:$0xff] %vm6167, %v6105
      %6185 = vst.msk [vmem:[#allocation4 + $0x88] sm:$0xff] %vm6167, %v6108
      %6186 = vst.msk [vmem:[#allocation4 + $0x90] sm:$0xff] %vm6167, %v6113
      %6187 = vst.msk [vmem:[#allocation4 + $0x98] sm:$0xff] %vm6167, %v6116
      %6188 = vst.msk [vmem:[#allocation4 + $0xa0] sm:$0xff] %vm6167, %v6121
      %6189 = vst.msk [vmem:[#allocation4 + $0xa8] sm:$0xff] %vm6167, %v6124
      %6190 = vst.msk [vmem:[#allocation4 + $0xb0] sm:$0xff] %vm6167, %v6129
      %6191 = vst.msk [vmem:[#allocation4 + $0xb8] sm:$0xff] %vm6167, %v6132
      %6192 = vst.msk [vmem:[#allocation4 + $0xc0] sm:$0xff] %vm6167, %v6137
      %6193 = vst.msk [vmem:[#allocation4 + $0xc8] sm:$0xff] %vm6167, %v6140
      %6194 = vst.msk [vmem:[#allocation4 + $0xd0] sm:$0xff] %vm6167, %v6145
      %6195 = vst.msk [vmem:[#allocation4 + $0xd8] sm:$0xff] %vm6167, %v6148
      %6196 = vst.msk [vmem:[#allocation4 + $0xe0] sm:$0xff] %vm6167, %v6153
      %6197 = vst.msk [vmem:[#allocation4 + $0xe8] sm:$0xff] %vm6167, %v6156
      %6198 = vst.msk [vmem:[#allocation4 + $0xf0] sm:$0xff] %vm6167, %v6161
      %6199 = vst.msk [vmem:[#allocation4 + $0xf8] sm:$0xff] %vm6167, %v6164
      %v6200 = vsel %vm6167, %v6041, 0.0
      %v6201 = vsel %vm6167, %v6044, 0.0
      %v6202 = vadd.f32 %v6200, %v6201
      %v6203 = vsel %vm6167, %v6049, 0.0
      %v6204 = vadd.f32 %v6202, %v6203
      %v6205 = vsel %vm6167, %v6052, 0.0
      %v6206 = vadd.f32 %v6204, %v6205
      %v6207 = vsel %vm6167, %v6057, 0.0
      %v6208 = vadd.f32 %v6206, %v6207
      %v6209 = vsel %vm6167, %v6060, 0.0
      %v6210 = vadd.f32 %v6208, %v6209
      %v6211 = vsel %vm6167, %v6065, 0.0
      %v6212 = vadd.f32 %v6210, %v6211
      %v6213 = vsel %vm6167, %v6068, 0.0
      %v6214 = vadd.f32 %v6212, %v6213
      %v6215 = vsel %vm6167, %v6073, 0.0
      %v6216 = vadd.f32 %v6214, %v6215
      %v6217 = vsel %vm6167, %v6076, 0.0
      %v6218 = vadd.f32 %v6216, %v6217
      %v6219 = vsel %vm6167, %v6081, 0.0
      %v6220 = vadd.f32 %v6218, %v6219
      %v6221 = vsel %vm6167, %v6084, 0.0
      %v6222 = vadd.f32 %v6220, %v6221
      %v6223 = vsel %vm6167, %v6089, 0.0
      %v6224 = vadd.f32 %v6222, %v6223
      %v6225 = vsel %vm6167, %v6092, 0.0
      %v6226 = vadd.f32 %v6224, %v6225
      %v6227 = vsel %vm6167, %v6097, 0.0
      %v6228 = vadd.f32 %v6226, %v6227
      %v6229 = vsel %vm6167, %v6100, 0.0
      %v6230 = vadd.f32 %v6228, %v6229
      %v6231 = vsel %vm6167, %v6105, 0.0
      %v6232 = vadd.f32 %v6230, %v6231
      %v6233 = vsel %vm6167, %v6108, 0.0
      %v6234 = vadd.f32 %v6232, %v6233
      %v6235 = vsel %vm6167, %v6113, 0.0
      %v6236 = vadd.f32 %v6234, %v6235
      %v6237 = vsel %vm6167, %v6116, 0.0
      %v6238 = vadd.f32 %v6236, %v6237
      %v6239 = vsel %vm6167, %v6121, 0.0
      %v6240 = vadd.f32 %v6238, %v6239
      %v6241 = vsel %vm6167, %v6124, 0.0
      %v6242 = vadd.f32 %v6240, %v6241
      %v6243 = vsel %vm6167, %v6129, 0.0
      %v6244 = vadd.f32 %v6242, %v6243
      %v6245 = vsel %vm6167, %v6132, 0.0
      %v6246 = vadd.f32 %v6244, %v6245
      %v6247 = vsel %vm6167, %v6137, 0.0
      %v6248 = vadd.f32 %v6246, %v6247
      %v6249 = vsel %vm6167, %v6140, 0.0
      %v6250 = vadd.f32 %v6248, %v6249
      %v6251 = vsel %vm6167, %v6145, 0.0
      %v6252 = vadd.f32 %v6250, %v6251
      %v6253 = vsel %vm6167, %v6148, 0.0
      %v6254 = vadd.f32 %v6252, %v6253
      %v6255 = vsel %vm6167, %v6153, 0.0
      %v6256 = vadd.f32 %v6254, %v6255
      %v6257 = vsel %vm6167, %v6156, 0.0
      %v6258 = vadd.f32 %v6256, %v6257
      %v6259 = vsel %vm6167, %v6161, 0.0
      %v6260 = vadd.f32 %v6258, %v6259
      %v6261 = vsel %vm6167, %v6164, 0.0
      %v6262 = vadd.f32 %v6260, %v6261
      %v6263 = vrot.slane %v6262, 4
      %v6264 = vadd.f32 %v6262, %v6263
      %v6265 = vrot.slane %v6264, 2
      %v6266 = vadd.f32 %v6264, %v6265
      %v6267 = vrot.slane %v6266, 1
      %v6268 = vadd.f32 %v6266, %v6267
      %v6269 = vadd.f32 %v6268, 0.0
      %v6270 = vmul.f32 %v6041, %v6041
      %v6271 = vmul.f32 %v6044, %v6044
      %v6272 = vmul.f32 %v6049, %v6049
      %v6273 = vmul.f32 %v6052, %v6052
      %v6274 = vmul.f32 %v6057, %v6057
      %v6275 = vmul.f32 %v6060, %v6060
      %v6276 = vmul.f32 %v6065, %v6065
      %v6277 = vmul.f32 %v6068, %v6068
      %v6278 = vmul.f32 %v6073, %v6073
      %v6279 = vmul.f32 %v6076, %v6076
      %v6280 = vmul.f32 %v6081, %v6081
      %v6281 = vmul.f32 %v6084, %v6084
      %v6282 = vmul.f32 %v6089, %v6089
      %v6283 = vmul.f32 %v6092, %v6092
      %v6284 = vmul.f32 %v6097, %v6097
      %v6285 = vmul.f32 %v6100, %v6100
      %v6286 = vmul.f32 %v6105, %v6105
      %v6287 = vmul.f32 %v6108, %v6108
      %v6288 = vmul.f32 %v6113, %v6113
      %v6289 = vmul.f32 %v6116, %v6116
      %v6290 = vmul.f32 %v6121, %v6121
      %v6291 = vmul.f32 %v6124, %v6124
      %v6292 = vmul.f32 %v6129, %v6129
      %v6293 = vmul.f32 %v6132, %v6132
      %v6294 = vmul.f32 %v6137, %v6137
      %v6295 = vmul.f32 %v6140, %v6140
      %v6296 = vmul.f32 %v6145, %v6145
      %v6297 = vmul.f32 %v6148, %v6148
      %v6298 = vmul.f32 %v6153, %v6153
      %v6299 = vmul.f32 %v6156, %v6156
      %v6300 = vmul.f32 %v6161, %v6161
      %v6301 = vmul.f32 %v6164, %v6164
      %v6302 = vsel %vm6167, %v6270, 0.0
      %v6303 = vsel %vm6167, %v6271, 0.0
      %v6304 = vadd.f32 %v6302, %v6303
      %v6305 = vsel %vm6167, %v6272, 0.0
      %v6306 = vadd.f32 %v6304, %v6305
      %v6307 = vsel %vm6167, %v6273, 0.0
      %v6308 = vadd.f32 %v6306, %v6307
      %v6309 = vsel %vm6167, %v6274, 0.0
      %v6310 = vadd.f32 %v6308, %v6309
      %v6311 = vsel %vm6167, %v6275, 0.0
      %v6312 = vadd.f32 %v6310, %v6311
      %v6313 = vsel %vm6167, %v6276, 0.0
      %v6314 = vadd.f32 %v6312, %v6313
      %v6315 = vsel %vm6167, %v6277, 0.0
      %v6316 = vadd.f32 %v6314, %v6315
      %v6317 = vsel %vm6167, %v6278, 0.0
      %v6318 = vadd.f32 %v6316, %v6317
      %v6319 = vsel %vm6167, %v6279, 0.0
      %v6320 = vadd.f32 %v6318, %v6319
      %v6321 = vsel %vm6167, %v6280, 0.0
      %v6322 = vadd.f32 %v6320, %v6321
      %v6323 = vsel %vm6167, %v6281, 0.0
      %v6324 = vadd.f32 %v6322, %v6323
      %v6325 = vsel %vm6167, %v6282, 0.0
      %v6326 = vadd.f32 %v6324, %v6325
      %v6327 = vsel %vm6167, %v6283, 0.0
      %v6328 = vadd.f32 %v6326, %v6327
      %v6329 = vsel %vm6167, %v6284, 0.0
      %v6330 = vadd.f32 %v6328, %v6329
      %v6331 = vsel %vm6167, %v6285, 0.0
      %v6332 = vadd.f32 %v6330, %v6331
      %v6333 = vsel %vm6167, %v6286, 0.0
      %v6334 = vadd.f32 %v6332, %v6333
      %v6335 = vsel %vm6167, %v6287, 0.0
      %v6336 = vadd.f32 %v6334, %v6335
      %v6337 = vsel %vm6167, %v6288, 0.0
      %v6338 = vadd.f32 %v6336, %v6337
      %v6339 = vsel %vm6167, %v6289, 0.0
      %v6340 = vadd.f32 %v6338, %v6339
      %v6341 = vsel %vm6167, %v6290, 0.0
      %v6342 = vadd.f32 %v6340, %v6341
      %v6343 = vsel %vm6167, %v6291, 0.0
      %v6344 = vadd.f32 %v6342, %v6343
      %v6345 = vsel %vm6167, %v6292, 0.0
      %v6346 = vadd.f32 %v6344, %v6345
      %v6347 = vsel %vm6167, %v6293, 0.0
      %v6348 = vadd.f32 %v6346, %v6347
      %v6349 = vsel %vm6167, %v6294, 0.0
      %v6350 = vadd.f32 %v6348, %v6349
      %v6351 = vsel %vm6167, %v6295, 0.0
      %v6352 = vadd.f32 %v6350, %v6351
      %v6353 = vsel %vm6167, %v6296, 0.0
      %v6354 = vadd.f32 %v6352, %v6353
      %v6355 = vsel %vm6167, %v6297, 0.0
      %v6356 = vadd.f32 %v6354, %v6355
      %v6357 = vsel %vm6167, %v6298, 0.0
      %v6358 = vadd.f32 %v6356, %v6357
      %v6359 = vsel %vm6167, %v6299, 0.0
      %v6360 = vadd.f32 %v6358, %v6359
      %v6361 = vsel %vm6167, %v6300, 0.0
      %v6362 = vadd.f32 %v6360, %v6361
      %v6363 = vsel %vm6167, %v6301, 0.0
      %v6364 = vadd.f32 %v6362, %v6363
      %v6365 = vrot.slane %v6364, 4
      %v6366 = vadd.f32 %v6364, %v6365
      %v6367 = vrot.slane %v6366, 2
      %v6368 = vadd.f32 %v6366, %v6367
      %v6369 = vrot.slane %v6368, 1
      %v6370 = vadd.f32 %v6368, %v6369
      %v6371 = vadd.f32 %v6370, 0.0
      %v6372 = vmul.f32 %v6269, 0.00390625
      %v6373 = vmul.f32 %v6371, 0.00390625
      %v6374 = vmul.f32 %v6372, %v6372
      %v6375 = vsub.f32 %v6373, %v6374
      %v6376 = vmax.f32 %v6375, 0.0
      %v6377 = vadd.f32 %v6376, 1e-05
      %v6378 = vrsqrt.pop %v6377
      %v6379 = vmul.f32 %v6378, %v505
      %v6380 = vmul.f32 %v6372, %v6379
      %v6382 = vrot.slane %v6380, 7
      %v6384 = vsub.f32 %v505, %v6382
      %v6385 = vld [vmem:[#allocation4] sm:$0xff]
      %v6386 = vld [vmem:[#allocation4 + $0x8] sm:$0xff]
      %v6387 = vld [vmem:[#allocation4 + $0x10] sm:$0xff]
      %v6388 = vld [vmem:[#allocation4 + $0x18] sm:$0xff]
      %v6389 = vld [vmem:[#allocation4 + $0x20] sm:$0xff]
      %v6390 = vld [vmem:[#allocation4 + $0x28] sm:$0xff]
      %v6391 = vld [vmem:[#allocation4 + $0x30] sm:$0xff]
      %v6392 = vld [vmem:[#allocation4 + $0x38] sm:$0xff]
      %v6393 = vld [vmem:[#allocation4 + $0x40] sm:$0xff]
      %v6394 = vld [vmem:[#allocation4 + $0x48] sm:$0xff]
      %v6395 = vld [vmem:[#allocation4 + $0x50] sm:$0xff]
      %v6396 = vld [vmem:[#allocation4 + $0x58] sm:$0xff]
      %v6397 = vld [vmem:[#allocation4 + $0x60] sm:$0xff]
      %v6398 = vld [vmem:[#allocation4 + $0x68] sm:$0xff]
      %v6399 = vld [vmem:[#allocation4 + $0x70] sm:$0xff]
      %v6400 = vld [vmem:[#allocation4 + $0x78] sm:$0xff]
      %v6401 = vld [vmem:[#allocation4 + $0x80] sm:$0xff]
      %v6402 = vld [vmem:[#allocation4 + $0x88] sm:$0xff]
      %v6403 = vld [vmem:[#allocation4 + $0x90] sm:$0xff]
      %v6404 = vld [vmem:[#allocation4 + $0x98] sm:$0xff]
      %v6405 = vld [vmem:[#allocation4 + $0xa0] sm:$0xff]
      %v6406 = vld [vmem:[#allocation4 + $0xa8] sm:$0xff]
      %v6407 = vld [vmem:[#allocation4 + $0xb0] sm:$0xff]
      %v6408 = vld [vmem:[#allocation4 + $0xb8] sm:$0xff]
      %v6409 = vld [vmem:[#allocation4 + $0xc0] sm:$0xff]
      %v6410 = vld [vmem:[#allocation4 + $0xc8] sm:$0xff]
      %v6411 = vld [vmem:[#allocation4 + $0xd0] sm:$0xff]
      %v6412 = vld [vmem:[#allocation4 + $0xd8] sm:$0xff]
      %v6413 = vld [vmem:[#allocation4 + $0xe0] sm:$0xff]
      %v6414 = vld [vmem:[#allocation4 + $0xe8] sm:$0xff]
      %v6415 = vld [vmem:[#allocation4 + $0xf0] sm:$0xff]
      %v6416 = vld [vmem:[#allocation4 + $0xf8] sm:$0xff]
      %v6417 = vlaneseq
      %v6418 = vshrl.u32 %v6417, 7
      %v6419 = vsub.s32 0, %v6418
      %v6420 = vrot.slane %v6379, %v6419
      %v6421 = vmul.f32 %v6385, %v6420
      %v6422 = vmul.f32 %v6386, %v6420
      %v6423 = vmul.f32 %v6387, %v6420
      %v6424 = vmul.f32 %v6388, %v6420
      %v6425 = vmul.f32 %v6389, %v6420
      %v6426 = vmul.f32 %v6390, %v6420
      %v6427 = vmul.f32 %v6391, %v6420
      %v6428 = vmul.f32 %v6392, %v6420
      %v6429 = vmul.f32 %v6393, %v6420
      %v6430 = vmul.f32 %v6394, %v6420
      %v6431 = vmul.f32 %v6395, %v6420
      %v6432 = vmul.f32 %v6396, %v6420
      %v6433 = vmul.f32 %v6397, %v6420
      %v6434 = vmul.f32 %v6398, %v6420
      %v6435 = vmul.f32 %v6399, %v6420
      %v6436 = vmul.f32 %v6400, %v6420
      %v6437 = vmul.f32 %v6401, %v6420
      %v6438 = vmul.f32 %v6402, %v6420
      %v6439 = vmul.f32 %v6403, %v6420
      %v6440 = vmul.f32 %v6404, %v6420
      %v6441 = vmul.f32 %v6405, %v6420
      %v6442 = vmul.f32 %v6406, %v6420
      %v6443 = vmul.f32 %v6407, %v6420
      %v6444 = vmul.f32 %v6408, %v6420
      %v6445 = vmul.f32 %v6409, %v6420
      %v6446 = vmul.f32 %v6410, %v6420
      %v6447 = vmul.f32 %v6411, %v6420
      %v6448 = vmul.f32 %v6412, %v6420
      %v6449 = vmul.f32 %v6413, %v6420
      %v6450 = vmul.f32 %v6414, %v6420
      %v6451 = vmul.f32 %v6415, %v6420
      %v6452 = vmul.f32 %v6416, %v6420
      %v6453 = vlaneseq
      %v6454 = vshrl.u32 %v6453, 7
      %v6455 = vsub.s32 1, %v6454
      %v6456 = vrot.slane %v6384, %v6455
      %v6457 = vadd.f32 %v6421, %v6456
      %v6458 = vadd.f32 %v6422, %v6456
      %v6459 = vadd.f32 %v6423, %v6456
      %v6460 = vadd.f32 %v6424, %v6456
      %v6461 = vadd.f32 %v6425, %v6456
      %v6462 = vadd.f32 %v6426, %v6456
      %v6463 = vadd.f32 %v6427, %v6456
      %v6464 = vadd.f32 %v6428, %v6456
      %v6465 = vadd.f32 %v6429, %v6456
      %v6466 = vadd.f32 %v6430, %v6456
      %v6467 = vadd.f32 %v6431, %v6456
      %v6468 = vadd.f32 %v6432, %v6456
      %v6469 = vadd.f32 %v6433, %v6456
      %v6470 = vadd.f32 %v6434, %v6456
      %v6471 = vadd.f32 %v6435, %v6456
      %v6472 = vadd.f32 %v6436, %v6456
      %v6473 = vadd.f32 %v6437, %v6456
      %v6474 = vadd.f32 %v6438, %v6456
      %v6475 = vadd.f32 %v6439, %v6456
      %v6476 = vadd.f32 %v6440, %v6456
      %v6477 = vadd.f32 %v6441, %v6456
      %v6478 = vadd.f32 %v6442, %v6456
      %v6479 = vadd.f32 %v6443, %v6456
      %v6480 = vadd.f32 %v6444, %v6456
      %v6481 = vadd.f32 %v6445, %v6456
      %v6482 = vadd.f32 %v6446, %v6456
      %v6483 = vadd.f32 %v6447, %v6456
      %v6484 = vadd.f32 %v6448, %v6456
      %v6485 = vadd.f32 %v6449, %v6456
      %v6486 = vadd.f32 %v6450, %v6456
      %v6487 = vadd.f32 %v6451, %v6456
      %v6488 = vadd.f32 %v6452, %v6456
      %v6489 = vmax.f32 %v6457, 0.0
      %v6490 = vmax.f32 %v6458, 0.0
      %v6491 = vmax.f32 %v6459, 0.0
      %v6492 = vmax.f32 %v6460, 0.0
      %v6493 = vmax.f32 %v6461, 0.0
      %v6494 = vmax.f32 %v6462, 0.0
      %v6495 = vmax.f32 %v6463, 0.0
      %v6496 = vmax.f32 %v6464, 0.0
      %v6497 = vmax.f32 %v6465, 0.0
      %v6498 = vmax.f32 %v6466, 0.0
      %v6499 = vmax.f32 %v6467, 0.0
      %v6500 = vmax.f32 %v6468, 0.0
      %v6501 = vmax.f32 %v6469, 0.0
      %v6502 = vmax.f32 %v6470, 0.0
      %v6503 = vmax.f32 %v6471, 0.0
      %v6504 = vmax.f32 %v6472, 0.0
      %v6505 = vmax.f32 %v6473, 0.0
      %v6506 = vmax.f32 %v6474, 0.0
      %v6507 = vmax.f32 %v6475, 0.0
      %v6508 = vmax.f32 %v6476, 0.0
      %v6509 = vmax.f32 %v6477, 0.0
      %v6510 = vmax.f32 %v6478, 0.0
      %v6511 = vmax.f32 %v6479, 0.0
      %v6512 = vmax.f32 %v6480, 0.0
      %v6513 = vmax.f32 %v6481, 0.0
      %v6514 = vmax.f32 %v6482, 0.0
      %v6515 = vmax.f32 %v6483, 0.0
      %v6516 = vmax.f32 %v6484, 0.0
      %v6517 = vmax.f32 %v6485, 0.0
      %v6518 = vmax.f32 %v6486, 0.0
      %v6519 = vmax.f32 %v6487, 0.0
      %v6520 = vmax.f32 %v6488, 0.0
      %v6521 = vpack.c.bf16 %v6490, %v6489
      %v6522 = vpack.c.bf16 %v6492, %v6491
      %v6523 = vpack.c.bf16 %v6494, %v6493
      %v6524 = vpack.c.bf16 %v6496, %v6495
      %v6525 = vpack.c.bf16 %v6498, %v6497
      %v6526 = vpack.c.bf16 %v6500, %v6499
      %v6527 = vpack.c.bf16 %v6502, %v6501
      %v6528 = vpack.c.bf16 %v6504, %v6503
      %v6529 = vpack.c.bf16 %v6506, %v6505
      %v6530 = vpack.c.bf16 %v6508, %v6507
      %v6531 = vpack.c.bf16 %v6510, %v6509
      %v6532 = vpack.c.bf16 %v6512, %v6511
      %v6533 = vpack.c.bf16 %v6514, %v6513
      %v6534 = vpack.c.bf16 %v6516, %v6515
      %v6535 = vpack.c.bf16 %v6518, %v6517
      %v6536 = vpack.c.bf16 %v6520, %v6519
      %v6553 = vunpack.c.l.b16 %v6521
      %v6554 = vunpack.c.h.b16 %v6521
      %v6555 = vunpack.c.l.b16 %v6522
      %v6556 = vunpack.c.h.b16 %v6522
      %v6557 = vunpack.c.l.b16 %v6523
      %v6558 = vunpack.c.h.b16 %v6523
      %v6559 = vunpack.c.l.b16 %v6524
      %v6560 = vunpack.c.h.b16 %v6524
      %v6561 = vunpack.c.l.b16 %v6525
      %v6562 = vunpack.c.h.b16 %v6525
      %v6563 = vunpack.c.l.b16 %v6526
      %v6564 = vunpack.c.h.b16 %v6526
      %v6565 = vunpack.c.l.b16 %v6527
      %v6566 = vunpack.c.h.b16 %v6527
      %v6567 = vunpack.c.l.b16 %v6528
      %v6568 = vunpack.c.h.b16 %v6528
      %v6569 = vunpack.c.l.b16 %v6529
      %v6570 = vunpack.c.h.b16 %v6529
      %v6571 = vunpack.c.l.b16 %v6530
      %v6572 = vunpack.c.h.b16 %v6530
      %v6573 = vunpack.c.l.b16 %v6531
      %v6574 = vunpack.c.h.b16 %v6531
      %v6575 = vunpack.c.l.b16 %v6532
      %v6576 = vunpack.c.h.b16 %v6532
      %v6577 = vunpack.c.l.b16 %v6533
      %v6578 = vunpack.c.h.b16 %v6533
      %v6579 = vunpack.c.l.b16 %v6534
      %v6580 = vunpack.c.h.b16 %v6534
      %v6581 = vunpack.c.l.b16 %v6535
      %v6582 = vunpack.c.h.b16 %v6535
      %v6583 = vunpack.c.l.b16 %v6536
      %v6584 = vunpack.c.h.b16 %v6536
      %v6585 = vpack.c.b16 %v6553, %v6553
      %v6586 = vpack.c.b16 %v6554, %v6554
      %v6587 = vpack.c.b16 %v6555, %v6555
      %v6588 = vpack.c.b16 %v6556, %v6556
      %v6589 = vpack.c.b16 %v6557, %v6557
      %v6590 = vpack.c.b16 %v6558, %v6558
      %v6591 = vpack.c.b16 %v6559, %v6559
      %v6592 = vpack.c.b16 %v6560, %v6560
      %v6593 = vpack.c.b16 %v6561, %v6561
      %v6594 = vpack.c.b16 %v6562, %v6562
      %v6595 = vpack.c.b16 %v6563, %v6563
      %v6596 = vpack.c.b16 %v6564, %v6564
      %v6597 = vpack.c.b16 %v6565, %v6565
      %v6598 = vpack.c.b16 %v6566, %v6566
      %v6599 = vpack.c.b16 %v6567, %v6567
      %v6600 = vpack.c.b16 %v6568, %v6568
      %v6601 = vpack.c.b16 %v6569, %v6569
      %v6602 = vpack.c.b16 %v6570, %v6570
      %v6603 = vpack.c.b16 %v6571, %v6571
      %v6604 = vpack.c.b16 %v6572, %v6572
      %v6605 = vpack.c.b16 %v6573, %v6573
      %v6606 = vpack.c.b16 %v6574, %v6574
      %v6607 = vpack.c.b16 %v6575, %v6575
      %v6608 = vpack.c.b16 %v6576, %v6576
      %v6609 = vpack.c.b16 %v6577, %v6577
      %v6610 = vpack.c.b16 %v6578, %v6578
      %v6611 = vpack.c.b16 %v6579, %v6579
      %v6612 = vpack.c.b16 %v6580, %v6580
      %v6613 = vpack.c.b16 %v6581, %v6581
      %v6614 = vpack.c.b16 %v6582, %v6582
      %v6615 = vpack.c.b16 %v6583, %v6583
      %v6616 = vpack.c.b16 %v6584, %v6584
      %v6618 = vshrl.u32 %v6585, 16
      %v6620 = vrot.slane %v6618, 7
      %v6621 = vshll.u32 %v6585, 16
      %v6623 = vor.u32 %v6620, %v6621
      %v6624 = vrot.slane %v6620, 4
      %v6626 = vshrl.u32 %v6586, 16
      %v6628 = vrot.slane %v6626, 7
      %v6629 = vshll.u32 %v6586, 16
      %v6631 = vor.u32 %v6628, %v6629
      %v6632 = vsel %vm636, %v6624, %v6631
      %v6633 = vrot.slane %v6628, 4
      %v6635 = vshrl.u32 %v6587, 16
      %v6637 = vrot.slane %v6635, 7
      %v6638 = vshll.u32 %v6587, 16
      %v6640 = vor.u32 %v6637, %v6638
      %v6641 = vrot.slane %v6637, 4
      %v6643 = vshrl.u32 %v6588, 16
      %v6645 = vrot.slane %v6643, 7
      %v6646 = vshll.u32 %v6588, 16
      %v6648 = vor.u32 %v6645, %v6646
      %v6649 = vsel %vm636, %v6641, %v6648
      %v6650 = vrot.slane %v6645, 4
      %v6652 = vshrl.u32 %v6589, 16
      %v6654 = vrot.slane %v6652, 7
      %v6655 = vshll.u32 %v6589, 16
      %v6657 = vor.u32 %v6654, %v6655
      %v6658 = vrot.slane %v6654, 4
      %v6660 = vshrl.u32 %v6590, 16
      %v6662 = vrot.slane %v6660, 7
      %v6663 = vshll.u32 %v6590, 16
      %v6665 = vor.u32 %v6662, %v6663
      %v6666 = vsel %vm636, %v6658, %v6665
      %v6667 = vrot.slane %v6662, 4
      %v6669 = vshrl.u32 %v6591, 16
      %v6671 = vrot.slane %v6669, 7
      %v6672 = vshll.u32 %v6591, 16
      %v6674 = vor.u32 %v6671, %v6672
      %v6675 = vrot.slane %v6671, 4
      %v6677 = vshrl.u32 %v6592, 16
      %v6679 = vrot.slane %v6677, 7
      %v6680 = vshll.u32 %v6592, 16
      %v6682 = vor.u32 %v6679, %v6680
      %v6683 = vsel %vm636, %v6675, %v6682
      %v6684 = vrot.slane %v6679, 4
      %v6686 = vshrl.u32 %v6593, 16
      %v6688 = vrot.slane %v6686, 7
      %v6689 = vshll.u32 %v6593, 16
      %v6691 = vor.u32 %v6688, %v6689
      %v6692 = vrot.slane %v6688, 4
      %v6694 = vshrl.u32 %v6594, 16
      %v6696 = vrot.slane %v6694, 7
      %v6697 = vshll.u32 %v6594, 16
      %v6699 = vor.u32 %v6696, %v6697
      %v6700 = vsel %vm636, %v6692, %v6699
      %v6701 = vrot.slane %v6696, 4
      %v6703 = vshrl.u32 %v6595, 16
      %v6705 = vrot.slane %v6703, 7
      %v6706 = vshll.u32 %v6595, 16
      %v6708 = vor.u32 %v6705, %v6706
      %v6709 = vrot.slane %v6705, 4
      %v6711 = vshrl.u32 %v6596, 16
      %v6713 = vrot.slane %v6711, 7
      %v6714 = vshll.u32 %v6596, 16
      %v6716 = vor.u32 %v6713, %v6714
      %v6717 = vsel %vm636, %v6709, %v6716
      %v6718 = vrot.slane %v6713, 4
      %v6720 = vshrl.u32 %v6597, 16
      %v6722 = vrot.slane %v6720, 7
      %v6723 = vshll.u32 %v6597, 16
      %v6725 = vor.u32 %v6722, %v6723
      %v6726 = vrot.slane %v6722, 4
      %v6728 = vshrl.u32 %v6598, 16
      %v6730 = vrot.slane %v6728, 7
      %v6731 = vshll.u32 %v6598, 16
      %v6733 = vor.u32 %v6730, %v6731
      %v6734 = vsel %vm636, %v6726, %v6733
      %v6735 = vrot.slane %v6730, 4
      %v6737 = vshrl.u32 %v6599, 16
      %v6739 = vrot.slane %v6737, 7
      %v6740 = vshll.u32 %v6599, 16
      %v6742 = vor.u32 %v6739, %v6740
      %v6743 = vrot.slane %v6739, 4
      %v6745 = vshrl.u32 %v6600, 16
      %v6747 = vrot.slane %v6745, 7
      %v6748 = vshll.u32 %v6600, 16
      %v6750 = vor.u32 %v6747, %v6748
      %v6751 = vsel %vm636, %v6743, %v6750
      %v6752 = vrot.slane %v6747, 4
      %v6754 = vshrl.u32 %v6601, 16
      %v6756 = vrot.slane %v6754, 7
      %v6757 = vshll.u32 %v6601, 16
      %v6759 = vor.u32 %v6756, %v6757
      %v6760 = vrot.slane %v6756, 4
      %v6762 = vshrl.u32 %v6602, 16
      %v6764 = vrot.slane %v6762, 7
      %v6765 = vshll.u32 %v6602, 16
      %v6767 = vor.u32 %v6764, %v6765
      %v6768 = vsel %vm636, %v6760, %v6767
      %v6769 = vrot.slane %v6764, 4
      %v6771 = vshrl.u32 %v6603, 16
      %v6773 = vrot.slane %v6771, 7
      %v6774 = vshll.u32 %v6603, 16
      %v6776 = vor.u32 %v6773, %v6774
      %v6777 = vrot.slane %v6773, 4
      %v6779 = vshrl.u32 %v6604, 16
      %v6781 = vrot.slane %v6779, 7
      %v6782 = vshll.u32 %v6604, 16
      %v6784 = vor.u32 %v6781, %v6782
      %v6785 = vsel %vm636, %v6777, %v6784
      %v6786 = vrot.slane %v6781, 4
      %v6788 = vshrl.u32 %v6605, 16
      %v6790 = vrot.slane %v6788, 7
      %v6791 = vshll.u32 %v6605, 16
      %v6793 = vor.u32 %v6790, %v6791
      %v6794 = vrot.slane %v6790, 4
      %v6796 = vshrl.u32 %v6606, 16
      %v6798 = vrot.slane %v6796, 7
      %v6799 = vshll.u32 %v6606, 16
      %v6801 = vor.u32 %v6798, %v6799
      %v6802 = vsel %vm636, %v6794, %v6801
      %v6803 = vrot.slane %v6798, 4
      %v6805 = vshrl.u32 %v6607, 16
      %v6807 = vrot.slane %v6805, 7
      %v6808 = vshll.u32 %v6607, 16
      %v6810 = vor.u32 %v6807, %v6808
      %v6811 = vrot.slane %v6807, 4
      %v6813 = vshrl.u32 %v6608, 16
      %v6815 = vrot.slane %v6813, 7
      %v6816 = vshll.u32 %v6608, 16
      %v6818 = vor.u32 %v6815, %v6816
      %v6819 = vsel %vm636, %v6811, %v6818
      %v6820 = vrot.slane %v6815, 4
      %v6822 = vshrl.u32 %v6609, 16
      %v6824 = vrot.slane %v6822, 7
      %v6825 = vshll.u32 %v6609, 16
      %v6827 = vor.u32 %v6824, %v6825
      %v6828 = vrot.slane %v6824, 4
      %v6830 = vshrl.u32 %v6610, 16
      %v6832 = vrot.slane %v6830, 7
      %v6833 = vshll.u32 %v6610, 16
      %v6835 = vor.u32 %v6832, %v6833
      %v6836 = vsel %vm636, %v6828, %v6835
      %v6837 = vrot.slane %v6832, 4
      %v6839 = vshrl.u32 %v6611, 16
      %v6841 = vrot.slane %v6839, 7
      %v6842 = vshll.u32 %v6611, 16
      %v6844 = vor.u32 %v6841, %v6842
      %v6845 = vrot.slane %v6841, 4
      %v6847 = vshrl.u32 %v6612, 16
      %v6849 = vrot.slane %v6847, 7
      %v6850 = vshll.u32 %v6612, 16
      %v6852 = vor.u32 %v6849, %v6850
      %v6853 = vsel %vm636, %v6845, %v6852
      %v6854 = vrot.slane %v6849, 4
      %v6856 = vshrl.u32 %v6613, 16
      %v6858 = vrot.slane %v6856, 7
      %v6859 = vshll.u32 %v6613, 16
      %v6861 = vor.u32 %v6858, %v6859
      %v6862 = vrot.slane %v6858, 4
      %v6864 = vshrl.u32 %v6614, 16
      %v6866 = vrot.slane %v6864, 7
      %v6867 = vshll.u32 %v6614, 16
      %v6869 = vor.u32 %v6866, %v6867
      %v6870 = vsel %vm636, %v6862, %v6869
      %v6871 = vrot.slane %v6866, 4
      %v6873 = vshrl.u32 %v6615, 16
      %v6875 = vrot.slane %v6873, 7
      %v6876 = vshll.u32 %v6615, 16
      %v6878 = vor.u32 %v6875, %v6876
      %v6879 = vrot.slane %v6875, 4
      %v6881 = vshrl.u32 %v6616, 16
      %v6883 = vrot.slane %v6881, 7
      %v6884 = vshll.u32 %v6616, 16
      %v6886 = vor.u32 %v6883, %v6884
      %v6887 = vsel %vm636, %v6879, %v6886
      %v6888 = vrot.slane %v6883, 4
      %v6937 = vld [vmem:[%s957] sm:$0xf]
      %v6938 = vsel %vm960, %v6623, %v6937
      %6939 = vst [vmem:[%s957] sm:$0xf] %v6938
      %6940 = vst.msk [vmem:[%s957 + $0x4] sm:$0xf] %vm964, %v6632
      %v6941 = vld [vmem:[%s957 + $0x8] sm:$0x1]
      %v6942 = vsel %vm967, %v6633, %v6941
      %6943 = vst [vmem:[%s957 + $0x8] sm:$0x1] %v6942
      %v6944 = vld [vmem:[%s957 + $0xc] sm:$0xf]
      %v6945 = vsel %vm960, %v6640, %v6944
      %6946 = vst [vmem:[%s957 + $0xc] sm:$0xf] %v6945
      %6947 = vst.msk [vmem:[%s957 + $0x10] sm:$0xf] %vm964, %v6649
      %v6948 = vld [vmem:[%s957 + $0x14] sm:$0x1]
      %v6949 = vsel %vm967, %v6650, %v6948
      %6950 = vst [vmem:[%s957 + $0x14] sm:$0x1] %v6949
      %v6951 = vld [vmem:[%s957 + $0x18] sm:$0xf]
      %v6952 = vsel %vm960, %v6657, %v6951
      %6953 = vst [vmem:[%s957 + $0x18] sm:$0xf] %v6952
      %6954 = vst.msk [vmem:[%s957 + $0x1c] sm:$0xf] %vm964, %v6666
      %v6955 = vld [vmem:[%s957 + $0x20] sm:$0x1]
      %v6956 = vsel %vm967, %v6667, %v6955
      %6957 = vst [vmem:[%s957 + $0x20] sm:$0x1] %v6956
      %v6958 = vld [vmem:[%s957 + $0x24] sm:$0xf]
      %v6959 = vsel %vm960, %v6674, %v6958
      %6960 = vst [vmem:[%s957 + $0x24] sm:$0xf] %v6959
      %6961 = vst.msk [vmem:[%s957 + $0x28] sm:$0xf] %vm964, %v6683
      %v6962 = vld [vmem:[%s957 + $0x2c] sm:$0x1]
      %v6963 = vsel %vm967, %v6684, %v6962
      %6964 = vst [vmem:[%s957 + $0x2c] sm:$0x1] %v6963
      %v6965 = vld [vmem:[%s957 + $0x30] sm:$0xf]
      %v6966 = vsel %vm960, %v6691, %v6965
      %6967 = vst [vmem:[%s957 + $0x30] sm:$0xf] %v6966
      %6968 = vst.msk [vmem:[%s957 + $0x34] sm:$0xf] %vm964, %v6700
      %v6969 = vld [vmem:[%s957 + $0x38] sm:$0x1]
      %v6970 = vsel %vm967, %v6701, %v6969
      %6971 = vst [vmem:[%s957 + $0x38] sm:$0x1] %v6970
      %v6972 = vld [vmem:[%s957 + $0x3c] sm:$0xf]
      %v6973 = vsel %vm960, %v6708, %v6972
      %6974 = vst [vmem:[%s957 + $0x3c] sm:$0xf] %v6973
      %6975 = vst.msk [vmem:[%s957 + $0x40] sm:$0xf] %vm964, %v6717
      %v6976 = vld [vmem:[%s957 + $0x44] sm:$0x1]
      %v6977 = vsel %vm967, %v6718, %v6976
      %6978 = vst [vmem:[%s957 + $0x44] sm:$0x1] %v6977
      %v6979 = vld [vmem:[%s957 + $0x48] sm:$0xf]
      %v6980 = vsel %vm960, %v6725, %v6979
      %6981 = vst [vmem:[%s957 + $0x48] sm:$0xf] %v6980
      %6982 = vst.msk [vmem:[%s957 + $0x4c] sm:$0xf] %vm964, %v6734
      %v6983 = vld [vmem:[%s957 + $0x50] sm:$0x1]
      %v6984 = vsel %vm967, %v6735, %v6983
      %6985 = vst [vmem:[%s957 + $0x50] sm:$0x1] %v6984
      %v6986 = vld [vmem:[%s957 + $0x54] sm:$0xf]
      %v6987 = vsel %vm960, %v6742, %v6986
      %6988 = vst [vmem:[%s957 + $0x54] sm:$0xf] %v6987
      %6989 = vst.msk [vmem:[%s957 + $0x58] sm:$0xf] %vm964, %v6751
      %v6990 = vld [vmem:[%s957 + $0x5c] sm:$0x1]
      %v6991 = vsel %vm967, %v6752, %v6990
      %6992 = vst [vmem:[%s957 + $0x5c] sm:$0x1] %v6991
      %v6993 = vld [vmem:[%s957 + $0x60] sm:$0xf]
      %v6994 = vsel %vm960, %v6759, %v6993
      %6995 = vst [vmem:[%s957 + $0x60] sm:$0xf] %v6994
      %6996 = vst.msk [vmem:[%s957 + $0x64] sm:$0xf] %vm964, %v6768
      %v6997 = vld [vmem:[%s957 + $0x68] sm:$0x1]
      %v6998 = vsel %vm967, %v6769, %v6997
      %6999 = vst [vmem:[%s957 + $0x68] sm:$0x1] %v6998
      %v7000 = vld [vmem:[%s957 + $0x6c] sm:$0xf]
      %v7001 = vsel %vm960, %v6776, %v7000
      %7002 = vst [vmem:[%s957 + $0x6c] sm:$0xf] %v7001
      %7003 = vst.msk [vmem:[%s957 + $0x70] sm:$0xf] %vm964, %v6785
      %v7004 = vld [vmem:[%s957 + $0x74] sm:$0x1]
      %v7005 = vsel %vm967, %v6786, %v7004
      %7006 = vst [vmem:[%s957 + $0x74] sm:$0x1] %v7005
      %v7007 = vld [vmem:[%s957 + $0x78] sm:$0xf]
      %v7008 = vsel %vm960, %v6793, %v7007
      %7009 = vst [vmem:[%s957 + $0x78] sm:$0xf] %v7008
      %7010 = vst.msk [vmem:[%s957 + $0x7c] sm:$0xf] %vm964, %v6802
      %v7011 = vld [vmem:[%s957 + $0x80] sm:$0x1]
      %v7012 = vsel %vm967, %v6803, %v7011
      %7013 = vst [vmem:[%s957 + $0x80] sm:$0x1] %v7012
      %v7014 = vld [vmem:[%s957 + $0x84] sm:$0xf]
      %v7015 = vsel %vm960, %v6810, %v7014
      %7016 = vst [vmem:[%s957 + $0x84] sm:$0xf] %v7015
      %7017 = vst.msk [vmem:[%s957 + $0x88] sm:$0xf] %vm964, %v6819
      %v7018 = vld [vmem:[%s957 + $0x8c] sm:$0x1]
      %v7019 = vsel %vm967, %v6820, %v7018
      %7020 = vst [vmem:[%s957 + $0x8c] sm:$0x1] %v7019
      %v7021 = vld [vmem:[%s957 + $0x90] sm:$0xf]
      %v7022 = vsel %vm960, %v6827, %v7021
      %7023 = vst [vmem:[%s957 + $0x90] sm:$0xf] %v7022
      %7024 = vst.msk [vmem:[%s957 + $0x94] sm:$0xf] %vm964, %v6836
      %v7025 = vld [vmem:[%s957 + $0x98] sm:$0x1]
      %v7026 = vsel %vm967, %v6837, %v7025
      %7027 = vst [vmem:[%s957 + $0x98] sm:$0x1] %v7026
      %v7028 = vld [vmem:[%s957 + $0x9c] sm:$0xf]
      %v7029 = vsel %vm960, %v6844, %v7028
      %7030 = vst [vmem:[%s957 + $0x9c] sm:$0xf] %v7029
      %7031 = vst.msk [vmem:[%s957 + $0xa0] sm:$0xf] %vm964, %v6853
      %v7032 = vld [vmem:[%s957 + $0xa4] sm:$0x1]
      %v7033 = vsel %vm967, %v6854, %v7032
      %7034 = vst [vmem:[%s957 + $0xa4] sm:$0x1] %v7033
      %v7035 = vld [vmem:[%s957 + $0xa8] sm:$0xf]
      %v7036 = vsel %vm960, %v6861, %v7035
      %7037 = vst [vmem:[%s957 + $0xa8] sm:$0xf] %v7036
      %7038 = vst.msk [vmem:[%s957 + $0xac] sm:$0xf] %vm964, %v6870
      %v7039 = vld [vmem:[%s957 + $0xb0] sm:$0x1]
      %v7040 = vsel %vm967, %v6871, %v7039
      %7041 = vst [vmem:[%s957 + $0xb0] sm:$0x1] %v7040
      %v7042 = vld [vmem:[%s957 + $0xb4] sm:$0xf]
      %v7043 = vsel %vm960, %v6878, %v7042
      %7044 = vst [vmem:[%s957 + $0xb4] sm:$0xf] %v7043
      %7045 = vst.msk [vmem:[%s957 + $0xb8] sm:$0xf] %vm964, %v6887
      %v7046 = vld [vmem:[%s957 + $0xbc] sm:$0x1]
      %v7047 = vsel %vm967, %v6888, %v7046
      %7048 = vst [vmem:[%s957 + $0xbc] sm:$0x1] %v7047
      %v7049 = vld [vmem:[%s1076] sm:$0xf]
      %v7050 = vld [vmem:[%s1076 + $0x4] sm:$0xf]
      %v7051 = vld [vmem:[%s1076 + $0x8] sm:$0x1]
      %v7052 = vld [vmem:[#allocation2] sm:$0xf]
      %v7053 = vsel %vm960, %v7049, %v7052
      %7054 = vst [vmem:[#allocation2] sm:$0xf] %v7053
      %7055 = vst.msk [vmem:[#allocation2 + $0x4] sm:$0xf] %vm964, %v7050
      %v7056 = vld [vmem:[#allocation2 + $0x8] sm:$0x1]
      %v7057 = vsel %vm967, %v7051, %v7056
      %7058 = vst [vmem:[#allocation2 + $0x8] sm:$0x1] %v7057
      %v7059 = vld [vmem:[%s1087] sm:$0xf]
      %v7060 = vld [vmem:[%s1087 + $0x4] sm:$0xf]
      %v7061 = vld [vmem:[%s1087 + $0x8] sm:$0x1]
      %v7062 = vld [vmem:[%s1091] sm:$0xf]
      %v7063 = vsel %vm960, %v7059, %v7062
      %7064 = vst [vmem:[%s1091] sm:$0xf] %v7063
      %7065 = vst.msk [vmem:[%s1091 + $0x4] sm:$0xf] %vm964, %v7060
      %v7066 = vld [vmem:[%s1091 + $0x8] sm:$0x1]
      %v7067 = vsel %vm967, %v7061, %v7066
      %7068 = vst [vmem:[%s1091 + $0x8] sm:$0x1] %v7067
      %v7069 = vld [vmem:[#allocation2] sm:$0x2]
      %v7070 = vld [vmem:[#allocation2 + $0xc] sm:$0x2]
      %v7071 = vld [vmem:[#allocation2 + $0x18] sm:$0x2]
      %v7072 = vld [vmem:[#allocation2 + $0x24] sm:$0x2]
      %v7073 = vld [vmem:[#allocation2 + $0x30] sm:$0x2]
      %v7074 = vld [vmem:[#allocation2 + $0x3c] sm:$0x2]
      %v7075 = vld [vmem:[#allocation2 + $0x48] sm:$0x2]
      %v7076 = vld [vmem:[#allocation2 + $0x54] sm:$0x2]
      %v7077 = vld [vmem:[#allocation2 + $0x60] sm:$0x2]
      %v7078 = vld [vmem:[#allocation2 + $0x6c] sm:$0x2]
      %v7079 = vld [vmem:[#allocation2 + $0x78] sm:$0x2]
      %v7080 = vld [vmem:[#allocation2 + $0x84] sm:$0x2]
      %v7081 = vld [vmem:[#allocation2 + $0x90] sm:$0x2]
      %v7082 = vld [vmem:[#allocation2 + $0x9c] sm:$0x2]
      %v7083 = vld [vmem:[#allocation2 + $0xa8] sm:$0x2]
      %v7084 = vld [vmem:[#allocation2 + $0xb4] sm:$0x2]
      %v7085 = vld [vmem:[#allocation2 + $0xc0] sm:$0x2]
      %v7086 = vld [vmem:[#allocation2 + $0xcc] sm:$0x2]
      %v7105 = vrot.slane %v7069, 5
      %v7106 = vrot.slane %v7105, 4
      %v7107 = vrot.slane %v7070, 5
      %v7108 = vrot.slane %v7107, 4
      %v7109 = vrot.slane %v7071, 5
      %v7110 = vrot.slane %v7109, 4
      %v7111 = vrot.slane %v7072, 5
      %v7112 = vrot.slane %v7111, 4
      %v7113 = vrot.slane %v7073, 5
      %v7114 = vrot.slane %v7113, 4
      %v7115 = vrot.slane %v7074, 5
      %v7116 = vrot.slane %v7115, 4
      %v7117 = vrot.slane %v7075, 5
      %v7118 = vrot.slane %v7117, 4
      %v7119 = vrot.slane %v7076, 5
      %v7120 = vrot.slane %v7119, 4
      %v7121 = vrot.slane %v7077, 5
      %v7122 = vrot.slane %v7121, 4
      %v7123 = vrot.slane %v7078, 5
      %v7124 = vrot.slane %v7123, 4
      %v7125 = vrot.slane %v7079, 5
      %v7126 = vrot.slane %v7125, 4
      %v7127 = vrot.slane %v7080, 5
      %v7128 = vrot.slane %v7127, 4
      %v7129 = vrot.slane %v7081, 5
      %v7130 = vrot.slane %v7129, 4
      %v7131 = vrot.slane %v7082, 5
      %v7132 = vrot.slane %v7131, 4
      %v7133 = vrot.slane %v7083, 5
      %v7134 = vrot.slane %v7133, 4
      %v7135 = vrot.slane %v7084, 5
      %v7136 = vrot.slane %v7135, 4
      %v7137 = vrot.slane %v7085, 5
      %v7138 = vrot.slane %v7137, 4
      %v7139 = vrot.slane %v7086, 5
      %v7140 = vrot.slane %v7139, 4
      %v7159 = vld [vmem:[#allocation2] sm:$0x1]
      %v7160 = vsel %vm967, %v7106, %v7159
      %7161 = vst [vmem:[#allocation2] sm:$0x1] %v7160
      %v7162 = vld [vmem:[#allocation2 + $0xc] sm:$0x1]
      %v7163 = vsel %vm967, %v7108, %v7162
      %7164 = vst [vmem:[#allocation2 + $0xc] sm:$0x1] %v7163
      %v7165 = vld [vmem:[#allocation2 + $0x18] sm:$0x1]
      %v7166 = vsel %vm967, %v7110, %v7165
      %7167 = vst [vmem:[#allocation2 + $0x18] sm:$0x1] %v7166
      %v7168 = vld [vmem:[#allocation2 + $0x24] sm:$0x1]
      %v7169 = vsel %vm967, %v7112, %v7168
      %7170 = vst [vmem:[#allocation2 + $0x24] sm:$0x1] %v7169
      %v7171 = vld [vmem:[#allocation2 + $0x30] sm:$0x1]
      %v7172 = vsel %vm967, %v7114, %v7171
      %7173 = vst [vmem:[#allocation2 + $0x30] sm:$0x1] %v7172
      %v7174 = vld [vmem:[#allocation2 + $0x3c] sm:$0x1]
      %v7175 = vsel %vm967, %v7116, %v7174
      %7176 = vst [vmem:[#allocation2 + $0x3c] sm:$0x1] %v7175
      %v7177 = vld [vmem:[#allocation2 + $0x48] sm:$0x1]
      %v7178 = vsel %vm967, %v7118, %v7177
      %7179 = vst [vmem:[#allocation2 + $0x48] sm:$0x1] %v7178
      %v7180 = vld [vmem:[#allocation2 + $0x54] sm:$0x1]
      %v7181 = vsel %vm967, %v7120, %v7180
      %7182 = vst [vmem:[#allocation2 + $0x54] sm:$0x1] %v7181
      %v7183 = vld [vmem:[#allocation2 + $0x60] sm:$0x1]
      %v7184 = vsel %vm967, %v7122, %v7183
      %7185 = vst [vmem:[#allocation2 + $0x60] sm:$0x1] %v7184
      %v7186 = vld [vmem:[#allocation2 + $0x6c] sm:$0x1]
      %v7187 = vsel %vm967, %v7124, %v7186
      %7188 = vst [vmem:[#allocation2 + $0x6c] sm:$0x1] %v7187
      %v7189 = vld [vmem:[#allocation2 + $0x78] sm:$0x1]
      %v7190 = vsel %vm967, %v7126, %v7189
      %7191 = vst [vmem:[#allocation2 + $0x78] sm:$0x1] %v7190
      %v7192 = vld [vmem:[#allocation2 + $0x84] sm:$0x1]
      %v7193 = vsel %vm967, %v7128, %v7192
      %7194 = vst [vmem:[#allocation2 + $0x84] sm:$0x1] %v7193
      %v7195 = vld [vmem:[#allocation2 + $0x90] sm:$0x1]
      %v7196 = vsel %vm967, %v7130, %v7195
      %7197 = vst [vmem:[#allocation2 + $0x90] sm:$0x1] %v7196
      %v7198 = vld [vmem:[#allocation2 + $0x9c] sm:$0x1]
      %v7199 = vsel %vm967, %v7132, %v7198
      %7200 = vst [vmem:[#allocation2 + $0x9c] sm:$0x1] %v7199
      %v7201 = vld [vmem:[#allocation2 + $0xa8] sm:$0x1]
      %v7202 = vsel %vm967, %v7134, %v7201
      %7203 = vst [vmem:[#allocation2 + $0xa8] sm:$0x1] %v7202
      %v7204 = vld [vmem:[#allocation2 + $0xb4] sm:$0x1]
      %v7205 = vsel %vm967, %v7136, %v7204
      %7206 = vst [vmem:[#allocation2 + $0xb4] sm:$0x1] %v7205
      %v7207 = vld [vmem:[#allocation2 + $0xc0] sm:$0x1]
      %v7208 = vsel %vm967, %v7138, %v7207
      %7209 = vst [vmem:[#allocation2 + $0xc0] sm:$0x1] %v7208
      %v7210 = vld [vmem:[#allocation2 + $0xcc] sm:$0x1]
      %v7211 = vsel %vm967, %v7140, %v7210
      %7212 = vst [vmem:[#allocation2 + $0xcc] sm:$0x1] %v7211
      %v7213 = vld [vmem:[#allocation2 + $0x4] sm:$0x8]
      %v7214 = vld [vmem:[#allocation2 + $0x10] sm:$0x8]
      %v7215 = vld [vmem:[#allocation2 + $0x1c] sm:$0x8]
      %v7216 = vld [vmem:[#allocation2 + $0x28] sm:$0x8]
      %v7217 = vld [vmem:[#allocation2 + $0x34] sm:$0x8]
      %v7218 = vld [vmem:[#allocation2 + $0x40] sm:$0x8]
      %v7219 = vld [vmem:[#allocation2 + $0x4c] sm:$0x8]
      %v7220 = vld [vmem:[#allocation2 + $0x58] sm:$0x8]
      %v7221 = vld [vmem:[#allocation2 + $0x64] sm:$0x8]
      %v7222 = vld [vmem:[#allocation2 + $0x70] sm:$0x8]
      %v7223 = vld [vmem:[#allocation2 + $0x7c] sm:$0x8]
      %v7224 = vld [vmem:[#allocation2 + $0x88] sm:$0x8]
      %v7225 = vld [vmem:[#allocation2 + $0x94] sm:$0x8]
      %v7226 = vld [vmem:[#allocation2 + $0xa0] sm:$0x8]
      %v7227 = vld [vmem:[#allocation2 + $0xac] sm:$0x8]
      %v7228 = vld [vmem:[#allocation2 + $0xb8] sm:$0x8]
      %v7229 = vld [vmem:[#allocation2 + $0xc4] sm:$0x8]
      %v7230 = vld [vmem:[#allocation2 + $0xd0] sm:$0x8]
      %v7249 = vrot.slane %v7213, 7
      %v7250 = vrot.slane %v7249, 4
      %v7251 = vrot.slane %v7214, 7
      %v7252 = vrot.slane %v7251, 4
      %v7253 = vrot.slane %v7215, 7
      %v7254 = vrot.slane %v7253, 4
      %v7255 = vrot.slane %v7216, 7
      %v7256 = vrot.slane %v7255, 4
      %v7257 = vrot.slane %v7217, 7
      %v7258 = vrot.slane %v7257, 4
      %v7259 = vrot.slane %v7218, 7
      %v7260 = vrot.slane %v7259, 4
      %v7261 = vrot.slane %v7219, 7
      %v7262 = vrot.slane %v7261, 4
      %v7263 = vrot.slane %v7220, 7
      %v7264 = vrot.slane %v7263, 4
      %v7265 = vrot.slane %v7221, 7
      %v7266 = vrot.slane %v7265, 4
      %v7267 = vrot.slane %v7222, 7
      %v7268 = vrot.slane %v7267, 4
      %v7269 = vrot.slane %v7223, 7
      %v7270 = vrot.slane %v7269, 4
      %v7271 = vrot.slane %v7224, 7
      %v7272 = vrot.slane %v7271, 4
      %v7273 = vrot.slane %v7225, 7
      %v7274 = vrot.slane %v7273, 4
      %v7275 = vrot.slane %v7226, 7
      %v7276 = vrot.slane %v7275, 4
      %v7277 = vrot.slane %v7227, 7
      %v7278 = vrot.slane %v7277, 4
      %v7279 = vrot.slane %v7228, 7
      %v7280 = vrot.slane %v7279, 4
      %v7281 = vrot.slane %v7229, 7
      %v7282 = vrot.slane %v7281, 4
      %v7283 = vrot.slane %v7230, 7
      %v7284 = vrot.slane %v7283, 4
      %v7303 = vld [vmem:[#allocation2 + $0x8] sm:$0x1]
      %v7304 = vsel %vm1333, %v7250, %v7303
      %7305 = vst [vmem:[#allocation2 + $0x8] sm:$0x1] %v7304
      %v7306 = vld [vmem:[#allocation2 + $0x14] sm:$0x1]
      %v7307 = vsel %vm1333, %v7252, %v7306
      %7308 = vst [vmem:[#allocation2 + $0x14] sm:$0x1] %v7307
      %v7309 = vld [vmem:[#allocation2 + $0x20] sm:$0x1]
      %v7310 = vsel %vm1333, %v7254, %v7309
      %7311 = vst [vmem:[#allocation2 + $0x20] sm:$0x1] %v7310
      %v7312 = vld [vmem:[#allocation2 + $0x2c] sm:$0x1]
      %v7313 = vsel %vm1333, %v7256, %v7312
      %7314 = vst [vmem:[#allocation2 + $0x2c] sm:$0x1] %v7313
      %v7315 = vld [vmem:[#allocation2 + $0x38] sm:$0x1]
      %v7316 = vsel %vm1333, %v7258, %v7315
      %7317 = vst [vmem:[#allocation2 + $0x38] sm:$0x1] %v7316
      %v7318 = vld [vmem:[#allocation2 + $0x44] sm:$0x1]
      %v7319 = vsel %vm1333, %v7260, %v7318
      %7320 = vst [vmem:[#allocation2 + $0x44] sm:$0x1] %v7319
      %v7321 = vld [vmem:[#allocation2 + $0x50] sm:$0x1]
      %v7322 = vsel %vm1333, %v7262, %v7321
      %7323 = vst [vmem:[#allocation2 + $0x50] sm:$0x1] %v7322
      %v7324 = vld [vmem:[#allocation2 + $0x5c] sm:$0x1]
      %v7325 = vsel %vm1333, %v7264, %v7324
      %7326 = vst [vmem:[#allocation2 + $0x5c] sm:$0x1] %v7325
      %v7327 = vld [vmem:[#allocation2 + $0x68] sm:$0x1]
      %v7328 = vsel %vm1333, %v7266, %v7327
      %7329 = vst [vmem:[#allocation2 + $0x68] sm:$0x1] %v7328
      %v7330 = vld [vmem:[#allocation2 + $0x74] sm:$0x1]
      %v7331 = vsel %vm1333, %v7268, %v7330
      %7332 = vst [vmem:[#allocation2 + $0x74] sm:$0x1] %v7331
      %v7333 = vld [vmem:[#allocation2 + $0x80] sm:$0x1]
      %v7334 = vsel %vm1333, %v7270, %v7333
      %7335 = vst [vmem:[#allocation2 + $0x80] sm:$0x1] %v7334
      %v7336 = vld [vmem:[#allocation2 + $0x8c] sm:$0x1]
      %v7337 = vsel %vm1333, %v7272, %v7336
      %7338 = vst [vmem:[#allocation2 + $0x8c] sm:$0x1] %v7337
      %v7339 = vld [vmem:[#allocation2 + $0x98] sm:$0x1]
      %v7340 = vsel %vm1333, %v7274, %v7339
      %7341 = vst [vmem:[#allocation2 + $0x98] sm:$0x1] %v7340
      %v7342 = vld [vmem:[#allocation2 + $0xa4] sm:$0x1]
      %v7343 = vsel %vm1333, %v7276, %v7342
      %7344 = vst [vmem:[#allocation2 + $0xa4] sm:$0x1] %v7343
      %v7345 = vld [vmem:[#allocation2 + $0xb0] sm:$0x1]
      %v7346 = vsel %vm1333, %v7278, %v7345
      %7347 = vst [vmem:[#allocation2 + $0xb0] sm:$0x1] %v7346
      %v7348 = vld [vmem:[#allocation2 + $0xbc] sm:$0x1]
      %v7349 = vsel %vm1333, %v7280, %v7348
      %7350 = vst [vmem:[#allocation2 + $0xbc] sm:$0x1] %v7349
      %v7351 = vld [vmem:[#allocation2 + $0xc8] sm:$0x1]
      %v7352 = vsel %vm1333, %v7282, %v7351
      %7353 = vst [vmem:[#allocation2 + $0xc8] sm:$0x1] %v7352
      %v7354 = vld [vmem:[#allocation2 + $0xd4] sm:$0x1]
      %v7355 = vsel %vm1333, %v7284, %v7354
      %7356 = vst [vmem:[#allocation2 + $0xd4] sm:$0x1] %v7355
      %v7357 = vld [vmem:[#allocation2] sm:$0xf]
      %v7358 = vld [vmem:[#allocation2 + $0x4] sm:$0xf]
      %v7359 = vld [vmem:[#allocation2 + $0xc] sm:$0xf]
      %v7360 = vld [vmem:[#allocation2 + $0x10] sm:$0xf]
      %v7361 = vld [vmem:[#allocation2 + $0x18] sm:$0xf]
      %v7362 = vld [vmem:[#allocation2 + $0x1c] sm:$0xf]
      %v7363 = vld [vmem:[#allocation2 + $0x24] sm:$0xf]
      %v7364 = vld [vmem:[#allocation2 + $0x28] sm:$0xf]
      %v7365 = vld [vmem:[#allocation2 + $0x30] sm:$0xf]
      %v7366 = vld [vmem:[#allocation2 + $0x34] sm:$0xf]
      %v7367 = vld [vmem:[#allocation2 + $0x3c] sm:$0xf]
      %v7368 = vld [vmem:[#allocation2 + $0x40] sm:$0xf]
      %v7369 = vld [vmem:[#allocation2 + $0x48] sm:$0xf]
      %v7370 = vld [vmem:[#allocation2 + $0x4c] sm:$0xf]
      %v7371 = vld [vmem:[#allocation2 + $0x54] sm:$0xf]
      %v7372 = vld [vmem:[#allocation2 + $0x58] sm:$0xf]
      %v7373 = vld [vmem:[#allocation2 + $0x60] sm:$0xf]
      %v7374 = vld [vmem:[#allocation2 + $0x64] sm:$0xf]
      %v7375 = vld [vmem:[#allocation2 + $0x6c] sm:$0xf]
      %v7376 = vld [vmem:[#allocation2 + $0x70] sm:$0xf]
      %v7377 = vld [vmem:[#allocation2 + $0x78] sm:$0xf]
      %v7378 = vld [vmem:[#allocation2 + $0x7c] sm:$0xf]
      %v7379 = vld [vmem:[#allocation2 + $0x84] sm:$0xf]
      %v7380 = vld [vmem:[#allocation2 + $0x88] sm:$0xf]
      %v7381 = vld [vmem:[#allocation2 + $0x90] sm:$0xf]
      %v7382 = vld [vmem:[#allocation2 + $0x94] sm:$0xf]
      %v7383 = vld [vmem:[#allocation2 + $0x9c] sm:$0xf]
      %v7384 = vld [vmem:[#allocation2 + $0xa0] sm:$0xf]
      %v7385 = vld [vmem:[#allocation2 + $0xa8] sm:$0xf]
      %v7386 = vld [vmem:[#allocation2 + $0xac] sm:$0xf]
      %v7387 = vld [vmem:[#allocation2 + $0xb4] sm:$0xf]
      %v7388 = vld [vmem:[#allocation2 + $0xb8] sm:$0xf]
      %7389 = vst.msk [vmem:[#allocation3] sm:$0xf] %vm964, %v7357
      %7390 = vst.msk [vmem:[#allocation3 + $0x24] sm:$0xf] %vm964, %v7358
      %7391 = vst.msk [vmem:[#allocation3 + $0x48] sm:$0xf] %vm964, %v7359
      %7392 = vst.msk [vmem:[#allocation3 + $0x6c] sm:$0xf] %vm964, %v7360
      %7393 = vst.msk [vmem:[#allocation3 + $0x90] sm:$0xf] %vm964, %v7361
      %7394 = vst.msk [vmem:[#allocation3 + $0xb4] sm:$0xf] %vm964, %v7362
      %7395 = vst.msk [vmem:[#allocation3 + $0xd8] sm:$0xf] %vm964, %v7363
      %7396 = vst.msk [vmem:[#allocation3 + $0xfc] sm:$0xf] %vm964, %v7364
      %7397 = vst.msk [vmem:[#allocation3 + $0x120] sm:$0xf] %vm964, %v7365
      %7398 = vst.msk [vmem:[#allocation3 + $0x144] sm:$0xf] %vm964, %v7366
      %7399 = vst.msk [vmem:[#allocation3 + $0x168] sm:$0xf] %vm964, %v7367
      %7400 = vst.msk [vmem:[#allocation3 + $0x18c] sm:$0xf] %vm964, %v7368
      %7401 = vst.msk [vmem:[#allocation3 + $0x1b0] sm:$0xf] %vm964, %v7369
      %7402 = vst.msk [vmem:[#allocation3 + $0x1d4] sm:$0xf] %vm964, %v7370
      %7403 = vst.msk [vmem:[#allocation3 + $0x1f8] sm:$0xf] %vm964, %v7371
      %7404 = vst.msk [vmem:[#allocation3 + $0x21c] sm:$0xf] %vm964, %v7372
      %7405 = vst.msk [vmem:[#allocation3 + $0x240] sm:$0xf] %vm964, %v7373
      %7406 = vst.msk [vmem:[#allocation3 + $0x264] sm:$0xf] %vm964, %v7374
      %7407 = vst.msk [vmem:[#allocation3 + $0x288] sm:$0xf] %vm964, %v7375
      %7408 = vst.msk [vmem:[#allocation3 + $0x2ac] sm:$0xf] %vm964, %v7376
      %7409 = vst.msk [vmem:[#allocation3 + $0x2d0] sm:$0xf] %vm964, %v7377
      %7410 = vst.msk [vmem:[#allocation3 + $0x2f4] sm:$0xf] %vm964, %v7378
      %7411 = vst.msk [vmem:[#allocation3 + $0x318] sm:$0xf] %vm964, %v7379
      %7412 = vst.msk [vmem:[#allocation3 + $0x33c] sm:$0xf] %vm964, %v7380
      %7413 = vst.msk [vmem:[#allocation3 + $0x360] sm:$0xf] %vm964, %v7381
      %7414 = vst.msk [vmem:[#allocation3 + $0x384] sm:$0xf] %vm964, %v7382
      %7415 = vst.msk [vmem:[#allocation3 + $0x3a8] sm:$0xf] %vm964, %v7383
      %7416 = vst.msk [vmem:[#allocation3 + $0x3cc] sm:$0xf] %vm964, %v7384
      %7417 = vst.msk [vmem:[#allocation3 + $0x3f0] sm:$0xf] %vm964, %v7385
      %7418 = vst.msk [vmem:[#allocation3 + $0x414] sm:$0xf] %vm964, %v7386
      %7419 = vst.msk [vmem:[#allocation3 + $0x438] sm:$0xf] %vm964, %v7387
      %7420 = vst.msk [vmem:[#allocation3 + $0x45c] sm:$0xf] %vm964, %v7388
      %v7421 = vld [vmem:[#allocation2] sm:$0xf]
      %v7422 = vld [vmem:[#allocation2 + $0x4] sm:$0xf]
      %v7423 = vld [vmem:[#allocation2 + $0x8] sm:$0x1]
      %v7424 = vld [vmem:[#allocation2 + $0xc] sm:$0xf]
      %v7425 = vld [vmem:[#allocation2 + $0x10] sm:$0xf]
      %v7426 = vld [vmem:[#allocation2 + $0x14] sm:$0x1]
      %v7427 = vld [vmem:[#allocation2 + $0x18] sm:$0xf]
      %v7428 = vld [vmem:[#allocation2 + $0x1c] sm:$0xf]
      %v7429 = vld [vmem:[#allocation2 + $0x20] sm:$0x1]
      %v7430 = vld [vmem:[#allocation2 + $0x24] sm:$0xf]
      %v7431 = vld [vmem:[#allocation2 + $0x28] sm:$0xf]
      %v7432 = vld [vmem:[#allocation2 + $0x2c] sm:$0x1]
      %v7433 = vld [vmem:[#allocation2 + $0x30] sm:$0xf]
      %v7434 = vld [vmem:[#allocation2 + $0x34] sm:$0xf]
      %v7435 = vld [vmem:[#allocation2 + $0x38] sm:$0x1]
      %v7436 = vld [vmem:[#allocation2 + $0x3c] sm:$0xf]
      %v7437 = vld [vmem:[#allocation2 + $0x40] sm:$0xf]
      %v7438 = vld [vmem:[#allocation2 + $0x44] sm:$0x1]
      %v7439 = vld [vmem:[#allocation2 + $0x48] sm:$0xf]
      %v7440 = vld [vmem:[#allocation2 + $0x4c] sm:$0xf]
      %v7441 = vld [vmem:[#allocation2 + $0x50] sm:$0x1]
      %v7442 = vld [vmem:[#allocation2 + $0x54] sm:$0xf]
      %v7443 = vld [vmem:[#allocation2 + $0x58] sm:$0xf]
      %v7444 = vld [vmem:[#allocation2 + $0x5c] sm:$0x1]
      %v7445 = vld [vmem:[#allocation2 + $0x60] sm:$0xf]
      %v7446 = vld [vmem:[#allocation2 + $0x64] sm:$0xf]
      %v7447 = vld [vmem:[#allocation2 + $0x68] sm:$0x1]
      %v7448 = vld [vmem:[#allocation2 + $0x6c] sm:$0xf]
      %v7449 = vld [vmem:[#allocation2 + $0x70] sm:$0xf]
      %v7450 = vld [vmem:[#allocation2 + $0x74] sm:$0x1]
      %v7451 = vld [vmem:[#allocation2 + $0x78] sm:$0xf]
      %v7452 = vld [vmem:[#allocation2 + $0x7c] sm:$0xf]
      %v7453 = vld [vmem:[#allocation2 + $0x80] sm:$0x1]
      %v7454 = vld [vmem:[#allocation2 + $0x84] sm:$0xf]
      %v7455 = vld [vmem:[#allocation2 + $0x88] sm:$0xf]
      %v7456 = vld [vmem:[#allocation2 + $0x8c] sm:$0x1]
      %v7457 = vld [vmem:[#allocation2 + $0x90] sm:$0xf]
      %v7458 = vld [vmem:[#allocation2 + $0x94] sm:$0xf]
      %v7459 = vld [vmem:[#allocation2 + $0x98] sm:$0x1]
      %v7460 = vld [vmem:[#allocation2 + $0x9c] sm:$0xf]
      %v7461 = vld [vmem:[#allocation2 + $0xa0] sm:$0xf]
      %v7462 = vld [vmem:[#allocation2 + $0xa4] sm:$0x1]
      %v7463 = vld [vmem:[#allocation2 + $0xa8] sm:$0xf]
      %v7464 = vld [vmem:[#allocation2 + $0xac] sm:$0xf]
      %v7465 = vld [vmem:[#allocation2 + $0xb0] sm:$0x1]
      %v7466 = vld [vmem:[#allocation2 + $0xb4] sm:$0xf]
      %v7467 = vld [vmem:[#allocation2 + $0xb8] sm:$0xf]
      %v7468 = vld [vmem:[#allocation2 + $0xbc] sm:$0x1]
      %v7470 = vshrl.u32 %v7421, 16
      %v7472 = vrot.slane %v7470, 4
      %v7473 = vshll.u32 %v7421, 16
      %v7475 = vrot.slane %v7473, 5
      %v7476 = vor.u32 %v7472, %v7475
      %v7477 = vrot.slane %v7476, 4
      %v7479 = vshll.u32 %v7422, 16
      %v7481 = vrot.slane %v7479, 5
      %v7482 = vsel %vm1502, %v7477, %v7481
      %v7483 = vshrl.u32 %v7422, 16
      %v7485 = vrot.slane %v7483, 4
      %v7486 = vor.u32 %v7485, %v7481
      %v7487 = vrot.slane %v7486, 4
      %v7489 = vshll.u32 %v7423, 16
      %v7491 = vrot.slane %v7489, 5
      %v7492 = vsel %vm1502, %v7487, %v7491
      %v7494 = vshrl.u32 %v7424, 16
      %v7496 = vrot.slane %v7494, 4
      %v7497 = vshll.u32 %v7424, 16
      %v7499 = vrot.slane %v7497, 5
      %v7500 = vor.u32 %v7496, %v7499
      %v7501 = vrot.slane %v7500, 4
      %v7503 = vshll.u32 %v7425, 16
      %v7505 = vrot.slane %v7503, 5
      %v7506 = vsel %vm1502, %v7501, %v7505
      %v7507 = vshrl.u32 %v7425, 16
      %v7509 = vrot.slane %v7507, 4
      %v7510 = vor.u32 %v7509, %v7505
      %v7511 = vrot.slane %v7510, 4
      %v7513 = vshll.u32 %v7426, 16
      %v7515 = vrot.slane %v7513, 5
      %v7516 = vsel %vm1502, %v7511, %v7515
      %v7518 = vshrl.u32 %v7427, 16
      %v7520 = vrot.slane %v7518, 4
      %v7521 = vshll.u32 %v7427, 16
      %v7523 = vrot.slane %v7521, 5
      %v7524 = vor.u32 %v7520, %v7523
      %v7525 = vrot.slane %v7524, 4
      %v7527 = vshll.u32 %v7428, 16
      %v7529 = vrot.slane %v7527, 5
      %v7530 = vsel %vm1502, %v7525, %v7529
      %v7531 = vshrl.u32 %v7428, 16
      %v7533 = vrot.slane %v7531, 4
      %v7534 = vor.u32 %v7533, %v7529
      %v7535 = vrot.slane %v7534, 4
      %v7537 = vshll.u32 %v7429, 16
      %v7539 = vrot.slane %v7537, 5
      %v7540 = vsel %vm1502, %v7535, %v7539
      %v7542 = vshrl.u32 %v7430, 16
      %v7544 = vrot.slane %v7542, 4
      %v7545 = vshll.u32 %v7430, 16
      %v7547 = vrot.slane %v7545, 5
      %v7548 = vor.u32 %v7544, %v7547
      %v7549 = vrot.slane %v7548, 4
      %v7551 = vshll.u32 %v7431, 16
      %v7553 = vrot.slane %v7551, 5
      %v7554 = vsel %vm1502, %v7549, %v7553
      %v7555 = vshrl.u32 %v7431, 16
      %v7557 = vrot.slane %v7555, 4
      %v7558 = vor.u32 %v7557, %v7553
      %v7559 = vrot.slane %v7558, 4
      %v7561 = vshll.u32 %v7432, 16
      %v7563 = vrot.slane %v7561, 5
      %v7564 = vsel %vm1502, %v7559, %v7563
      %v7566 = vshrl.u32 %v7433, 16
      %v7568 = vrot.slane %v7566, 4
      %v7569 = vshll.u32 %v7433, 16
      %v7571 = vrot.slane %v7569, 5
      %v7572 = vor.u32 %v7568, %v7571
      %v7573 = vrot.slane %v7572, 4
      %v7575 = vshll.u32 %v7434, 16
      %v7577 = vrot.slane %v7575, 5
      %v7578 = vsel %vm1502, %v7573, %v7577
      %v7579 = vshrl.u32 %v7434, 16
      %v7581 = vrot.slane %v7579, 4
      %v7582 = vor.u32 %v7581, %v7577
      %v7583 = vrot.slane %v7582, 4
      %v7585 = vshll.u32 %v7435, 16
      %v7587 = vrot.slane %v7585, 5
      %v7588 = vsel %vm1502, %v7583, %v7587
      %v7590 = vshrl.u32 %v7436, 16
      %v7592 = vrot.slane %v7590, 4
      %v7593 = vshll.u32 %v7436, 16
      %v7595 = vrot.slane %v7593, 5
      %v7596 = vor.u32 %v7592, %v7595
      %v7597 = vrot.slane %v7596, 4
      %v7599 = vshll.u32 %v7437, 16
      %v7601 = vrot.slane %v7599, 5
      %v7602 = vsel %vm1502, %v7597, %v7601
      %v7603 = vshrl.u32 %v7437, 16
      %v7605 = vrot.slane %v7603, 4
      %v7606 = vor.u32 %v7605, %v7601
      %v7607 = vrot.slane %v7606, 4
      %v7609 = vshll.u32 %v7438, 16
      %v7611 = vrot.slane %v7609, 5
      %v7612 = vsel %vm1502, %v7607, %v7611
      %v7614 = vshrl.u32 %v7439, 16
      %v7616 = vrot.slane %v7614, 4
      %v7617 = vshll.u32 %v7439, 16
      %v7619 = vrot.slane %v7617, 5
      %v7620 = vor.u32 %v7616, %v7619
      %v7621 = vrot.slane %v7620, 4
      %v7623 = vshll.u32 %v7440, 16
      %v7625 = vrot.slane %v7623, 5
      %v7626 = vsel %vm1502, %v7621, %v7625
      %v7627 = vshrl.u32 %v7440, 16
      %v7629 = vrot.slane %v7627, 4
      %v7630 = vor.u32 %v7629, %v7625
      %v7631 = vrot.slane %v7630, 4
      %v7633 = vshll.u32 %v7441, 16
      %v7635 = vrot.slane %v7633, 5
      %v7636 = vsel %vm1502, %v7631, %v7635
      %v7638 = vshrl.u32 %v7442, 16
      %v7640 = vrot.slane %v7638, 4
      %v7641 = vshll.u32 %v7442, 16
      %v7643 = vrot.slane %v7641, 5
      %v7644 = vor.u32 %v7640, %v7643
      %v7645 = vrot.slane %v7644, 4
      %v7647 = vshll.u32 %v7443, 16
      %v7649 = vrot.slane %v7647, 5
      %v7650 = vsel %vm1502, %v7645, %v7649
      %v7651 = vshrl.u32 %v7443, 16
      %v7653 = vrot.slane %v7651, 4
      %v7654 = vor.u32 %v7653, %v7649
      %v7655 = vrot.slane %v7654, 4
      %v7657 = vshll.u32 %v7444, 16
      %v7659 = vrot.slane %v7657, 5
      %v7660 = vsel %vm1502, %v7655, %v7659
      %v7662 = vshrl.u32 %v7445, 16
      %v7664 = vrot.slane %v7662, 4
      %v7665 = vshll.u32 %v7445, 16
      %v7667 = vrot.slane %v7665, 5
      %v7668 = vor.u32 %v7664, %v7667
      %v7669 = vrot.slane %v7668, 4
      %v7671 = vshll.u32 %v7446, 16
      %v7673 = vrot.slane %v7671, 5
      %v7674 = vsel %vm1502, %v7669, %v7673
      %v7675 = vshrl.u32 %v7446, 16
      %v7677 = vrot.slane %v7675, 4
      %v7678 = vor.u32 %v7677, %v7673
      %v7679 = vrot.slane %v7678, 4
      %v7681 = vshll.u32 %v7447, 16
      %v7683 = vrot.slane %v7681, 5
      %v7684 = vsel %vm1502, %v7679, %v7683
      %v7686 = vshrl.u32 %v7448, 16
      %v7688 = vrot.slane %v7686, 4
      %v7689 = vshll.u32 %v7448, 16
      %v7691 = vrot.slane %v7689, 5
      %v7692 = vor.u32 %v7688, %v7691
      %v7693 = vrot.slane %v7692, 4
      %v7695 = vshll.u32 %v7449, 16
      %v7697 = vrot.slane %v7695, 5
      %v7698 = vsel %vm1502, %v7693, %v7697
      %v7699 = vshrl.u32 %v7449, 16
      %v7701 = vrot.slane %v7699, 4
      %v7702 = vor.u32 %v7701, %v7697
      %v7703 = vrot.slane %v7702, 4
      %v7705 = vshll.u32 %v7450, 16
      %v7707 = vrot.slane %v7705, 5
      %v7708 = vsel %vm1502, %v7703, %v7707
      %v7710 = vshrl.u32 %v7451, 16
      %v7712 = vrot.slane %v7710, 4
      %v7713 = vshll.u32 %v7451, 16
      %v7715 = vrot.slane %v7713, 5
      %v7716 = vor.u32 %v7712, %v7715
      %v7717 = vrot.slane %v7716, 4
      %v7719 = vshll.u32 %v7452, 16
      %v7721 = vrot.slane %v7719, 5
      %v7722 = vsel %vm1502, %v7717, %v7721
      %v7723 = vshrl.u32 %v7452, 16
      %v7725 = vrot.slane %v7723, 4
      %v7726 = vor.u32 %v7725, %v7721
      %v7727 = vrot.slane %v7726, 4
      %v7729 = vshll.u32 %v7453, 16
      %v7731 = vrot.slane %v7729, 5
      %v7732 = vsel %vm1502, %v7727, %v7731
      %v7734 = vshrl.u32 %v7454, 16
      %v7736 = vrot.slane %v7734, 4
      %v7737 = vshll.u32 %v7454, 16
      %v7739 = vrot.slane %v7737, 5
      %v7740 = vor.u32 %v7736, %v7739
      %v7741 = vrot.slane %v7740, 4
      %v7743 = vshll.u32 %v7455, 16
      %v7745 = vrot.slane %v7743, 5
      %v7746 = vsel %vm1502, %v7741, %v7745
      %v7747 = vshrl.u32 %v7455, 16
      %v7749 = vrot.slane %v7747, 4
      %v7750 = vor.u32 %v7749, %v7745
      %v7751 = vrot.slane %v7750, 4
      %v7753 = vshll.u32 %v7456, 16
      %v7755 = vrot.slane %v7753, 5
      %v7756 = vsel %vm1502, %v7751, %v7755
      %v7758 = vshrl.u32 %v7457, 16
      %v7760 = vrot.slane %v7758, 4
      %v7761 = vshll.u32 %v7457, 16
      %v7763 = vrot.slane %v7761, 5
      %v7764 = vor.u32 %v7760, %v7763
      %v7765 = vrot.slane %v7764, 4
      %v7767 = vshll.u32 %v7458, 16
      %v7769 = vrot.slane %v7767, 5
      %v7770 = vsel %vm1502, %v7765, %v7769
      %v7771 = vshrl.u32 %v7458, 16
      %v7773 = vrot.slane %v7771, 4
      %v7774 = vor.u32 %v7773, %v7769
      %v7775 = vrot.slane %v7774, 4
      %v7777 = vshll.u32 %v7459, 16
      %v7779 = vrot.slane %v7777, 5
      %v7780 = vsel %vm1502, %v7775, %v7779
      %v7782 = vshrl.u32 %v7460, 16
      %v7784 = vrot.slane %v7782, 4
      %v7785 = vshll.u32 %v7460, 16
      %v7787 = vrot.slane %v7785, 5
      %v7788 = vor.u32 %v7784, %v7787
      %v7789 = vrot.slane %v7788, 4
      %v7791 = vshll.u32 %v7461, 16
      %v7793 = vrot.slane %v7791, 5
      %v7794 = vsel %vm1502, %v7789, %v7793
      %v7795 = vshrl.u32 %v7461, 16
      %v7797 = vrot.slane %v7795, 4
      %v7798 = vor.u32 %v7797, %v7793
      %v7799 = vrot.slane %v7798, 4
      %v7801 = vshll.u32 %v7462, 16
      %v7803 = vrot.slane %v7801, 5
      %v7804 = vsel %vm1502, %v7799, %v7803
      %v7806 = vshrl.u32 %v7463, 16
      %v7808 = vrot.slane %v7806, 4
      %v7809 = vshll.u32 %v7463, 16
      %v7811 = vrot.slane %v7809, 5
      %v7812 = vor.u32 %v7808, %v7811
      %v7813 = vrot.slane %v7812, 4
      %v7815 = vshll.u32 %v7464, 16
      %v7817 = vrot.slane %v7815, 5
      %v7818 = vsel %vm1502, %v7813, %v7817
      %v7819 = vshrl.u32 %v7464, 16
      %v7821 = vrot.slane %v7819, 4
      %v7822 = vor.u32 %v7821, %v7817
      %v7823 = vrot.slane %v7822, 4
      %v7825 = vshll.u32 %v7465, 16
      %v7827 = vrot.slane %v7825, 5
      %v7828 = vsel %vm1502, %v7823, %v7827
      %v7830 = vshrl.u32 %v7466, 16
      %v7832 = vrot.slane %v7830, 4
      %v7833 = vshll.u32 %v7466, 16
      %v7835 = vrot.slane %v7833, 5
      %v7836 = vor.u32 %v7832, %v7835
      %v7837 = vrot.slane %v7836, 4
      %v7839 = vshll.u32 %v7467, 16
      %v7841 = vrot.slane %v7839, 5
      %v7842 = vsel %vm1502, %v7837, %v7841
      %v7843 = vshrl.u32 %v7467, 16
      %v7845 = vrot.slane %v7843, 4
      %v7846 = vor.u32 %v7845, %v7841
      %v7847 = vrot.slane %v7846, 4
      %v7849 = vshll.u32 %v7468, 16
      %v7851 = vrot.slane %v7849, 5
      %v7852 = vsel %vm1502, %v7847, %v7851
      %7885 = vst.msk [vmem:[#allocation3 + $0x4] sm:$0xf] %vm964, %v7482
      %7886 = vst.msk [vmem:[#allocation3 + $0x28] sm:$0xf] %vm964, %v7492
      %7887 = vst.msk [vmem:[#allocation3 + $0x4c] sm:$0xf] %vm964, %v7506
      %7888 = vst.msk [vmem:[#allocation3 + $0x70] sm:$0xf] %vm964, %v7516
      %7889 = vst.msk [vmem:[#allocation3 + $0x94] sm:$0xf] %vm964, %v7530
      %7890 = vst.msk [vmem:[#allocation3 + $0xb8] sm:$0xf] %vm964, %v7540
      %7891 = vst.msk [vmem:[#allocation3 + $0xdc] sm:$0xf] %vm964, %v7554
      %7892 = vst.msk [vmem:[#allocation3 + $0x100] sm:$0xf] %vm964, %v7564
      %7893 = vst.msk [vmem:[#allocation3 + $0x124] sm:$0xf] %vm964, %v7578
      %7894 = vst.msk [vmem:[#allocation3 + $0x148] sm:$0xf] %vm964, %v7588
      %7895 = vst.msk [vmem:[#allocation3 + $0x16c] sm:$0xf] %vm964, %v7602
      %7896 = vst.msk [vmem:[#allocation3 + $0x190] sm:$0xf] %vm964, %v7612
      %7897 = vst.msk [vmem:[#allocation3 + $0x1b4] sm:$0xf] %vm964, %v7626
      %7898 = vst.msk [vmem:[#allocation3 + $0x1d8] sm:$0xf] %vm964, %v7636
      %7899 = vst.msk [vmem:[#allocation3 + $0x1fc] sm:$0xf] %vm964, %v7650
      %7900 = vst.msk [vmem:[#allocation3 + $0x220] sm:$0xf] %vm964, %v7660
      %7901 = vst.msk [vmem:[#allocation3 + $0x244] sm:$0xf] %vm964, %v7674
      %7902 = vst.msk [vmem:[#allocation3 + $0x268] sm:$0xf] %vm964, %v7684
      %7903 = vst.msk [vmem:[#allocation3 + $0x28c] sm:$0xf] %vm964, %v7698
      %7904 = vst.msk [vmem:[#allocation3 + $0x2b0] sm:$0xf] %vm964, %v7708
      %7905 = vst.msk [vmem:[#allocation3 + $0x2d4] sm:$0xf] %vm964, %v7722
      %7906 = vst.msk [vmem:[#allocation3 + $0x2f8] sm:$0xf] %vm964, %v7732
      %7907 = vst.msk [vmem:[#allocation3 + $0x31c] sm:$0xf] %vm964, %v7746
      %7908 = vst.msk [vmem:[#allocation3 + $0x340] sm:$0xf] %vm964, %v7756
      %7909 = vst.msk [vmem:[#allocation3 + $0x364] sm:$0xf] %vm964, %v7770
      %7910 = vst.msk [vmem:[#allocation3 + $0x388] sm:$0xf] %vm964, %v7780
      %7911 = vst.msk [vmem:[#allocation3 + $0x3ac] sm:$0xf] %vm964, %v7794
      %7912 = vst.msk [vmem:[#allocation3 + $0x3d0] sm:$0xf] %vm964, %v7804
      %7913 = vst.msk [vmem:[#allocation3 + $0x3f4] sm:$0xf] %vm964, %v7818
      %7914 = vst.msk [vmem:[#allocation3 + $0x418] sm:$0xf] %vm964, %v7828
      %7915 = vst.msk [vmem:[#allocation3 + $0x43c] sm:$0xf] %vm964, %v7842
      %7916 = vst.msk [vmem:[#allocation3 + $0x460] sm:$0xf] %vm964, %v7852
      %v7917 = vld [vmem:[#allocation2] sm:$0xe]
      %v7918 = vld [vmem:[#allocation2 + $0x4] sm:$0xf]
      %v7919 = vld [vmem:[#allocation2 + $0x8] sm:$0x1]
      %v7920 = vld [vmem:[#allocation2 + $0xc] sm:$0xe]
      %v7921 = vld [vmem:[#allocation2 + $0x10] sm:$0xf]
      %v7922 = vld [vmem:[#allocation2 + $0x14] sm:$0x1]
      %v7923 = vld [vmem:[#allocation2 + $0x18] sm:$0xe]
      %v7924 = vld [vmem:[#allocation2 + $0x1c] sm:$0xf]
      %v7925 = vld [vmem:[#allocation2 + $0x20] sm:$0x1]
      %v7926 = vld [vmem:[#allocation2 + $0x24] sm:$0xe]
      %v7927 = vld [vmem:[#allocation2 + $0x28] sm:$0xf]
      %v7928 = vld [vmem:[#allocation2 + $0x2c] sm:$0x1]
      %v7929 = vld [vmem:[#allocation2 + $0x30] sm:$0xe]
      %v7930 = vld [vmem:[#allocation2 + $0x34] sm:$0xf]
      %v7931 = vld [vmem:[#allocation2 + $0x38] sm:$0x1]
      %v7932 = vld [vmem:[#allocation2 + $0x3c] sm:$0xe]
      %v7933 = vld [vmem:[#allocation2 + $0x40] sm:$0xf]
      %v7934 = vld [vmem:[#allocation2 + $0x44] sm:$0x1]
      %v7935 = vld [vmem:[#allocation2 + $0x48] sm:$0xe]
      %v7936 = vld [vmem:[#allocation2 + $0x4c] sm:$0xf]
      %v7937 = vld [vmem:[#allocation2 + $0x50] sm:$0x1]
      %v7938 = vld [vmem:[#allocation2 + $0x54] sm:$0xe]
      %v7939 = vld [vmem:[#allocation2 + $0x58] sm:$0xf]
      %v7940 = vld [vmem:[#allocation2 + $0x5c] sm:$0x1]
      %v7941 = vld [vmem:[#allocation2 + $0x60] sm:$0xe]
      %v7942 = vld [vmem:[#allocation2 + $0x64] sm:$0xf]
      %v7943 = vld [vmem:[#allocation2 + $0x68] sm:$0x1]
      %v7944 = vld [vmem:[#allocation2 + $0x6c] sm:$0xe]
      %v7945 = vld [vmem:[#allocation2 + $0x70] sm:$0xf]
      %v7946 = vld [vmem:[#allocation2 + $0x74] sm:$0x1]
      %v7947 = vld [vmem:[#allocation2 + $0x78] sm:$0xe]
      %v7948 = vld [vmem:[#allocation2 + $0x7c] sm:$0xf]
      %v7949 = vld [vmem:[#allocation2 + $0x80] sm:$0x1]
      %v7950 = vld [vmem:[#allocation2 + $0x84] sm:$0xe]
      %v7951 = vld [vmem:[#allocation2 + $0x88] sm:$0xf]
      %v7952 = vld [vmem:[#allocation2 + $0x8c] sm:$0x1]
      %v7953 = vld [vmem:[#allocation2 + $0x90] sm:$0xe]
      %v7954 = vld [vmem:[#allocation2 + $0x94] sm:$0xf]
      %v7955 = vld [vmem:[#allocation2 + $0x98] sm:$0x1]
      %v7956 = vld [vmem:[#allocation2 + $0x9c] sm:$0xe]
      %v7957 = vld [vmem:[#allocation2 + $0xa0] sm:$0xf]
      %v7958 = vld [vmem:[#allocation2 + $0xa4] sm:$0x1]
      %v7959 = vld [vmem:[#allocation2 + $0xa8] sm:$0xe]
      %v7960 = vld [vmem:[#allocation2 + $0xac] sm:$0xf]
      %v7961 = vld [vmem:[#allocation2 + $0xb0] sm:$0x1]
      %v7962 = vld [vmem:[#allocation2 + $0xb4] sm:$0xe]
      %v7963 = vld [vmem:[#allocation2 + $0xb8] sm:$0xf]
      %v7964 = vld [vmem:[#allocation2 + $0xbc] sm:$0x1]
      %v8013 = vrot.slane %v7917, 5
      %v8014 = vrot.slane %v8013, 4
      %v8015 = vrot.slane %v7918, 5
      %v8016 = vsel %vm2049, %v8014, %v8015
      %v8017 = vrot.slane %v8015, 4
      %v8018 = vrot.slane %v7919, 5
      %v8019 = vsel %vm2049, %v8017, %v8018
      %v8020 = vrot.slane %v7920, 5
      %v8021 = vrot.slane %v8020, 4
      %v8022 = vrot.slane %v7921, 5
      %v8023 = vsel %vm2049, %v8021, %v8022
      %v8024 = vrot.slane %v8022, 4
      %v8025 = vrot.slane %v7922, 5
      %v8026 = vsel %vm2049, %v8024, %v8025
      %v8027 = vrot.slane %v7923, 5
      %v8028 = vrot.slane %v8027, 4
      %v8029 = vrot.slane %v7924, 5
      %v8030 = vsel %vm2049, %v8028, %v8029
      %v8031 = vrot.slane %v8029, 4
      %v8032 = vrot.slane %v7925, 5
      %v8033 = vsel %vm2049, %v8031, %v8032
      %v8034 = vrot.slane %v7926, 5
      %v8035 = vrot.slane %v8034, 4
      %v8036 = vrot.slane %v7927, 5
      %v8037 = vsel %vm2049, %v8035, %v8036
      %v8038 = vrot.slane %v8036, 4
      %v8039 = vrot.slane %v7928, 5
      %v8040 = vsel %vm2049, %v8038, %v8039
      %v8041 = vrot.slane %v7929, 5
      %v8042 = vrot.slane %v8041, 4
      %v8043 = vrot.slane %v7930, 5
      %v8044 = vsel %vm2049, %v8042, %v8043
      %v8045 = vrot.slane %v8043, 4
      %v8046 = vrot.slane %v7931, 5
      %v8047 = vsel %vm2049, %v8045, %v8046
      %v8048 = vrot.slane %v7932, 5
      %v8049 = vrot.slane %v8048, 4
      %v8050 = vrot.slane %v7933, 5
      %v8051 = vsel %vm2049, %v8049, %v8050
      %v8052 = vrot.slane %v8050, 4
      %v8053 = vrot.slane %v7934, 5
      %v8054 = vsel %vm2049, %v8052, %v8053
      %v8055 = vrot.slane %v7935, 5
      %v8056 = vrot.slane %v8055, 4
      %v8057 = vrot.slane %v7936, 5
      %v8058 = vsel %vm2049, %v8056, %v8057
      %v8059 = vrot.slane %v8057, 4
      %v8060 = vrot.slane %v7937, 5
      %v8061 = vsel %vm2049, %v8059, %v8060
      %v8062 = vrot.slane %v7938, 5
      %v8063 = vrot.slane %v8062, 4
      %v8064 = vrot.slane %v7939, 5
      %v8065 = vsel %vm2049, %v8063, %v8064
      %v8066 = vrot.slane %v8064, 4
      %v8067 = vrot.slane %v7940, 5
      %v8068 = vsel %vm2049, %v8066, %v8067
      %v8069 = vrot.slane %v7941, 5
      %v8070 = vrot.slane %v8069, 4
      %v8071 = vrot.slane %v7942, 5
      %v8072 = vsel %vm2049, %v8070, %v8071
      %v8073 = vrot.slane %v8071, 4
      %v8074 = vrot.slane %v7943, 5
      %v8075 = vsel %vm2049, %v8073, %v8074
      %v8076 = vrot.slane %v7944, 5
      %v8077 = vrot.slane %v8076, 4
      %v8078 = vrot.slane %v7945, 5
      %v8079 = vsel %vm2049, %v8077, %v8078
      %v8080 = vrot.slane %v8078, 4
      %v8081 = vrot.slane %v7946, 5
      %v8082 = vsel %vm2049, %v8080, %v8081
      %v8083 = vrot.slane %v7947, 5
      %v8084 = vrot.slane %v8083, 4
      %v8085 = vrot.slane %v7948, 5
      %v8086 = vsel %vm2049, %v8084, %v8085
      %v8087 = vrot.slane %v8085, 4
      %v8088 = vrot.slane %v7949, 5
      %v8089 = vsel %vm2049, %v8087, %v8088
      %v8090 = vrot.slane %v7950, 5
      %v8091 = vrot.slane %v8090, 4
      %v8092 = vrot.slane %v7951, 5
      %v8093 = vsel %vm2049, %v8091, %v8092
      %v8094 = vrot.slane %v8092, 4
      %v8095 = vrot.slane %v7952, 5
      %v8096 = vsel %vm2049, %v8094, %v8095
      %v8097 = vrot.slane %v7953, 5
      %v8098 = vrot.slane %v8097, 4
      %v8099 = vrot.slane %v7954, 5
      %v8100 = vsel %vm2049, %v8098, %v8099
      %v8101 = vrot.slane %v8099, 4
      %v8102 = vrot.slane %v7955, 5
      %v8103 = vsel %vm2049, %v8101, %v8102
      %v8104 = vrot.slane %v7956, 5
      %v8105 = vrot.slane %v8104, 4
      %v8106 = vrot.slane %v7957, 5
      %v8107 = vsel %vm2049, %v8105, %v8106
      %v8108 = vrot.slane %v8106, 4
      %v8109 = vrot.slane %v7958, 5
      %v8110 = vsel %vm2049, %v8108, %v8109
      %v8111 = vrot.slane %v7959, 5
      %v8112 = vrot.slane %v8111, 4
      %v8113 = vrot.slane %v7960, 5
      %v8114 = vsel %vm2049, %v8112, %v8113
      %v8115 = vrot.slane %v8113, 4
      %v8116 = vrot.slane %v7961, 5
      %v8117 = vsel %vm2049, %v8115, %v8116
      %v8118 = vrot.slane %v7962, 5
      %v8119 = vrot.slane %v8118, 4
      %v8120 = vrot.slane %v7963, 5
      %v8121 = vsel %vm2049, %v8119, %v8120
      %v8122 = vrot.slane %v8120, 4
      %v8123 = vrot.slane %v7964, 5
      %v8124 = vsel %vm2049, %v8122, %v8123
      %8157 = vst.msk [vmem:[#allocation3 + $0x8] sm:$0xf] %vm964, %v8016
      %8158 = vst.msk [vmem:[#allocation3 + $0x2c] sm:$0xf] %vm964, %v8019
      %8159 = vst.msk [vmem:[#allocation3 + $0x50] sm:$0xf] %vm964, %v8023
      %8160 = vst.msk [vmem:[#allocation3 + $0x74] sm:$0xf] %vm964, %v8026
      %8161 = vst.msk [vmem:[#allocation3 + $0x98] sm:$0xf] %vm964, %v8030
      %8162 = vst.msk [vmem:[#allocation3 + $0xbc] sm:$0xf] %vm964, %v8033
      %8163 = vst.msk [vmem:[#allocation3 + $0xe0] sm:$0xf] %vm964, %v8037
      %8164 = vst.msk [vmem:[#allocation3 + $0x104] sm:$0xf] %vm964, %v8040
      %8165 = vst.msk [vmem:[#allocation3 + $0x128] sm:$0xf] %vm964, %v8044
      %8166 = vst.msk [vmem:[#allocation3 + $0x14c] sm:$0xf] %vm964, %v8047
      %8167 = vst.msk [vmem:[#allocation3 + $0x170] sm:$0xf] %vm964, %v8051
      %8168 = vst.msk [vmem:[#allocation3 + $0x194] sm:$0xf] %vm964, %v8054
      %8169 = vst.msk [vmem:[#allocation3 + $0x1b8] sm:$0xf] %vm964, %v8058
      %8170 = vst.msk [vmem:[#allocation3 + $0x1dc] sm:$0xf] %vm964, %v8061
      %8171 = vst.msk [vmem:[#allocation3 + $0x200] sm:$0xf] %vm964, %v8065
      %8172 = vst.msk [vmem:[#allocation3 + $0x224] sm:$0xf] %vm964, %v8068
      %8173 = vst.msk [vmem:[#allocation3 + $0x248] sm:$0xf] %vm964, %v8072
      %8174 = vst.msk [vmem:[#allocation3 + $0x26c] sm:$0xf] %vm964, %v8075
      %8175 = vst.msk [vmem:[#allocation3 + $0x290] sm:$0xf] %vm964, %v8079
      %8176 = vst.msk [vmem:[#allocation3 + $0x2b4] sm:$0xf] %vm964, %v8082
      %8177 = vst.msk [vmem:[#allocation3 + $0x2d8] sm:$0xf] %vm964, %v8086
      %8178 = vst.msk [vmem:[#allocation3 + $0x2fc] sm:$0xf] %vm964, %v8089
      %8179 = vst.msk [vmem:[#allocation3 + $0x320] sm:$0xf] %vm964, %v8093
      %8180 = vst.msk [vmem:[#allocation3 + $0x344] sm:$0xf] %vm964, %v8096
      %8181 = vst.msk [vmem:[#allocation3 + $0x368] sm:$0xf] %vm964, %v8100
      %8182 = vst.msk [vmem:[#allocation3 + $0x38c] sm:$0xf] %vm964, %v8103
      %8183 = vst.msk [vmem:[#allocation3 + $0x3b0] sm:$0xf] %vm964, %v8107
      %8184 = vst.msk [vmem:[#allocation3 + $0x3d4] sm:$0xf] %vm964, %v8110
      %8185 = vst.msk [vmem:[#allocation3 + $0x3f8] sm:$0xf] %vm964, %v8114
      %8186 = vst.msk [vmem:[#allocation3 + $0x41c] sm:$0xf] %vm964, %v8117
      %8187 = vst.msk [vmem:[#allocation3 + $0x440] sm:$0xf] %vm964, %v8121
      %8188 = vst.msk [vmem:[#allocation3 + $0x464] sm:$0xf] %vm964, %v8124
      %v8189 = vld [vmem:[%s957] sm:$0xf]
      %v8190 = vld [vmem:[%s957 + $0x4] sm:$0xf]
      %v8191 = vld [vmem:[%s957 + $0xc] sm:$0xf]
      %v8192 = vld [vmem:[%s957 + $0x10] sm:$0xf]
      %v8193 = vld [vmem:[%s957 + $0x18] sm:$0xf]
      %v8194 = vld [vmem:[%s957 + $0x1c] sm:$0xf]
      %v8195 = vld [vmem:[%s957 + $0x24] sm:$0xf]
      %v8196 = vld [vmem:[%s957 + $0x28] sm:$0xf]
      %v8197 = vld [vmem:[%s957 + $0x30] sm:$0xf]
      %v8198 = vld [vmem:[%s957 + $0x34] sm:$0xf]
      %v8199 = vld [vmem:[%s957 + $0x3c] sm:$0xf]
      %v8200 = vld [vmem:[%s957 + $0x40] sm:$0xf]
      %v8201 = vld [vmem:[%s957 + $0x48] sm:$0xf]
      %v8202 = vld [vmem:[%s957 + $0x4c] sm:$0xf]
      %v8203 = vld [vmem:[%s957 + $0x54] sm:$0xf]
      %v8204 = vld [vmem:[%s957 + $0x58] sm:$0xf]
      %v8205 = vld [vmem:[%s957 + $0x60] sm:$0xf]
      %v8206 = vld [vmem:[%s957 + $0x64] sm:$0xf]
      %v8207 = vld [vmem:[%s957 + $0x6c] sm:$0xf]
      %v8208 = vld [vmem:[%s957 + $0x70] sm:$0xf]
      %v8209 = vld [vmem:[%s957 + $0x78] sm:$0xf]
      %v8210 = vld [vmem:[%s957 + $0x7c] sm:$0xf]
      %v8211 = vld [vmem:[%s957 + $0x84] sm:$0xf]
      %v8212 = vld [vmem:[%s957 + $0x88] sm:$0xf]
      %v8213 = vld [vmem:[%s957 + $0x90] sm:$0xf]
      %v8214 = vld [vmem:[%s957 + $0x94] sm:$0xf]
      %v8215 = vld [vmem:[%s957 + $0x9c] sm:$0xf]
      %v8216 = vld [vmem:[%s957 + $0xa0] sm:$0xf]
      %v8217 = vld [vmem:[%s957 + $0xa8] sm:$0xf]
      %v8218 = vld [vmem:[%s957 + $0xac] sm:$0xf]
      %v8219 = vld [vmem:[%s957 + $0xb4] sm:$0xf]
      %v8220 = vld [vmem:[%s957 + $0xb8] sm:$0xf]
      %8221 = vst.msk [vmem:[#allocation3 + $0xc] sm:$0xf] %vm964, %v8189
      %8222 = vst.msk [vmem:[#allocation3 + $0x30] sm:$0xf] %vm964, %v8190
      %8223 = vst.msk [vmem:[#allocation3 + $0x54] sm:$0xf] %vm964, %v8191
      %8224 = vst.msk [vmem:[#allocation3 + $0x78] sm:$0xf] %vm964, %v8192
      %8225 = vst.msk [vmem:[#allocation3 + $0x9c] sm:$0xf] %vm964, %v8193
      %8226 = vst.msk [vmem:[#allocation3 + $0xc0] sm:$0xf] %vm964, %v8194
      %8227 = vst.msk [vmem:[#allocation3 + $0xe4] sm:$0xf] %vm964, %v8195
      %8228 = vst.msk [vmem:[#allocation3 + $0x108] sm:$0xf] %vm964, %v8196
      %8229 = vst.msk [vmem:[#allocation3 + $0x12c] sm:$0xf] %vm964, %v8197
      %8230 = vst.msk [vmem:[#allocation3 + $0x150] sm:$0xf] %vm964, %v8198
      %8231 = vst.msk [vmem:[#allocation3 + $0x174] sm:$0xf] %vm964, %v8199
      %8232 = vst.msk [vmem:[#allocation3 + $0x198] sm:$0xf] %vm964, %v8200
      %8233 = vst.msk [vmem:[#allocation3 + $0x1bc] sm:$0xf] %vm964, %v8201
      %8234 = vst.msk [vmem:[#allocation3 + $0x1e0] sm:$0xf] %vm964, %v8202
      %8235 = vst.msk [vmem:[#allocation3 + $0x204] sm:$0xf] %vm964, %v8203
      %8236 = vst.msk [vmem:[#allocation3 + $0x228] sm:$0xf] %vm964, %v8204
      %8237 = vst.msk [vmem:[#allocation3 + $0x24c] sm:$0xf] %vm964, %v8205
      %8238 = vst.msk [vmem:[#allocation3 + $0x270] sm:$0xf] %vm964, %v8206
      %8239 = vst.msk [vmem:[#allocation3 + $0x294] sm:$0xf] %vm964, %v8207
      %8240 = vst.msk [vmem:[#allocation3 + $0x2b8] sm:$0xf] %vm964, %v8208
      %8241 = vst.msk [vmem:[#allocation3 + $0x2dc] sm:$0xf] %vm964, %v8209
      %8242 = vst.msk [vmem:[#allocation3 + $0x300] sm:$0xf] %vm964, %v8210
      %8243 = vst.msk [vmem:[#allocation3 + $0x324] sm:$0xf] %vm964, %v8211
      %8244 = vst.msk [vmem:[#allocation3 + $0x348] sm:$0xf] %vm964, %v8212
      %8245 = vst.msk [vmem:[#allocation3 + $0x36c] sm:$0xf] %vm964, %v8213
      %8246 = vst.msk [vmem:[#allocation3 + $0x390] sm:$0xf] %vm964, %v8214
      %8247 = vst.msk [vmem:[#allocation3 + $0x3b4] sm:$0xf] %vm964, %v8215
      %8248 = vst.msk [vmem:[#allocation3 + $0x3d8] sm:$0xf] %vm964, %v8216
      %8249 = vst.msk [vmem:[#allocation3 + $0x3fc] sm:$0xf] %vm964, %v8217
      %8250 = vst.msk [vmem:[#allocation3 + $0x420] sm:$0xf] %vm964, %v8218
      %8251 = vst.msk [vmem:[#allocation3 + $0x444] sm:$0xf] %vm964, %v8219
      %8252 = vst.msk [vmem:[#allocation3 + $0x468] sm:$0xf] %vm964, %v8220
      %v8253 = vld [vmem:[%s957] sm:$0xf]
      %v8254 = vld [vmem:[%s957 + $0x4] sm:$0xf]
      %v8255 = vld [vmem:[%s957 + $0x8] sm:$0x1]
      %v8256 = vld [vmem:[%s957 + $0xc] sm:$0xf]
      %v8257 = vld [vmem:[%s957 + $0x10] sm:$0xf]
      %v8258 = vld [vmem:[%s957 + $0x14] sm:$0x1]
      %v8259 = vld [vmem:[%s957 + $0x18] sm:$0xf]
      %v8260 = vld [vmem:[%s957 + $0x1c] sm:$0xf]
      %v8261 = vld [vmem:[%s957 + $0x20] sm:$0x1]
      %v8262 = vld [vmem:[%s957 + $0x24] sm:$0xf]
      %v8263 = vld [vmem:[%s957 + $0x28] sm:$0xf]
      %v8264 = vld [vmem:[%s957 + $0x2c] sm:$0x1]
      %v8265 = vld [vmem:[%s957 + $0x30] sm:$0xf]
      %v8266 = vld [vmem:[%s957 + $0x34] sm:$0xf]
      %v8267 = vld [vmem:[%s957 + $0x38] sm:$0x1]
      %v8268 = vld [vmem:[%s957 + $0x3c] sm:$0xf]
      %v8269 = vld [vmem:[%s957 + $0x40] sm:$0xf]
      %v8270 = vld [vmem:[%s957 + $0x44] sm:$0x1]
      %v8271 = vld [vmem:[%s957 + $0x48] sm:$0xf]
      %v8272 = vld [vmem:[%s957 + $0x4c] sm:$0xf]
      %v8273 = vld [vmem:[%s957 + $0x50] sm:$0x1]
      %v8274 = vld [vmem:[%s957 + $0x54] sm:$0xf]
      %v8275 = vld [vmem:[%s957 + $0x58] sm:$0xf]
      %v8276 = vld [vmem:[%s957 + $0x5c] sm:$0x1]
      %v8277 = vld [vmem:[%s957 + $0x60] sm:$0xf]
      %v8278 = vld [vmem:[%s957 + $0x64] sm:$0xf]
      %v8279 = vld [vmem:[%s957 + $0x68] sm:$0x1]
      %v8280 = vld [vmem:[%s957 + $0x6c] sm:$0xf]
      %v8281 = vld [vmem:[%s957 + $0x70] sm:$0xf]
      %v8282 = vld [vmem:[%s957 + $0x74] sm:$0x1]
      %v8283 = vld [vmem:[%s957 + $0x78] sm:$0xf]
      %v8284 = vld [vmem:[%s957 + $0x7c] sm:$0xf]
      %v8285 = vld [vmem:[%s957 + $0x80] sm:$0x1]
      %v8286 = vld [vmem:[%s957 + $0x84] sm:$0xf]
      %v8287 = vld [vmem:[%s957 + $0x88] sm:$0xf]
      %v8288 = vld [vmem:[%s957 + $0x8c] sm:$0x1]
      %v8289 = vld [vmem:[%s957 + $0x90] sm:$0xf]
      %v8290 = vld [vmem:[%s957 + $0x94] sm:$0xf]
      %v8291 = vld [vmem:[%s957 + $0x98] sm:$0x1]
      %v8292 = vld [vmem:[%s957 + $0x9c] sm:$0xf]
      %v8293 = vld [vmem:[%s957 + $0xa0] sm:$0xf]
      %v8294 = vld [vmem:[%s957 + $0xa4] sm:$0x1]
      %v8295 = vld [vmem:[%s957 + $0xa8] sm:$0xf]
      %v8296 = vld [vmem:[%s957 + $0xac] sm:$0xf]
      %v8297 = vld [vmem:[%s957 + $0xb0] sm:$0x1]
      %v8298 = vld [vmem:[%s957 + $0xb4] sm:$0xf]
      %v8299 = vld [vmem:[%s957 + $0xb8] sm:$0xf]
      %v8300 = vld [vmem:[%s957 + $0xbc] sm:$0x1]
      %v8302 = vshrl.u32 %v8253, 16
      %v8304 = vrot.slane %v8302, 4
      %v8305 = vshll.u32 %v8253, 16
      %v8307 = vrot.slane %v8305, 5
      %v8308 = vor.u32 %v8304, %v8307
      %v8309 = vrot.slane %v8308, 4
      %v8311 = vshll.u32 %v8254, 16
      %v8313 = vrot.slane %v8311, 5
      %v8314 = vsel %vm1502, %v8309, %v8313
      %v8315 = vshrl.u32 %v8254, 16
      %v8317 = vrot.slane %v8315, 4
      %v8318 = vor.u32 %v8317, %v8313
      %v8319 = vrot.slane %v8318, 4
      %v8321 = vshll.u32 %v8255, 16
      %v8323 = vrot.slane %v8321, 5
      %v8324 = vsel %vm1502, %v8319, %v8323
      %v8326 = vshrl.u32 %v8256, 16
      %v8328 = vrot.slane %v8326, 4
      %v8329 = vshll.u32 %v8256, 16
      %v8331 = vrot.slane %v8329, 5
      %v8332 = vor.u32 %v8328, %v8331
      %v8333 = vrot.slane %v8332, 4
      %v8335 = vshll.u32 %v8257, 16
      %v8337 = vrot.slane %v8335, 5
      %v8338 = vsel %vm1502, %v8333, %v8337
      %v8339 = vshrl.u32 %v8257, 16
      %v8341 = vrot.slane %v8339, 4
      %v8342 = vor.u32 %v8341, %v8337
      %v8343 = vrot.slane %v8342, 4
      %v8345 = vshll.u32 %v8258, 16
      %v8347 = vrot.slane %v8345, 5
      %v8348 = vsel %vm1502, %v8343, %v8347
      %v8350 = vshrl.u32 %v8259, 16
      %v8352 = vrot.slane %v8350, 4
      %v8353 = vshll.u32 %v8259, 16
      %v8355 = vrot.slane %v8353, 5
      %v8356 = vor.u32 %v8352, %v8355
      %v8357 = vrot.slane %v8356, 4
      %v8359 = vshll.u32 %v8260, 16
      %v8361 = vrot.slane %v8359, 5
      %v8362 = vsel %vm1502, %v8357, %v8361
      %v8363 = vshrl.u32 %v8260, 16
      %v8365 = vrot.slane %v8363, 4
      %v8366 = vor.u32 %v8365, %v8361
      %v8367 = vrot.slane %v8366, 4
      %v8369 = vshll.u32 %v8261, 16
      %v8371 = vrot.slane %v8369, 5
      %v8372 = vsel %vm1502, %v8367, %v8371
      %v8374 = vshrl.u32 %v8262, 16
      %v8376 = vrot.slane %v8374, 4
      %v8377 = vshll.u32 %v8262, 16
      %v8379 = vrot.slane %v8377, 5
      %v8380 = vor.u32 %v8376, %v8379
      %v8381 = vrot.slane %v8380, 4
      %v8383 = vshll.u32 %v8263, 16
      %v8385 = vrot.slane %v8383, 5
      %v8386 = vsel %vm1502, %v8381, %v8385
      %v8387 = vshrl.u32 %v8263, 16
      %v8389 = vrot.slane %v8387, 4
      %v8390 = vor.u32 %v8389, %v8385
      %v8391 = vrot.slane %v8390, 4
      %v8393 = vshll.u32 %v8264, 16
      %v8395 = vrot.slane %v8393, 5
      %v8396 = vsel %vm1502, %v8391, %v8395
      %v8398 = vshrl.u32 %v8265, 16
      %v8400 = vrot.slane %v8398, 4
      %v8401 = vshll.u32 %v8265, 16
      %v8403 = vrot.slane %v8401, 5
      %v8404 = vor.u32 %v8400, %v8403
      %v8405 = vrot.slane %v8404, 4
      %v8407 = vshll.u32 %v8266, 16
      %v8409 = vrot.slane %v8407, 5
      %v8410 = vsel %vm1502, %v8405, %v8409
      %v8411 = vshrl.u32 %v8266, 16
      %v8413 = vrot.slane %v8411, 4
      %v8414 = vor.u32 %v8413, %v8409
      %v8415 = vrot.slane %v8414, 4
      %v8417 = vshll.u32 %v8267, 16
      %v8419 = vrot.slane %v8417, 5
      %v8420 = vsel %vm1502, %v8415, %v8419
      %v8422 = vshrl.u32 %v8268, 16
      %v8424 = vrot.slane %v8422, 4
      %v8425 = vshll.u32 %v8268, 16
      %v8427 = vrot.slane %v8425, 5
      %v8428 = vor.u32 %v8424, %v8427
      %v8429 = vrot.slane %v8428, 4
      %v8431 = vshll.u32 %v8269, 16
      %v8433 = vrot.slane %v8431, 5
      %v8434 = vsel %vm1502, %v8429, %v8433
      %v8435 = vshrl.u32 %v8269, 16
      %v8437 = vrot.slane %v8435, 4
      %v8438 = vor.u32 %v8437, %v8433
      %v8439 = vrot.slane %v8438, 4
      %v8441 = vshll.u32 %v8270, 16
      %v8443 = vrot.slane %v8441, 5
      %v8444 = vsel %vm1502, %v8439, %v8443
      %v8446 = vshrl.u32 %v8271, 16
      %v8448 = vrot.slane %v8446, 4
      %v8449 = vshll.u32 %v8271, 16
      %v8451 = vrot.slane %v8449, 5
      %v8452 = vor.u32 %v8448, %v8451
      %v8453 = vrot.slane %v8452, 4
      %v8455 = vshll.u32 %v8272, 16
      %v8457 = vrot.slane %v8455, 5
      %v8458 = vsel %vm1502, %v8453, %v8457
      %v8459 = vshrl.u32 %v8272, 16
      %v8461 = vrot.slane %v8459, 4
      %v8462 = vor.u32 %v8461, %v8457
      %v8463 = vrot.slane %v8462, 4
      %v8465 = vshll.u32 %v8273, 16
      %v8467 = vrot.slane %v8465, 5
      %v8468 = vsel %vm1502, %v8463, %v8467
      %v8470 = vshrl.u32 %v8274, 16
      %v8472 = vrot.slane %v8470, 4
      %v8473 = vshll.u32 %v8274, 16
      %v8475 = vrot.slane %v8473, 5
      %v8476 = vor.u32 %v8472, %v8475
      %v8477 = vrot.slane %v8476, 4
      %v8479 = vshll.u32 %v8275, 16
      %v8481 = vrot.slane %v8479, 5
      %v8482 = vsel %vm1502, %v8477, %v8481
      %v8483 = vshrl.u32 %v8275, 16
      %v8485 = vrot.slane %v8483, 4
      %v8486 = vor.u32 %v8485, %v8481
      %v8487 = vrot.slane %v8486, 4
      %v8489 = vshll.u32 %v8276, 16
      %v8491 = vrot.slane %v8489, 5
      %v8492 = vsel %vm1502, %v8487, %v8491
      %v8494 = vshrl.u32 %v8277, 16
      %v8496 = vrot.slane %v8494, 4
      %v8497 = vshll.u32 %v8277, 16
      %v8499 = vrot.slane %v8497, 5
      %v8500 = vor.u32 %v8496, %v8499
      %v8501 = vrot.slane %v8500, 4
      %v8503 = vshll.u32 %v8278, 16
      %v8505 = vrot.slane %v8503, 5
      %v8506 = vsel %vm1502, %v8501, %v8505
      %v8507 = vshrl.u32 %v8278, 16
      %v8509 = vrot.slane %v8507, 4
      %v8510 = vor.u32 %v8509, %v8505
      %v8511 = vrot.slane %v8510, 4
      %v8513 = vshll.u32 %v8279, 16
      %v8515 = vrot.slane %v8513, 5
      %v8516 = vsel %vm1502, %v8511, %v8515
      %v8518 = vshrl.u32 %v8280, 16
      %v8520 = vrot.slane %v8518, 4
      %v8521 = vshll.u32 %v8280, 16
      %v8523 = vrot.slane %v8521, 5
      %v8524 = vor.u32 %v8520, %v8523
      %v8525 = vrot.slane %v8524, 4
      %v8527 = vshll.u32 %v8281, 16
      %v8529 = vrot.slane %v8527, 5
      %v8530 = vsel %vm1502, %v8525, %v8529
      %v8531 = vshrl.u32 %v8281, 16
      %v8533 = vrot.slane %v8531, 4
      %v8534 = vor.u32 %v8533, %v8529
      %v8535 = vrot.slane %v8534, 4
      %v8537 = vshll.u32 %v8282, 16
      %v8539 = vrot.slane %v8537, 5
      %v8540 = vsel %vm1502, %v8535, %v8539
      %v8542 = vshrl.u32 %v8283, 16
      %v8544 = vrot.slane %v8542, 4
      %v8545 = vshll.u32 %v8283, 16
      %v8547 = vrot.slane %v8545, 5
      %v8548 = vor.u32 %v8544, %v8547
      %v8549 = vrot.slane %v8548, 4
      %v8551 = vshll.u32 %v8284, 16
      %v8553 = vrot.slane %v8551, 5
      %v8554 = vsel %vm1502, %v8549, %v8553
      %v8555 = vshrl.u32 %v8284, 16
      %v8557 = vrot.slane %v8555, 4
      %v8558 = vor.u32 %v8557, %v8553
      %v8559 = vrot.slane %v8558, 4
      %v8561 = vshll.u32 %v8285, 16
      %v8563 = vrot.slane %v8561, 5
      %v8564 = vsel %vm1502, %v8559, %v8563
      %v8566 = vshrl.u32 %v8286, 16
      %v8568 = vrot.slane %v8566, 4
      %v8569 = vshll.u32 %v8286, 16
      %v8571 = vrot.slane %v8569, 5
      %v8572 = vor.u32 %v8568, %v8571
      %v8573 = vrot.slane %v8572, 4
      %v8575 = vshll.u32 %v8287, 16
      %v8577 = vrot.slane %v8575, 5
      %v8578 = vsel %vm1502, %v8573, %v8577
      %v8579 = vshrl.u32 %v8287, 16
      %v8581 = vrot.slane %v8579, 4
      %v8582 = vor.u32 %v8581, %v8577
      %v8583 = vrot.slane %v8582, 4
      %v8585 = vshll.u32 %v8288, 16
      %v8587 = vrot.slane %v8585, 5
      %v8588 = vsel %vm1502, %v8583, %v8587
      %v8590 = vshrl.u32 %v8289, 16
      %v8592 = vrot.slane %v8590, 4
      %v8593 = vshll.u32 %v8289, 16
      %v8595 = vrot.slane %v8593, 5
      %v8596 = vor.u32 %v8592, %v8595
      %v8597 = vrot.slane %v8596, 4
      %v8599 = vshll.u32 %v8290, 16
      %v8601 = vrot.slane %v8599, 5
      %v8602 = vsel %vm1502, %v8597, %v8601
      %v8603 = vshrl.u32 %v8290, 16
      %v8605 = vrot.slane %v8603, 4
      %v8606 = vor.u32 %v8605, %v8601
      %v8607 = vrot.slane %v8606, 4
      %v8609 = vshll.u32 %v8291, 16
      %v8611 = vrot.slane %v8609, 5
      %v8612 = vsel %vm1502, %v8607, %v8611
      %v8614 = vshrl.u32 %v8292, 16
      %v8616 = vrot.slane %v8614, 4
      %v8617 = vshll.u32 %v8292, 16
      %v8619 = vrot.slane %v8617, 5
      %v8620 = vor.u32 %v8616, %v8619
      %v8621 = vrot.slane %v8620, 4
      %v8623 = vshll.u32 %v8293, 16
      %v8625 = vrot.slane %v8623, 5
      %v8626 = vsel %vm1502, %v8621, %v8625
      %v8627 = vshrl.u32 %v8293, 16
      %v8629 = vrot.slane %v8627, 4
      %v8630 = vor.u32 %v8629, %v8625
      %v8631 = vrot.slane %v8630, 4
      %v8633 = vshll.u32 %v8294, 16
      %v8635 = vrot.slane %v8633, 5
      %v8636 = vsel %vm1502, %v8631, %v8635
      %v8638 = vshrl.u32 %v8295, 16
      %v8640 = vrot.slane %v8638, 4
      %v8641 = vshll.u32 %v8295, 16
      %v8643 = vrot.slane %v8641, 5
      %v8644 = vor.u32 %v8640, %v8643
      %v8645 = vrot.slane %v8644, 4
      %v8647 = vshll.u32 %v8296, 16
      %v8649 = vrot.slane %v8647, 5
      %v8650 = vsel %vm1502, %v8645, %v8649
      %v8651 = vshrl.u32 %v8296, 16
      %v8653 = vrot.slane %v8651, 4
      %v8654 = vor.u32 %v8653, %v8649
      %v8655 = vrot.slane %v8654, 4
      %v8657 = vshll.u32 %v8297, 16
      %v8659 = vrot.slane %v8657, 5
      %v8660 = vsel %vm1502, %v8655, %v8659
      %v8662 = vshrl.u32 %v8298, 16
      %v8664 = vrot.slane %v8662, 4
      %v8665 = vshll.u32 %v8298, 16
      %v8667 = vrot.slane %v8665, 5
      %v8668 = vor.u32 %v8664, %v8667
      %v8669 = vrot.slane %v8668, 4
      %v8671 = vshll.u32 %v8299, 16
      %v8673 = vrot.slane %v8671, 5
      %v8674 = vsel %vm1502, %v8669, %v8673
      %v8675 = vshrl.u32 %v8299, 16
      %v8677 = vrot.slane %v8675, 4
      %v8678 = vor.u32 %v8677, %v8673
      %v8679 = vrot.slane %v8678, 4
      %v8681 = vshll.u32 %v8300, 16
      %v8683 = vrot.slane %v8681, 5
      %v8684 = vsel %vm1502, %v8679, %v8683
      %8717 = vst.msk [vmem:[#allocation3 + $0x10] sm:$0xf] %vm964, %v8314
      %8718 = vst.msk [vmem:[#allocation3 + $0x34] sm:$0xf] %vm964, %v8324
      %8719 = vst.msk [vmem:[#allocation3 + $0x58] sm:$0xf] %vm964, %v8338
      %8720 = vst.msk [vmem:[#allocation3 + $0x7c] sm:$0xf] %vm964, %v8348
      %8721 = vst.msk [vmem:[#allocation3 + $0xa0] sm:$0xf] %vm964, %v8362
      %8722 = vst.msk [vmem:[#allocation3 + $0xc4] sm:$0xf] %vm964, %v8372
      %8723 = vst.msk [vmem:[#allocation3 + $0xe8] sm:$0xf] %vm964, %v8386
      %8724 = vst.msk [vmem:[#allocation3 + $0x10c] sm:$0xf] %vm964, %v8396
      %8725 = vst.msk [vmem:[#allocation3 + $0x130] sm:$0xf] %vm964, %v8410
      %8726 = vst.msk [vmem:[#allocation3 + $0x154] sm:$0xf] %vm964, %v8420
      %8727 = vst.msk [vmem:[#allocation3 + $0x178] sm:$0xf] %vm964, %v8434
      %8728 = vst.msk [vmem:[#allocation3 + $0x19c] sm:$0xf] %vm964, %v8444
      %8729 = vst.msk [vmem:[#allocation3 + $0x1c0] sm:$0xf] %vm964, %v8458
      %8730 = vst.msk [vmem:[#allocation3 + $0x1e4] sm:$0xf] %vm964, %v8468
      %8731 = vst.msk [vmem:[#allocation3 + $0x208] sm:$0xf] %vm964, %v8482
      %8732 = vst.msk [vmem:[#allocation3 + $0x22c] sm:$0xf] %vm964, %v8492
      %8733 = vst.msk [vmem:[#allocation3 + $0x250] sm:$0xf] %vm964, %v8506
      %8734 = vst.msk [vmem:[#allocation3 + $0x274] sm:$0xf] %vm964, %v8516
      %8735 = vst.msk [vmem:[#allocation3 + $0x298] sm:$0xf] %vm964, %v8530
      %8736 = vst.msk [vmem:[#allocation3 + $0x2bc] sm:$0xf] %vm964, %v8540
      %8737 = vst.msk [vmem:[#allocation3 + $0x2e0] sm:$0xf] %vm964, %v8554
      %8738 = vst.msk [vmem:[#allocation3 + $0x304] sm:$0xf] %vm964, %v8564
      %8739 = vst.msk [vmem:[#allocation3 + $0x328] sm:$0xf] %vm964, %v8578
      %8740 = vst.msk [vmem:[#allocation3 + $0x34c] sm:$0xf] %vm964, %v8588
      %8741 = vst.msk [vmem:[#allocation3 + $0x370] sm:$0xf] %vm964, %v8602
      %8742 = vst.msk [vmem:[#allocation3 + $0x394] sm:$0xf] %vm964, %v8612
      %8743 = vst.msk [vmem:[#allocation3 + $0x3b8] sm:$0xf] %vm964, %v8626
      %8744 = vst.msk [vmem:[#allocation3 + $0x3dc] sm:$0xf] %vm964, %v8636
      %8745 = vst.msk [vmem:[#allocation3 + $0x400] sm:$0xf] %vm964, %v8650
      %8746 = vst.msk [vmem:[#allocation3 + $0x424] sm:$0xf] %vm964, %v8660
      %8747 = vst.msk [vmem:[#allocation3 + $0x448] sm:$0xf] %vm964, %v8674
      %8748 = vst.msk [vmem:[#allocation3 + $0x46c] sm:$0xf] %vm964, %v8684
      %v8749 = vld [vmem:[%s957] sm:$0xe]
      %v8750 = vld [vmem:[%s957 + $0x4] sm:$0xf]
      %v8751 = vld [vmem:[%s957 + $0x8] sm:$0x1]
      %v8752 = vld [vmem:[%s957 + $0xc] sm:$0xe]
      %v8753 = vld [vmem:[%s957 + $0x10] sm:$0xf]
      %v8754 = vld [vmem:[%s957 + $0x14] sm:$0x1]
      %v8755 = vld [vmem:[%s957 + $0x18] sm:$0xe]
      %v8756 = vld [vmem:[%s957 + $0x1c] sm:$0xf]
      %v8757 = vld [vmem:[%s957 + $0x20] sm:$0x1]
      %v8758 = vld [vmem:[%s957 + $0x24] sm:$0xe]
      %v8759 = vld [vmem:[%s957 + $0x28] sm:$0xf]
      %v8760 = vld [vmem:[%s957 + $0x2c] sm:$0x1]
      %v8761 = vld [vmem:[%s957 + $0x30] sm:$0xe]
      %v8762 = vld [vmem:[%s957 + $0x34] sm:$0xf]
      %v8763 = vld [vmem:[%s957 + $0x38] sm:$0x1]
      %v8764 = vld [vmem:[%s957 + $0x3c] sm:$0xe]
      %v8765 = vld [vmem:[%s957 + $0x40] sm:$0xf]
      %v8766 = vld [vmem:[%s957 + $0x44] sm:$0x1]
      %v8767 = vld [vmem:[%s957 + $0x48] sm:$0xe]
      %v8768 = vld [vmem:[%s957 + $0x4c] sm:$0xf]
      %v8769 = vld [vmem:[%s957 + $0x50] sm:$0x1]
      %v8770 = vld [vmem:[%s957 + $0x54] sm:$0xe]
      %v8771 = vld [vmem:[%s957 + $0x58] sm:$0xf]
      %v8772 = vld [vmem:[%s957 + $0x5c] sm:$0x1]
      %v8773 = vld [vmem:[%s957 + $0x60] sm:$0xe]
      %v8774 = vld [vmem:[%s957 + $0x64] sm:$0xf]
      %v8775 = vld [vmem:[%s957 + $0x68] sm:$0x1]
      %v8776 = vld [vmem:[%s957 + $0x6c] sm:$0xe]
      %v8777 = vld [vmem:[%s957 + $0x70] sm:$0xf]
      %v8778 = vld [vmem:[%s957 + $0x74] sm:$0x1]
      %v8779 = vld [vmem:[%s957 + $0x78] sm:$0xe]
      %v8780 = vld [vmem:[%s957 + $0x7c] sm:$0xf]
      %v8781 = vld [vmem:[%s957 + $0x80] sm:$0x1]
      %v8782 = vld [vmem:[%s957 + $0x84] sm:$0xe]
      %v8783 = vld [vmem:[%s957 + $0x88] sm:$0xf]
      %v8784 = vld [vmem:[%s957 + $0x8c] sm:$0x1]
      %v8785 = vld [vmem:[%s957 + $0x90] sm:$0xe]
      %v8786 = vld [vmem:[%s957 + $0x94] sm:$0xf]
      %v8787 = vld [vmem:[%s957 + $0x98] sm:$0x1]
      %v8788 = vld [vmem:[%s957 + $0x9c] sm:$0xe]
      %v8789 = vld [vmem:[%s957 + $0xa0] sm:$0xf]
      %v8790 = vld [vmem:[%s957 + $0xa4] sm:$0x1]
      %v8791 = vld [vmem:[%s957 + $0xa8] sm:$0xe]
      %v8792 = vld [vmem:[%s957 + $0xac] sm:$0xf]
      %v8793 = vld [vmem:[%s957 + $0xb0] sm:$0x1]
      %v8794 = vld [vmem:[%s957 + $0xb4] sm:$0xe]
      %v8795 = vld [vmem:[%s957 + $0xb8] sm:$0xf]
      %v8796 = vld [vmem:[%s957 + $0xbc] sm:$0x1]
      %v8845 = vrot.slane %v8749, 5
      %v8846 = vrot.slane %v8845, 4
      %v8847 = vrot.slane %v8750, 5
      %v8848 = vsel %vm2049, %v8846, %v8847
      %v8849 = vrot.slane %v8847, 4
      %v8850 = vrot.slane %v8751, 5
      %v8851 = vsel %vm2049, %v8849, %v8850
      %v8852 = vrot.slane %v8752, 5
      %v8853 = vrot.slane %v8852, 4
      %v8854 = vrot.slane %v8753, 5
      %v8855 = vsel %vm2049, %v8853, %v8854
      %v8856 = vrot.slane %v8854, 4
      %v8857 = vrot.slane %v8754, 5
      %v8858 = vsel %vm2049, %v8856, %v8857
      %v8859 = vrot.slane %v8755, 5
      %v8860 = vrot.slane %v8859, 4
      %v8861 = vrot.slane %v8756, 5
      %v8862 = vsel %vm2049, %v8860, %v8861
      %v8863 = vrot.slane %v8861, 4
      %v8864 = vrot.slane %v8757, 5
      %v8865 = vsel %vm2049, %v8863, %v8864
      %v8866 = vrot.slane %v8758, 5
      %v8867 = vrot.slane %v8866, 4
      %v8868 = vrot.slane %v8759, 5
      %v8869 = vsel %vm2049, %v8867, %v8868
      %v8870 = vrot.slane %v8868, 4
      %v8871 = vrot.slane %v8760, 5
      %v8872 = vsel %vm2049, %v8870, %v8871
      %v8873 = vrot.slane %v8761, 5
      %v8874 = vrot.slane %v8873, 4
      %v8875 = vrot.slane %v8762, 5
      %v8876 = vsel %vm2049, %v8874, %v8875
      %v8877 = vrot.slane %v8875, 4
      %v8878 = vrot.slane %v8763, 5
      %v8879 = vsel %vm2049, %v8877, %v8878
      %v8880 = vrot.slane %v8764, 5
      %v8881 = vrot.slane %v8880, 4
      %v8882 = vrot.slane %v8765, 5
      %v8883 = vsel %vm2049, %v8881, %v8882
      %v8884 = vrot.slane %v8882, 4
      %v8885 = vrot.slane %v8766, 5
      %v8886 = vsel %vm2049, %v8884, %v8885
      %v8887 = vrot.slane %v8767, 5
      %v8888 = vrot.slane %v8887, 4
      %v8889 = vrot.slane %v8768, 5
      %v8890 = vsel %vm2049, %v8888, %v8889
      %v8891 = vrot.slane %v8889, 4
      %v8892 = vrot.slane %v8769, 5
      %v8893 = vsel %vm2049, %v8891, %v8892
      %v8894 = vrot.slane %v8770, 5
      %v8895 = vrot.slane %v8894, 4
      %v8896 = vrot.slane %v8771, 5
      %v8897 = vsel %vm2049, %v8895, %v8896
      %v8898 = vrot.slane %v8896, 4
      %v8899 = vrot.slane %v8772, 5
      %v8900 = vsel %vm2049, %v8898, %v8899
      %v8901 = vrot.slane %v8773, 5
      %v8902 = vrot.slane %v8901, 4
      %v8903 = vrot.slane %v8774, 5
      %v8904 = vsel %vm2049, %v8902, %v8903
      %v8905 = vrot.slane %v8903, 4
      %v8906 = vrot.slane %v8775, 5
      %v8907 = vsel %vm2049, %v8905, %v8906
      %v8908 = vrot.slane %v8776, 5
      %v8909 = vrot.slane %v8908, 4
      %v8910 = vrot.slane %v8777, 5
      %v8911 = vsel %vm2049, %v8909, %v8910
      %v8912 = vrot.slane %v8910, 4
      %v8913 = vrot.slane %v8778, 5
      %v8914 = vsel %vm2049, %v8912, %v8913
      %v8915 = vrot.slane %v8779, 5
      %v8916 = vrot.slane %v8915, 4
      %v8917 = vrot.slane %v8780, 5
      %v8918 = vsel %vm2049, %v8916, %v8917
      %v8919 = vrot.slane %v8917, 4
      %v8920 = vrot.slane %v8781, 5
      %v8921 = vsel %vm2049, %v8919, %v8920
      %v8922 = vrot.slane %v8782, 5
      %v8923 = vrot.slane %v8922, 4
      %v8924 = vrot.slane %v8783, 5
      %v8925 = vsel %vm2049, %v8923, %v8924
      %v8926 = vrot.slane %v8924, 4
      %v8927 = vrot.slane %v8784, 5
      %v8928 = vsel %vm2049, %v8926, %v8927
      %v8929 = vrot.slane %v8785, 5
      %v8930 = vrot.slane %v8929, 4
      %v8931 = vrot.slane %v8786, 5
      %v8932 = vsel %vm2049, %v8930, %v8931
      %v8933 = vrot.slane %v8931, 4
      %v8934 = vrot.slane %v8787, 5
      %v8935 = vsel %vm2049, %v8933, %v8934
      %v8936 = vrot.slane %v8788, 5
      %v8937 = vrot.slane %v8936, 4
      %v8938 = vrot.slane %v8789, 5
      %v8939 = vsel %vm2049, %v8937, %v8938
      %v8940 = vrot.slane %v8938, 4
      %v8941 = vrot.slane %v8790, 5
      %v8942 = vsel %vm2049, %v8940, %v8941
      %v8943 = vrot.slane %v8791, 5
      %v8944 = vrot.slane %v8943, 4
      %v8945 = vrot.slane %v8792, 5
      %v8946 = vsel %vm2049, %v8944, %v8945
      %v8947 = vrot.slane %v8945, 4
      %v8948 = vrot.slane %v8793, 5
      %v8949 = vsel %vm2049, %v8947, %v8948
      %v8950 = vrot.slane %v8794, 5
      %v8951 = vrot.slane %v8950, 4
      %v8952 = vrot.slane %v8795, 5
      %v8953 = vsel %vm2049, %v8951, %v8952
      %v8954 = vrot.slane %v8952, 4
      %v8955 = vrot.slane %v8796, 5
      %v8956 = vsel %vm2049, %v8954, %v8955
      %8989 = vst.msk [vmem:[#allocation3 + $0x14] sm:$0xf] %vm964, %v8848
      %8990 = vst.msk [vmem:[#allocation3 + $0x38] sm:$0xf] %vm964, %v8851
      %8991 = vst.msk [vmem:[#allocation3 + $0x5c] sm:$0xf] %vm964, %v8855
      %8992 = vst.msk [vmem:[#allocation3 + $0x80] sm:$0xf] %vm964, %v8858
      %8993 = vst.msk [vmem:[#allocation3 + $0xa4] sm:$0xf] %vm964, %v8862
      %8994 = vst.msk [vmem:[#allocation3 + $0xc8] sm:$0xf] %vm964, %v8865
      %8995 = vst.msk [vmem:[#allocation3 + $0xec] sm:$0xf] %vm964, %v8869
      %8996 = vst.msk [vmem:[#allocation3 + $0x110] sm:$0xf] %vm964, %v8872
      %8997 = vst.msk [vmem:[#allocation3 + $0x134] sm:$0xf] %vm964, %v8876
      %8998 = vst.msk [vmem:[#allocation3 + $0x158] sm:$0xf] %vm964, %v8879
      %8999 = vst.msk [vmem:[#allocation3 + $0x17c] sm:$0xf] %vm964, %v8883
      %9000 = vst.msk [vmem:[#allocation3 + $0x1a0] sm:$0xf] %vm964, %v8886
      %9001 = vst.msk [vmem:[#allocation3 + $0x1c4] sm:$0xf] %vm964, %v8890
      %9002 = vst.msk [vmem:[#allocation3 + $0x1e8] sm:$0xf] %vm964, %v8893
      %9003 = vst.msk [vmem:[#allocation3 + $0x20c] sm:$0xf] %vm964, %v8897
      %9004 = vst.msk [vmem:[#allocation3 + $0x230] sm:$0xf] %vm964, %v8900
      %9005 = vst.msk [vmem:[#allocation3 + $0x254] sm:$0xf] %vm964, %v8904
      %9006 = vst.msk [vmem:[#allocation3 + $0x278] sm:$0xf] %vm964, %v8907
      %9007 = vst.msk [vmem:[#allocation3 + $0x29c] sm:$0xf] %vm964, %v8911
      %9008 = vst.msk [vmem:[#allocation3 + $0x2c0] sm:$0xf] %vm964, %v8914
      %9009 = vst.msk [vmem:[#allocation3 + $0x2e4] sm:$0xf] %vm964, %v8918
      %9010 = vst.msk [vmem:[#allocation3 + $0x308] sm:$0xf] %vm964, %v8921
      %9011 = vst.msk [vmem:[#allocation3 + $0x32c] sm:$0xf] %vm964, %v8925
      %9012 = vst.msk [vmem:[#allocation3 + $0x350] sm:$0xf] %vm964, %v8928
      %9013 = vst.msk [vmem:[#allocation3 + $0x374] sm:$0xf] %vm964, %v8932
      %9014 = vst.msk [vmem:[#allocation3 + $0x398] sm:$0xf] %vm964, %v8935
      %9015 = vst.msk [vmem:[#allocation3 + $0x3bc] sm:$0xf] %vm964, %v8939
      %9016 = vst.msk [vmem:[#allocation3 + $0x3e0] sm:$0xf] %vm964, %v8942
      %9017 = vst.msk [vmem:[#allocation3 + $0x404] sm:$0xf] %vm964, %v8946
      %9018 = vst.msk [vmem:[#allocation3 + $0x428] sm:$0xf] %vm964, %v8949
      %9019 = vst.msk [vmem:[#allocation3 + $0x44c] sm:$0xf] %vm964, %v8953
      %9020 = vst.msk [vmem:[#allocation3 + $0x470] sm:$0xf] %vm964, %v8956
      %v9021 = vld [vmem:[%s1076] sm:$0xf]
      %v9022 = vld [vmem:[%s1076 + $0x4] sm:$0xf]
      %v9023 = vld [vmem:[%s1076 + $0xc] sm:$0xf]
      %v9024 = vld [vmem:[%s1076 + $0x10] sm:$0xf]
      %v9025 = vld [vmem:[%s1076 + $0x18] sm:$0xf]
      %v9026 = vld [vmem:[%s1076 + $0x1c] sm:$0xf]
      %v9027 = vld [vmem:[%s1076 + $0x24] sm:$0xf]
      %v9028 = vld [vmem:[%s1076 + $0x28] sm:$0xf]
      %v9029 = vld [vmem:[%s1076 + $0x30] sm:$0xf]
      %v9030 = vld [vmem:[%s1076 + $0x34] sm:$0xf]
      %v9031 = vld [vmem:[%s1076 + $0x3c] sm:$0xf]
      %v9032 = vld [vmem:[%s1076 + $0x40] sm:$0xf]
      %v9033 = vld [vmem:[%s1076 + $0x48] sm:$0xf]
      %v9034 = vld [vmem:[%s1076 + $0x4c] sm:$0xf]
      %v9035 = vld [vmem:[%s1076 + $0x54] sm:$0xf]
      %v9036 = vld [vmem:[%s1076 + $0x58] sm:$0xf]
      %v9037 = vld [vmem:[%s1076 + $0x60] sm:$0xf]
      %v9038 = vld [vmem:[%s1076 + $0x64] sm:$0xf]
      %v9039 = vld [vmem:[%s1076 + $0x6c] sm:$0xf]
      %v9040 = vld [vmem:[%s1076 + $0x70] sm:$0xf]
      %v9041 = vld [vmem:[%s1076 + $0x78] sm:$0xf]
      %v9042 = vld [vmem:[%s1076 + $0x7c] sm:$0xf]
      %v9043 = vld [vmem:[%s1076 + $0x84] sm:$0xf]
      %v9044 = vld [vmem:[%s1076 + $0x88] sm:$0xf]
      %v9045 = vld [vmem:[%s1076 + $0x90] sm:$0xf]
      %v9046 = vld [vmem:[%s1076 + $0x94] sm:$0xf]
      %v9047 = vld [vmem:[%s1076 + $0x9c] sm:$0xf]
      %v9048 = vld [vmem:[%s1076 + $0xa0] sm:$0xf]
      %v9049 = vld [vmem:[%s1076 + $0xa8] sm:$0xf]
      %v9050 = vld [vmem:[%s1076 + $0xac] sm:$0xf]
      %v9051 = vld [vmem:[%s1076 + $0xb4] sm:$0xf]
      %v9052 = vld [vmem:[%s1076 + $0xb8] sm:$0xf]
      %9053 = vst.msk [vmem:[#allocation3 + $0x18] sm:$0xf] %vm964, %v9021
      %9054 = vst.msk [vmem:[#allocation3 + $0x3c] sm:$0xf] %vm964, %v9022
      %9055 = vst.msk [vmem:[#allocation3 + $0x60] sm:$0xf] %vm964, %v9023
      %9056 = vst.msk [vmem:[#allocation3 + $0x84] sm:$0xf] %vm964, %v9024
      %9057 = vst.msk [vmem:[#allocation3 + $0xa8] sm:$0xf] %vm964, %v9025
      %9058 = vst.msk [vmem:[#allocation3 + $0xcc] sm:$0xf] %vm964, %v9026
      %9059 = vst.msk [vmem:[#allocation3 + $0xf0] sm:$0xf] %vm964, %v9027
      %9060 = vst.msk [vmem:[#allocation3 + $0x114] sm:$0xf] %vm964, %v9028
      %9061 = vst.msk [vmem:[#allocation3 + $0x138] sm:$0xf] %vm964, %v9029
      %9062 = vst.msk [vmem:[#allocation3 + $0x15c] sm:$0xf] %vm964, %v9030
      %9063 = vst.msk [vmem:[#allocation3 + $0x180] sm:$0xf] %vm964, %v9031
      %9064 = vst.msk [vmem:[#allocation3 + $0x1a4] sm:$0xf] %vm964, %v9032
      %9065 = vst.msk [vmem:[#allocation3 + $0x1c8] sm:$0xf] %vm964, %v9033
      %9066 = vst.msk [vmem:[#allocation3 + $0x1ec] sm:$0xf] %vm964, %v9034
      %9067 = vst.msk [vmem:[#allocation3 + $0x210] sm:$0xf] %vm964, %v9035
      %9068 = vst.msk [vmem:[#allocation3 + $0x234] sm:$0xf] %vm964, %v9036
      %9069 = vst.msk [vmem:[#allocation3 + $0x258] sm:$0xf] %vm964, %v9037
      %9070 = vst.msk [vmem:[#allocation3 + $0x27c] sm:$0xf] %vm964, %v9038
      %9071 = vst.msk [vmem:[#allocation3 + $0x2a0] sm:$0xf] %vm964, %v9039
      %9072 = vst.msk [vmem:[#allocation3 + $0x2c4] sm:$0xf] %vm964, %v9040
      %9073 = vst.msk [vmem:[#allocation3 + $0x2e8] sm:$0xf] %vm964, %v9041
      %9074 = vst.msk [vmem:[#allocation3 + $0x30c] sm:$0xf] %vm964, %v9042
      %9075 = vst.msk [vmem:[#allocation3 + $0x330] sm:$0xf] %vm964, %v9043
      %9076 = vst.msk [vmem:[#allocation3 + $0x354] sm:$0xf] %vm964, %v9044
      %9077 = vst.msk [vmem:[#allocation3 + $0x378] sm:$0xf] %vm964, %v9045
      %9078 = vst.msk [vmem:[#allocation3 + $0x39c] sm:$0xf] %vm964, %v9046
      %9079 = vst.msk [vmem:[#allocation3 + $0x3c0] sm:$0xf] %vm964, %v9047
      %9080 = vst.msk [vmem:[#allocation3 + $0x3e4] sm:$0xf] %vm964, %v9048
      %9081 = vst.msk [vmem:[#allocation3 + $0x408] sm:$0xf] %vm964, %v9049
      %9082 = vst.msk [vmem:[#allocation3 + $0x42c] sm:$0xf] %vm964, %v9050
      %9083 = vst.msk [vmem:[#allocation3 + $0x450] sm:$0xf] %vm964, %v9051
      %9084 = vst.msk [vmem:[#allocation3 + $0x474] sm:$0xf] %vm964, %v9052
      %v9085 = vld [vmem:[%s1076] sm:$0xf]
      %v9086 = vld [vmem:[%s1076 + $0x4] sm:$0xf]
      %v9087 = vld [vmem:[%s1076 + $0x8] sm:$0x1]
      %v9088 = vld [vmem:[%s1076 + $0xc] sm:$0xf]
      %v9089 = vld [vmem:[%s1076 + $0x10] sm:$0xf]
      %v9090 = vld [vmem:[%s1076 + $0x14] sm:$0x1]
      %v9091 = vld [vmem:[%s1076 + $0x18] sm:$0xf]
      %v9092 = vld [vmem:[%s1076 + $0x1c] sm:$0xf]
      %v9093 = vld [vmem:[%s1076 + $0x20] sm:$0x1]
      %v9094 = vld [vmem:[%s1076 + $0x24] sm:$0xf]
      %v9095 = vld [vmem:[%s1076 + $0x28] sm:$0xf]
      %v9096 = vld [vmem:[%s1076 + $0x2c] sm:$0x1]
      %v9097 = vld [vmem:[%s1076 + $0x30] sm:$0xf]
      %v9098 = vld [vmem:[%s1076 + $0x34] sm:$0xf]
      %v9099 = vld [vmem:[%s1076 + $0x38] sm:$0x1]
      %v9100 = vld [vmem:[%s1076 + $0x3c] sm:$0xf]
      %v9101 = vld [vmem:[%s1076 + $0x40] sm:$0xf]
      %v9102 = vld [vmem:[%s1076 + $0x44] sm:$0x1]
      %v9103 = vld [vmem:[%s1076 + $0x48] sm:$0xf]
      %v9104 = vld [vmem:[%s1076 + $0x4c] sm:$0xf]
      %v9105 = vld [vmem:[%s1076 + $0x50] sm:$0x1]
      %v9106 = vld [vmem:[%s1076 + $0x54] sm:$0xf]
      %v9107 = vld [vmem:[%s1076 + $0x58] sm:$0xf]
      %v9108 = vld [vmem:[%s1076 + $0x5c] sm:$0x1]
      %v9109 = vld [vmem:[%s1076 + $0x60] sm:$0xf]
      %v9110 = vld [vmem:[%s1076 + $0x64] sm:$0xf]
      %v9111 = vld [vmem:[%s1076 + $0x68] sm:$0x1]
      %v9112 = vld [vmem:[%s1076 + $0x6c] sm:$0xf]
      %v9113 = vld [vmem:[%s1076 + $0x70] sm:$0xf]
      %v9114 = vld [vmem:[%s1076 + $0x74] sm:$0x1]
      %v9115 = vld [vmem:[%s1076 + $0x78] sm:$0xf]
      %v9116 = vld [vmem:[%s1076 + $0x7c] sm:$0xf]
      %v9117 = vld [vmem:[%s1076 + $0x80] sm:$0x1]
      %v9118 = vld [vmem:[%s1076 + $0x84] sm:$0xf]
      %v9119 = vld [vmem:[%s1076 + $0x88] sm:$0xf]
      %v9120 = vld [vmem:[%s1076 + $0x8c] sm:$0x1]
      %v9121 = vld [vmem:[%s1076 + $0x90] sm:$0xf]
      %v9122 = vld [vmem:[%s1076 + $0x94] sm:$0xf]
      %v9123 = vld [vmem:[%s1076 + $0x98] sm:$0x1]
      %v9124 = vld [vmem:[%s1076 + $0x9c] sm:$0xf]
      %v9125 = vld [vmem:[%s1076 + $0xa0] sm:$0xf]
      %v9126 = vld [vmem:[%s1076 + $0xa4] sm:$0x1]
      %v9127 = vld [vmem:[%s1076 + $0xa8] sm:$0xf]
      %v9128 = vld [vmem:[%s1076 + $0xac] sm:$0xf]
      %v9129 = vld [vmem:[%s1076 + $0xb0] sm:$0x1]
      %v9130 = vld [vmem:[%s1076 + $0xb4] sm:$0xf]
      %v9131 = vld [vmem:[%s1076 + $0xb8] sm:$0xf]
      %v9132 = vld [vmem:[%s1076 + $0xbc] sm:$0x1]
      %v9134 = vshrl.u32 %v9085, 16
      %v9136 = vrot.slane %v9134, 4
      %v9137 = vshll.u32 %v9085, 16
      %v9139 = vrot.slane %v9137, 5
      %v9140 = vor.u32 %v9136, %v9139
      %v9141 = vrot.slane %v9140, 4
      %v9143 = vshll.u32 %v9086, 16
      %v9145 = vrot.slane %v9143, 5
      %v9146 = vsel %vm1502, %v9141, %v9145
      %v9147 = vshrl.u32 %v9086, 16
      %v9149 = vrot.slane %v9147, 4
      %v9150 = vor.u32 %v9149, %v9145
      %v9151 = vrot.slane %v9150, 4
      %v9153 = vshll.u32 %v9087, 16
      %v9155 = vrot.slane %v9153, 5
      %v9156 = vsel %vm1502, %v9151, %v9155
      %v9158 = vshrl.u32 %v9088, 16
      %v9160 = vrot.slane %v9158, 4
      %v9161 = vshll.u32 %v9088, 16
      %v9163 = vrot.slane %v9161, 5
      %v9164 = vor.u32 %v9160, %v9163
      %v9165 = vrot.slane %v9164, 4
      %v9167 = vshll.u32 %v9089, 16
      %v9169 = vrot.slane %v9167, 5
      %v9170 = vsel %vm1502, %v9165, %v9169
      %v9171 = vshrl.u32 %v9089, 16
      %v9173 = vrot.slane %v9171, 4
      %v9174 = vor.u32 %v9173, %v9169
      %v9175 = vrot.slane %v9174, 4
      %v9177 = vshll.u32 %v9090, 16
      %v9179 = vrot.slane %v9177, 5
      %v9180 = vsel %vm1502, %v9175, %v9179
      %v9182 = vshrl.u32 %v9091, 16
      %v9184 = vrot.slane %v9182, 4
      %v9185 = vshll.u32 %v9091, 16
      %v9187 = vrot.slane %v9185, 5
      %v9188 = vor.u32 %v9184, %v9187
      %v9189 = vrot.slane %v9188, 4
      %v9191 = vshll.u32 %v9092, 16
      %v9193 = vrot.slane %v9191, 5
      %v9194 = vsel %vm1502, %v9189, %v9193
      %v9195 = vshrl.u32 %v9092, 16
      %v9197 = vrot.slane %v9195, 4
      %v9198 = vor.u32 %v9197, %v9193
      %v9199 = vrot.slane %v9198, 4
      %v9201 = vshll.u32 %v9093, 16
      %v9203 = vrot.slane %v9201, 5
      %v9204 = vsel %vm1502, %v9199, %v9203
      %v9206 = vshrl.u32 %v9094, 16
      %v9208 = vrot.slane %v9206, 4
      %v9209 = vshll.u32 %v9094, 16
      %v9211 = vrot.slane %v9209, 5
      %v9212 = vor.u32 %v9208, %v9211
      %v9213 = vrot.slane %v9212, 4
      %v9215 = vshll.u32 %v9095, 16
      %v9217 = vrot.slane %v9215, 5
      %v9218 = vsel %vm1502, %v9213, %v9217
      %v9219 = vshrl.u32 %v9095, 16
      %v9221 = vrot.slane %v9219, 4
      %v9222 = vor.u32 %v9221, %v9217
      %v9223 = vrot.slane %v9222, 4
      %v9225 = vshll.u32 %v9096, 16
      %v9227 = vrot.slane %v9225, 5
      %v9228 = vsel %vm1502, %v9223, %v9227
      %v9230 = vshrl.u32 %v9097, 16
      %v9232 = vrot.slane %v9230, 4
      %v9233 = vshll.u32 %v9097, 16
      %v9235 = vrot.slane %v9233, 5
      %v9236 = vor.u32 %v9232, %v9235
      %v9237 = vrot.slane %v9236, 4
      %v9239 = vshll.u32 %v9098, 16
      %v9241 = vrot.slane %v9239, 5
      %v9242 = vsel %vm1502, %v9237, %v9241
      %v9243 = vshrl.u32 %v9098, 16
      %v9245 = vrot.slane %v9243, 4
      %v9246 = vor.u32 %v9245, %v9241
      %v9247 = vrot.slane %v9246, 4
      %v9249 = vshll.u32 %v9099, 16
      %v9251 = vrot.slane %v9249, 5
      %v9252 = vsel %vm1502, %v9247, %v9251
      %v9254 = vshrl.u32 %v9100, 16
      %v9256 = vrot.slane %v9254, 4
      %v9257 = vshll.u32 %v9100, 16
      %v9259 = vrot.slane %v9257, 5
      %v9260 = vor.u32 %v9256, %v9259
      %v9261 = vrot.slane %v9260, 4
      %v9263 = vshll.u32 %v9101, 16
      %v9265 = vrot.slane %v9263, 5
      %v9266 = vsel %vm1502, %v9261, %v9265
      %v9267 = vshrl.u32 %v9101, 16
      %v9269 = vrot.slane %v9267, 4
      %v9270 = vor.u32 %v9269, %v9265
      %v9271 = vrot.slane %v9270, 4
      %v9273 = vshll.u32 %v9102, 16
      %v9275 = vrot.slane %v9273, 5
      %v9276 = vsel %vm1502, %v9271, %v9275
      %v9278 = vshrl.u32 %v9103, 16
      %v9280 = vrot.slane %v9278, 4
      %v9281 = vshll.u32 %v9103, 16
      %v9283 = vrot.slane %v9281, 5
      %v9284 = vor.u32 %v9280, %v9283
      %v9285 = vrot.slane %v9284, 4
      %v9287 = vshll.u32 %v9104, 16
      %v9289 = vrot.slane %v9287, 5
      %v9290 = vsel %vm1502, %v9285, %v9289
      %v9291 = vshrl.u32 %v9104, 16
      %v9293 = vrot.slane %v9291, 4
      %v9294 = vor.u32 %v9293, %v9289
      %v9295 = vrot.slane %v9294, 4
      %v9297 = vshll.u32 %v9105, 16
      %v9299 = vrot.slane %v9297, 5
      %v9300 = vsel %vm1502, %v9295, %v9299
      %v9302 = vshrl.u32 %v9106, 16
      %v9304 = vrot.slane %v9302, 4
      %v9305 = vshll.u32 %v9106, 16
      %v9307 = vrot.slane %v9305, 5
      %v9308 = vor.u32 %v9304, %v9307
      %v9309 = vrot.slane %v9308, 4
      %v9311 = vshll.u32 %v9107, 16
      %v9313 = vrot.slane %v9311, 5
      %v9314 = vsel %vm1502, %v9309, %v9313
      %v9315 = vshrl.u32 %v9107, 16
      %v9317 = vrot.slane %v9315, 4
      %v9318 = vor.u32 %v9317, %v9313
      %v9319 = vrot.slane %v9318, 4
      %v9321 = vshll.u32 %v9108, 16
      %v9323 = vrot.slane %v9321, 5
      %v9324 = vsel %vm1502, %v9319, %v9323
      %v9326 = vshrl.u32 %v9109, 16
      %v9328 = vrot.slane %v9326, 4
      %v9329 = vshll.u32 %v9109, 16
      %v9331 = vrot.slane %v9329, 5
      %v9332 = vor.u32 %v9328, %v9331
      %v9333 = vrot.slane %v9332, 4
      %v9335 = vshll.u32 %v9110, 16
      %v9337 = vrot.slane %v9335, 5
      %v9338 = vsel %vm1502, %v9333, %v9337
      %v9339 = vshrl.u32 %v9110, 16
      %v9341 = vrot.slane %v9339, 4
      %v9342 = vor.u32 %v9341, %v9337
      %v9343 = vrot.slane %v9342, 4
      %v9345 = vshll.u32 %v9111, 16
      %v9347 = vrot.slane %v9345, 5
      %v9348 = vsel %vm1502, %v9343, %v9347
      %v9350 = vshrl.u32 %v9112, 16
      %v9352 = vrot.slane %v9350, 4
      %v9353 = vshll.u32 %v9112, 16
      %v9355 = vrot.slane %v9353, 5
      %v9356 = vor.u32 %v9352, %v9355
      %v9357 = vrot.slane %v9356, 4
      %v9359 = vshll.u32 %v9113, 16
      %v9361 = vrot.slane %v9359, 5
      %v9362 = vsel %vm1502, %v9357, %v9361
      %v9363 = vshrl.u32 %v9113, 16
      %v9365 = vrot.slane %v9363, 4
      %v9366 = vor.u32 %v9365, %v9361
      %v9367 = vrot.slane %v9366, 4
      %v9369 = vshll.u32 %v9114, 16
      %v9371 = vrot.slane %v9369, 5
      %v9372 = vsel %vm1502, %v9367, %v9371
      %v9374 = vshrl.u32 %v9115, 16
      %v9376 = vrot.slane %v9374, 4
      %v9377 = vshll.u32 %v9115, 16
      %v9379 = vrot.slane %v9377, 5
      %v9380 = vor.u32 %v9376, %v9379
      %v9381 = vrot.slane %v9380, 4
      %v9383 = vshll.u32 %v9116, 16
      %v9385 = vrot.slane %v9383, 5
      %v9386 = vsel %vm1502, %v9381, %v9385
      %v9387 = vshrl.u32 %v9116, 16
      %v9389 = vrot.slane %v9387, 4
      %v9390 = vor.u32 %v9389, %v9385
      %v9391 = vrot.slane %v9390, 4
      %v9393 = vshll.u32 %v9117, 16
      %v9395 = vrot.slane %v9393, 5
      %v9396 = vsel %vm1502, %v9391, %v9395
      %v9398 = vshrl.u32 %v9118, 16
      %v9400 = vrot.slane %v9398, 4
      %v9401 = vshll.u32 %v9118, 16
      %v9403 = vrot.slane %v9401, 5
      %v9404 = vor.u32 %v9400, %v9403
      %v9405 = vrot.slane %v9404, 4
      %v9407 = vshll.u32 %v9119, 16
      %v9409 = vrot.slane %v9407, 5
      %v9410 = vsel %vm1502, %v9405, %v9409
      %v9411 = vshrl.u32 %v9119, 16
      %v9413 = vrot.slane %v9411, 4
      %v9414 = vor.u32 %v9413, %v9409
      %v9415 = vrot.slane %v9414, 4
      %v9417 = vshll.u32 %v9120, 16
      %v9419 = vrot.slane %v9417, 5
      %v9420 = vsel %vm1502, %v9415, %v9419
      %v9422 = vshrl.u32 %v9121, 16
      %v9424 = vrot.slane %v9422, 4
      %v9425 = vshll.u32 %v9121, 16
      %v9427 = vrot.slane %v9425, 5
      %v9428 = vor.u32 %v9424, %v9427
      %v9429 = vrot.slane %v9428, 4
      %v9431 = vshll.u32 %v9122, 16
      %v9433 = vrot.slane %v9431, 5
      %v9434 = vsel %vm1502, %v9429, %v9433
      %v9435 = vshrl.u32 %v9122, 16
      %v9437 = vrot.slane %v9435, 4
      %v9438 = vor.u32 %v9437, %v9433
      %v9439 = vrot.slane %v9438, 4
      %v9441 = vshll.u32 %v9123, 16
      %v9443 = vrot.slane %v9441, 5
      %v9444 = vsel %vm1502, %v9439, %v9443
      %v9446 = vshrl.u32 %v9124, 16
      %v9448 = vrot.slane %v9446, 4
      %v9449 = vshll.u32 %v9124, 16
      %v9451 = vrot.slane %v9449, 5
      %v9452 = vor.u32 %v9448, %v9451
      %v9453 = vrot.slane %v9452, 4
      %v9455 = vshll.u32 %v9125, 16
      %v9457 = vrot.slane %v9455, 5
      %v9458 = vsel %vm1502, %v9453, %v9457
      %v9459 = vshrl.u32 %v9125, 16
      %v9461 = vrot.slane %v9459, 4
      %v9462 = vor.u32 %v9461, %v9457
      %v9463 = vrot.slane %v9462, 4
      %v9465 = vshll.u32 %v9126, 16
      %v9467 = vrot.slane %v9465, 5
      %v9468 = vsel %vm1502, %v9463, %v9467
      %v9470 = vshrl.u32 %v9127, 16
      %v9472 = vrot.slane %v9470, 4
      %v9473 = vshll.u32 %v9127, 16
      %v9475 = vrot.slane %v9473, 5
      %v9476 = vor.u32 %v9472, %v9475
      %v9477 = vrot.slane %v9476, 4
      %v9479 = vshll.u32 %v9128, 16
      %v9481 = vrot.slane %v9479, 5
      %v9482 = vsel %vm1502, %v9477, %v9481
      %v9483 = vshrl.u32 %v9128, 16
      %v9485 = vrot.slane %v9483, 4
      %v9486 = vor.u32 %v9485, %v9481
      %v9487 = vrot.slane %v9486, 4
      %v9489 = vshll.u32 %v9129, 16
      %v9491 = vrot.slane %v9489, 5
      %v9492 = vsel %vm1502, %v9487, %v9491
      %v9494 = vshrl.u32 %v9130, 16
      %v9496 = vrot.slane %v9494, 4
      %v9497 = vshll.u32 %v9130, 16
      %v9499 = vrot.slane %v9497, 5
      %v9500 = vor.u32 %v9496, %v9499
      %v9501 = vrot.slane %v9500, 4
      %v9503 = vshll.u32 %v9131, 16
      %v9505 = vrot.slane %v9503, 5
      %v9506 = vsel %vm1502, %v9501, %v9505
      %v9507 = vshrl.u32 %v9131, 16
      %v9509 = vrot.slane %v9507, 4
      %v9510 = vor.u32 %v9509, %v9505
      %v9511 = vrot.slane %v9510, 4
      %v9513 = vshll.u32 %v9132, 16
      %v9515 = vrot.slane %v9513, 5
      %v9516 = vsel %vm1502, %v9511, %v9515
      %9549 = vst.msk [vmem:[#allocation3 + $0x1c] sm:$0xf] %vm964, %v9146
      %9550 = vst.msk [vmem:[#allocation3 + $0x40] sm:$0xf] %vm964, %v9156
      %9551 = vst.msk [vmem:[#allocation3 + $0x64] sm:$0xf] %vm964, %v9170
      %9552 = vst.msk [vmem:[#allocation3 + $0x88] sm:$0xf] %vm964, %v9180
      %9553 = vst.msk [vmem:[#allocation3 + $0xac] sm:$0xf] %vm964, %v9194
      %9554 = vst.msk [vmem:[#allocation3 + $0xd0] sm:$0xf] %vm964, %v9204
      %9555 = vst.msk [vmem:[#allocation3 + $0xf4] sm:$0xf] %vm964, %v9218
      %9556 = vst.msk [vmem:[#allocation3 + $0x118] sm:$0xf] %vm964, %v9228
      %9557 = vst.msk [vmem:[#allocation3 + $0x13c] sm:$0xf] %vm964, %v9242
      %9558 = vst.msk [vmem:[#allocation3 + $0x160] sm:$0xf] %vm964, %v9252
      %9559 = vst.msk [vmem:[#allocation3 + $0x184] sm:$0xf] %vm964, %v9266
      %9560 = vst.msk [vmem:[#allocation3 + $0x1a8] sm:$0xf] %vm964, %v9276
      %9561 = vst.msk [vmem:[#allocation3 + $0x1cc] sm:$0xf] %vm964, %v9290
      %9562 = vst.msk [vmem:[#allocation3 + $0x1f0] sm:$0xf] %vm964, %v9300
      %9563 = vst.msk [vmem:[#allocation3 + $0x214] sm:$0xf] %vm964, %v9314
      %9564 = vst.msk [vmem:[#allocation3 + $0x238] sm:$0xf] %vm964, %v9324
      %9565 = vst.msk [vmem:[#allocation3 + $0x25c] sm:$0xf] %vm964, %v9338
      %9566 = vst.msk [vmem:[#allocation3 + $0x280] sm:$0xf] %vm964, %v9348
      %9567 = vst.msk [vmem:[#allocation3 + $0x2a4] sm:$0xf] %vm964, %v9362
      %9568 = vst.msk [vmem:[#allocation3 + $0x2c8] sm:$0xf] %vm964, %v9372
      %9569 = vst.msk [vmem:[#allocation3 + $0x2ec] sm:$0xf] %vm964, %v9386
      %9570 = vst.msk [vmem:[#allocation3 + $0x310] sm:$0xf] %vm964, %v9396
      %9571 = vst.msk [vmem:[#allocation3 + $0x334] sm:$0xf] %vm964, %v9410
      %9572 = vst.msk [vmem:[#allocation3 + $0x358] sm:$0xf] %vm964, %v9420
      %9573 = vst.msk [vmem:[#allocation3 + $0x37c] sm:$0xf] %vm964, %v9434
      %9574 = vst.msk [vmem:[#allocation3 + $0x3a0] sm:$0xf] %vm964, %v9444
      %9575 = vst.msk [vmem:[#allocation3 + $0x3c4] sm:$0xf] %vm964, %v9458
      %9576 = vst.msk [vmem:[#allocation3 + $0x3e8] sm:$0xf] %vm964, %v9468
      %9577 = vst.msk [vmem:[#allocation3 + $0x40c] sm:$0xf] %vm964, %v9482
      %9578 = vst.msk [vmem:[#allocation3 + $0x430] sm:$0xf] %vm964, %v9492
      %9579 = vst.msk [vmem:[#allocation3 + $0x454] sm:$0xf] %vm964, %v9506
      %9580 = vst.msk [vmem:[#allocation3 + $0x478] sm:$0xf] %vm964, %v9516
      %v9581 = vld [vmem:[%s1076] sm:$0xe]
      %v9582 = vld [vmem:[%s1076 + $0x4] sm:$0xf]
      %v9583 = vld [vmem:[%s1076 + $0x8] sm:$0x1]
      %v9584 = vld [vmem:[%s1076 + $0xc] sm:$0xe]
      %v9585 = vld [vmem:[%s1076 + $0x10] sm:$0xf]
      %v9586 = vld [vmem:[%s1076 + $0x14] sm:$0x1]
      %v9587 = vld [vmem:[%s1076 + $0x18] sm:$0xe]
      %v9588 = vld [vmem:[%s1076 + $0x1c] sm:$0xf]
      %v9589 = vld [vmem:[%s1076 + $0x20] sm:$0x1]
      %v9590 = vld [vmem:[%s1076 + $0x24] sm:$0xe]
      %v9591 = vld [vmem:[%s1076 + $0x28] sm:$0xf]
      %v9592 = vld [vmem:[%s1076 + $0x2c] sm:$0x1]
      %v9593 = vld [vmem:[%s1076 + $0x30] sm:$0xe]
      %v9594 = vld [vmem:[%s1076 + $0x34] sm:$0xf]
      %v9595 = vld [vmem:[%s1076 + $0x38] sm:$0x1]
      %v9596 = vld [vmem:[%s1076 + $0x3c] sm:$0xe]
      %v9597 = vld [vmem:[%s1076 + $0x40] sm:$0xf]
      %v9598 = vld [vmem:[%s1076 + $0x44] sm:$0x1]
      %v9599 = vld [vmem:[%s1076 + $0x48] sm:$0xe]
      %v9600 = vld [vmem:[%s1076 + $0x4c] sm:$0xf]
      %v9601 = vld [vmem:[%s1076 + $0x50] sm:$0x1]
      %v9602 = vld [vmem:[%s1076 + $0x54] sm:$0xe]
      %v9603 = vld [vmem:[%s1076 + $0x58] sm:$0xf]
      %v9604 = vld [vmem:[%s1076 + $0x5c] sm:$0x1]
      %v9605 = vld [vmem:[%s1076 + $0x60] sm:$0xe]
      %v9606 = vld [vmem:[%s1076 + $0x64] sm:$0xf]
      %v9607 = vld [vmem:[%s1076 + $0x68] sm:$0x1]
      %v9608 = vld [vmem:[%s1076 + $0x6c] sm:$0xe]
      %v9609 = vld [vmem:[%s1076 + $0x70] sm:$0xf]
      %v9610 = vld [vmem:[%s1076 + $0x74] sm:$0x1]
      %v9611 = vld [vmem:[%s1076 + $0x78] sm:$0xe]
      %v9612 = vld [vmem:[%s1076 + $0x7c] sm:$0xf]
      %v9613 = vld [vmem:[%s1076 + $0x80] sm:$0x1]
      %v9614 = vld [vmem:[%s1076 + $0x84] sm:$0xe]
      %v9615 = vld [vmem:[%s1076 + $0x88] sm:$0xf]
      %v9616 = vld [vmem:[%s1076 + $0x8c] sm:$0x1]
      %v9617 = vld [vmem:[%s1076 + $0x90] sm:$0xe]
      %v9618 = vld [vmem:[%s1076 + $0x94] sm:$0xf]
      %v9619 = vld [vmem:[%s1076 + $0x98] sm:$0x1]
      %v9620 = vld [vmem:[%s1076 + $0x9c] sm:$0xe]
      %v9621 = vld [vmem:[%s1076 + $0xa0] sm:$0xf]
      %v9622 = vld [vmem:[%s1076 + $0xa4] sm:$0x1]
      %v9623 = vld [vmem:[%s1076 + $0xa8] sm:$0xe]
      %v9624 = vld [vmem:[%s1076 + $0xac] sm:$0xf]
      %v9625 = vld [vmem:[%s1076 + $0xb0] sm:$0x1]
      %v9626 = vld [vmem:[%s1076 + $0xb4] sm:$0xe]
      %v9627 = vld [vmem:[%s1076 + $0xb8] sm:$0xf]
      %v9628 = vld [vmem:[%s1076 + $0xbc] sm:$0x1]
      %v9677 = vrot.slane %v9581, 5
      %v9678 = vrot.slane %v9677, 4
      %v9679 = vrot.slane %v9582, 5
      %v9680 = vsel %vm2049, %v9678, %v9679
      %v9681 = vrot.slane %v9679, 4
      %v9682 = vrot.slane %v9583, 5
      %v9683 = vsel %vm2049, %v9681, %v9682
      %v9684 = vrot.slane %v9584, 5
      %v9685 = vrot.slane %v9684, 4
      %v9686 = vrot.slane %v9585, 5
      %v9687 = vsel %vm2049, %v9685, %v9686
      %v9688 = vrot.slane %v9686, 4
      %v9689 = vrot.slane %v9586, 5
      %v9690 = vsel %vm2049, %v9688, %v9689
      %v9691 = vrot.slane %v9587, 5
      %v9692 = vrot.slane %v9691, 4
      %v9693 = vrot.slane %v9588, 5
      %v9694 = vsel %vm2049, %v9692, %v9693
      %v9695 = vrot.slane %v9693, 4
      %v9696 = vrot.slane %v9589, 5
      %v9697 = vsel %vm2049, %v9695, %v9696
      %v9698 = vrot.slane %v9590, 5
      %v9699 = vrot.slane %v9698, 4
      %v9700 = vrot.slane %v9591, 5
      %v9701 = vsel %vm2049, %v9699, %v9700
      %v9702 = vrot.slane %v9700, 4
      %v9703 = vrot.slane %v9592, 5
      %v9704 = vsel %vm2049, %v9702, %v9703
      %v9705 = vrot.slane %v9593, 5
      %v9706 = vrot.slane %v9705, 4
      %v9707 = vrot.slane %v9594, 5
      %v9708 = vsel %vm2049, %v9706, %v9707
      %v9709 = vrot.slane %v9707, 4
      %v9710 = vrot.slane %v9595, 5
      %v9711 = vsel %vm2049, %v9709, %v9710
      %v9712 = vrot.slane %v9596, 5
      %v9713 = vrot.slane %v9712, 4
      %v9714 = vrot.slane %v9597, 5
      %v9715 = vsel %vm2049, %v9713, %v9714
      %v9716 = vrot.slane %v9714, 4
      %v9717 = vrot.slane %v9598, 5
      %v9718 = vsel %vm2049, %v9716, %v9717
      %v9719 = vrot.slane %v9599, 5
      %v9720 = vrot.slane %v9719, 4
      %v9721 = vrot.slane %v9600, 5
      %v9722 = vsel %vm2049, %v9720, %v9721
      %v9723 = vrot.slane %v9721, 4
      %v9724 = vrot.slane %v9601, 5
      %v9725 = vsel %vm2049, %v9723, %v9724
      %v9726 = vrot.slane %v9602, 5
      %v9727 = vrot.slane %v9726, 4
      %v9728 = vrot.slane %v9603, 5
      %v9729 = vsel %vm2049, %v9727, %v9728
      %v9730 = vrot.slane %v9728, 4
      %v9731 = vrot.slane %v9604, 5
      %v9732 = vsel %vm2049, %v9730, %v9731
      %v9733 = vrot.slane %v9605, 5
      %v9734 = vrot.slane %v9733, 4
      %v9735 = vrot.slane %v9606, 5
      %v9736 = vsel %vm2049, %v9734, %v9735
      %v9737 = vrot.slane %v9735, 4
      %v9738 = vrot.slane %v9607, 5
      %v9739 = vsel %vm2049, %v9737, %v9738
      %v9740 = vrot.slane %v9608, 5
      %v9741 = vrot.slane %v9740, 4
      %v9742 = vrot.slane %v9609, 5
      %v9743 = vsel %vm2049, %v9741, %v9742
      %v9744 = vrot.slane %v9742, 4
      %v9745 = vrot.slane %v9610, 5
      %v9746 = vsel %vm2049, %v9744, %v9745
      %v9747 = vrot.slane %v9611, 5
      %v9748 = vrot.slane %v9747, 4
      %v9749 = vrot.slane %v9612, 5
      %v9750 = vsel %vm2049, %v9748, %v9749
      %v9751 = vrot.slane %v9749, 4
      %v9752 = vrot.slane %v9613, 5
      %v9753 = vsel %vm2049, %v9751, %v9752
      %v9754 = vrot.slane %v9614, 5
      %v9755 = vrot.slane %v9754, 4
      %v9756 = vrot.slane %v9615, 5
      %v9757 = vsel %vm2049, %v9755, %v9756
      %v9758 = vrot.slane %v9756, 4
      %v9759 = vrot.slane %v9616, 5
      %v9760 = vsel %vm2049, %v9758, %v9759
      %v9761 = vrot.slane %v9617, 5
      %v9762 = vrot.slane %v9761, 4
      %v9763 = vrot.slane %v9618, 5
      %v9764 = vsel %vm2049, %v9762, %v9763
      %v9765 = vrot.slane %v9763, 4
      %v9766 = vrot.slane %v9619, 5
      %v9767 = vsel %vm2049, %v9765, %v9766
      %v9768 = vrot.slane %v9620, 5
      %v9769 = vrot.slane %v9768, 4
      %v9770 = vrot.slane %v9621, 5
      %v9771 = vsel %vm2049, %v9769, %v9770
      %v9772 = vrot.slane %v9770, 4
      %v9773 = vrot.slane %v9622, 5
      %v9774 = vsel %vm2049, %v9772, %v9773
      %v9775 = vrot.slane %v9623, 5
      %v9776 = vrot.slane %v9775, 4
      %v9777 = vrot.slane %v9624, 5
      %v9778 = vsel %vm2049, %v9776, %v9777
      %v9779 = vrot.slane %v9777, 4
      %v9780 = vrot.slane %v9625, 5
      %v9781 = vsel %vm2049, %v9779, %v9780
      %v9782 = vrot.slane %v9626, 5
      %v9783 = vrot.slane %v9782, 4
      %v9784 = vrot.slane %v9627, 5
      %v9785 = vsel %vm2049, %v9783, %v9784
      %v9786 = vrot.slane %v9784, 4
      %v9787 = vrot.slane %v9628, 5
      %v9788 = vsel %vm2049, %v9786, %v9787
      %9821 = vst.msk [vmem:[#allocation3 + $0x20] sm:$0xf] %vm964, %v9680
      %9822 = vst.msk [vmem:[#allocation3 + $0x44] sm:$0xf] %vm964, %v9683
      %9823 = vst.msk [vmem:[#allocation3 + $0x68] sm:$0xf] %vm964, %v9687
      %9824 = vst.msk [vmem:[#allocation3 + $0x8c] sm:$0xf] %vm964, %v9690
      %9825 = vst.msk [vmem:[#allocation3 + $0xb0] sm:$0xf] %vm964, %v9694
      %9826 = vst.msk [vmem:[#allocation3 + $0xd4] sm:$0xf] %vm964, %v9697
      %9827 = vst.msk [vmem:[#allocation3 + $0xf8] sm:$0xf] %vm964, %v9701
      %9828 = vst.msk [vmem:[#allocation3 + $0x11c] sm:$0xf] %vm964, %v9704
      %9829 = vst.msk [vmem:[#allocation3 + $0x140] sm:$0xf] %vm964, %v9708
      %9830 = vst.msk [vmem:[#allocation3 + $0x164] sm:$0xf] %vm964, %v9711
      %9831 = vst.msk [vmem:[#allocation3 + $0x188] sm:$0xf] %vm964, %v9715
      %9832 = vst.msk [vmem:[#allocation3 + $0x1ac] sm:$0xf] %vm964, %v9718
      %9833 = vst.msk [vmem:[#allocation3 + $0x1d0] sm:$0xf] %vm964, %v9722
      %9834 = vst.msk [vmem:[#allocation3 + $0x1f4] sm:$0xf] %vm964, %v9725
      %9835 = vst.msk [vmem:[#allocation3 + $0x218] sm:$0xf] %vm964, %v9729
      %9836 = vst.msk [vmem:[#allocation3 + $0x23c] sm:$0xf] %vm964, %v9732
      %9837 = vst.msk [vmem:[#allocation3 + $0x260] sm:$0xf] %vm964, %v9736
      %9838 = vst.msk [vmem:[#allocation3 + $0x284] sm:$0xf] %vm964, %v9739
      %9839 = vst.msk [vmem:[#allocation3 + $0x2a8] sm:$0xf] %vm964, %v9743
      %9840 = vst.msk [vmem:[#allocation3 + $0x2cc] sm:$0xf] %vm964, %v9746
      %9841 = vst.msk [vmem:[#allocation3 + $0x2f0] sm:$0xf] %vm964, %v9750
      %9842 = vst.msk [vmem:[#allocation3 + $0x314] sm:$0xf] %vm964, %v9753
      %9843 = vst.msk [vmem:[#allocation3 + $0x338] sm:$0xf] %vm964, %v9757
      %9844 = vst.msk [vmem:[#allocation3 + $0x35c] sm:$0xf] %vm964, %v9760
      %9845 = vst.msk [vmem:[#allocation3 + $0x380] sm:$0xf] %vm964, %v9764
      %9846 = vst.msk [vmem:[#allocation3 + $0x3a4] sm:$0xf] %vm964, %v9767
      %9847 = vst.msk [vmem:[#allocation3 + $0x3c8] sm:$0xf] %vm964, %v9771
      %9848 = vst.msk [vmem:[#allocation3 + $0x3ec] sm:$0xf] %vm964, %v9774
      %9849 = vst.msk [vmem:[#allocation3 + $0x410] sm:$0xf] %vm964, %v9778
      %9850 = vst.msk [vmem:[#allocation3 + $0x434] sm:$0xf] %vm964, %v9781
      %9851 = vst.msk [vmem:[#allocation3 + $0x458] sm:$0xf] %vm964, %v9785
      %9852 = vst.msk [vmem:[#allocation3 + $0x47c] sm:$0xf] %vm964, %v9788
      %v9853 = vld [vmem:[#allocation3] sm:$0xff]
      %v9854 = vld [vmem:[#allocation3 + $0x8] sm:$0xff]
      %v9855 = vld [vmem:[#allocation3 + $0x10] sm:$0xff]
      %v9856 = vld [vmem:[#allocation3 + $0x18] sm:$0xff]
      %v9857 = vld [vmem:[#allocation3 + $0x20] sm:$0xf]
      %v9858 = vld [vmem:[#allocation3 + $0x24] sm:$0xff]
      %v9859 = vld [vmem:[#allocation3 + $0x2c] sm:$0xff]
      %v9860 = vld [vmem:[#allocation3 + $0x34] sm:$0xff]
      %v9861 = vld [vmem:[#allocation3 + $0x3c] sm:$0xff]
      %v9862 = vld [vmem:[#allocation3 + $0x44] sm:$0xf]
      %v9863 = vld [vmem:[#allocation3 + $0x48] sm:$0xff]
      %v9864 = vld [vmem:[#allocation3 + $0x50] sm:$0xff]
      %v9865 = vld [vmem:[#allocation3 + $0x58] sm:$0xff]
      %v9866 = vld [vmem:[#allocation3 + $0x60] sm:$0xff]
      %v9867 = vld [vmem:[#allocation3 + $0x68] sm:$0xf]
      %v9868 = vld [vmem:[#allocation3 + $0x6c] sm:$0xff]
      %v9869 = vld [vmem:[#allocation3 + $0x74] sm:$0xff]
      %v9870 = vld [vmem:[#allocation3 + $0x7c] sm:$0xff]
      %v9871 = vld [vmem:[#allocation3 + $0x84] sm:$0xff]
      %v9872 = vld [vmem:[#allocation3 + $0x8c] sm:$0xf]
      %v9873 = vld [vmem:[#allocation3 + $0x90] sm:$0xff]
      %v9874 = vld [vmem:[#allocation3 + $0x98] sm:$0xff]
      %v9875 = vld [vmem:[#allocation3 + $0xa0] sm:$0xff]
      %v9876 = vld [vmem:[#allocation3 + $0xa8] sm:$0xff]
      %v9877 = vld [vmem:[#allocation3 + $0xb0] sm:$0xf]
      %v9878 = vld [vmem:[#allocation3 + $0xb4] sm:$0xff]
      %v9879 = vld [vmem:[#allocation3 + $0xbc] sm:$0xff]
      %v9880 = vld [vmem:[#allocation3 + $0xc4] sm:$0xff]
      %v9881 = vld [vmem:[#allocation3 + $0xcc] sm:$0xff]
      %v9882 = vld [vmem:[#allocation3 + $0xd4] sm:$0xf]
      %v9883 = vld [vmem:[#allocation3 + $0xd8] sm:$0xff]
      %v9884 = vld [vmem:[#allocation3 + $0xe0] sm:$0xff]
      %v9885 = vld [vmem:[#allocation3 + $0xe8] sm:$0xff]
      %v9886 = vld [vmem:[#allocation3 + $0xf0] sm:$0xff]
      %v9887 = vld [vmem:[#allocation3 + $0xf8] sm:$0xf]
      %v9888 = vld [vmem:[#allocation3 + $0xfc] sm:$0xff]
      %v9889 = vld [vmem:[#allocation3 + $0x104] sm:$0xff]
      %v9890 = vld [vmem:[#allocation3 + $0x10c] sm:$0xff]
      %v9891 = vld [vmem:[#allocation3 + $0x114] sm:$0xff]
      %v9892 = vld [vmem:[#allocation3 + $0x11c] sm:$0xf]
      %v9893 = vld [vmem:[#allocation3 + $0x120] sm:$0xff]
      %v9894 = vld [vmem:[#allocation3 + $0x128] sm:$0xff]
      %v9895 = vld [vmem:[#allocation3 + $0x130] sm:$0xff]
      %v9896 = vld [vmem:[#allocation3 + $0x138] sm:$0xff]
      %v9897 = vld [vmem:[#allocation3 + $0x140] sm:$0xf]
      %v9898 = vld [vmem:[#allocation3 + $0x144] sm:$0xff]
      %v9899 = vld [vmem:[#allocation3 + $0x14c] sm:$0xff]
      %v9900 = vld [vmem:[#allocation3 + $0x154] sm:$0xff]
      %v9901 = vld [vmem:[#allocation3 + $0x15c] sm:$0xff]
      %v9902 = vld [vmem:[#allocation3 + $0x164] sm:$0xf]
      %v9903 = vld [vmem:[#allocation3 + $0x168] sm:$0xff]
      %v9904 = vld [vmem:[#allocation3 + $0x170] sm:$0xff]
      %v9905 = vld [vmem:[#allocation3 + $0x178] sm:$0xff]
      %v9906 = vld [vmem:[#allocation3 + $0x180] sm:$0xff]
      %v9907 = vld [vmem:[#allocation3 + $0x188] sm:$0xf]
      %v9908 = vld [vmem:[#allocation3 + $0x18c] sm:$0xff]
      %v9909 = vld [vmem:[#allocation3 + $0x194] sm:$0xff]
      %v9910 = vld [vmem:[#allocation3 + $0x19c] sm:$0xff]
      %v9911 = vld [vmem:[#allocation3 + $0x1a4] sm:$0xff]
      %v9912 = vld [vmem:[#allocation3 + $0x1ac] sm:$0xf]
      %v9913 = vld [vmem:[#allocation3 + $0x1b0] sm:$0xff]
      %v9914 = vld [vmem:[#allocation3 + $0x1b8] sm:$0xff]
      %v9915 = vld [vmem:[#allocation3 + $0x1c0] sm:$0xff]
      %v9916 = vld [vmem:[#allocation3 + $0x1c8] sm:$0xff]
      %v9917 = vld [vmem:[#allocation3 + $0x1d0] sm:$0xf]
      %v9918 = vld [vmem:[#allocation3 + $0x1d4] sm:$0xff]
      %v9919 = vld [vmem:[#allocation3 + $0x1dc] sm:$0xff]
      %v9920 = vld [vmem:[#allocation3 + $0x1e4] sm:$0xff]
      %v9921 = vld [vmem:[#allocation3 + $0x1ec] sm:$0xff]
      %v9922 = vld [vmem:[#allocation3 + $0x1f4] sm:$0xf]
      %v9923 = vld [vmem:[#allocation3 + $0x1f8] sm:$0xff]
      %v9924 = vld [vmem:[#allocation3 + $0x200] sm:$0xff]
      %v9925 = vld [vmem:[#allocation3 + $0x208] sm:$0xff]
      %v9926 = vld [vmem:[#allocation3 + $0x210] sm:$0xff]
      %v9927 = vld [vmem:[#allocation3 + $0x218] sm:$0xf]
      %v9928 = vld [vmem:[#allocation3 + $0x21c] sm:$0xff]
      %v9929 = vld [vmem:[#allocation3 + $0x224] sm:$0xff]
      %v9930 = vld [vmem:[#allocation3 + $0x22c] sm:$0xff]
      %v9931 = vld [vmem:[#allocation3 + $0x234] sm:$0xff]
      %v9932 = vld [vmem:[#allocation3 + $0x23c] sm:$0xf]
      %v9933 = vld [vmem:[#allocation3 + $0x240] sm:$0xff]
      %v9934 = vld [vmem:[#allocation3 + $0x248] sm:$0xff]
      %v9935 = vld [vmem:[#allocation3 + $0x250] sm:$0xff]
      %v9936 = vld [vmem:[#allocation3 + $0x258] sm:$0xff]
      %v9937 = vld [vmem:[#allocation3 + $0x260] sm:$0xf]
      %v9938 = vld [vmem:[#allocation3 + $0x264] sm:$0xff]
      %v9939 = vld [vmem:[#allocation3 + $0x26c] sm:$0xff]
      %v9940 = vld [vmem:[#allocation3 + $0x274] sm:$0xff]
      %v9941 = vld [vmem:[#allocation3 + $0x27c] sm:$0xff]
      %v9942 = vld [vmem:[#allocation3 + $0x284] sm:$0xf]
      %v9943 = vld [vmem:[#allocation3 + $0x288] sm:$0xff]
      %v9944 = vld [vmem:[#allocation3 + $0x290] sm:$0xff]
      %v9945 = vld [vmem:[#allocation3 + $0x298] sm:$0xff]
      %v9946 = vld [vmem:[#allocation3 + $0x2a0] sm:$0xff]
      %v9947 = vld [vmem:[#allocation3 + $0x2a8] sm:$0xf]
      %v9948 = vld [vmem:[#allocation3 + $0x2ac] sm:$0xff]
      %v9949 = vld [vmem:[#allocation3 + $0x2b4] sm:$0xff]
      %v9950 = vld [vmem:[#allocation3 + $0x2bc] sm:$0xff]
      %v9951 = vld [vmem:[#allocation3 + $0x2c4] sm:$0xff]
      %v9952 = vld [vmem:[#allocation3 + $0x2cc] sm:$0xf]
      %v9953 = vld [vmem:[#allocation3 + $0x2d0] sm:$0xff]
      %v9954 = vld [vmem:[#allocation3 + $0x2d8] sm:$0xff]
      %v9955 = vld [vmem:[#allocation3 + $0x2e0] sm:$0xff]
      %v9956 = vld [vmem:[#allocation3 + $0x2e8] sm:$0xff]
      %v9957 = vld [vmem:[#allocation3 + $0x2f0] sm:$0xf]
      %v9958 = vld [vmem:[#allocation3 + $0x2f4] sm:$0xff]
      %v9959 = vld [vmem:[#allocation3 + $0x2fc] sm:$0xff]
      %v9960 = vld [vmem:[#allocation3 + $0x304] sm:$0xff]
      %v9961 = vld [vmem:[#allocation3 + $0x30c] sm:$0xff]
      %v9962 = vld [vmem:[#allocation3 + $0x314] sm:$0xf]
      %v9963 = vld [vmem:[#allocation3 + $0x318] sm:$0xff]
      %v9964 = vld [vmem:[#allocation3 + $0x320] sm:$0xff]
      %v9965 = vld [vmem:[#allocation3 + $0x328] sm:$0xff]
      %v9966 = vld [vmem:[#allocation3 + $0x330] sm:$0xff]
      %v9967 = vld [vmem:[#allocation3 + $0x338] sm:$0xf]
      %v9968 = vld [vmem:[#allocation3 + $0x33c] sm:$0xff]
      %v9969 = vld [vmem:[#allocation3 + $0x344] sm:$0xff]
      %v9970 = vld [vmem:[#allocation3 + $0x34c] sm:$0xff]
      %v9971 = vld [vmem:[#allocation3 + $0x354] sm:$0xff]
      %v9972 = vld [vmem:[#allocation3 + $0x35c] sm:$0xf]
      %v9973 = vld [vmem:[#allocation3 + $0x360] sm:$0xff]
      %v9974 = vld [vmem:[#allocation3 + $0x368] sm:$0xff]
      %v9975 = vld [vmem:[#allocation3 + $0x370] sm:$0xff]
      %v9976 = vld [vmem:[#allocation3 + $0x378] sm:$0xff]
      %v9977 = vld [vmem:[#allocation3 + $0x380] sm:$0xf]
      %v9978 = vld [vmem:[#allocation3 + $0x384] sm:$0xff]
      %v9979 = vld [vmem:[#allocation3 + $0x38c] sm:$0xff]
      %v9980 = vld [vmem:[#allocation3 + $0x394] sm:$0xff]
      %v9981 = vld [vmem:[#allocation3 + $0x39c] sm:$0xff]
      %v9982 = vld [vmem:[#allocation3 + $0x3a4] sm:$0xf]
      %v9983 = vld [vmem:[#allocation3 + $0x3a8] sm:$0xff]
      %v9984 = vld [vmem:[#allocation3 + $0x3b0] sm:$0xff]
      %v9985 = vld [vmem:[#allocation3 + $0x3b8] sm:$0xff]
      %v9986 = vld [vmem:[#allocation3 + $0x3c0] sm:$0xff]
      %v9987 = vld [vmem:[#allocation3 + $0x3c8] sm:$0xf]
      %v9988 = vld [vmem:[#allocation3 + $0x3cc] sm:$0xff]
      %v9989 = vld [vmem:[#allocation3 + $0x3d4] sm:$0xff]
      %v9990 = vld [vmem:[#allocation3 + $0x3dc] sm:$0xff]
      %v9991 = vld [vmem:[#allocation3 + $0x3e4] sm:$0xff]
      %v9992 = vld [vmem:[#allocation3 + $0x3ec] sm:$0xf]
      %v9993 = vld [vmem:[#allocation3 + $0x3f0] sm:$0xff]
      %v9994 = vld [vmem:[#allocation3 + $0x3f8] sm:$0xff]
      %v9995 = vld [vmem:[#allocation3 + $0x400] sm:$0xff]
      %v9996 = vld [vmem:[#allocation3 + $0x408] sm:$0xff]
      %v9997 = vld [vmem:[#allocation3 + $0x410] sm:$0xf]
      %v9998 = vld [vmem:[#allocation3 + $0x414] sm:$0xff]
      %v9999 = vld [vmem:[#allocation3 + $0x41c] sm:$0xff]
      %v10000 = vld [vmem:[#allocation3 + $0x424] sm:$0xff]
      %v10001 = vld [vmem:[#allocation3 + $0x42c] sm:$0xff]
      %v10002 = vld [vmem:[#allocation3 + $0x434] sm:$0xf]
      %v10003 = vld [vmem:[#allocation3 + $0x438] sm:$0xff]
      %v10004 = vld [vmem:[#allocation3 + $0x440] sm:$0xff]
      %v10005 = vld [vmem:[#allocation3 + $0x448] sm:$0xff]
      %v10006 = vld [vmem:[#allocation3 + $0x450] sm:$0xff]
      %v10007 = vld [vmem:[#allocation3 + $0x458] sm:$0xf]
      %v10008 = vld [vmem:[#allocation3 + $0x45c] sm:$0xff]
      %v10009 = vld [vmem:[#allocation3 + $0x464] sm:$0xff]
      %v10010 = vld [vmem:[#allocation3 + $0x46c] sm:$0xff]
      %v10011 = vld [vmem:[#allocation3 + $0x474] sm:$0xff]
      %v10012 = vld [vmem:[#allocation3 + $0x47c] sm:$0xf]
      %v10013 = vld [vmem:[%s2] sm:$0xf]
      %v10014 = vld [vmem:[%s2 + $0x4] sm:$0xf]
      %v10015 = vld [vmem:[%s2 + $0x8] sm:$0xf]
      %v10016 = vld [vmem:[%s2 + $0xc] sm:$0xf]
      %v10017 = vld [vmem:[%s2 + $0x10] sm:$0xf]
      %v10018 = vld [vmem:[%s2 + $0x14] sm:$0xf]
      %v10019 = vld [vmem:[%s2 + $0x18] sm:$0xf]
      %v10020 = vld [vmem:[%s2 + $0x1c] sm:$0xf]
      %v10021 = vld [vmem:[%s2 + $0x20] sm:$0xf]
      %v10022 = vld [vmem:[%s2 + $0x24] sm:$0xf]
      %v10023 = vld [vmem:[%s2 + $0x28] sm:$0xf]
      %v10024 = vld [vmem:[%s2 + $0x2c] sm:$0xf]
      %v10025 = vld [vmem:[%s2 + $0x30] sm:$0xf]
      %v10026 = vld [vmem:[%s2 + $0x34] sm:$0xf]
      %v10027 = vld [vmem:[%s2 + $0x38] sm:$0xf]
      %v10028 = vld [vmem:[%s2 + $0x3c] sm:$0xf]
      %v10029 = vld [vmem:[%s2 + $0x40] sm:$0xf]
      %v10030 = vld [vmem:[%s2 + $0x44] sm:$0xf]
      %v10031 = vld [vmem:[%s2 + $0x48] sm:$0xf]
      %v10032 = vld [vmem:[%s2 + $0x4c] sm:$0xf]
      %v10033 = vld [vmem:[%s2 + $0x50] sm:$0xf]
      %v10034 = vld [vmem:[%s2 + $0x54] sm:$0xf]
      %v10035 = vld [vmem:[%s2 + $0x58] sm:$0xf]
      %v10036 = vld [vmem:[%s2 + $0x5c] sm:$0xf]
      %v10037 = vld [vmem:[%s2 + $0x60] sm:$0xf]
      %v10038 = vld [vmem:[%s2 + $0x64] sm:$0xf]
      %v10039 = vld [vmem:[%s2 + $0x68] sm:$0xf]
      %v10040 = vld [vmem:[%s2 + $0x6c] sm:$0xf]
      %v10041 = vld [vmem:[%s2 + $0x70] sm:$0xf]
      %v10042 = vld [vmem:[%s2 + $0x74] sm:$0xf]
      %v10043 = vld [vmem:[%s2 + $0x78] sm:$0xf]
      %v10044 = vld [vmem:[%s2 + $0x7c] sm:$0xf]
      %v10045 = vld [vmem:[%s2 + $0x80] sm:$0xf]
      %v10046 = vld [vmem:[%s2 + $0x84] sm:$0xf]
      %v10047 = vld [vmem:[%s2 + $0x88] sm:$0xf]
      %v10048 = vld [vmem:[%s2 + $0x8c] sm:$0xf]
      %v10049 = vld [vmem:[%s2 + $0x90] sm:$0xf]
      %v10050 = vld [vmem:[%s2 + $0x94] sm:$0xf]
      %v10051 = vld [vmem:[%s2 + $0x98] sm:$0xf]
      %v10052 = vld [vmem:[%s2 + $0x9c] sm:$0xf]
      %v10053 = vld [vmem:[%s2 + $0xa0] sm:$0xf]
      %v10054 = vld [vmem:[%s2 + $0xa4] sm:$0xf]
      %v10055 = vld [vmem:[%s2 + $0xa8] sm:$0xf]
      %v10056 = vld [vmem:[%s2 + $0xac] sm:$0xf]
      %v10057 = vld [vmem:[%s2 + $0xb0] sm:$0xf]
      %v10058 = vld [vmem:[%s2 + $0xb4] sm:$0xf]
      %v10059 = vld [vmem:[%s2 + $0xb8] sm:$0xf]
      %v10060 = vld [vmem:[%s2 + $0xbc] sm:$0xf]
      %v10061 = vld [vmem:[%s2 + $0xc0] sm:$0xf]
      %v10062 = vld [vmem:[%s2 + $0xc4] sm:$0xf]
      %v10063 = vld [vmem:[%s2 + $0xc8] sm:$0xf]
      %v10064 = vld [vmem:[%s2 + $0xcc] sm:$0xf]
      %v10065 = vld [vmem:[%s2 + $0xd0] sm:$0xf]
      %v10066 = vld [vmem:[%s2 + $0xd4] sm:$0xf]
      %v10067 = vld [vmem:[%s2 + $0xd8] sm:$0xf]
      %v10068 = vld [vmem:[%s2 + $0xdc] sm:$0xf]
      %v10069 = vld [vmem:[%s2 + $0xe0] sm:$0xf]
      %v10070 = vld [vmem:[%s2 + $0xe4] sm:$0xf]
      %v10071 = vld [vmem:[%s2 + $0xe8] sm:$0xf]
      %v10072 = vld [vmem:[%s2 + $0xec] sm:$0xf]
      %v10073 = vld [vmem:[%s2 + $0xf0] sm:$0xf]
      %v10074 = vld [vmem:[%s2 + $0xf4] sm:$0xf]
      %v10075 = vld [vmem:[%s2 + $0xf8] sm:$0xf]
      %v10076 = vld [vmem:[%s2 + $0xfc] sm:$0xf]
      %v10077 = vld [vmem:[%s2 + $0x100] sm:$0xf]
      %v10078 = vld [vmem:[%s2 + $0x104] sm:$0xf]
      %v10079 = vld [vmem:[%s2 + $0x108] sm:$0xf]
      %v10080 = vld [vmem:[%s2 + $0x10c] sm:$0xf]
      %v10081 = vld [vmem:[%s2 + $0x110] sm:$0xf]
      %v10082 = vld [vmem:[%s2 + $0x114] sm:$0xf]
      %v10083 = vld [vmem:[%s2 + $0x118] sm:$0xf]
      %v10084 = vld [vmem:[%s2 + $0x11c] sm:$0xf]
      %v10085 = vld [vmem:[%s2 + $0x120] sm:$0xf]
      %v10086 = vld [vmem:[%s2 + $0x124] sm:$0xf]
      %v10087 = vld [vmem:[%s2 + $0x128] sm:$0xf]
      %v10088 = vld [vmem:[%s2 + $0x12c] sm:$0xf]
      %v10089 = vld [vmem:[%s2 + $0x130] sm:$0xf]
      %v10090 = vld [vmem:[%s2 + $0x134] sm:$0xf]
      %v10091 = vld [vmem:[%s2 + $0x138] sm:$0xf]
      %v10092 = vld [vmem:[%s2 + $0x13c] sm:$0xf]
      %v10093 = vld [vmem:[%s2 + $0x140] sm:$0xf]
      %v10094 = vld [vmem:[%s2 + $0x144] sm:$0xf]
      %v10095 = vld [vmem:[%s2 + $0x148] sm:$0xf]
      %v10096 = vld [vmem:[%s2 + $0x14c] sm:$0xf]
      %v10097 = vld [vmem:[%s2 + $0x150] sm:$0xf]
      %v10098 = vld [vmem:[%s2 + $0x154] sm:$0xf]
      %v10099 = vld [vmem:[%s2 + $0x158] sm:$0xf]
      %v10100 = vld [vmem:[%s2 + $0x15c] sm:$0xf]
      %v10101 = vld [vmem:[%s2 + $0x160] sm:$0xf]
      %v10102 = vld [vmem:[%s2 + $0x164] sm:$0xf]
      %v10103 = vld [vmem:[%s2 + $0x168] sm:$0xf]
      %v10104 = vld [vmem:[%s2 + $0x16c] sm:$0xf]
      %v10105 = vld [vmem:[%s2 + $0x170] sm:$0xf]
      %v10106 = vld [vmem:[%s2 + $0x174] sm:$0xf]
      %v10107 = vld [vmem:[%s2 + $0x178] sm:$0xf]
      %v10108 = vld [vmem:[%s2 + $0x17c] sm:$0xf]
      %v10109 = vld [vmem:[%s2 + $0x180] sm:$0xf]
      %v10110 = vld [vmem:[%s2 + $0x184] sm:$0xf]
      %v10111 = vld [vmem:[%s2 + $0x188] sm:$0xf]
      %v10112 = vld [vmem:[%s2 + $0x18c] sm:$0xf]
      %v10113 = vld [vmem:[%s2 + $0x190] sm:$0xf]
      %v10114 = vld [vmem:[%s2 + $0x194] sm:$0xf]
      %v10115 = vld [vmem:[%s2 + $0x198] sm:$0xf]
      %v10116 = vld [vmem:[%s2 + $0x19c] sm:$0xf]
      %v10117 = vld [vmem:[%s2 + $0x1a0] sm:$0xf]
      %v10118 = vld [vmem:[%s2 + $0x1a4] sm:$0xf]
      %v10119 = vld [vmem:[%s2 + $0x1a8] sm:$0xf]
      %v10120 = vld [vmem:[%s2 + $0x1ac] sm:$0xf]
      %v10121 = vld [vmem:[%s2 + $0x1b0] sm:$0xf]
      %v10122 = vld [vmem:[%s2 + $0x1b4] sm:$0xf]
      %v10123 = vld [vmem:[%s2 + $0x1b8] sm:$0xf]
      %v10124 = vld [vmem:[%s2 + $0x1bc] sm:$0xf]
      %v10125 = vld [vmem:[%s2 + $0x1c0] sm:$0xf]
      %v10126 = vld [vmem:[%s2 + $0x1c4] sm:$0xf]
      %v10127 = vld [vmem:[%s2 + $0x1c8] sm:$0xf]
      %v10128 = vld [vmem:[%s2 + $0x1cc] sm:$0xf]
      %v10129 = vld [vmem:[%s2 + $0x1d0] sm:$0xf]
      %v10130 = vld [vmem:[%s2 + $0x1d4] sm:$0xf]
      %v10131 = vld [vmem:[%s2 + $0x1d8] sm:$0xf]
      %v10132 = vld [vmem:[%s2 + $0x1dc] sm:$0xf]
      %v10133 = vld [vmem:[%s2 + $0x1e0] sm:$0xf]
      %v10134 = vld [vmem:[%s2 + $0x1e4] sm:$0xf]
      %v10135 = vld [vmem:[%s2 + $0x1e8] sm:$0xf]
      %v10136 = vld [vmem:[%s2 + $0x1ec] sm:$0xf]
      %v10137 = vld [vmem:[%s2 + $0x1f0] sm:$0xf]
      %v10138 = vld [vmem:[%s2 + $0x1f4] sm:$0xf]
      %v10139 = vld [vmem:[%s2 + $0x1f8] sm:$0xf]
      %v10140 = vld [vmem:[%s2 + $0x1fc] sm:$0xf]
      %v10141 = vld [vmem:[%s2 + $0x200] sm:$0xf]
      %v10142 = vld [vmem:[%s2 + $0x204] sm:$0xf]
      %v10143 = vld [vmem:[%s2 + $0x208] sm:$0xf]
      %v10144 = vld [vmem:[%s2 + $0x20c] sm:$0xf]
      %v10145 = vld [vmem:[%s2 + $0x210] sm:$0xf]
      %v10146 = vld [vmem:[%s2 + $0x214] sm:$0xf]
      %v10147 = vld [vmem:[%s2 + $0x218] sm:$0xf]
      %v10148 = vld [vmem:[%s2 + $0x21c] sm:$0xf]
      %v10149 = vld [vmem:[%s2 + $0x220] sm:$0xf]
      %v10150 = vld [vmem:[%s2 + $0x224] sm:$0xf]
      %v10151 = vld [vmem:[%s2 + $0x228] sm:$0xf]
      %v10152 = vld [vmem:[%s2 + $0x22c] sm:$0xf]
      %v10153 = vld [vmem:[%s2 + $0x230] sm:$0xf]
      %v10154 = vld [vmem:[%s2 + $0x234] sm:$0xf]
      %v10155 = vld [vmem:[%s2 + $0x238] sm:$0xf]
      %v10156 = vld [vmem:[%s2 + $0x23c] sm:$0xf]
      %v10317 = vunpack.c.l.b16 %v9853
      %v10318 = vunpack.c.h.b16 %v9853
      %v10319 = vunpack.c.l.b16 %v9854
      %v10320 = vunpack.c.h.b16 %v9854
      %v10321 = vunpack.c.l.b16 %v9855
      %v10322 = vunpack.c.h.b16 %v9855
      %v10323 = vunpack.c.l.b16 %v9856
      %v10324 = vunpack.c.h.b16 %v9856
      %v10325 = vunpack.c.l.b16 %v9857
      %v10326 = vunpack.c.l.b16 %v9858
      %v10327 = vunpack.c.h.b16 %v9858
      %v10328 = vunpack.c.l.b16 %v9859
      %v10329 = vunpack.c.h.b16 %v9859
      %v10330 = vunpack.c.l.b16 %v9860
      %v10331 = vunpack.c.h.b16 %v9860
      %v10332 = vunpack.c.l.b16 %v9861
      %v10333 = vunpack.c.h.b16 %v9861
      %v10334 = vunpack.c.l.b16 %v9862
      %v10335 = vunpack.c.l.b16 %v9863
      %v10336 = vunpack.c.h.b16 %v9863
      %v10337 = vunpack.c.l.b16 %v9864
      %v10338 = vunpack.c.h.b16 %v9864
      %v10339 = vunpack.c.l.b16 %v9865
      %v10340 = vunpack.c.h.b16 %v9865
      %v10341 = vunpack.c.l.b16 %v9866
      %v10342 = vunpack.c.h.b16 %v9866
      %v10343 = vunpack.c.l.b16 %v9867
      %v10344 = vunpack.c.l.b16 %v9868
      %v10345 = vunpack.c.h.b16 %v9868
      %v10346 = vunpack.c.l.b16 %v9869
      %v10347 = vunpack.c.h.b16 %v9869
      %v10348 = vunpack.c.l.b16 %v9870
      %v10349 = vunpack.c.h.b16 %v9870
      %v10350 = vunpack.c.l.b16 %v9871
      %v10351 = vunpack.c.h.b16 %v9871
      %v10352 = vunpack.c.l.b16 %v9872
      %v10353 = vunpack.c.l.b16 %v9873
      %v10354 = vunpack.c.h.b16 %v9873
      %v10355 = vunpack.c.l.b16 %v9874
      %v10356 = vunpack.c.h.b16 %v9874
      %v10357 = vunpack.c.l.b16 %v9875
      %v10358 = vunpack.c.h.b16 %v9875
      %v10359 = vunpack.c.l.b16 %v9876
      %v10360 = vunpack.c.h.b16 %v9876
      %v10361 = vunpack.c.l.b16 %v9877
      %v10362 = vunpack.c.l.b16 %v9878
      %v10363 = vunpack.c.h.b16 %v9878
      %v10364 = vunpack.c.l.b16 %v9879
      %v10365 = vunpack.c.h.b16 %v9879
      %v10366 = vunpack.c.l.b16 %v9880
      %v10367 = vunpack.c.h.b16 %v9880
      %v10368 = vunpack.c.l.b16 %v9881
      %v10369 = vunpack.c.h.b16 %v9881
      %v10370 = vunpack.c.l.b16 %v9882
      %v10371 = vunpack.c.l.b16 %v9883
      %v10372 = vunpack.c.h.b16 %v9883
      %v10373 = vunpack.c.l.b16 %v9884
      %v10374 = vunpack.c.h.b16 %v9884
      %v10375 = vunpack.c.l.b16 %v9885
      %v10376 = vunpack.c.h.b16 %v9885
      %v10377 = vunpack.c.l.b16 %v9886
      %v10378 = vunpack.c.h.b16 %v9886
      %v10379 = vunpack.c.l.b16 %v9887
      %v10380 = vunpack.c.l.b16 %v9888
      %v10381 = vunpack.c.h.b16 %v9888
      %v10382 = vunpack.c.l.b16 %v9889
      %v10383 = vunpack.c.h.b16 %v9889
      %v10384 = vunpack.c.l.b16 %v9890
      %v10385 = vunpack.c.h.b16 %v9890
      %v10386 = vunpack.c.l.b16 %v9891
      %v10387 = vunpack.c.h.b16 %v9891
      %v10388 = vunpack.c.l.b16 %v9892
      %v10389 = vunpack.c.l.b16 %v9893
      %v10390 = vunpack.c.h.b16 %v9893
      %v10391 = vunpack.c.l.b16 %v9894
      %v10392 = vunpack.c.h.b16 %v9894
      %v10393 = vunpack.c.l.b16 %v9895
      %v10394 = vunpack.c.h.b16 %v9895
      %v10395 = vunpack.c.l.b16 %v9896
      %v10396 = vunpack.c.h.b16 %v9896
      %v10397 = vunpack.c.l.b16 %v9897
      %v10398 = vunpack.c.l.b16 %v9898
      %v10399 = vunpack.c.h.b16 %v9898
      %v10400 = vunpack.c.l.b16 %v9899
      %v10401 = vunpack.c.h.b16 %v9899
      %v10402 = vunpack.c.l.b16 %v9900
      %v10403 = vunpack.c.h.b16 %v9900
      %v10404 = vunpack.c.l.b16 %v9901
      %v10405 = vunpack.c.h.b16 %v9901
      %v10406 = vunpack.c.l.b16 %v9902
      %v10407 = vunpack.c.l.b16 %v9903
      %v10408 = vunpack.c.h.b16 %v9903
      %v10409 = vunpack.c.l.b16 %v9904
      %v10410 = vunpack.c.h.b16 %v9904
      %v10411 = vunpack.c.l.b16 %v9905
      %v10412 = vunpack.c.h.b16 %v9905
      %v10413 = vunpack.c.l.b16 %v9906
      %v10414 = vunpack.c.h.b16 %v9906
      %v10415 = vunpack.c.l.b16 %v9907
      %v10416 = vunpack.c.l.b16 %v9908
      %v10417 = vunpack.c.h.b16 %v9908
      %v10418 = vunpack.c.l.b16 %v9909
      %v10419 = vunpack.c.h.b16 %v9909
      %v10420 = vunpack.c.l.b16 %v9910
      %v10421 = vunpack.c.h.b16 %v9910
      %v10422 = vunpack.c.l.b16 %v9911
      %v10423 = vunpack.c.h.b16 %v9911
      %v10424 = vunpack.c.l.b16 %v9912
      %v10425 = vunpack.c.l.b16 %v9913
      %v10426 = vunpack.c.h.b16 %v9913
      %v10427 = vunpack.c.l.b16 %v9914
      %v10428 = vunpack.c.h.b16 %v9914
      %v10429 = vunpack.c.l.b16 %v9915
      %v10430 = vunpack.c.h.b16 %v9915
      %v10431 = vunpack.c.l.b16 %v9916
      %v10432 = vunpack.c.h.b16 %v9916
      %v10433 = vunpack.c.l.b16 %v9917
      %v10434 = vunpack.c.l.b16 %v9918
      %v10435 = vunpack.c.h.b16 %v9918
      %v10436 = vunpack.c.l.b16 %v9919
      %v10437 = vunpack.c.h.b16 %v9919
      %v10438 = vunpack.c.l.b16 %v9920
      %v10439 = vunpack.c.h.b16 %v9920
      %v10440 = vunpack.c.l.b16 %v9921
      %v10441 = vunpack.c.h.b16 %v9921
      %v10442 = vunpack.c.l.b16 %v9922
      %v10443 = vunpack.c.l.b16 %v9923
      %v10444 = vunpack.c.h.b16 %v9923
      %v10445 = vunpack.c.l.b16 %v9924
      %v10446 = vunpack.c.h.b16 %v9924
      %v10447 = vunpack.c.l.b16 %v9925
      %v10448 = vunpack.c.h.b16 %v9925
      %v10449 = vunpack.c.l.b16 %v9926
      %v10450 = vunpack.c.h.b16 %v9926
      %v10451 = vunpack.c.l.b16 %v9927
      %v10452 = vunpack.c.l.b16 %v9928
      %v10453 = vunpack.c.h.b16 %v9928
      %v10454 = vunpack.c.l.b16 %v9929
      %v10455 = vunpack.c.h.b16 %v9929
      %v10456 = vunpack.c.l.b16 %v9930
      %v10457 = vunpack.c.h.b16 %v9930
      %v10458 = vunpack.c.l.b16 %v9931
      %v10459 = vunpack.c.h.b16 %v9931
      %v10460 = vunpack.c.l.b16 %v9932
      %v10461 = vunpack.c.l.b16 %v9933
      %v10462 = vunpack.c.h.b16 %v9933
      %v10463 = vunpack.c.l.b16 %v9934
      %v10464 = vunpack.c.h.b16 %v9934
      %v10465 = vunpack.c.l.b16 %v9935
      %v10466 = vunpack.c.h.b16 %v9935
      %v10467 = vunpack.c.l.b16 %v9936
      %v10468 = vunpack.c.h.b16 %v9936
      %v10469 = vunpack.c.l.b16 %v9937
      %v10470 = vunpack.c.l.b16 %v9938
      %v10471 = vunpack.c.h.b16 %v9938
      %v10472 = vunpack.c.l.b16 %v9939
      %v10473 = vunpack.c.h.b16 %v9939
      %v10474 = vunpack.c.l.b16 %v9940
      %v10475 = vunpack.c.h.b16 %v9940
      %v10476 = vunpack.c.l.b16 %v9941
      %v10477 = vunpack.c.h.b16 %v9941
      %v10478 = vunpack.c.l.b16 %v9942
      %v10479 = vunpack.c.l.b16 %v9943
      %v10480 = vunpack.c.h.b16 %v9943
      %v10481 = vunpack.c.l.b16 %v9944
      %v10482 = vunpack.c.h.b16 %v9944
      %v10483 = vunpack.c.l.b16 %v9945
      %v10484 = vunpack.c.h.b16 %v9945
      %v10485 = vunpack.c.l.b16 %v9946
      %v10486 = vunpack.c.h.b16 %v9946
      %v10487 = vunpack.c.l.b16 %v9947
      %v10488 = vunpack.c.l.b16 %v9948
      %v10489 = vunpack.c.h.b16 %v9948
      %v10490 = vunpack.c.l.b16 %v9949
      %v10491 = vunpack.c.h.b16 %v9949
      %v10492 = vunpack.c.l.b16 %v9950
      %v10493 = vunpack.c.h.b16 %v9950
      %v10494 = vunpack.c.l.b16 %v9951
      %v10495 = vunpack.c.h.b16 %v9951
      %v10496 = vunpack.c.l.b16 %v9952
      %v10497 = vunpack.c.l.b16 %v9953
      %v10498 = vunpack.c.h.b16 %v9953
      %v10499 = vunpack.c.l.b16 %v9954
      %v10500 = vunpack.c.h.b16 %v9954
      %v10501 = vunpack.c.l.b16 %v9955
      %v10502 = vunpack.c.h.b16 %v9955
      %v10503 = vunpack.c.l.b16 %v9956
      %v10504 = vunpack.c.h.b16 %v9956
      %v10505 = vunpack.c.l.b16 %v9957
      %v10506 = vunpack.c.l.b16 %v9958
      %v10507 = vunpack.c.h.b16 %v9958
      %v10508 = vunpack.c.l.b16 %v9959
      %v10509 = vunpack.c.h.b16 %v9959
      %v10510 = vunpack.c.l.b16 %v9960
      %v10511 = vunpack.c.h.b16 %v9960
      %v10512 = vunpack.c.l.b16 %v9961
      %v10513 = vunpack.c.h.b16 %v9961
      %v10514 = vunpack.c.l.b16 %v9962
      %v10515 = vunpack.c.l.b16 %v9963
      %v10516 = vunpack.c.h.b16 %v9963
      %v10517 = vunpack.c.l.b16 %v9964
      %v10518 = vunpack.c.h.b16 %v9964
      %v10519 = vunpack.c.l.b16 %v9965
      %v10520 = vunpack.c.h.b16 %v9965
      %v10521 = vunpack.c.l.b16 %v9966
      %v10522 = vunpack.c.h.b16 %v9966
      %v10523 = vunpack.c.l.b16 %v9967
      %v10524 = vunpack.c.l.b16 %v9968
      %v10525 = vunpack.c.h.b16 %v9968
      %v10526 = vunpack.c.l.b16 %v9969
      %v10527 = vunpack.c.h.b16 %v9969
      %v10528 = vunpack.c.l.b16 %v9970
      %v10529 = vunpack.c.h.b16 %v9970
      %v10530 = vunpack.c.l.b16 %v9971
      %v10531 = vunpack.c.h.b16 %v9971
      %v10532 = vunpack.c.l.b16 %v9972
      %v10533 = vunpack.c.l.b16 %v9973
      %v10534 = vunpack.c.h.b16 %v9973
      %v10535 = vunpack.c.l.b16 %v9974
      %v10536 = vunpack.c.h.b16 %v9974
      %v10537 = vunpack.c.l.b16 %v9975
      %v10538 = vunpack.c.h.b16 %v9975
      %v10539 = vunpack.c.l.b16 %v9976
      %v10540 = vunpack.c.h.b16 %v9976
      %v10541 = vunpack.c.l.b16 %v9977
      %v10542 = vunpack.c.l.b16 %v9978
      %v10543 = vunpack.c.h.b16 %v9978
      %v10544 = vunpack.c.l.b16 %v9979
      %v10545 = vunpack.c.h.b16 %v9979
      %v10546 = vunpack.c.l.b16 %v9980
      %v10547 = vunpack.c.h.b16 %v9980
      %v10548 = vunpack.c.l.b16 %v9981
      %v10549 = vunpack.c.h.b16 %v9981
      %v10550 = vunpack.c.l.b16 %v9982
      %v10551 = vunpack.c.l.b16 %v9983
      %v10552 = vunpack.c.h.b16 %v9983
      %v10553 = vunpack.c.l.b16 %v9984
      %v10554 = vunpack.c.h.b16 %v9984
      %v10555 = vunpack.c.l.b16 %v9985
      %v10556 = vunpack.c.h.b16 %v9985
      %v10557 = vunpack.c.l.b16 %v9986
      %v10558 = vunpack.c.h.b16 %v9986
      %v10559 = vunpack.c.l.b16 %v9987
      %v10560 = vunpack.c.l.b16 %v9988
      %v10561 = vunpack.c.h.b16 %v9988
      %v10562 = vunpack.c.l.b16 %v9989
      %v10563 = vunpack.c.h.b16 %v9989
      %v10564 = vunpack.c.l.b16 %v9990
      %v10565 = vunpack.c.h.b16 %v9990
      %v10566 = vunpack.c.l.b16 %v9991
      %v10567 = vunpack.c.h.b16 %v9991
      %v10568 = vunpack.c.l.b16 %v9992
      %v10569 = vunpack.c.l.b16 %v9993
      %v10570 = vunpack.c.h.b16 %v9993
      %v10571 = vunpack.c.l.b16 %v9994
      %v10572 = vunpack.c.h.b16 %v9994
      %v10573 = vunpack.c.l.b16 %v9995
      %v10574 = vunpack.c.h.b16 %v9995
      %v10575 = vunpack.c.l.b16 %v9996
      %v10576 = vunpack.c.h.b16 %v9996
      %v10577 = vunpack.c.l.b16 %v9997
      %v10578 = vunpack.c.l.b16 %v9998
      %v10579 = vunpack.c.h.b16 %v9998
      %v10580 = vunpack.c.l.b16 %v9999
      %v10581 = vunpack.c.h.b16 %v9999
      %v10582 = vunpack.c.l.b16 %v10000
      %v10583 = vunpack.c.h.b16 %v10000
      %v10584 = vunpack.c.l.b16 %v10001
      %v10585 = vunpack.c.h.b16 %v10001
      %v10586 = vunpack.c.l.b16 %v10002
      %v10587 = vunpack.c.l.b16 %v10003
      %v10588 = vunpack.c.h.b16 %v10003
      %v10589 = vunpack.c.l.b16 %v10004
      %v10590 = vunpack.c.h.b16 %v10004
      %v10591 = vunpack.c.l.b16 %v10005
      %v10592 = vunpack.c.h.b16 %v10005
      %v10593 = vunpack.c.l.b16 %v10006
      %v10594 = vunpack.c.h.b16 %v10006
      %v10595 = vunpack.c.l.b16 %v10007
      %v10596 = vunpack.c.l.b16 %v10008
      %v10597 = vunpack.c.h.b16 %v10008
      %v10598 = vunpack.c.l.b16 %v10009
      %v10599 = vunpack.c.h.b16 %v10009
      %v10600 = vunpack.c.l.b16 %v10010
      %v10601 = vunpack.c.h.b16 %v10010
      %v10602 = vunpack.c.l.b16 %v10011
      %v10603 = vunpack.c.h.b16 %v10011
      %v10604 = vunpack.c.l.b16 %v10012
      %v10605 = vpack.c.b16 %v10326, %v10317
      %v10606 = vpack.c.b16 %v10327, %v10318
      %v10607 = vpack.c.b16 %v10328, %v10319
      %v10608 = vpack.c.b16 %v10329, %v10320
      %v10609 = vpack.c.b16 %v10330, %v10321
      %v10610 = vpack.c.b16 %v10331, %v10322
      %v10611 = vpack.c.b16 %v10332, %v10323
      %v10612 = vpack.c.b16 %v10333, %v10324
      %v10613 = vpack.c.b16 %v10334, %v10325
      %v10614 = vpack.c.b16 %v10344, %v10335
      %v10615 = vpack.c.b16 %v10345, %v10336
      %v10616 = vpack.c.b16 %v10346, %v10337
      %v10617 = vpack.c.b16 %v10347, %v10338
      %v10618 = vpack.c.b16 %v10348, %v10339
      %v10619 = vpack.c.b16 %v10349, %v10340
      %v10620 = vpack.c.b16 %v10350, %v10341
      %v10621 = vpack.c.b16 %v10351, %v10342
      %v10622 = vpack.c.b16 %v10352, %v10343
      %v10623 = vpack.c.b16 %v10362, %v10353
      %v10624 = vpack.c.b16 %v10363, %v10354
      %v10625 = vpack.c.b16 %v10364, %v10355
      %v10626 = vpack.c.b16 %v10365, %v10356
      %v10627 = vpack.c.b16 %v10366, %v10357
      %v10628 = vpack.c.b16 %v10367, %v10358
      %v10629 = vpack.c.b16 %v10368, %v10359
      %v10630 = vpack.c.b16 %v10369, %v10360
      %v10631 = vpack.c.b16 %v10370, %v10361
      %v10632 = vpack.c.b16 %v10380, %v10371
      %v10633 = vpack.c.b16 %v10381, %v10372
      %v10634 = vpack.c.b16 %v10382, %v10373
      %v10635 = vpack.c.b16 %v10383, %v10374
      %v10636 = vpack.c.b16 %v10384, %v10375
      %v10637 = vpack.c.b16 %v10385, %v10376
      %v10638 = vpack.c.b16 %v10386, %v10377
      %v10639 = vpack.c.b16 %v10387, %v10378
      %v10640 = vpack.c.b16 %v10388, %v10379
      %v10641 = vpack.c.b16 %v10398, %v10389
      %v10642 = vpack.c.b16 %v10399, %v10390
      %v10643 = vpack.c.b16 %v10400, %v10391
      %v10644 = vpack.c.b16 %v10401, %v10392
      %v10645 = vpack.c.b16 %v10402, %v10393
      %v10646 = vpack.c.b16 %v10403, %v10394
      %v10647 = vpack.c.b16 %v10404, %v10395
      %v10648 = vpack.c.b16 %v10405, %v10396
      %v10649 = vpack.c.b16 %v10406, %v10397
      %v10650 = vpack.c.b16 %v10416, %v10407
      %v10651 = vpack.c.b16 %v10417, %v10408
      %v10652 = vpack.c.b16 %v10418, %v10409
      %v10653 = vpack.c.b16 %v10419, %v10410
      %v10654 = vpack.c.b16 %v10420, %v10411
      %v10655 = vpack.c.b16 %v10421, %v10412
      %v10656 = vpack.c.b16 %v10422, %v10413
      %v10657 = vpack.c.b16 %v10423, %v10414
      %v10658 = vpack.c.b16 %v10424, %v10415
      %v10659 = vpack.c.b16 %v10434, %v10425
      %v10660 = vpack.c.b16 %v10435, %v10426
      %v10661 = vpack.c.b16 %v10436, %v10427
      %v10662 = vpack.c.b16 %v10437, %v10428
      %v10663 = vpack.c.b16 %v10438, %v10429
      %v10664 = vpack.c.b16 %v10439, %v10430
      %v10665 = vpack.c.b16 %v10440, %v10431
      %v10666 = vpack.c.b16 %v10441, %v10432
      %v10667 = vpack.c.b16 %v10442, %v10433
      %v10668 = vpack.c.b16 %v10452, %v10443
      %v10669 = vpack.c.b16 %v10453, %v10444
      %v10670 = vpack.c.b16 %v10454, %v10445
      %v10671 = vpack.c.b16 %v10455, %v10446
      %v10672 = vpack.c.b16 %v10456, %v10447
      %v10673 = vpack.c.b16 %v10457, %v10448
      %v10674 = vpack.c.b16 %v10458, %v10449
      %v10675 = vpack.c.b16 %v10459, %v10450
      %v10676 = vpack.c.b16 %v10460, %v10451
      %v10677 = vpack.c.b16 %v10470, %v10461
      %v10678 = vpack.c.b16 %v10471, %v10462
      %v10679 = vpack.c.b16 %v10472, %v10463
      %v10680 = vpack.c.b16 %v10473, %v10464
      %v10681 = vpack.c.b16 %v10474, %v10465
      %v10682 = vpack.c.b16 %v10475, %v10466
      %v10683 = vpack.c.b16 %v10476, %v10467
      %v10684 = vpack.c.b16 %v10477, %v10468
      %v10685 = vpack.c.b16 %v10478, %v10469
      %v10686 = vpack.c.b16 %v10488, %v10479
      %v10687 = vpack.c.b16 %v10489, %v10480
      %v10688 = vpack.c.b16 %v10490, %v10481
      %v10689 = vpack.c.b16 %v10491, %v10482
      %v10690 = vpack.c.b16 %v10492, %v10483
      %v10691 = vpack.c.b16 %v10493, %v10484
      %v10692 = vpack.c.b16 %v10494, %v10485
      %v10693 = vpack.c.b16 %v10495, %v10486
      %v10694 = vpack.c.b16 %v10496, %v10487
      %v10695 = vpack.c.b16 %v10506, %v10497
      %v10696 = vpack.c.b16 %v10507, %v10498
      %v10697 = vpack.c.b16 %v10508, %v10499
      %v10698 = vpack.c.b16 %v10509, %v10500
      %v10699 = vpack.c.b16 %v10510, %v10501
      %v10700 = vpack.c.b16 %v10511, %v10502
      %v10701 = vpack.c.b16 %v10512, %v10503
      %v10702 = vpack.c.b16 %v10513, %v10504
      %v10703 = vpack.c.b16 %v10514, %v10505
      %v10704 = vpack.c.b16 %v10524, %v10515
      %v10705 = vpack.c.b16 %v10525, %v10516
      %v10706 = vpack.c.b16 %v10526, %v10517
      %v10707 = vpack.c.b16 %v10527, %v10518
      %v10708 = vpack.c.b16 %v10528, %v10519
      %v10709 = vpack.c.b16 %v10529, %v10520
      %v10710 = vpack.c.b16 %v10530, %v10521
      %v10711 = vpack.c.b16 %v10531, %v10522
      %v10712 = vpack.c.b16 %v10532, %v10523
      %v10713 = vpack.c.b16 %v10542, %v10533
      %v10714 = vpack.c.b16 %v10543, %v10534
      %v10715 = vpack.c.b16 %v10544, %v10535
      %v10716 = vpack.c.b16 %v10545, %v10536
      %v10717 = vpack.c.b16 %v10546, %v10537
      %v10718 = vpack.c.b16 %v10547, %v10538
      %v10719 = vpack.c.b16 %v10548, %v10539
      %v10720 = vpack.c.b16 %v10549, %v10540
      %v10721 = vpack.c.b16 %v10550, %v10541
      %v10722 = vpack.c.b16 %v10560, %v10551
      %v10723 = vpack.c.b16 %v10561, %v10552
      %v10724 = vpack.c.b16 %v10562, %v10553
      %v10725 = vpack.c.b16 %v10563, %v10554
      %v10726 = vpack.c.b16 %v10564, %v10555
      %v10727 = vpack.c.b16 %v10565, %v10556
      %v10728 = vpack.c.b16 %v10566, %v10557
      %v10729 = vpack.c.b16 %v10567, %v10558
      %v10730 = vpack.c.b16 %v10568, %v10559
      %v10731 = vpack.c.b16 %v10578, %v10569
      %v10732 = vpack.c.b16 %v10579, %v10570
      %v10733 = vpack.c.b16 %v10580, %v10571
      %v10734 = vpack.c.b16 %v10581, %v10572
      %v10735 = vpack.c.b16 %v10582, %v10573
      %v10736 = vpack.c.b16 %v10583, %v10574
      %v10737 = vpack.c.b16 %v10584, %v10575
      %v10738 = vpack.c.b16 %v10585, %v10576
      %v10739 = vpack.c.b16 %v10586, %v10577
      %v10740 = vpack.c.b16 %v10596, %v10587
      %v10741 = vpack.c.b16 %v10597, %v10588
      %v10742 = vpack.c.b16 %v10598, %v10589
      %v10743 = vpack.c.b16 %v10599, %v10590
      %v10744 = vpack.c.b16 %v10600, %v10591
      %v10745 = vpack.c.b16 %v10601, %v10592
      %v10746 = vpack.c.b16 %v10602, %v10593
      %v10747 = vpack.c.b16 %v10603, %v10594
      %v10748 = vpack.c.b16 %v10604, %v10595
      %v11037 = vunpack.c.l.b16 %v10013
      %v11038 = vunpack.c.l.b16 %v10014
      %v11039 = vunpack.c.l.b16 %v10015
      %v11040 = vunpack.c.l.b16 %v10016
      %v11041 = vunpack.c.l.b16 %v10017
      %v11042 = vunpack.c.l.b16 %v10018
      %v11043 = vunpack.c.l.b16 %v10019
      %v11044 = vunpack.c.l.b16 %v10020
      %v11045 = vunpack.c.l.b16 %v10021
      %v11046 = vunpack.c.l.b16 %v10022
      %v11047 = vunpack.c.l.b16 %v10023
      %v11048 = vunpack.c.l.b16 %v10024
      %v11049 = vunpack.c.l.b16 %v10025
      %v11050 = vunpack.c.l.b16 %v10026
      %v11051 = vunpack.c.l.b16 %v10027
      %v11052 = vunpack.c.l.b16 %v10028
      %v11053 = vunpack.c.l.b16 %v10029
      %v11054 = vunpack.c.l.b16 %v10030
      %v11055 = vunpack.c.l.b16 %v10031
      %v11056 = vunpack.c.l.b16 %v10032
      %v11057 = vunpack.c.l.b16 %v10033
      %v11058 = vunpack.c.l.b16 %v10034
      %v11059 = vunpack.c.l.b16 %v10035
      %v11060 = vunpack.c.l.b16 %v10036
      %v11061 = vunpack.c.l.b16 %v10037
      %v11062 = vunpack.c.l.b16 %v10038
      %v11063 = vunpack.c.l.b16 %v10039
      %v11064 = vunpack.c.l.b16 %v10040
      %v11065 = vunpack.c.l.b16 %v10041
      %v11066 = vunpack.c.l.b16 %v10042
      %v11067 = vunpack.c.l.b16 %v10043
      %v11068 = vunpack.c.l.b16 %v10044
      %v11069 = vunpack.c.l.b16 %v10045
      %v11070 = vunpack.c.l.b16 %v10046
      %v11071 = vunpack.c.l.b16 %v10047
      %v11072 = vunpack.c.l.b16 %v10048
      %v11073 = vunpack.c.l.b16 %v10049
      %v11074 = vunpack.c.l.b16 %v10050
      %v11075 = vunpack.c.l.b16 %v10051
      %v11076 = vunpack.c.l.b16 %v10052
      %v11077 = vunpack.c.l.b16 %v10053
      %v11078 = vunpack.c.l.b16 %v10054
      %v11079 = vunpack.c.l.b16 %v10055
      %v11080 = vunpack.c.l.b16 %v10056
      %v11081 = vunpack.c.l.b16 %v10057
      %v11082 = vunpack.c.l.b16 %v10058
      %v11083 = vunpack.c.l.b16 %v10059
      %v11084 = vunpack.c.l.b16 %v10060
      %v11085 = vunpack.c.l.b16 %v10061
      %v11086 = vunpack.c.l.b16 %v10062
      %v11087 = vunpack.c.l.b16 %v10063
      %v11088 = vunpack.c.l.b16 %v10064
      %v11089 = vunpack.c.l.b16 %v10065
      %v11090 = vunpack.c.l.b16 %v10066
      %v11091 = vunpack.c.l.b16 %v10067
      %v11092 = vunpack.c.l.b16 %v10068
      %v11093 = vunpack.c.l.b16 %v10069
      %v11094 = vunpack.c.l.b16 %v10070
      %v11095 = vunpack.c.l.b16 %v10071
      %v11096 = vunpack.c.l.b16 %v10072
      %v11097 = vunpack.c.l.b16 %v10073
      %v11098 = vunpack.c.l.b16 %v10074
      %v11099 = vunpack.c.l.b16 %v10075
      %v11100 = vunpack.c.l.b16 %v10076
      %v11101 = vunpack.c.l.b16 %v10077
      %v11102 = vunpack.c.l.b16 %v10078
      %v11103 = vunpack.c.l.b16 %v10079
      %v11104 = vunpack.c.l.b16 %v10080
      %v11105 = vunpack.c.l.b16 %v10081
      %v11106 = vunpack.c.l.b16 %v10082
      %v11107 = vunpack.c.l.b16 %v10083
      %v11108 = vunpack.c.l.b16 %v10084
      %v11109 = vunpack.c.l.b16 %v10085
      %v11110 = vunpack.c.l.b16 %v10086
      %v11111 = vunpack.c.l.b16 %v10087
      %v11112 = vunpack.c.l.b16 %v10088
      %v11113 = vunpack.c.l.b16 %v10089
      %v11114 = vunpack.c.l.b16 %v10090
      %v11115 = vunpack.c.l.b16 %v10091
      %v11116 = vunpack.c.l.b16 %v10092
      %v11117 = vunpack.c.l.b16 %v10093
      %v11118 = vunpack.c.l.b16 %v10094
      %v11119 = vunpack.c.l.b16 %v10095
      %v11120 = vunpack.c.l.b16 %v10096
      %v11121 = vunpack.c.l.b16 %v10097
      %v11122 = vunpack.c.l.b16 %v10098
      %v11123 = vunpack.c.l.b16 %v10099
      %v11124 = vunpack.c.l.b16 %v10100
      %v11125 = vunpack.c.l.b16 %v10101
      %v11126 = vunpack.c.l.b16 %v10102
      %v11127 = vunpack.c.l.b16 %v10103
      %v11128 = vunpack.c.l.b16 %v10104
      %v11129 = vunpack.c.l.b16 %v10105
      %v11130 = vunpack.c.l.b16 %v10106
      %v11131 = vunpack.c.l.b16 %v10107
      %v11132 = vunpack.c.l.b16 %v10108
      %v11133 = vunpack.c.l.b16 %v10109
      %v11134 = vunpack.c.l.b16 %v10110
      %v11135 = vunpack.c.l.b16 %v10111
      %v11136 = vunpack.c.l.b16 %v10112
      %v11137 = vunpack.c.l.b16 %v10113
      %v11138 = vunpack.c.l.b16 %v10114
      %v11139 = vunpack.c.l.b16 %v10115
      %v11140 = vunpack.c.l.b16 %v10116
      %v11141 = vunpack.c.l.b16 %v10117
      %v11142 = vunpack.c.l.b16 %v10118
      %v11143 = vunpack.c.l.b16 %v10119
      %v11144 = vunpack.c.l.b16 %v10120
      %v11145 = vunpack.c.l.b16 %v10121
      %v11146 = vunpack.c.l.b16 %v10122
      %v11147 = vunpack.c.l.b16 %v10123
      %v11148 = vunpack.c.l.b16 %v10124
      %v11149 = vunpack.c.l.b16 %v10125
      %v11150 = vunpack.c.l.b16 %v10126
      %v11151 = vunpack.c.l.b16 %v10127
      %v11152 = vunpack.c.l.b16 %v10128
      %v11153 = vunpack.c.l.b16 %v10129
      %v11154 = vunpack.c.l.b16 %v10130
      %v11155 = vunpack.c.l.b16 %v10131
      %v11156 = vunpack.c.l.b16 %v10132
      %v11157 = vunpack.c.l.b16 %v10133
      %v11158 = vunpack.c.l.b16 %v10134
      %v11159 = vunpack.c.l.b16 %v10135
      %v11160 = vunpack.c.l.b16 %v10136
      %v11161 = vunpack.c.l.b16 %v10137
      %v11162 = vunpack.c.l.b16 %v10138
      %v11163 = vunpack.c.l.b16 %v10139
      %v11164 = vunpack.c.l.b16 %v10140
      %v11165 = vunpack.c.l.b16 %v10141
      %v11166 = vunpack.c.l.b16 %v10142
      %v11167 = vunpack.c.l.b16 %v10143
      %v11168 = vunpack.c.l.b16 %v10144
      %v11169 = vunpack.c.l.b16 %v10145
      %v11170 = vunpack.c.l.b16 %v10146
      %v11171 = vunpack.c.l.b16 %v10147
      %v11172 = vunpack.c.l.b16 %v10148
      %v11173 = vunpack.c.l.b16 %v10149
      %v11174 = vunpack.c.l.b16 %v10150
      %v11175 = vunpack.c.l.b16 %v10151
      %v11176 = vunpack.c.l.b16 %v10152
      %v11177 = vunpack.c.l.b16 %v10153
      %v11178 = vunpack.c.l.b16 %v10154
      %v11179 = vunpack.c.l.b16 %v10155
      %v11180 = vunpack.c.l.b16 %v10156
      %v11181 = vpack.c.b16 %v11038, %v11037
      %v11182 = vpack.c.b16 %v11040, %v11039
      %v11183 = vpack.c.b16 %v11042, %v11041
      %v11184 = vpack.c.b16 %v11044, %v11043
      %v11185 = vpack.c.b16 %v11046, %v11045
      %v11186 = vpack.c.b16 %v11048, %v11047
      %v11187 = vpack.c.b16 %v11050, %v11049
      %v11188 = vpack.c.b16 %v11052, %v11051
      %v11189 = vpack.c.b16 %v11054, %v11053
      %v11190 = vpack.c.b16 %v11056, %v11055
      %v11191 = vpack.c.b16 %v11058, %v11057
      %v11192 = vpack.c.b16 %v11060, %v11059
      %v11193 = vpack.c.b16 %v11062, %v11061
      %v11194 = vpack.c.b16 %v11064, %v11063
      %v11195 = vpack.c.b16 %v11066, %v11065
      %v11196 = vpack.c.b16 %v11068, %v11067
      %v11197 = vpack.c.b16 %v11070, %v11069
      %v11198 = vpack.c.b16 %v11072, %v11071
      %v11199 = vpack.c.b16 %v11074, %v11073
      %v11200 = vpack.c.b16 %v11076, %v11075
      %v11201 = vpack.c.b16 %v11078, %v11077
      %v11202 = vpack.c.b16 %v11080, %v11079
      %v11203 = vpack.c.b16 %v11082, %v11081
      %v11204 = vpack.c.b16 %v11084, %v11083
      %v11205 = vpack.c.b16 %v11086, %v11085
      %v11206 = vpack.c.b16 %v11088, %v11087
      %v11207 = vpack.c.b16 %v11090, %v11089
      %v11208 = vpack.c.b16 %v11092, %v11091
      %v11209 = vpack.c.b16 %v11094, %v11093
      %v11210 = vpack.c.b16 %v11096, %v11095
      %v11211 = vpack.c.b16 %v11098, %v11097
      %v11212 = vpack.c.b16 %v11100, %v11099
      %v11213 = vpack.c.b16 %v11102, %v11101
      %v11214 = vpack.c.b16 %v11104, %v11103
      %v11215 = vpack.c.b16 %v11106, %v11105
      %v11216 = vpack.c.b16 %v11108, %v11107
      %v11217 = vpack.c.b16 %v11110, %v11109
      %v11218 = vpack.c.b16 %v11112, %v11111
      %v11219 = vpack.c.b16 %v11114, %v11113
      %v11220 = vpack.c.b16 %v11116, %v11115
      %v11221 = vpack.c.b16 %v11118, %v11117
      %v11222 = vpack.c.b16 %v11120, %v11119
      %v11223 = vpack.c.b16 %v11122, %v11121
      %v11224 = vpack.c.b16 %v11124, %v11123
      %v11225 = vpack.c.b16 %v11126, %v11125
      %v11226 = vpack.c.b16 %v11128, %v11127
      %v11227 = vpack.c.b16 %v11130, %v11129
      %v11228 = vpack.c.b16 %v11132, %v11131
      %v11229 = vpack.c.b16 %v11134, %v11133
      %v11230 = vpack.c.b16 %v11136, %v11135
      %v11231 = vpack.c.b16 %v11138, %v11137
      %v11232 = vpack.c.b16 %v11140, %v11139
      %v11233 = vpack.c.b16 %v11142, %v11141
      %v11234 = vpack.c.b16 %v11144, %v11143
      %v11235 = vpack.c.b16 %v11146, %v11145
      %v11236 = vpack.c.b16 %v11148, %v11147
      %v11237 = vpack.c.b16 %v11150, %v11149
      %v11238 = vpack.c.b16 %v11152, %v11151
      %v11239 = vpack.c.b16 %v11154, %v11153
      %v11240 = vpack.c.b16 %v11156, %v11155
      %v11241 = vpack.c.b16 %v11158, %v11157
      %v11242 = vpack.c.b16 %v11160, %v11159
      %v11243 = vpack.c.b16 %v11162, %v11161
      %v11244 = vpack.c.b16 %v11164, %v11163
      %v11245 = vpack.c.b16 %v11166, %v11165
      %v11246 = vpack.c.b16 %v11168, %v11167
      %v11247 = vpack.c.b16 %v11170, %v11169
      %v11248 = vpack.c.b16 %v11172, %v11171
      %v11249 = vpack.c.b16 %v11174, %v11173
      %v11250 = vpack.c.b16 %v11176, %v11175
      %v11251 = vpack.c.b16 %v11178, %v11177
      %v11252 = vpack.c.b16 %v11180, %v11179
      %11325 = vmatprep.subr.bf16.mxu0 0
      %11326 = vmatpush1.bf16.msra.mxu0 %v11188
      %11327 = vmatprep.subr.bf16.mxu0 0
      %11328 = vmatpush1.bf16.msra.mxu0 %v11187
      %11329 = vmatprep.subr.bf16.mxu0 0
      %11330 = vmatpush1.bf16.msra.mxu0 %v11186
      %11331 = vmatprep.subr.bf16.mxu0 0
      %11332 = vmatpush1.bf16.msra.mxu0 %v11185
      %11333 = vmatprep.subr.bf16.mxu0 0
      %11334 = vmatpush1.bf16.msra.mxu0 %v11184
      %11335 = vmatprep.subr.bf16.mxu0 0
      %11336 = vmatpush1.bf16.msra.mxu0 %v11183
      %11337 = vmatprep.subr.bf16.mxu0 0
      %11338 = vmatpush1.bf16.msra.mxu0 %v11182
      %11339 = vmatprep.subr.bf16.mxu0 0
      %11340 = vmatpush1.bf16.msra.mxu0 %v11181
      %11341 = vmatprep.subr.bf16.mxu0 0
      %11342 = vmatpush2.bf16.msra.mxu0 %v11196
      %11343 = vmatprep.subr.bf16.mxu0 0
      %11344 = vmatpush2.bf16.msra.mxu0 %v11195
      %11345 = vmatprep.subr.bf16.mxu0 0
      %11346 = vmatpush2.bf16.msra.mxu0 %v11194
      %11347 = vmatprep.subr.bf16.mxu0 0
      %11348 = vmatpush2.bf16.msra.mxu0 %v11193
      %11349 = vmatprep.subr.bf16.mxu0 0
      %11350 = vmatpush2.bf16.msra.mxu0 %v11192
      %11351 = vmatprep.subr.bf16.mxu0 0
      %11352 = vmatpush2.bf16.msra.mxu0 %v11191
      %11353 = vmatprep.subr.bf16.mxu0 0
      %11354 = vmatpush2.bf16.msra.mxu0 %v11190
      %11355 = vmatprep.subr.bf16.mxu0 0
      %11356 = vmatpush2.bf16.msra.mxu0 %v11189
      %11357 = vmatprep.mubr.bf16.mxu0 %v10606
      %11358 = vmatmul.mubr.bf16.gmra.mxu0 %v10605
      %v11359 = vpop.f32.mrf.mxu0
      %v11360 = vadd.f32 0.0, %v11359
      %v11361 = vpop.f32.mrf.mxu0
      %v11362 = vpop.f32.mrf.mxu0
      %v11363 = vadd.f32 0.0, %v11362
      %v11364 = vpop.f32.mrf.mxu0
      %11365 = vmatprep.mubr.bf16.mxu0 %v10615
      %11366 = vmatmul.mubr.bf16.gmra.mxu0 %v10614
      %v11367 = vpop.f32.mrf.mxu0
      %v11368 = vadd.f32 0.0, %v11367
      %v11369 = vpop.f32.mrf.mxu0
      %v11370 = vpop.f32.mrf.mxu0
      %v11371 = vadd.f32 0.0, %v11370
      %v11372 = vpop.f32.mrf.mxu0
      %11373 = vmatprep.mubr.bf16.mxu0 %v10624
      %11374 = vmatmul.mubr.bf16.gmra.mxu0 %v10623
      %v11375 = vpop.f32.mrf.mxu0
      %v11376 = vadd.f32 0.0, %v11375
      %v11377 = vpop.f32.mrf.mxu0
      %v11378 = vpop.f32.mrf.mxu0
      %v11379 = vadd.f32 0.0, %v11378
      %v11380 = vpop.f32.mrf.mxu0
      %11381 = vmatprep.mubr.bf16.mxu0 %v10633
      %11382 = vmatmul.mubr.bf16.gmra.mxu0 %v10632
      %v11383 = vpop.f32.mrf.mxu0
      %v11384 = vadd.f32 0.0, %v11383
      %v11385 = vpop.f32.mrf.mxu0
      %v11386 = vpop.f32.mrf.mxu0
      %v11387 = vadd.f32 0.0, %v11386
      %v11388 = vpop.f32.mrf.mxu0
      %11389 = vmatprep.mubr.bf16.mxu0 %v10642
      %11390 = vmatmul.mubr.bf16.gmra.mxu0 %v10641
      %v11391 = vpop.f32.mrf.mxu0
      %v11392 = vadd.f32 0.0, %v11391
      %v11393 = vpop.f32.mrf.mxu0
      %v11394 = vpop.f32.mrf.mxu0
      %v11395 = vadd.f32 0.0, %v11394
      %v11396 = vpop.f32.mrf.mxu0
      %11397 = vmatprep.mubr.bf16.mxu0 %v10651
      %11398 = vmatmul.mubr.bf16.gmra.mxu0 %v10650
      %v11399 = vpop.f32.mrf.mxu0
      %v11400 = vadd.f32 0.0, %v11399
      %v11401 = vpop.f32.mrf.mxu0
      %v11402 = vpop.f32.mrf.mxu0
      %v11403 = vadd.f32 0.0, %v11402
      %v11404 = vpop.f32.mrf.mxu0
      %11405 = vmatprep.mubr.bf16.mxu0 %v10660
      %11406 = vmatmul.mubr.bf16.gmra.mxu0 %v10659
      %v11407 = vpop.f32.mrf.mxu0
      %v11408 = vadd.f32 0.0, %v11407
      %v11409 = vpop.f32.mrf.mxu0
      %v11410 = vpop.f32.mrf.mxu0
      %v11411 = vadd.f32 0.0, %v11410
      %v11412 = vpop.f32.mrf.mxu0
      %11413 = vmatprep.mubr.bf16.mxu0 %v10669
      %11414 = vmatmul.mubr.bf16.gmra.mxu0 %v10668
      %v11415 = vpop.f32.mrf.mxu0
      %v11416 = vadd.f32 0.0, %v11415
      %v11417 = vpop.f32.mrf.mxu0
      %v11418 = vpop.f32.mrf.mxu0
      %v11419 = vadd.f32 0.0, %v11418
      %v11420 = vpop.f32.mrf.mxu0
      %11421 = vmatprep.mubr.bf16.mxu0 %v10678
      %11422 = vmatmul.mubr.bf16.gmra.mxu0 %v10677
      %v11423 = vpop.f32.mrf.mxu0
      %v11424 = vadd.f32 0.0, %v11423
      %v11425 = vpop.f32.mrf.mxu0
      %v11426 = vpop.f32.mrf.mxu0
      %v11427 = vadd.f32 0.0, %v11426
      %v11428 = vpop.f32.mrf.mxu0
      %11429 = vmatprep.mubr.bf16.mxu0 %v10687
      %11430 = vmatmul.mubr.bf16.gmra.mxu0 %v10686
      %v11431 = vpop.f32.mrf.mxu0
      %v11432 = vadd.f32 0.0, %v11431
      %v11433 = vpop.f32.mrf.mxu0
      %v11434 = vpop.f32.mrf.mxu0
      %v11435 = vadd.f32 0.0, %v11434
      %v11436 = vpop.f32.mrf.mxu0
      %11437 = vmatprep.mubr.bf16.mxu0 %v10696
      %11438 = vmatmul.mubr.bf16.gmra.mxu0 %v10695
      %v11439 = vpop.f32.mrf.mxu0
      %v11440 = vadd.f32 0.0, %v11439
      %v11441 = vpop.f32.mrf.mxu0
      %v11442 = vpop.f32.mrf.mxu0
      %v11443 = vadd.f32 0.0, %v11442
      %v11444 = vpop.f32.mrf.mxu0
      %11445 = vmatprep.mubr.bf16.mxu0 %v10705
      %11446 = vmatmul.mubr.bf16.gmra.mxu0 %v10704
      %v11447 = vpop.f32.mrf.mxu0
      %v11448 = vadd.f32 0.0, %v11447
      %v11449 = vpop.f32.mrf.mxu0
      %v11450 = vpop.f32.mrf.mxu0
      %v11451 = vadd.f32 0.0, %v11450
      %v11452 = vpop.f32.mrf.mxu0
      %11453 = vmatprep.mubr.bf16.mxu0 %v10714
      %11454 = vmatmul.mubr.bf16.gmra.mxu0 %v10713
      %v11455 = vpop.f32.mrf.mxu0
      %v11456 = vadd.f32 0.0, %v11455
      %v11457 = vpop.f32.mrf.mxu0
      %v11458 = vpop.f32.mrf.mxu0
      %v11459 = vadd.f32 0.0, %v11458
      %v11460 = vpop.f32.mrf.mxu0
      %11461 = vmatprep.mubr.bf16.mxu0 %v10723
      %11462 = vmatmul.mubr.bf16.gmra.mxu0 %v10722
      %v11463 = vpop.f32.mrf.mxu0
      %v11464 = vadd.f32 0.0, %v11463
      %v11465 = vpop.f32.mrf.mxu0
      %v11466 = vpop.f32.mrf.mxu0
      %v11467 = vadd.f32 0.0, %v11466
      %v11468 = vpop.f32.mrf.mxu0
      %11469 = vmatprep.mubr.bf16.mxu0 %v10732
      %11470 = vmatmul.mubr.bf16.gmra.mxu0 %v10731
      %v11471 = vpop.f32.mrf.mxu0
      %v11472 = vadd.f32 0.0, %v11471
      %v11473 = vpop.f32.mrf.mxu0
      %v11474 = vpop.f32.mrf.mxu0
      %v11475 = vadd.f32 0.0, %v11474
      %v11476 = vpop.f32.mrf.mxu0
      %11477 = vmatprep.mubr.bf16.mxu0 %v10741
      %11478 = vmatmul.mubr.bf16.gmra.mxu0 %v10740
      %v11479 = vpop.f32.mrf.mxu0
      %v11480 = vadd.f32 0.0, %v11479
      %v11481 = vpop.f32.mrf.mxu0
      %v11482 = vpop.f32.mrf.mxu0
      %v11483 = vadd.f32 0.0, %v11482
      %v11484 = vpop.f32.mrf.mxu0
      %11485 = vdwg.mxu0
      %11486 = vmatprep.subr.bf16.mxu0 0
      %11487 = vmatpush1.bf16.msra.mxu0 %v11204
      %11488 = vmatprep.subr.bf16.mxu0 0
      %11489 = vmatpush1.bf16.msra.mxu0 %v11203
      %11490 = vmatprep.subr.bf16.mxu0 0
      %11491 = vmatpush1.bf16.msra.mxu0 %v11202
      %11492 = vmatprep.subr.bf16.mxu0 0
      %11493 = vmatpush1.bf16.msra.mxu0 %v11201
      %11494 = vmatprep.subr.bf16.mxu0 0
      %11495 = vmatpush1.bf16.msra.mxu0 %v11200
      %11496 = vmatprep.subr.bf16.mxu0 0
      %11497 = vmatpush1.bf16.msra.mxu0 %v11199
      %11498 = vmatprep.subr.bf16.mxu0 0
      %11499 = vmatpush1.bf16.msra.mxu0 %v11198
      %11500 = vmatprep.subr.bf16.mxu0 0
      %11501 = vmatpush1.bf16.msra.mxu0 %v11197
      %11502 = vmatprep.subr.bf16.mxu0 0
      %11503 = vmatpush2.bf16.msra.mxu0 %v11212
      %11504 = vmatprep.subr.bf16.mxu0 0
      %11505 = vmatpush2.bf16.msra.mxu0 %v11211
      %11506 = vmatprep.subr.bf16.mxu0 0
      %11507 = vmatpush2.bf16.msra.mxu0 %v11210
      %11508 = vmatprep.subr.bf16.mxu0 0
      %11509 = vmatpush2.bf16.msra.mxu0 %v11209
      %11510 = vmatprep.subr.bf16.mxu0 0
      %11511 = vmatpush2.bf16.msra.mxu0 %v11208
      %11512 = vmatprep.subr.bf16.mxu0 0
      %11513 = vmatpush2.bf16.msra.mxu0 %v11207
      %11514 = vmatprep.subr.bf16.mxu0 0
      %11515 = vmatpush2.bf16.msra.mxu0 %v11206
      %11516 = vmatprep.subr.bf16.mxu0 0
      %11517 = vmatpush2.bf16.msra.mxu0 %v11205
      %11518 = vmatprep.mubr.bf16.mxu0 %v10608
      %11519 = vmatmul.mubr.bf16.gmra.mxu0 %v10607
      %v11520 = vpop.f32.mrf.mxu0
      %v11521 = vadd.f32 %v11360, %v11520
      %v11522 = vpop.f32.mrf.mxu0
      %v11523 = vpop.f32.mrf.mxu0
      %v11524 = vadd.f32 %v11363, %v11523
      %v11525 = vpop.f32.mrf.mxu0
      %11526 = vmatprep.mubr.bf16.mxu0 %v10617
      %11527 = vmatmul.mubr.bf16.gmra.mxu0 %v10616
      %v11528 = vpop.f32.mrf.mxu0
      %v11529 = vadd.f32 %v11368, %v11528
      %v11530 = vpop.f32.mrf.mxu0
      %v11531 = vpop.f32.mrf.mxu0
      %v11532 = vadd.f32 %v11371, %v11531
      %v11533 = vpop.f32.mrf.mxu0
      %11534 = vmatprep.mubr.bf16.mxu0 %v10626
      %11535 = vmatmul.mubr.bf16.gmra.mxu0 %v10625
      %v11536 = vpop.f32.mrf.mxu0
      %v11537 = vadd.f32 %v11376, %v11536
      %v11538 = vpop.f32.mrf.mxu0
      %v11539 = vpop.f32.mrf.mxu0
      %v11540 = vadd.f32 %v11379, %v11539
      %v11541 = vpop.f32.mrf.mxu0
      %11542 = vmatprep.mubr.bf16.mxu0 %v10635
      %11543 = vmatmul.mubr.bf16.gmra.mxu0 %v10634
      %v11544 = vpop.f32.mrf.mxu0
      %v11545 = vadd.f32 %v11384, %v11544
      %v11546 = vpop.f32.mrf.mxu0
      %v11547 = vpop.f32.mrf.mxu0
      %v11548 = vadd.f32 %v11387, %v11547
      %v11549 = vpop.f32.mrf.mxu0
      %11550 = vmatprep.mubr.bf16.mxu0 %v10644
      %11551 = vmatmul.mubr.bf16.gmra.mxu0 %v10643
      %v11552 = vpop.f32.mrf.mxu0
      %v11553 = vadd.f32 %v11392, %v11552
      %v11554 = vpop.f32.mrf.mxu0
      %v11555 = vpop.f32.mrf.mxu0
      %v11556 = vadd.f32 %v11395, %v11555
      %v11557 = vpop.f32.mrf.mxu0
      %11558 = vmatprep.mubr.bf16.mxu0 %v10653
      %11559 = vmatmul.mubr.bf16.gmra.mxu0 %v10652
      %v11560 = vpop.f32.mrf.mxu0
      %v11561 = vadd.f32 %v11400, %v11560
      %v11562 = vpop.f32.mrf.mxu0
      %v11563 = vpop.f32.mrf.mxu0
      %v11564 = vadd.f32 %v11403, %v11563
      %v11565 = vpop.f32.mrf.mxu0
      %11566 = vmatprep.mubr.bf16.mxu0 %v10662
      %11567 = vmatmul.mubr.bf16.gmra.mxu0 %v10661
      %v11568 = vpop.f32.mrf.mxu0
      %v11569 = vadd.f32 %v11408, %v11568
      %v11570 = vpop.f32.mrf.mxu0
      %v11571 = vpop.f32.mrf.mxu0
      %v11572 = vadd.f32 %v11411, %v11571
      %v11573 = vpop.f32.mrf.mxu0
      %11574 = vmatprep.mubr.bf16.mxu0 %v10671
      %11575 = vmatmul.mubr.bf16.gmra.mxu0 %v10670
      %v11576 = vpop.f32.mrf.mxu0
      %v11577 = vadd.f32 %v11416, %v11576
      %v11578 = vpop.f32.mrf.mxu0
      %v11579 = vpop.f32.mrf.mxu0
      %v11580 = vadd.f32 %v11419, %v11579
      %v11581 = vpop.f32.mrf.mxu0
      %11582 = vmatprep.mubr.bf16.mxu0 %v10680
      %11583 = vmatmul.mubr.bf16.gmra.mxu0 %v10679
      %v11584 = vpop.f32.mrf.mxu0
      %v11585 = vadd.f32 %v11424, %v11584
      %v11586 = vpop.f32.mrf.mxu0
      %v11587 = vpop.f32.mrf.mxu0
      %v11588 = vadd.f32 %v11427, %v11587
      %v11589 = vpop.f32.mrf.mxu0
      %11590 = vmatprep.mubr.bf16.mxu0 %v10689
      %11591 = vmatmul.mubr.bf16.gmra.mxu0 %v10688
      %v11592 = vpop.f32.mrf.mxu0
      %v11593 = vadd.f32 %v11432, %v11592
      %v11594 = vpop.f32.mrf.mxu0
      %v11595 = vpop.f32.mrf.mxu0
      %v11596 = vadd.f32 %v11435, %v11595
      %v11597 = vpop.f32.mrf.mxu0
      %11598 = vmatprep.mubr.bf16.mxu0 %v10698
      %11599 = vmatmul.mubr.bf16.gmra.mxu0 %v10697
      %v11600 = vpop.f32.mrf.mxu0
      %v11601 = vadd.f32 %v11440, %v11600
      %v11602 = vpop.f32.mrf.mxu0
      %v11603 = vpop.f32.mrf.mxu0
      %v11604 = vadd.f32 %v11443, %v11603
      %v11605 = vpop.f32.mrf.mxu0
      %11606 = vmatprep.mubr.bf16.mxu0 %v10707
      %11607 = vmatmul.mubr.bf16.gmra.mxu0 %v10706
      %v11608 = vpop.f32.mrf.mxu0
      %v11609 = vadd.f32 %v11448, %v11608
      %v11610 = vpop.f32.mrf.mxu0
      %v11611 = vpop.f32.mrf.mxu0
      %v11612 = vadd.f32 %v11451, %v11611
      %v11613 = vpop.f32.mrf.mxu0
      %11614 = vmatprep.mubr.bf16.mxu0 %v10716
      %11615 = vmatmul.mubr.bf16.gmra.mxu0 %v10715
      %v11616 = vpop.f32.mrf.mxu0
      %v11617 = vadd.f32 %v11456, %v11616
      %v11618 = vpop.f32.mrf.mxu0
      %v11619 = vpop.f32.mrf.mxu0
      %v11620 = vadd.f32 %v11459, %v11619
      %v11621 = vpop.f32.mrf.mxu0
      %11622 = vmatprep.mubr.bf16.mxu0 %v10725
      %11623 = vmatmul.mubr.bf16.gmra.mxu0 %v10724
      %v11624 = vpop.f32.mrf.mxu0
      %v11625 = vadd.f32 %v11464, %v11624
      %v11626 = vpop.f32.mrf.mxu0
      %v11627 = vpop.f32.mrf.mxu0
      %v11628 = vadd.f32 %v11467, %v11627
      %v11629 = vpop.f32.mrf.mxu0
      %11630 = vmatprep.mubr.bf16.mxu0 %v10734
      %11631 = vmatmul.mubr.bf16.gmra.mxu0 %v10733
      %v11632 = vpop.f32.mrf.mxu0
      %v11633 = vadd.f32 %v11472, %v11632
      %v11634 = vpop.f32.mrf.mxu0
      %v11635 = vpop.f32.mrf.mxu0
      %v11636 = vadd.f32 %v11475, %v11635
      %v11637 = vpop.f32.mrf.mxu0
      %11638 = vmatprep.mubr.bf16.mxu0 %v10743
      %11639 = vmatmul.mubr.bf16.gmra.mxu0 %v10742
      %v11640 = vpop.f32.mrf.mxu0
      %v11641 = vadd.f32 %v11480, %v11640
      %v11642 = vpop.f32.mrf.mxu0
      %v11643 = vpop.f32.mrf.mxu0
      %v11644 = vadd.f32 %v11483, %v11643
      %v11645 = vpop.f32.mrf.mxu0
      %11646 = vdwg.mxu0
      %11647 = vmatprep.subr.bf16.mxu0 0
      %11648 = vmatpush1.bf16.msra.mxu0 %v11220
      %11649 = vmatprep.subr.bf16.mxu0 0
      %11650 = vmatpush1.bf16.msra.mxu0 %v11219
      %11651 = vmatprep.subr.bf16.mxu0 0
      %11652 = vmatpush1.bf16.msra.mxu0 %v11218
      %11653 = vmatprep.subr.bf16.mxu0 0
      %11654 = vmatpush1.bf16.msra.mxu0 %v11217
      %11655 = vmatprep.subr.bf16.mxu0 0
      %11656 = vmatpush1.bf16.msra.mxu0 %v11216
      %11657 = vmatprep.subr.bf16.mxu0 0
      %11658 = vmatpush1.bf16.msra.mxu0 %v11215
      %11659 = vmatprep.subr.bf16.mxu0 0
      %11660 = vmatpush1.bf16.msra.mxu0 %v11214
      %11661 = vmatprep.subr.bf16.mxu0 0
      %11662 = vmatpush1.bf16.msra.mxu0 %v11213
      %11663 = vmatprep.subr.bf16.mxu0 0
      %11664 = vmatpush2.bf16.msra.mxu0 %v11228
      %11665 = vmatprep.subr.bf16.mxu0 0
      %11666 = vmatpush2.bf16.msra.mxu0 %v11227
      %11667 = vmatprep.subr.bf16.mxu0 0
      %11668 = vmatpush2.bf16.msra.mxu0 %v11226
      %11669 = vmatprep.subr.bf16.mxu0 0
      %11670 = vmatpush2.bf16.msra.mxu0 %v11225
      %11671 = vmatprep.subr.bf16.mxu0 0
      %11672 = vmatpush2.bf16.msra.mxu0 %v11224
      %11673 = vmatprep.subr.bf16.mxu0 0
      %11674 = vmatpush2.bf16.msra.mxu0 %v11223
      %11675 = vmatprep.subr.bf16.mxu0 0
      %11676 = vmatpush2.bf16.msra.mxu0 %v11222
      %11677 = vmatprep.subr.bf16.mxu0 0
      %11678 = vmatpush2.bf16.msra.mxu0 %v11221
      %11679 = vmatprep.mubr.bf16.mxu0 %v10610
      %11680 = vmatmul.mubr.bf16.gmra.mxu0 %v10609
      %v11681 = vpop.f32.mrf.mxu0
      %v11682 = vadd.f32 %v11521, %v11681
      %v11683 = vpop.f32.mrf.mxu0
      %v11684 = vpop.f32.mrf.mxu0
      %v11685 = vadd.f32 %v11524, %v11684
      %v11686 = vpop.f32.mrf.mxu0
      %11687 = vmatprep.mubr.bf16.mxu0 %v10619
      %11688 = vmatmul.mubr.bf16.gmra.mxu0 %v10618
      %v11689 = vpop.f32.mrf.mxu0
      %v11690 = vadd.f32 %v11529, %v11689
      %v11691 = vpop.f32.mrf.mxu0
      %v11692 = vpop.f32.mrf.mxu0
      %v11693 = vadd.f32 %v11532, %v11692
      %v11694 = vpop.f32.mrf.mxu0
      %11695 = vmatprep.mubr.bf16.mxu0 %v10628
      %11696 = vmatmul.mubr.bf16.gmra.mxu0 %v10627
      %v11697 = vpop.f32.mrf.mxu0
      %v11698 = vadd.f32 %v11537, %v11697
      %v11699 = vpop.f32.mrf.mxu0
      %v11700 = vpop.f32.mrf.mxu0
      %v11701 = vadd.f32 %v11540, %v11700
      %v11702 = vpop.f32.mrf.mxu0
      %11703 = vmatprep.mubr.bf16.mxu0 %v10637
      %11704 = vmatmul.mubr.bf16.gmra.mxu0 %v10636
      %v11705 = vpop.f32.mrf.mxu0
      %v11706 = vadd.f32 %v11545, %v11705
      %v11707 = vpop.f32.mrf.mxu0
      %v11708 = vpop.f32.mrf.mxu0
      %v11709 = vadd.f32 %v11548, %v11708
      %v11710 = vpop.f32.mrf.mxu0
      %11711 = vmatprep.mubr.bf16.mxu0 %v10646
      %11712 = vmatmul.mubr.bf16.gmra.mxu0 %v10645
      %v11713 = vpop.f32.mrf.mxu0
      %v11714 = vadd.f32 %v11553, %v11713
      %v11715 = vpop.f32.mrf.mxu0
      %v11716 = vpop.f32.mrf.mxu0
      %v11717 = vadd.f32 %v11556, %v11716
      %v11718 = vpop.f32.mrf.mxu0
      %11719 = vmatprep.mubr.bf16.mxu0 %v10655
      %11720 = vmatmul.mubr.bf16.gmra.mxu0 %v10654
      %v11721 = vpop.f32.mrf.mxu0
      %v11722 = vadd.f32 %v11561, %v11721
      %v11723 = vpop.f32.mrf.mxu0
      %v11724 = vpop.f32.mrf.mxu0
      %v11725 = vadd.f32 %v11564, %v11724
      %v11726 = vpop.f32.mrf.mxu0
      %11727 = vmatprep.mubr.bf16.mxu0 %v10664
      %11728 = vmatmul.mubr.bf16.gmra.mxu0 %v10663
      %v11729 = vpop.f32.mrf.mxu0
      %v11730 = vadd.f32 %v11569, %v11729
      %v11731 = vpop.f32.mrf.mxu0
      %v11732 = vpop.f32.mrf.mxu0
      %v11733 = vadd.f32 %v11572, %v11732
      %v11734 = vpop.f32.mrf.mxu0
      %11735 = vmatprep.mubr.bf16.mxu0 %v10673
      %11736 = vmatmul.mubr.bf16.gmra.mxu0 %v10672
      %v11737 = vpop.f32.mrf.mxu0
      %v11738 = vadd.f32 %v11577, %v11737
      %v11739 = vpop.f32.mrf.mxu0
      %v11740 = vpop.f32.mrf.mxu0
      %v11741 = vadd.f32 %v11580, %v11740
      %v11742 = vpop.f32.mrf.mxu0
      %11743 = vmatprep.mubr.bf16.mxu0 %v10682
      %11744 = vmatmul.mubr.bf16.gmra.mxu0 %v10681
      %v11745 = vpop.f32.mrf.mxu0
      %v11746 = vadd.f32 %v11585, %v11745
      %v11747 = vpop.f32.mrf.mxu0
      %v11748 = vpop.f32.mrf.mxu0
      %v11749 = vadd.f32 %v11588, %v11748
      %v11750 = vpop.f32.mrf.mxu0
      %11751 = vmatprep.mubr.bf16.mxu0 %v10691
      %11752 = vmatmul.mubr.bf16.gmra.mxu0 %v10690
      %v11753 = vpop.f32.mrf.mxu0
      %v11754 = vadd.f32 %v11593, %v11753
      %v11755 = vpop.f32.mrf.mxu0
      %v11756 = vpop.f32.mrf.mxu0
      %v11757 = vadd.f32 %v11596, %v11756
      %v11758 = vpop.f32.mrf.mxu0
      %11759 = vmatprep.mubr.bf16.mxu0 %v10700
      %11760 = vmatmul.mubr.bf16.gmra.mxu0 %v10699
      %v11761 = vpop.f32.mrf.mxu0
      %v11762 = vadd.f32 %v11601, %v11761
      %v11763 = vpop.f32.mrf.mxu0
      %v11764 = vpop.f32.mrf.mxu0
      %v11765 = vadd.f32 %v11604, %v11764
      %v11766 = vpop.f32.mrf.mxu0
      %11767 = vmatprep.mubr.bf16.mxu0 %v10709
      %11768 = vmatmul.mubr.bf16.gmra.mxu0 %v10708
      %v11769 = vpop.f32.mrf.mxu0
      %v11770 = vadd.f32 %v11609, %v11769
      %v11771 = vpop.f32.mrf.mxu0
      %v11772 = vpop.f32.mrf.mxu0
      %v11773 = vadd.f32 %v11612, %v11772
      %v11774 = vpop.f32.mrf.mxu0
      %11775 = vmatprep.mubr.bf16.mxu0 %v10718
      %11776 = vmatmul.mubr.bf16.gmra.mxu0 %v10717
      %v11777 = vpop.f32.mrf.mxu0
      %v11778 = vadd.f32 %v11617, %v11777
      %v11779 = vpop.f32.mrf.mxu0
      %v11780 = vpop.f32.mrf.mxu0
      %v11781 = vadd.f32 %v11620, %v11780
      %v11782 = vpop.f32.mrf.mxu0
      %11783 = vmatprep.mubr.bf16.mxu0 %v10727
      %11784 = vmatmul.mubr.bf16.gmra.mxu0 %v10726
      %v11785 = vpop.f32.mrf.mxu0
      %v11786 = vadd.f32 %v11625, %v11785
      %v11787 = vpop.f32.mrf.mxu0
      %v11788 = vpop.f32.mrf.mxu0
      %v11789 = vadd.f32 %v11628, %v11788
      %v11790 = vpop.f32.mrf.mxu0
      %11791 = vmatprep.mubr.bf16.mxu0 %v10736
      %11792 = vmatmul.mubr.bf16.gmra.mxu0 %v10735
      %v11793 = vpop.f32.mrf.mxu0
      %v11794 = vadd.f32 %v11633, %v11793
      %v11795 = vpop.f32.mrf.mxu0
      %v11796 = vpop.f32.mrf.mxu0
      %v11797 = vadd.f32 %v11636, %v11796
      %v11798 = vpop.f32.mrf.mxu0
      %11799 = vmatprep.mubr.bf16.mxu0 %v10745
      %11800 = vmatmul.mubr.bf16.gmra.mxu0 %v10744
      %v11801 = vpop.f32.mrf.mxu0
      %v11802 = vadd.f32 %v11641, %v11801
      %v11803 = vpop.f32.mrf.mxu0
      %v11804 = vpop.f32.mrf.mxu0
      %v11805 = vadd.f32 %v11644, %v11804
      %v11806 = vpop.f32.mrf.mxu0
      %11807 = vdwg.mxu0
      %11808 = vmatprep.subr.bf16.mxu0 0
      %11809 = vmatpush1.bf16.msra.mxu0 %v11236
      %11810 = vmatprep.subr.bf16.mxu0 0
      %11811 = vmatpush1.bf16.msra.mxu0 %v11235
      %11812 = vmatprep.subr.bf16.mxu0 0
      %11813 = vmatpush1.bf16.msra.mxu0 %v11234
      %11814 = vmatprep.subr.bf16.mxu0 0
      %11815 = vmatpush1.bf16.msra.mxu0 %v11233
      %11816 = vmatprep.subr.bf16.mxu0 0
      %11817 = vmatpush1.bf16.msra.mxu0 %v11232
      %11818 = vmatprep.subr.bf16.mxu0 0
      %11819 = vmatpush1.bf16.msra.mxu0 %v11231
      %11820 = vmatprep.subr.bf16.mxu0 0
      %11821 = vmatpush1.bf16.msra.mxu0 %v11230
      %11822 = vmatprep.subr.bf16.mxu0 0
      %11823 = vmatpush1.bf16.msra.mxu0 %v11229
      %11824 = vmatprep.subr.bf16.mxu0 0
      %11825 = vmatpush2.bf16.msra.mxu0 %v11244
      %11826 = vmatprep.subr.bf16.mxu0 0
      %11827 = vmatpush2.bf16.msra.mxu0 %v11243
      %11828 = vmatprep.subr.bf16.mxu0 0
      %11829 = vmatpush2.bf16.msra.mxu0 %v11242
      %11830 = vmatprep.subr.bf16.mxu0 0
      %11831 = vmatpush2.bf16.msra.mxu0 %v11241
      %11832 = vmatprep.subr.bf16.mxu0 0
      %11833 = vmatpush2.bf16.msra.mxu0 %v11240
      %11834 = vmatprep.subr.bf16.mxu0 0
      %11835 = vmatpush2.bf16.msra.mxu0 %v11239
      %11836 = vmatprep.subr.bf16.mxu0 0
      %11837 = vmatpush2.bf16.msra.mxu0 %v11238
      %11838 = vmatprep.subr.bf16.mxu0 0
      %11839 = vmatpush2.bf16.msra.mxu0 %v11237
      %11840 = vmatprep.mubr.bf16.mxu0 %v10612
      %11841 = vmatmul.mubr.bf16.gmra.mxu0 %v10611
      %v11842 = vpop.f32.mrf.mxu0
      %v11843 = vadd.f32 %v11682, %v11842
      %v11844 = vpop.f32.mrf.mxu0
      %v11845 = vpop.f32.mrf.mxu0
      %v11846 = vadd.f32 %v11685, %v11845
      %v11847 = vpop.f32.mrf.mxu0
      %11848 = vmatprep.mubr.bf16.mxu0 %v10621
      %11849 = vmatmul.mubr.bf16.gmra.mxu0 %v10620
      %v11850 = vpop.f32.mrf.mxu0
      %v11851 = vadd.f32 %v11690, %v11850
      %v11852 = vpop.f32.mrf.mxu0
      %v11853 = vpop.f32.mrf.mxu0
      %v11854 = vadd.f32 %v11693, %v11853
      %v11855 = vpop.f32.mrf.mxu0
      %11856 = vmatprep.mubr.bf16.mxu0 %v10630
      %11857 = vmatmul.mubr.bf16.gmra.mxu0 %v10629
      %v11858 = vpop.f32.mrf.mxu0
      %v11859 = vadd.f32 %v11698, %v11858
      %v11860 = vpop.f32.mrf.mxu0
      %v11861 = vpop.f32.mrf.mxu0
      %v11862 = vadd.f32 %v11701, %v11861
      %v11863 = vpop.f32.mrf.mxu0
      %11864 = vmatprep.mubr.bf16.mxu0 %v10639
      %11865 = vmatmul.mubr.bf16.gmra.mxu0 %v10638
      %v11866 = vpop.f32.mrf.mxu0
      %v11867 = vadd.f32 %v11706, %v11866
      %v11868 = vpop.f32.mrf.mxu0
      %v11869 = vpop.f32.mrf.mxu0
      %v11870 = vadd.f32 %v11709, %v11869
      %v11871 = vpop.f32.mrf.mxu0
      %11872 = vmatprep.mubr.bf16.mxu0 %v10648
      %11873 = vmatmul.mubr.bf16.gmra.mxu0 %v10647
      %v11874 = vpop.f32.mrf.mxu0
      %v11875 = vadd.f32 %v11714, %v11874
      %v11876 = vpop.f32.mrf.mxu0
      %v11877 = vpop.f32.mrf.mxu0
      %v11878 = vadd.f32 %v11717, %v11877
      %v11879 = vpop.f32.mrf.mxu0
      %11880 = vmatprep.mubr.bf16.mxu0 %v10657
      %11881 = vmatmul.mubr.bf16.gmra.mxu0 %v10656
      %v11882 = vpop.f32.mrf.mxu0
      %v11883 = vadd.f32 %v11722, %v11882
      %v11884 = vpop.f32.mrf.mxu0
      %v11885 = vpop.f32.mrf.mxu0
      %v11886 = vadd.f32 %v11725, %v11885
      %v11887 = vpop.f32.mrf.mxu0
      %11888 = vmatprep.mubr.bf16.mxu0 %v10666
      %11889 = vmatmul.mubr.bf16.gmra.mxu0 %v10665
      %v11890 = vpop.f32.mrf.mxu0
      %v11891 = vadd.f32 %v11730, %v11890
      %v11892 = vpop.f32.mrf.mxu0
      %v11893 = vpop.f32.mrf.mxu0
      %v11894 = vadd.f32 %v11733, %v11893
      %v11895 = vpop.f32.mrf.mxu0
      %11896 = vmatprep.mubr.bf16.mxu0 %v10675
      %11897 = vmatmul.mubr.bf16.gmra.mxu0 %v10674
      %v11898 = vpop.f32.mrf.mxu0
      %v11899 = vadd.f32 %v11738, %v11898
      %v11900 = vpop.f32.mrf.mxu0
      %v11901 = vpop.f32.mrf.mxu0
      %v11902 = vadd.f32 %v11741, %v11901
      %v11903 = vpop.f32.mrf.mxu0
      %11904 = vmatprep.mubr.bf16.mxu0 %v10684
      %11905 = vmatmul.mubr.bf16.gmra.mxu0 %v10683
      %v11906 = vpop.f32.mrf.mxu0
      %v11907 = vadd.f32 %v11746, %v11906
      %v11908 = vpop.f32.mrf.mxu0
      %v11909 = vpop.f32.mrf.mxu0
      %v11910 = vadd.f32 %v11749, %v11909
      %v11911 = vpop.f32.mrf.mxu0
      %11912 = vmatprep.mubr.bf16.mxu0 %v10693
      %11913 = vmatmul.mubr.bf16.gmra.mxu0 %v10692
      %v11914 = vpop.f32.mrf.mxu0
      %v11915 = vadd.f32 %v11754, %v11914
      %v11916 = vpop.f32.mrf.mxu0
      %v11917 = vpop.f32.mrf.mxu0
      %v11918 = vadd.f32 %v11757, %v11917
      %v11919 = vpop.f32.mrf.mxu0
      %11920 = vmatprep.mubr.bf16.mxu0 %v10702
      %11921 = vmatmul.mubr.bf16.gmra.mxu0 %v10701
      %v11922 = vpop.f32.mrf.mxu0
      %v11923 = vadd.f32 %v11762, %v11922
      %v11924 = vpop.f32.mrf.mxu0
      %v11925 = vpop.f32.mrf.mxu0
      %v11926 = vadd.f32 %v11765, %v11925
      %v11927 = vpop.f32.mrf.mxu0
      %11928 = vmatprep.mubr.bf16.mxu0 %v10711
      %11929 = vmatmul.mubr.bf16.gmra.mxu0 %v10710
      %v11930 = vpop.f32.mrf.mxu0
      %v11931 = vadd.f32 %v11770, %v11930
      %v11932 = vpop.f32.mrf.mxu0
      %v11933 = vpop.f32.mrf.mxu0
      %v11934 = vadd.f32 %v11773, %v11933
      %v11935 = vpop.f32.mrf.mxu0
      %11936 = vmatprep.mubr.bf16.mxu0 %v10720
      %11937 = vmatmul.mubr.bf16.gmra.mxu0 %v10719
      %v11938 = vpop.f32.mrf.mxu0
      %v11939 = vadd.f32 %v11778, %v11938
      %v11940 = vpop.f32.mrf.mxu0
      %v11941 = vpop.f32.mrf.mxu0
      %v11942 = vadd.f32 %v11781, %v11941
      %v11943 = vpop.f32.mrf.mxu0
      %11944 = vmatprep.mubr.bf16.mxu0 %v10729
      %11945 = vmatmul.mubr.bf16.gmra.mxu0 %v10728
      %v11946 = vpop.f32.mrf.mxu0
      %v11947 = vadd.f32 %v11786, %v11946
      %v11948 = vpop.f32.mrf.mxu0
      %v11949 = vpop.f32.mrf.mxu0
      %v11950 = vadd.f32 %v11789, %v11949
      %v11951 = vpop.f32.mrf.mxu0
      %11952 = vmatprep.mubr.bf16.mxu0 %v10738
      %11953 = vmatmul.mubr.bf16.gmra.mxu0 %v10737
      %v11954 = vpop.f32.mrf.mxu0
      %v11955 = vadd.f32 %v11794, %v11954
      %v11956 = vpop.f32.mrf.mxu0
      %v11957 = vpop.f32.mrf.mxu0
      %v11958 = vadd.f32 %v11797, %v11957
      %v11959 = vpop.f32.mrf.mxu0
      %11960 = vmatprep.mubr.bf16.mxu0 %v10747
      %11961 = vmatmul.mubr.bf16.gmra.mxu0 %v10746
      %v11962 = vpop.f32.mrf.mxu0
      %v11963 = vadd.f32 %v11802, %v11962
      %v11964 = vpop.f32.mrf.mxu0
      %v11965 = vpop.f32.mrf.mxu0
      %v11966 = vadd.f32 %v11805, %v11965
      %v11967 = vpop.f32.mrf.mxu0
      %11968 = vdwg.mxu0
      %11969 = vmatprep.subr.bf16.mxu0 0
      %11970 = vmatpush1.bf16.msra.mxu0 %v11252
      %11971 = vmatprep.subr.bf16.mxu0 0
      %11972 = vmatpush1.bf16.msra.mxu0 %v11251
      %11973 = vmatprep.subr.bf16.mxu0 0
      %11974 = vmatpush1.bf16.msra.mxu0 %v11250
      %11975 = vmatprep.subr.bf16.mxu0 0
      %11976 = vmatpush1.bf16.msra.mxu0 %v11249
      %11977 = vmatprep.subr.bf16.mxu0 0
      %11978 = vmatpush1.bf16.msra.mxu0 %v11248
      %11979 = vmatprep.subr.bf16.mxu0 0
      %11980 = vmatpush1.bf16.msra.mxu0 %v11247
      %11981 = vmatprep.subr.bf16.mxu0 0
      %11982 = vmatpush1.bf16.msra.mxu0 %v11246
      %11983 = vmatprep.subr.bf16.mxu0 0
      %11984 = vmatpush1.bf16.msra.mxu0 %v11245
      %11985 = vmatprep.subr.bf16.mxu0 0
      %11986 = vmatpush2.bf16.msra.mxu0 0
      %11987 = vmatprep.subr.bf16.mxu0 0
      %11988 = vmatpush2.bf16.msra.mxu0 0
      %11989 = vmatprep.subr.bf16.mxu0 0
      %11990 = vmatpush2.bf16.msra.mxu0 0
      %11991 = vmatprep.subr.bf16.mxu0 0
      %11992 = vmatpush2.bf16.msra.mxu0 0
      %11993 = vmatprep.subr.bf16.mxu0 0
      %11994 = vmatpush2.bf16.msra.mxu0 0
      %11995 = vmatprep.subr.bf16.mxu0 0
      %11996 = vmatpush2.bf16.msra.mxu0 0
      %11997 = vmatprep.subr.bf16.mxu0 0
      %11998 = vmatpush2.bf16.msra.mxu0 0
      %11999 = vmatprep.subr.bf16.mxu0 0
      %12000 = vmatpush2.bf16.msra.mxu0 0
      %12001 = vmatprep.mubr.bf16.mxu0 0
      %12002 = vmatmul.mubr.bf16.gmra.mxu0 %v10613
      %v12003 = vpop.f32.mrf.mxu0
      %v12004 = vadd.f32 %v11843, %v12003
      %v12005 = vpop.f32.mrf.mxu0
      %v12006 = vpop.f32.mrf.mxu0
      %v12007 = vadd.f32 %v11846, %v12006
      %v12008 = vpop.f32.mrf.mxu0
      %12009 = vmatprep.mubr.bf16.mxu0 0
      %12010 = vmatmul.mubr.bf16.gmra.mxu0 %v10622
      %v12011 = vpop.f32.mrf.mxu0
      %v12012 = vadd.f32 %v11851, %v12011
      %v12013 = vpop.f32.mrf.mxu0
      %v12014 = vpop.f32.mrf.mxu0
      %v12015 = vadd.f32 %v11854, %v12014
      %v12016 = vpop.f32.mrf.mxu0
      %12017 = vmatprep.mubr.bf16.mxu0 0
      %12018 = vmatmul.mubr.bf16.gmra.mxu0 %v10631
      %v12019 = vpop.f32.mrf.mxu0
      %v12020 = vadd.f32 %v11859, %v12019
      %v12021 = vpop.f32.mrf.mxu0
      %v12022 = vpop.f32.mrf.mxu0
      %v12023 = vadd.f32 %v11862, %v12022
      %v12024 = vpop.f32.mrf.mxu0
      %12025 = vmatprep.mubr.bf16.mxu0 0
      %12026 = vmatmul.mubr.bf16.gmra.mxu0 %v10640
      %v12027 = vpop.f32.mrf.mxu0
      %v12028 = vadd.f32 %v11867, %v12027
      %v12029 = vpop.f32.mrf.mxu0
      %v12030 = vpop.f32.mrf.mxu0
      %v12031 = vadd.f32 %v11870, %v12030
      %v12032 = vpop.f32.mrf.mxu0
      %12033 = vmatprep.mubr.bf16.mxu0 0
      %12034 = vmatmul.mubr.bf16.gmra.mxu0 %v10649
      %v12035 = vpop.f32.mrf.mxu0
      %v12036 = vadd.f32 %v11875, %v12035
      %v12037 = vpop.f32.mrf.mxu0
      %v12038 = vpop.f32.mrf.mxu0
      %v12039 = vadd.f32 %v11878, %v12038
      %v12040 = vpop.f32.mrf.mxu0
      %12041 = vmatprep.mubr.bf16.mxu0 0
      %12042 = vmatmul.mubr.bf16.gmra.mxu0 %v10658
      %v12043 = vpop.f32.mrf.mxu0
      %v12044 = vadd.f32 %v11883, %v12043
      %v12045 = vpop.f32.mrf.mxu0
      %v12046 = vpop.f32.mrf.mxu0
      %v12047 = vadd.f32 %v11886, %v12046
      %v12048 = vpop.f32.mrf.mxu0
      %12049 = vmatprep.mubr.bf16.mxu0 0
      %12050 = vmatmul.mubr.bf16.gmra.mxu0 %v10667
      %v12051 = vpop.f32.mrf.mxu0
      %v12052 = vadd.f32 %v11891, %v12051
      %v12053 = vpop.f32.mrf.mxu0
      %v12054 = vpop.f32.mrf.mxu0
      %v12055 = vadd.f32 %v11894, %v12054
      %v12056 = vpop.f32.mrf.mxu0
      %12057 = vmatprep.mubr.bf16.mxu0 0
      %12058 = vmatmul.mubr.bf16.gmra.mxu0 %v10676
      %v12059 = vpop.f32.mrf.mxu0
      %v12060 = vadd.f32 %v11899, %v12059
      %v12061 = vpop.f32.mrf.mxu0
      %v12062 = vpop.f32.mrf.mxu0
      %v12063 = vadd.f32 %v11902, %v12062
      %v12064 = vpop.f32.mrf.mxu0
      %12065 = vmatprep.mubr.bf16.mxu0 0
      %12066 = vmatmul.mubr.bf16.gmra.mxu0 %v10685
      %v12067 = vpop.f32.mrf.mxu0
      %v12068 = vadd.f32 %v11907, %v12067
      %v12069 = vpop.f32.mrf.mxu0
      %v12070 = vpop.f32.mrf.mxu0
      %v12071 = vadd.f32 %v11910, %v12070
      %v12072 = vpop.f32.mrf.mxu0
      %12073 = vmatprep.mubr.bf16.mxu0 0
      %12074 = vmatmul.mubr.bf16.gmra.mxu0 %v10694
      %v12075 = vpop.f32.mrf.mxu0
      %v12076 = vadd.f32 %v11915, %v12075
      %v12077 = vpop.f32.mrf.mxu0
      %v12078 = vpop.f32.mrf.mxu0
      %v12079 = vadd.f32 %v11918, %v12078
      %v12080 = vpop.f32.mrf.mxu0
      %12081 = vmatprep.mubr.bf16.mxu0 0
      %12082 = vmatmul.mubr.bf16.gmra.mxu0 %v10703
      %v12083 = vpop.f32.mrf.mxu0
      %v12084 = vadd.f32 %v11923, %v12083
      %v12085 = vpop.f32.mrf.mxu0
      %v12086 = vpop.f32.mrf.mxu0
      %v12087 = vadd.f32 %v11926, %v12086
      %v12088 = vpop.f32.mrf.mxu0
      %12089 = vmatprep.mubr.bf16.mxu0 0
      %12090 = vmatmul.mubr.bf16.gmra.mxu0 %v10712
      %v12091 = vpop.f32.mrf.mxu0
      %v12092 = vadd.f32 %v11931, %v12091
      %v12093 = vpop.f32.mrf.mxu0
      %v12094 = vpop.f32.mrf.mxu0
      %v12095 = vadd.f32 %v11934, %v12094
      %v12096 = vpop.f32.mrf.mxu0
      %12097 = vmatprep.mubr.bf16.mxu0 0
      %12098 = vmatmul.mubr.bf16.gmra.mxu0 %v10721
      %v12099 = vpop.f32.mrf.mxu0
      %v12100 = vadd.f32 %v11939, %v12099
      %v12101 = vpop.f32.mrf.mxu0
      %v12102 = vpop.f32.mrf.mxu0
      %v12103 = vadd.f32 %v11942, %v12102
      %v12104 = vpop.f32.mrf.mxu0
      %12105 = vmatprep.mubr.bf16.mxu0 0
      %12106 = vmatmul.mubr.bf16.gmra.mxu0 %v10730
      %v12107 = vpop.f32.mrf.mxu0
      %v12108 = vadd.f32 %v11947, %v12107
      %v12109 = vpop.f32.mrf.mxu0
      %v12110 = vpop.f32.mrf.mxu0
      %v12111 = vadd.f32 %v11950, %v12110
      %v12112 = vpop.f32.mrf.mxu0
      %12113 = vmatprep.mubr.bf16.mxu0 0
      %12114 = vmatmul.mubr.bf16.gmra.mxu0 %v10739
      %v12115 = vpop.f32.mrf.mxu0
      %v12116 = vadd.f32 %v11955, %v12115
      %v12117 = vpop.f32.mrf.mxu0
      %v12118 = vpop.f32.mrf.mxu0
      %v12119 = vadd.f32 %v11958, %v12118
      %v12120 = vpop.f32.mrf.mxu0
      %12121 = vmatprep.mubr.bf16.mxu0 0
      %12122 = vmatmul.mubr.bf16.gmra.mxu0 %v10748
      %v12123 = vpop.f32.mrf.mxu0
      %v12124 = vadd.f32 %v11963, %v12123
      %v12125 = vpop.f32.mrf.mxu0
      %v12126 = vpop.f32.mrf.mxu0
      %v12127 = vadd.f32 %v11966, %v12126
      %v12128 = vpop.f32.mrf.mxu0
      %12129 = vdwg.mxu0
      %12130 = vst.msk [vmem:[#allocation4] sm:$0xff] %vm6167, %v12004
      %12131 = vst.msk [vmem:[#allocation4 + $0x8] sm:$0xff] %vm6167, %v12007
      %12132 = vst.msk [vmem:[#allocation4 + $0x10] sm:$0xff] %vm6167, %v12012
      %12133 = vst.msk [vmem:[#allocation4 + $0x18] sm:$0xff] %vm6167, %v12015
      %12134 = vst.msk [vmem:[#allocation4 + $0x20] sm:$0xff] %vm6167, %v12020
      %12135 = vst.msk [vmem:[#allocation4 + $0x28] sm:$0xff] %vm6167, %v12023
      %12136 = vst.msk [vmem:[#allocation4 + $0x30] sm:$0xff] %vm6167, %v12028
      %12137 = vst.msk [vmem:[#allocation4 + $0x38] sm:$0xff] %vm6167, %v12031
      %12138 = vst.msk [vmem:[#allocation4 + $0x40] sm:$0xff] %vm6167, %v12036
      %12139 = vst.msk [vmem:[#allocation4 + $0x48] sm:$0xff] %vm6167, %v12039
      %12140 = vst.msk [vmem:[#allocation4 + $0x50] sm:$0xff] %vm6167, %v12044
      %12141 = vst.msk [vmem:[#allocation4 + $0x58] sm:$0xff] %vm6167, %v12047
      %12142 = vst.msk [vmem:[#allocation4 + $0x60] sm:$0xff] %vm6167, %v12052
      %12143 = vst.msk [vmem:[#allocation4 + $0x68] sm:$0xff] %vm6167, %v12055
      %12144 = vst.msk [vmem:[#allocation4 + $0x70] sm:$0xff] %vm6167, %v12060
      %12145 = vst.msk [vmem:[#allocation4 + $0x78] sm:$0xff] %vm6167, %v12063
      %12146 = vst.msk [vmem:[#allocation4 + $0x80] sm:$0xff] %vm6167, %v12068
      %12147 = vst.msk [vmem:[#allocation4 + $0x88] sm:$0xff] %vm6167, %v12071
      %12148 = vst.msk [vmem:[#allocation4 + $0x90] sm:$0xff] %vm6167, %v12076
      %12149 = vst.msk [vmem:[#allocation4 + $0x98] sm:$0xff] %vm6167, %v12079
      %12150 = vst.msk [vmem:[#allocation4 + $0xa0] sm:$0xff] %vm6167, %v12084
      %12151 = vst.msk [vmem:[#allocation4 + $0xa8] sm:$0xff] %vm6167, %v12087
      %12152 = vst.msk [vmem:[#allocation4 + $0xb0] sm:$0xff] %vm6167, %v12092
      %12153 = vst.msk [vmem:[#allocation4 + $0xb8] sm:$0xff] %vm6167, %v12095
      %12154 = vst.msk [vmem:[#allocation4 + $0xc0] sm:$0xff] %vm6167, %v12100
      %12155 = vst.msk [vmem:[#allocation4 + $0xc8] sm:$0xff] %vm6167, %v12103
      %12156 = vst.msk [vmem:[#allocation4 + $0xd0] sm:$0xff] %vm6167, %v12108
      %12157 = vst.msk [vmem:[#allocation4 + $0xd8] sm:$0xff] %vm6167, %v12111
      %12158 = vst.msk [vmem:[#allocation4 + $0xe0] sm:$0xff] %vm6167, %v12116
      %12159 = vst.msk [vmem:[#allocation4 + $0xe8] sm:$0xff] %vm6167, %v12119
      %12160 = vst.msk [vmem:[#allocation4 + $0xf0] sm:$0xff] %vm6167, %v12124
      %12161 = vst.msk [vmem:[#allocation4 + $0xf8] sm:$0xff] %vm6167, %v12127
      %v12162 = vsel %vm6167, %v12004, 0.0
      %v12163 = vsel %vm6167, %v12007, 0.0
      %v12164 = vadd.f32 %v12162, %v12163
      %v12165 = vsel %vm6167, %v12012, 0.0
      %v12166 = vadd.f32 %v12164, %v12165
      %v12167 = vsel %vm6167, %v12015, 0.0
      %v12168 = vadd.f32 %v12166, %v12167
      %v12169 = vsel %vm6167, %v12020, 0.0
      %v12170 = vadd.f32 %v12168, %v12169
      %v12171 = vsel %vm6167, %v12023, 0.0
      %v12172 = vadd.f32 %v12170, %v12171
      %v12173 = vsel %vm6167, %v12028, 0.0
      %v12174 = vadd.f32 %v12172, %v12173
      %v12175 = vsel %vm6167, %v12031, 0.0
      %v12176 = vadd.f32 %v12174, %v12175
      %v12177 = vsel %vm6167, %v12036, 0.0
      %v12178 = vadd.f32 %v12176, %v12177
      %v12179 = vsel %vm6167, %v12039, 0.0
      %v12180 = vadd.f32 %v12178, %v12179
      %v12181 = vsel %vm6167, %v12044, 0.0
      %v12182 = vadd.f32 %v12180, %v12181
      %v12183 = vsel %vm6167, %v12047, 0.0
      %v12184 = vadd.f32 %v12182, %v12183
      %v12185 = vsel %vm6167, %v12052, 0.0
      %v12186 = vadd.f32 %v12184, %v12185
      %v12187 = vsel %vm6167, %v12055, 0.0
      %v12188 = vadd.f32 %v12186, %v12187
      %v12189 = vsel %vm6167, %v12060, 0.0
      %v12190 = vadd.f32 %v12188, %v12189
      %v12191 = vsel %vm6167, %v12063, 0.0
      %v12192 = vadd.f32 %v12190, %v12191
      %v12193 = vsel %vm6167, %v12068, 0.0
      %v12194 = vadd.f32 %v12192, %v12193
      %v12195 = vsel %vm6167, %v12071, 0.0
      %v12196 = vadd.f32 %v12194, %v12195
      %v12197 = vsel %vm6167, %v12076, 0.0
      %v12198 = vadd.f32 %v12196, %v12197
      %v12199 = vsel %vm6167, %v12079, 0.0
      %v12200 = vadd.f32 %v12198, %v12199
      %v12201 = vsel %vm6167, %v12084, 0.0
      %v12202 = vadd.f32 %v12200, %v12201
      %v12203 = vsel %vm6167, %v12087, 0.0
      %v12204 = vadd.f32 %v12202, %v12203
      %v12205 = vsel %vm6167, %v12092, 0.0
      %v12206 = vadd.f32 %v12204, %v12205
      %v12207 = vsel %vm6167, %v12095, 0.0
      %v12208 = vadd.f32 %v12206, %v12207
      %v12209 = vsel %vm6167, %v12100, 0.0
      %v12210 = vadd.f32 %v12208, %v12209
      %v12211 = vsel %vm6167, %v12103, 0.0
      %v12212 = vadd.f32 %v12210, %v12211
      %v12213 = vsel %vm6167, %v12108, 0.0
      %v12214 = vadd.f32 %v12212, %v12213
      %v12215 = vsel %vm6167, %v12111, 0.0
      %v12216 = vadd.f32 %v12214, %v12215
      %v12217 = vsel %vm6167, %v12116, 0.0
      %v12218 = vadd.f32 %v12216, %v12217
      %v12219 = vsel %vm6167, %v12119, 0.0
      %v12220 = vadd.f32 %v12218, %v12219
      %v12221 = vsel %vm6167, %v12124, 0.0
      %v12222 = vadd.f32 %v12220, %v12221
      %v12223 = vsel %vm6167, %v12127, 0.0
      %v12224 = vadd.f32 %v12222, %v12223
      %v12225 = vrot.slane %v12224, 4
      %v12226 = vadd.f32 %v12224, %v12225
      %v12227 = vrot.slane %v12226, 2
      %v12228 = vadd.f32 %v12226, %v12227
      %v12229 = vrot.slane %v12228, 1
      %v12230 = vadd.f32 %v12228, %v12229
      %v12231 = vadd.f32 %v12230, 0.0
      %v12232 = vmul.f32 %v12004, %v12004
      %v12233 = vmul.f32 %v12007, %v12007
      %v12234 = vmul.f32 %v12012, %v12012
      %v12235 = vmul.f32 %v12015, %v12015
      %v12236 = vmul.f32 %v12020, %v12020
      %v12237 = vmul.f32 %v12023, %v12023
      %v12238 = vmul.f32 %v12028, %v12028
      %v12239 = vmul.f32 %v12031, %v12031
      %v12240 = vmul.f32 %v12036, %v12036
      %v12241 = vmul.f32 %v12039, %v12039
      %v12242 = vmul.f32 %v12044, %v12044
      %v12243 = vmul.f32 %v12047, %v12047
      %v12244 = vmul.f32 %v12052, %v12052
      %v12245 = vmul.f32 %v12055, %v12055
      %v12246 = vmul.f32 %v12060, %v12060
      %v12247 = vmul.f32 %v12063, %v12063
      %v12248 = vmul.f32 %v12068, %v12068
      %v12249 = vmul.f32 %v12071, %v12071
      %v12250 = vmul.f32 %v12076, %v12076
      %v12251 = vmul.f32 %v12079, %v12079
      %v12252 = vmul.f32 %v12084, %v12084
      %v12253 = vmul.f32 %v12087, %v12087
      %v12254 = vmul.f32 %v12092, %v12092
      %v12255 = vmul.f32 %v12095, %v12095
      %v12256 = vmul.f32 %v12100, %v12100
      %v12257 = vmul.f32 %v12103, %v12103
      %v12258 = vmul.f32 %v12108, %v12108
      %v12259 = vmul.f32 %v12111, %v12111
      %v12260 = vmul.f32 %v12116, %v12116
      %v12261 = vmul.f32 %v12119, %v12119
      %v12262 = vmul.f32 %v12124, %v12124
      %v12263 = vmul.f32 %v12127, %v12127
      %v12264 = vsel %vm6167, %v12232, 0.0
      %v12265 = vsel %vm6167, %v12233, 0.0
      %v12266 = vadd.f32 %v12264, %v12265
      %v12267 = vsel %vm6167, %v12234, 0.0
      %v12268 = vadd.f32 %v12266, %v12267
      %v12269 = vsel %vm6167, %v12235, 0.0
      %v12270 = vadd.f32 %v12268, %v12269
      %v12271 = vsel %vm6167, %v12236, 0.0
      %v12272 = vadd.f32 %v12270, %v12271
      %v12273 = vsel %vm6167, %v12237, 0.0
      %v12274 = vadd.f32 %v12272, %v12273
      %v12275 = vsel %vm6167, %v12238, 0.0
      %v12276 = vadd.f32 %v12274, %v12275
      %v12277 = vsel %vm6167, %v12239, 0.0
      %v12278 = vadd.f32 %v12276, %v12277
      %v12279 = vsel %vm6167, %v12240, 0.0
      %v12280 = vadd.f32 %v12278, %v12279
      %v12281 = vsel %vm6167, %v12241, 0.0
      %v12282 = vadd.f32 %v12280, %v12281
      %v12283 = vsel %vm6167, %v12242, 0.0
      %v12284 = vadd.f32 %v12282, %v12283
      %v12285 = vsel %vm6167, %v12243, 0.0
      %v12286 = vadd.f32 %v12284, %v12285
      %v12287 = vsel %vm6167, %v12244, 0.0
      %v12288 = vadd.f32 %v12286, %v12287
      %v12289 = vsel %vm6167, %v12245, 0.0
      %v12290 = vadd.f32 %v12288, %v12289
      %v12291 = vsel %vm6167, %v12246, 0.0
      %v12292 = vadd.f32 %v12290, %v12291
      %v12293 = vsel %vm6167, %v12247, 0.0
      %v12294 = vadd.f32 %v12292, %v12293
      %v12295 = vsel %vm6167, %v12248, 0.0
      %v12296 = vadd.f32 %v12294, %v12295
      %v12297 = vsel %vm6167, %v12249, 0.0
      %v12298 = vadd.f32 %v12296, %v12297
      %v12299 = vsel %vm6167, %v12250, 0.0
      %v12300 = vadd.f32 %v12298, %v12299
      %v12301 = vsel %vm6167, %v12251, 0.0
      %v12302 = vadd.f32 %v12300, %v12301
      %v12303 = vsel %vm6167, %v12252, 0.0
      %v12304 = vadd.f32 %v12302, %v12303
      %v12305 = vsel %vm6167, %v12253, 0.0
      %v12306 = vadd.f32 %v12304, %v12305
      %v12307 = vsel %vm6167, %v12254, 0.0
      %v12308 = vadd.f32 %v12306, %v12307
      %v12309 = vsel %vm6167, %v12255, 0.0
      %v12310 = vadd.f32 %v12308, %v12309
      %v12311 = vsel %vm6167, %v12256, 0.0
      %v12312 = vadd.f32 %v12310, %v12311
      %v12313 = vsel %vm6167, %v12257, 0.0
      %v12314 = vadd.f32 %v12312, %v12313
      %v12315 = vsel %vm6167, %v12258, 0.0
      %v12316 = vadd.f32 %v12314, %v12315
      %v12317 = vsel %vm6167, %v12259, 0.0
      %v12318 = vadd.f32 %v12316, %v12317
      %v12319 = vsel %vm6167, %v12260, 0.0
      %v12320 = vadd.f32 %v12318, %v12319
      %v12321 = vsel %vm6167, %v12261, 0.0
      %v12322 = vadd.f32 %v12320, %v12321
      %v12323 = vsel %vm6167, %v12262, 0.0
      %v12324 = vadd.f32 %v12322, %v12323
      %v12325 = vsel %vm6167, %v12263, 0.0
      %v12326 = vadd.f32 %v12324, %v12325
      %v12327 = vrot.slane %v12326, 4
      %v12328 = vadd.f32 %v12326, %v12327
      %v12329 = vrot.slane %v12328, 2
      %v12330 = vadd.f32 %v12328, %v12329
      %v12331 = vrot.slane %v12330, 1
      %v12332 = vadd.f32 %v12330, %v12331
      %v12333 = vadd.f32 %v12332, 0.0
      %v12334 = vmul.f32 %v12231, 0.00390625
      %v12335 = vmul.f32 %v12333, 0.00390625
      %v12336 = vmul.f32 %v12334, %v12334
      %v12337 = vsub.f32 %v12335, %v12336
      %v12338 = vmax.f32 %v12337, 0.0
      %v12339 = vadd.f32 %v12338, 1e-05
      %v12340 = vrsqrt.pop %v12339
      %v12341 = vmul.f32 %v12340, %v505
      %v12342 = vmul.f32 %v12334, %v12341
      %v12344 = vrot.slane %v12342, 7
      %v12346 = vsub.f32 %v505, %v12344
      %v12347 = vld [vmem:[#allocation4] sm:$0xff]
      %v12348 = vld [vmem:[#allocation4 + $0x8] sm:$0xff]
      %v12349 = vld [vmem:[#allocation4 + $0x10] sm:$0xff]
      %v12350 = vld [vmem:[#allocation4 + $0x18] sm:$0xff]
      %v12351 = vld [vmem:[#allocation4 + $0x20] sm:$0xff]
      %v12352 = vld [vmem:[#allocation4 + $0x28] sm:$0xff]
      %v12353 = vld [vmem:[#allocation4 + $0x30] sm:$0xff]
      %v12354 = vld [vmem:[#allocation4 + $0x38] sm:$0xff]
      %v12355 = vld [vmem:[#allocation4 + $0x40] sm:$0xff]
      %v12356 = vld [vmem:[#allocation4 + $0x48] sm:$0xff]
      %v12357 = vld [vmem:[#allocation4 + $0x50] sm:$0xff]
      %v12358 = vld [vmem:[#allocation4 + $0x58] sm:$0xff]
      %v12359 = vld [vmem:[#allocation4 + $0x60] sm:$0xff]
      %v12360 = vld [vmem:[#allocation4 + $0x68] sm:$0xff]
      %v12361 = vld [vmem:[#allocation4 + $0x70] sm:$0xff]
      %v12362 = vld [vmem:[#allocation4 + $0x78] sm:$0xff]
      %v12363 = vld [vmem:[#allocation4 + $0x80] sm:$0xff]
      %v12364 = vld [vmem:[#allocation4 + $0x88] sm:$0xff]
      %v12365 = vld [vmem:[#allocation4 + $0x90] sm:$0xff]
      %v12366 = vld [vmem:[#allocation4 + $0x98] sm:$0xff]
      %v12367 = vld [vmem:[#allocation4 + $0xa0] sm:$0xff]
      %v12368 = vld [vmem:[#allocation4 + $0xa8] sm:$0xff]
      %v12369 = vld [vmem:[#allocation4 + $0xb0] sm:$0xff]
      %v12370 = vld [vmem:[#allocation4 + $0xb8] sm:$0xff]
      %v12371 = vld [vmem:[#allocation4 + $0xc0] sm:$0xff]
      %v12372 = vld [vmem:[#allocation4 + $0xc8] sm:$0xff]
      %v12373 = vld [vmem:[#allocation4 + $0xd0] sm:$0xff]
      %v12374 = vld [vmem:[#allocation4 + $0xd8] sm:$0xff]
      %v12375 = vld [vmem:[#allocation4 + $0xe0] sm:$0xff]
      %v12376 = vld [vmem:[#allocation4 + $0xe8] sm:$0xff]
      %v12377 = vld [vmem:[#allocation4 + $0xf0] sm:$0xff]
      %v12378 = vld [vmem:[#allocation4 + $0xf8] sm:$0xff]
      %v12379 = vlaneseq
      %v12380 = vshrl.u32 %v12379, 7
      %v12381 = vsub.s32 2, %v12380
      %v12382 = vrot.slane %v12341, %v12381
      %v12383 = vmul.f32 %v12347, %v12382
      %v12384 = vmul.f32 %v12348, %v12382
      %v12385 = vmul.f32 %v12349, %v12382
      %v12386 = vmul.f32 %v12350, %v12382
      %v12387 = vmul.f32 %v12351, %v12382
      %v12388 = vmul.f32 %v12352, %v12382
      %v12389 = vmul.f32 %v12353, %v12382
      %v12390 = vmul.f32 %v12354, %v12382
      %v12391 = vmul.f32 %v12355, %v12382
      %v12392 = vmul.f32 %v12356, %v12382
      %v12393 = vmul.f32 %v12357, %v12382
      %v12394 = vmul.f32 %v12358, %v12382
      %v12395 = vmul.f32 %v12359, %v12382
      %v12396 = vmul.f32 %v12360, %v12382
      %v12397 = vmul.f32 %v12361, %v12382
      %v12398 = vmul.f32 %v12362, %v12382
      %v12399 = vmul.f32 %v12363, %v12382
      %v12400 = vmul.f32 %v12364, %v12382
      %v12401 = vmul.f32 %v12365, %v12382
      %v12402 = vmul.f32 %v12366, %v12382
      %v12403 = vmul.f32 %v12367, %v12382
      %v12404 = vmul.f32 %v12368, %v12382
      %v12405 = vmul.f32 %v12369, %v12382
      %v12406 = vmul.f32 %v12370, %v12382
      %v12407 = vmul.f32 %v12371, %v12382
      %v12408 = vmul.f32 %v12372, %v12382
      %v12409 = vmul.f32 %v12373, %v12382
      %v12410 = vmul.f32 %v12374, %v12382
      %v12411 = vmul.f32 %v12375, %v12382
      %v12412 = vmul.f32 %v12376, %v12382
      %v12413 = vmul.f32 %v12377, %v12382
      %v12414 = vmul.f32 %v12378, %v12382
      %v12415 = vlaneseq
      %v12416 = vshrl.u32 %v12415, 7
      %v12417 = vsub.s32 3, %v12416
      %v12418 = vrot.slane %v12346, %v12417
      %v12419 = vadd.f32 %v12383, %v12418
      %v12420 = vadd.f32 %v12384, %v12418
      %v12421 = vadd.f32 %v12385, %v12418
      %v12422 = vadd.f32 %v12386, %v12418
      %v12423 = vadd.f32 %v12387, %v12418
      %v12424 = vadd.f32 %v12388, %v12418
      %v12425 = vadd.f32 %v12389, %v12418
      %v12426 = vadd.f32 %v12390, %v12418
      %v12427 = vadd.f32 %v12391, %v12418
      %v12428 = vadd.f32 %v12392, %v12418
      %v12429 = vadd.f32 %v12393, %v12418
      %v12430 = vadd.f32 %v12394, %v12418
      %v12431 = vadd.f32 %v12395, %v12418
      %v12432 = vadd.f32 %v12396, %v12418
      %v12433 = vadd.f32 %v12397, %v12418
      %v12434 = vadd.f32 %v12398, %v12418
      %v12435 = vadd.f32 %v12399, %v12418
      %v12436 = vadd.f32 %v12400, %v12418
      %v12437 = vadd.f32 %v12401, %v12418
      %v12438 = vadd.f32 %v12402, %v12418
      %v12439 = vadd.f32 %v12403, %v12418
      %v12440 = vadd.f32 %v12404, %v12418
      %v12441 = vadd.f32 %v12405, %v12418
      %v12442 = vadd.f32 %v12406, %v12418
      %v12443 = vadd.f32 %v12407, %v12418
      %v12444 = vadd.f32 %v12408, %v12418
      %v12445 = vadd.f32 %v12409, %v12418
      %v12446 = vadd.f32 %v12410, %v12418
      %v12447 = vadd.f32 %v12411, %v12418
      %v12448 = vadd.f32 %v12412, %v12418
      %v12449 = vadd.f32 %v12413, %v12418
      %v12450 = vadd.f32 %v12414, %v12418
      %v12451 = vld [vmem:[%s205] sm:$0xff]
      %v12452 = vld [vmem:[%s205 + $0x8] sm:$0xff]
      %v12453 = vld [vmem:[%s205 + $0x10] sm:$0xff]
      %v12454 = vld [vmem:[%s205 + $0x18] sm:$0xff]
      %v12455 = vld [vmem:[%s205 + $0x20] sm:$0xff]
      %v12456 = vld [vmem:[%s205 + $0x28] sm:$0xff]
      %v12457 = vld [vmem:[%s205 + $0x30] sm:$0xff]
      %v12458 = vld [vmem:[%s205 + $0x38] sm:$0xff]
      %v12459 = vld [vmem:[%s205 + $0x40] sm:$0xff]
      %v12460 = vld [vmem:[%s205 + $0x48] sm:$0xff]
      %v12461 = vld [vmem:[%s205 + $0x50] sm:$0xff]
      %v12462 = vld [vmem:[%s205 + $0x58] sm:$0xff]
      %v12463 = vld [vmem:[%s205 + $0x60] sm:$0xff]
      %v12464 = vld [vmem:[%s205 + $0x68] sm:$0xff]
      %v12465 = vld [vmem:[%s205 + $0x70] sm:$0xff]
      %v12466 = vld [vmem:[%s205 + $0x78] sm:$0xff]
      %v12467 = vld [vmem:[%s205 + $0x80] sm:$0xff]
      %v12468 = vld [vmem:[%s205 + $0x88] sm:$0xff]
      %v12469 = vld [vmem:[%s205 + $0x90] sm:$0xff]
      %v12470 = vld [vmem:[%s205 + $0x98] sm:$0xff]
      %v12471 = vld [vmem:[%s205 + $0xa0] sm:$0xff]
      %v12472 = vld [vmem:[%s205 + $0xa8] sm:$0xff]
      %v12473 = vld [vmem:[%s205 + $0xb0] sm:$0xff]
      %v12474 = vld [vmem:[%s205 + $0xb8] sm:$0xff]
      %v12475 = vld [vmem:[%s205 + $0xc0] sm:$0xff]
      %v12476 = vld [vmem:[%s205 + $0xc8] sm:$0xff]
      %v12477 = vld [vmem:[%s205 + $0xd0] sm:$0xff]
      %v12478 = vld [vmem:[%s205 + $0xd8] sm:$0xff]
      %v12479 = vld [vmem:[%s205 + $0xe0] sm:$0xff]
      %v12480 = vld [vmem:[%s205 + $0xe8] sm:$0xff]
      %v12481 = vld [vmem:[%s205 + $0xf0] sm:$0xff]
      %v12482 = vld [vmem:[%s205 + $0xf8] sm:$0xff]
      %v12483 = vadd.f32 %v12451, %v12419
      %v12484 = vadd.f32 %v12452, %v12420
      %v12485 = vadd.f32 %v12453, %v12421
      %v12486 = vadd.f32 %v12454, %v12422
      %v12487 = vadd.f32 %v12455, %v12423
      %v12488 = vadd.f32 %v12456, %v12424
      %v12489 = vadd.f32 %v12457, %v12425
      %v12490 = vadd.f32 %v12458, %v12426
      %v12491 = vadd.f32 %v12459, %v12427
      %v12492 = vadd.f32 %v12460, %v12428
      %v12493 = vadd.f32 %v12461, %v12429
      %v12494 = vadd.f32 %v12462, %v12430
      %v12495 = vadd.f32 %v12463, %v12431
      %v12496 = vadd.f32 %v12464, %v12432
      %v12497 = vadd.f32 %v12465, %v12433
      %v12498 = vadd.f32 %v12466, %v12434
      %v12499 = vadd.f32 %v12467, %v12435
      %v12500 = vadd.f32 %v12468, %v12436
      %v12501 = vadd.f32 %v12469, %v12437
      %v12502 = vadd.f32 %v12470, %v12438
      %v12503 = vadd.f32 %v12471, %v12439
      %v12504 = vadd.f32 %v12472, %v12440
      %v12505 = vadd.f32 %v12473, %v12441
      %v12506 = vadd.f32 %v12474, %v12442
      %v12507 = vadd.f32 %v12475, %v12443
      %v12508 = vadd.f32 %v12476, %v12444
      %v12509 = vadd.f32 %v12477, %v12445
      %v12510 = vadd.f32 %v12478, %v12446
      %v12511 = vadd.f32 %v12479, %v12447
      %v12512 = vadd.f32 %v12480, %v12448
      %v12513 = vadd.f32 %v12481, %v12449
      %v12514 = vadd.f32 %v12482, %v12450
      %12515 = vst.msk [vmem:[%s214] sm:$0xff] %vm6167, %v12483
      %12516 = vst.msk [vmem:[%s214 + $0x8] sm:$0xff] %vm6167, %v12484
      %12517 = vst.msk [vmem:[%s214 + $0x10] sm:$0xff] %vm6167, %v12485
      %12518 = vst.msk [vmem:[%s214 + $0x18] sm:$0xff] %vm6167, %v12486
      %12519 = vst.msk [vmem:[%s214 + $0x20] sm:$0xff] %vm6167, %v12487
      %12520 = vst.msk [vmem:[%s214 + $0x28] sm:$0xff] %vm6167, %v12488
      %12521 = vst.msk [vmem:[%s214 + $0x30] sm:$0xff] %vm6167, %v12489
      %12522 = vst.msk [vmem:[%s214 + $0x38] sm:$0xff] %vm6167, %v12490
      %12523 = vst.msk [vmem:[%s214 + $0x40] sm:$0xff] %vm6167, %v12491
      %12524 = vst.msk [vmem:[%s214 + $0x48] sm:$0xff] %vm6167, %v12492
      %12525 = vst.msk [vmem:[%s214 + $0x50] sm:$0xff] %vm6167, %v12493
      %12526 = vst.msk [vmem:[%s214 + $0x58] sm:$0xff] %vm6167, %v12494
      %12527 = vst.msk [vmem:[%s214 + $0x60] sm:$0xff] %vm6167, %v12495
      %12528 = vst.msk [vmem:[%s214 + $0x68] sm:$0xff] %vm6167, %v12496
      %12529 = vst.msk [vmem:[%s214 + $0x70] sm:$0xff] %vm6167, %v12497
      %12530 = vst.msk [vmem:[%s214 + $0x78] sm:$0xff] %vm6167, %v12498
      %12531 = vst.msk [vmem:[%s214 + $0x80] sm:$0xff] %vm6167, %v12499
      %12532 = vst.msk [vmem:[%s214 + $0x88] sm:$0xff] %vm6167, %v12500
      %12533 = vst.msk [vmem:[%s214 + $0x90] sm:$0xff] %vm6167, %v12501
      %12534 = vst.msk [vmem:[%s214 + $0x98] sm:$0xff] %vm6167, %v12502
      %12535 = vst.msk [vmem:[%s214 + $0xa0] sm:$0xff] %vm6167, %v12503
      %12536 = vst.msk [vmem:[%s214 + $0xa8] sm:$0xff] %vm6167, %v12504
      %12537 = vst.msk [vmem:[%s214 + $0xb0] sm:$0xff] %vm6167, %v12505
      %12538 = vst.msk [vmem:[%s214 + $0xb8] sm:$0xff] %vm6167, %v12506
      %12539 = vst.msk [vmem:[%s214 + $0xc0] sm:$0xff] %vm6167, %v12507
      %12540 = vst.msk [vmem:[%s214 + $0xc8] sm:$0xff] %vm6167, %v12508
      %12541 = vst.msk [vmem:[%s214 + $0xd0] sm:$0xff] %vm6167, %v12509
      %12542 = vst.msk [vmem:[%s214 + $0xd8] sm:$0xff] %vm6167, %v12510
      %12543 = vst.msk [vmem:[%s214 + $0xe0] sm:$0xff] %vm6167, %v12511
      %12544 = vst.msk [vmem:[%s214 + $0xe8] sm:$0xff] %vm6167, %v12512
      %12545 = vst.msk [vmem:[%s214 + $0xf0] sm:$0xff] %vm6167, %v12513
      %12546 = vst.msk [vmem:[%s214 + $0xf8] sm:$0xff] %vm6167, %v12514
      %p12547 = scmp.lt.s32.totalorder %s15, 1
      %s12548 = scalar_select %p12547, %s15, 1
      %s12549 = smul.addr %s12548, 32
      %s12550 = smul.addr %s12549, 8
      %s12551 = scalar_lea.vmem %s4, %s12550
      // Predicated region
      $region37: #{tpu_custom_call.1} parent=35 // pred_check
        %p12552 = pneg %p127
      $region38: #{tpu_custom_call.1} parent=35 // pred_check_branch
        %12554 = sbr.rel (%p12552) target = $region40
      $region39: #{tpu_custom_call.1} parent=35 // pred_region
        _
      $region40: #{tpu_custom_call.1} parent=35 // pred_fallthru
        _
    $region36: #{tpu_custom_call.1} parent=5 // pred_fallthru
      _
    %p12555 = scmp.le.s32.totalorder 2, %s10
    // Predicated region
    $region41: #{tpu_custom_call.1} parent=5 // pred_check
      %p12556 = pneg %p12555
    $region42: #{tpu_custom_call.1} parent=5 // pred_check_branch
      %12558 = sbr.rel (%p12556) target = $region44
    $region43: #{tpu_custom_call.1} parent=5 // pred_region
      %s12559 = ssub.s32 %s10, 2
      // Predicated region
      $region45: #{tpu_custom_call.1} parent=43 // pred_check
        %p12560 = pneg %p133
      $region46: #{tpu_custom_call.1} parent=43 // pred_check_branch
        %12562 = sbr.rel (%p12560) target = $region48
      $region47: #{tpu_custom_call.1} parent=43 // pred_region
        %p12563 = scmp.lt.s32.totalorder %s16, 1
        %s12564 = scalar_select %p12563, %s16, 1
        %s12565 = smul.addr %s12564, 32
        %s12566 = smul.addr %s12565, 8
        %s12567 = scalar_lea.vmem %s4, %s12566
      $region48: #{tpu_custom_call.1} parent=43 // pred_fallthru
        _
    $region44: #{tpu_custom_call.1} parent=5 // pred_fallthru
      _
  $region6: #{tpu_custom_call.1} parent=0 // loop_footer
    %s14 = sadd.s32 1, %s10
  $region7: #{tpu_custom_call.1} parent=0 // loop_footer_branch
    %9 = sbr.rel target = $region3
  $region8: #{tpu_custom_call.1} parent=0 // loop_exit
    _

</llo_original>
